<compile_context>
chip_gen: v7x
topology: tpu7x:2x2x1
jax: 0.10.0
libtpu: 0.0.40
codegen_flags: <defaults>
</compile_context>

<pallas_src>
import functools

import jax
import jax.numpy as jnp
import numpy as np
from jax.experimental import pallas as pl
from jax.experimental.pallas import tpu as pltpu


def _flash_self_attention_kernel(
    x_q_ref,     # (1, TQ, D)  f32  — query tile of x
    x_kv_ref,    # (1, TK, D)  f32  — KV tile of x (read only while qi == 0)
    gamma_ref,   # (1, D)      f32
    beta_ref,    # (1, D)      f32
    wq_ref,      # (D, H*Dh)   bf16
    wk_ref,      # (D, H*Dh)   bf16
    wv_ref,      # (D, H*Dh)   bf16
    bq_ref,      # (1, H*Dh)   f32
    bk_ref,      # (1, H*Dh)   f32
    bv_ref,      # (1, H*Dh)   f32
    wo_ref,      # (H*Dh, D)   bf16
    bo_ref,      # (1, D)      f32
    o_ref,       # (1, TQ, D)
    q_scr,       # (H, TQ, Dh) bf16 — current q block, head-split, pre-scaled
    k_scr,       # (H, S,  Dh) bf16 — whole-sequence K, head-split
    v_scr,       # (H, S,  Dh) bf16 — whole-sequence V, head-split
    m_scr,       # (H, TQ, 1)  f32  — running max
    l_scr,       # (H, TQ, 1)  f32  — running sum
    acc_scr,     # (H, TQ, Dh) f32  — running PV accumulator
    *,
    n_heads: int,
    d_head: int,
):
    qi = pl.program_id(1)
    ki = pl.program_id(2)
    nk = pl.num_programs(2)

    TQ = x_q_ref.shape[1]
    TK = x_kv_ref.shape[1]
    HD = n_heads * d_head

    gamma = gamma_ref[0][None, :]
    beta = beta_ref[0][None, :]
    kv_start = pl.multiple_of(ki * TK, TK)

    def layernorm_bf16(x_f32):
        # torch.nn.LayerNorm defaults: eps=1e-5, biased variance.  Stats in f32,
        # result cast to bf16 for the MXU.
        mean = jnp.mean(x_f32, axis=-1, keepdims=True)
        xc = x_f32 - mean
        var = jnp.mean(xc * xc, axis=-1, keepdims=True)
        xn = xc * jax.lax.rsqrt(var + 1e-5)
        return (xn * gamma + beta).astype(jnp.bfloat16)

    # ---- K/V projection for this KV tile: paid exactly once per batch ----
    @pl.when(qi == 0)
    def _fill_kv():
        xn = layernorm_bf16(x_kv_ref[0].astype(jnp.float32))             # (TK, D) bf16
        k = jnp.dot(xn, wk_ref[...], preferred_element_type=jnp.float32) + bk_ref[0][None, :]
        v = jnp.dot(xn, wv_ref[...], preferred_element_type=jnp.float32) + bv_ref[0][None, :]
        kh = jnp.transpose(k.reshape(TK, n_heads, d_head), (1, 0, 2))    # (H, TK, Dh)
        vh = jnp.transpose(v.reshape(TK, n_heads, d_head), (1, 0, 2))
        k_scr[:, pl.ds(kv_start, TK), :] = kh.astype(jnp.bfloat16)
        v_scr[:, pl.ds(kv_start, TK), :] = vh.astype(jnp.bfloat16)

    # ---- Q projection for this query block: paid once per (batch, q-block) ----
    @pl.when(ki == 0)
    def _fill_q():
        xn = layernorm_bf16(x_q_ref[0].astype(jnp.float32))              # (TQ, D) bf16
        q = jnp.dot(xn, wq_ref[...], preferred_element_type=jnp.float32) + bq_ref[0][None, :]
        q = q * jnp.float32(1.0 / np.sqrt(d_head))                       # fold 1/sqrt(Dh) into Q
        q_scr[...] = jnp.transpose(
            q.reshape(TQ, n_heads, d_head), (1, 0, 2)).astype(jnp.bfloat16)
        m_scr[...] = jnp.full(m_scr.shape, -jnp.inf, m_scr.dtype)
        l_scr[...] = jnp.zeros(l_scr.shape, l_scr.dtype)
        acc_scr[...] = jnp.zeros(acc_scr.shape, acc_scr.dtype)

    # ---- online-softmax step against this KV tile ----
    kh = k_scr[:, pl.ds(kv_start, TK), :]                                 # (H, TK, Dh) bf16
    vh = v_scr[:, pl.ds(kv_start, TK), :]
    s = jnp.einsum('hqd,hkd->hqk', q_scr[...], kh,
                   preferred_element_type=jnp.float32)                    # (H, TQ, TK) f32

    m_prev = m_scr[...]
    m_new = jnp.maximum(m_prev, jnp.max(s, axis=-1, keepdims=True))
    alpha = jnp.exp(m_prev - m_new)                                       # (H, TQ, 1) f32
    p = jnp.exp(s - m_new)                                                # f32 block
    l_scr[...] = alpha * l_scr[...] + jnp.sum(p, axis=-1, keepdims=True)
    # Single bf16 copy of the probabilities feeds the MXU.
    acc_scr[...] = alpha * acc_scr[...] + jnp.einsum(
        'hqk,hkd->hqd', p.astype(jnp.bfloat16), vh,
        preferred_element_type=jnp.float32)                               # (H, TQ, Dh) f32
    m_scr[...] = m_new

    # ---- finalize: normalize, merge heads, single (TQ,HD)@(HD,D) out-proj ----
    @pl.when(ki == nk - 1)
    def _finalize():
        o = acc_scr[...] * pl.reciprocal(l_scr[...], approx=True)         # (H, TQ, Dh) f32
        o = jnp.transpose(o.astype(jnp.bfloat16), (1, 0, 2)).reshape(TQ, HD)
        out = jnp.dot(o, wo_ref[...], preferred_element_type=jnp.float32) + bo_ref[0][None, :]
        o_ref[0] = out.astype(o_ref.dtype)


def _pick_block(requested, seq_len, candidates):
    if requested is not None:
        if seq_len % requested != 0:
            raise ValueError(f"block size {requested} must divide seq_len {seq_len}")
        return requested
    for c in candidates:
        if seq_len % c == 0:
            return c
    return seq_len


def self_attention_pallas(x, params, *, n_heads, d_head, block_q=None, block_k=None):
    """x: (B, S, D) float32.  params: dict of f32 weights (see init_params)."""
    B, S, D = x.shape
    HD = n_heads * d_head

    TQ = _pick_block(block_q, S, (256, 128))
    TK = _pick_block(block_k, S, (512, 256, 128))

    # Cast weights to bf16 at the boundary (MXU peak dtype, halves weight VMEM);
    # biases / LayerNorm params stay f32.  Wo stays (H*Dh, D) for one big matmul.
    wq = params["wq"].astype(jnp.bfloat16)
    wk = params["wk"].astype(jnp.bfloat16)
    wv = params["wv"].astype(jnp.bfloat16)
    wo = params["wo"].astype(jnp.bfloat16)

    kernel = functools.partial(_flash_self_attention_kernel,
                               n_heads=n_heads, d_head=d_head)

    def _resident(shape):
        # Grid-invariant block: constant index map -> DMA'd once, stays in VMEM.
        return pl.BlockSpec(shape, lambda b, qi, ki: tuple(0 for _ in shape))

    # Generation-aware VMEM limit (v7x: 64 MiB/TC, v5e/v6e: 128 MiB).
    try:
        vmem_cap = pltpu.get_tpu_info().vmem_capacity_bytes
        vmem_limit = min(int(vmem_cap * 3 // 4), 100 * 1024 * 1024)
    except Exception:
        vmem_limit = 48 * 1024 * 1024   # safe on every generation

    # Advisory cost estimate for XLA's scheduler.
    flops = B * (6 * S * D * HD                      # QKV projections
                 + 4 * n_heads * S * S * d_head      # QK^T + PV
                 + 2 * S * HD * D)                   # output projection
    transcendentals = B * (n_heads * S * S           # exp(p)
                           + n_heads * S * (S // TK) # exp(alpha)
                           + n_heads * S + 2 * S)    # recip + rsqrt
    bytes_accessed = (2 * B * S * D * 4              # x in + out (f32)
                      + 4 * D * HD * 2               # bf16 weights
                      + (3 * HD + 3 * D) * 4)        # biases + gamma/beta
    cost = pl.CostEstimate(flops=flops, transcendentals=transcendentals,
                           bytes_accessed=bytes_accessed)

    grid = (B, S // TQ, S // TK)

    return pl.pallas_call(
        kernel,
        out_shape=jax.ShapeDtypeStruct((B, S, D), x.dtype),
        grid_spec=pltpu.PrefetchScalarGridSpec(
            num_scalar_prefetch=0,
            grid=grid,
            in_specs=[
                # query tile of x
                pl.BlockSpec((1, TQ, D), lambda b, qi, ki: (b, qi, 0)),
                # KV tile of x: only read while qi == 0; afterwards pin to block 0
                # so the pipeline stops re-streaming tiles the kernel ignores.
                pl.BlockSpec((1, TK, D),
                             lambda b, qi, ki: (b, jnp.where(qi == 0, ki, 0), 0)),
                _resident((1, D)),       # gamma
                _resident((1, D)),       # beta
                _resident((D, HD)),      # Wq  (bf16)
                _resident((D, HD)),      # Wk  (bf16)
                _resident((D, HD)),      # Wv  (bf16)
                _resident((1, HD)),      # bq
                _resident((1, HD)),      # bk
                _resident((1, HD)),      # bv
                _resident((HD, D)),      # Wo  (bf16)
                _resident((1, D)),       # bo
            ],
            out_specs=pl.BlockSpec((1, TQ, D), lambda b, qi, ki: (b, qi, 0)),
            scratch_shapes=[
                pltpu.VMEM((n_heads, TQ, d_head), jnp.bfloat16),   # Q block
                pltpu.VMEM((n_heads, S, d_head), jnp.bfloat16),    # K (whole sequence)
                pltpu.VMEM((n_heads, S, d_head), jnp.bfloat16),    # V (whole sequence)
                pltpu.VMEM((n_heads, TQ, 1), jnp.float32),         # running max
                pltpu.VMEM((n_heads, TQ, 1), jnp.float32),         # running sum
                pltpu.VMEM((n_heads, TQ, d_head), jnp.float32),    # PV accumulator
            ],
        ),
        compiler_params=pltpu.CompilerParams(
            dimension_semantics=("parallel", "arbitrary", "arbitrary"),
            vmem_limit_bytes=vmem_limit,
        ),
        cost_estimate=cost,
    )(
        x, x,
        params["gamma"], params["beta"],
        wq, wk, wv,
        params["bq"], params["bk"], params["bv"],
        wo, params["bo"],
    )


def init_params(key, d_model, n_heads, d_head):
    HD = n_heads * d_head
    ks = jax.random.split(key, 8)
    s_in = 1.0 / np.sqrt(d_model)
    s_out = 1.0 / np.sqrt(HD)
    return {
        "gamma": jnp.ones((1, d_model), jnp.float32),
        "beta": jnp.zeros((1, d_model), jnp.float32),
        "wq": jax.random.uniform(ks[0], (d_model, HD), jnp.float32, -s_in, s_in),
        "bq": jax.random.uniform(ks[1], (1, HD), jnp.float32, -s_in, s_in),
        "wk": jax.random.uniform(ks[2], (d_model, HD), jnp.float32, -s_in, s_in),
        "bk": jax.random.uniform(ks[3], (1, HD), jnp.float32, -s_in, s_in),
        "wv": jax.random.uniform(ks[4], (d_model, HD), jnp.float32, -s_in, s_in),
        "bv": jax.random.uniform(ks[5], (1, HD), jnp.float32, -s_in, s_in),
        "wo": jax.random.uniform(ks[6], (HD, d_model), jnp.float32, -s_out, s_out),
        "bo": jax.random.uniform(ks[7], (1, d_model), jnp.float32, -s_out, s_out),
    }


def self_attention_ref(x, params, *, n_heads, d_head):
    """Pure-JAX f32 reference mirroring the PyTorch forward (eval mode)."""
    B, S, D = x.shape
    mean = x.mean(-1, keepdims=True)
    var = ((x - mean) ** 2).mean(-1, keepdims=True)
    xn = (x - mean) / jnp.sqrt(var + 1e-5) * params["gamma"][0] + params["beta"][0]
    q = (xn @ params["wq"] + params["bq"][0]).reshape(B, S, n_heads, d_head)
    k = (xn @ params["wk"] + params["bk"][0]).reshape(B, S, n_heads, d_head)
    v = (xn @ params["wv"] + params["bv"][0]).reshape(B, S, n_heads, d_head)
    scores = jnp.einsum("bihd,bjhd->bhij", q, k) / jnp.sqrt(jnp.float32(d_head))
    att = jax.nn.softmax(scores, axis=-1)
    out = jnp.einsum("bhij,bjhd->bihd", att, v).reshape(B, S, n_heads * d_head)
    return out @ params["wo"] + params["bo"][0]


def _check(B, S, d_model, n_heads, d_head, key, **kw):
    kx, kp = jax.random.split(key)
    x = jax.random.normal(kx, (B, S, d_model), jnp.float32)
    params = init_params(kp, d_model, n_heads, d_head)
    out = self_attention_pallas(x, params, n_heads=n_heads, d_head=d_head, **kw)
    out = jax.block_until_ready(out)
    ref = self_attention_ref(x, params, n_heads=n_heads, d_head=d_head)
    # bf16 MXU operands (f32 accumulation) + approx reciprocal -> loosened tolerance.
    np.testing.assert_allclose(np.asarray(out), np.asarray(ref), rtol=2e-2, atol=2e-2)


if __name__ == "__main__":
    key = jax.random.PRNGKey(0)
    k1, k2 = jax.random.split(key)

    # Config 1: small but lane-friendly shapes; explicit 64/64 blocks force a real
    # multi-block flash loop (2 query blocks x 2 KV blocks) to exercise the
    # online-softmax accumulation and the per-batch K/V scratch fill.
    _check(B=2, S=128, d_model=128, n_heads=4, d_head=32, key=k1,
           block_q=64, block_k=64)

    # Config 2: tiny odd-ball shapes (single block per axis, full-extent blocks).
    _check(B=2, S=8, d_model=32, n_heads=4, d_head=8, key=k2)

    print("KERNEL_OK")
</pallas_src>

<mosaic_0001>
module attributes {stable_mosaic.version = 11 : i64} {
  func.func @_flash_self_attention_kernel(%arg0: i32, %arg1: i32, %arg2: i32, %arg3: memref<1x64x128xf32, #tpu.memory_space<vmem>>, %arg4: memref<1x64x128xf32, #tpu.memory_space<vmem>>, %arg5: memref<1x128xf32, #tpu.memory_space<vmem>>, %arg6: memref<1x128xf32, #tpu.memory_space<vmem>>, %arg7: memref<128x128xbf16, #tpu.memory_space<vmem>>, %arg8: memref<128x128xbf16, #tpu.memory_space<vmem>>, %arg9: memref<128x128xbf16, #tpu.memory_space<vmem>>, %arg10: memref<1x128xf32, #tpu.memory_space<vmem>>, %arg11: memref<1x128xf32, #tpu.memory_space<vmem>>, %arg12: memref<1x128xf32, #tpu.memory_space<vmem>>, %arg13: memref<128x128xbf16, #tpu.memory_space<vmem>>, %arg14: memref<1x128xf32, #tpu.memory_space<vmem>>, %arg15: memref<1x64x128xf32, #tpu.memory_space<vmem>>, %arg16: memref<4x64x32xbf16, #tpu.memory_space<vmem>>, %arg17: memref<4x128x32xbf16, #tpu.memory_space<vmem>>, %arg18: memref<4x128x32xbf16, #tpu.memory_space<vmem>>, %arg19: memref<4x64x1xf32, #tpu.memory_space<vmem>>, %arg20: memref<4x64x1xf32, #tpu.memory_space<vmem>>, %arg21: memref<4x64x32xf32, #tpu.memory_space<vmem>>) attributes {dimension_semantics = [#tpu.dimension_semantics<parallel>, #tpu.dimension_semantics<arbitrary>, #tpu.dimension_semantics<arbitrary>], iteration_bounds = array<i64: 2, 2, 2>, scalar_prefetch = 0 : i64, scratch_operands = 6 : i64, tpu.core_type = #tpu.core_type<tc>, window_params = [{transform_indices = @transform_0, window_bounds = array<i64: 1, 64, 128>}, {transform_indices = @transform_1, window_bounds = array<i64: 1, 64, 128>}, {pipeline_mode = #tpu.pipeline_mode<synchronous>, transform_indices = @transform_2, window_bounds = array<i64: 1, 128>}, {pipeline_mode = #tpu.pipeline_mode<synchronous>, transform_indices = @transform_3, window_bounds = array<i64: 1, 128>}, {pipeline_mode = #tpu.pipeline_mode<synchronous>, transform_indices = @transform_4, window_bounds = array<i64: 128, 128>}, {pipeline_mode = #tpu.pipeline_mode<synchronous>, transform_indices = @transform_5, window_bounds = array<i64: 128, 128>}, {pipeline_mode = #tpu.pipeline_mode<synchronous>, transform_indices = @transform_6, window_bounds = array<i64: 128, 128>}, {pipeline_mode = #tpu.pipeline_mode<synchronous>, transform_indices = @transform_7, window_bounds = array<i64: 1, 128>}, {pipeline_mode = #tpu.pipeline_mode<synchronous>, transform_indices = @transform_8, window_bounds = array<i64: 1, 128>}, {pipeline_mode = #tpu.pipeline_mode<synchronous>, transform_indices = @transform_9, window_bounds = array<i64: 1, 128>}, {pipeline_mode = #tpu.pipeline_mode<synchronous>, transform_indices = @transform_10, window_bounds = array<i64: 128, 128>}, {pipeline_mode = #tpu.pipeline_mode<synchronous>, transform_indices = @transform_11, window_bounds = array<i64: 1, 128>}, {transform_indices = @transform_12, window_bounds = array<i64: 1, 64, 128>}]} {
    %c0 = arith.constant 0 : index
    %c0_0 = arith.constant 0 : index
    %0 = vector.load %arg5[%c0, %c0_0] : memref<1x128xf32, #tpu.memory_space<vmem>>, vector<1x128xf32>
    %1 = vector.shape_cast %0 : vector<1x128xf32> to vector<128xf32>
    %2 = vector.shape_cast %1 : vector<128xf32> to vector<1x128xf32>
    %c0_1 = arith.constant 0 : index
    %c0_2 = arith.constant 0 : index
    %3 = vector.load %arg6[%c0_1, %c0_2] : memref<1x128xf32, #tpu.memory_space<vmem>>, vector<1x128xf32>
    %4 = vector.shape_cast %3 : vector<1x128xf32> to vector<128xf32>
    %5 = vector.shape_cast %4 : vector<128xf32> to vector<1x128xf32>
    %c64_i32 = arith.constant 64 : i32
    %6 = arith.muli %arg2, %c64_i32 : i32
    %7 = tpu.assume_multiple %6, 64 : i32
    %c0_i32 = arith.constant 0 : i32
    %8 = arith.cmpi eq, %arg1, %c0_i32 : i32
    %9 = arith.extui %8 : i1 to i32
    %c0_i32_3 = arith.constant 0 : i32
    %10 = arith.cmpi ne, %9, %c0_i32_3 : i32
    scf.if %10 {
      %c0_35 = arith.constant 0 : index
      %c0_36 = arith.constant 0 : index
      %c0_37 = arith.constant 0 : index
      %46 = vector.load %arg4[%c0_35, %c0_36, %c0_37] : memref<1x64x128xf32, #tpu.memory_space<vmem>>, vector<1x64x128xf32>
      %47 = vector.shape_cast %46 : vector<1x64x128xf32> to vector<64x128xf32>
      %cst_38 = arith.constant dense<0.000000e+00> : vector<64xf32>
      %48 = vector.multi_reduction <add>, %47, %cst_38 [1] : vector<64x128xf32> to vector<64xf32>
      %49 = vector.shape_cast %48 : vector<64xf32> to vector<64x1xf32>
      %cst_39 = arith.constant 1.280000e+02 : f32
      %50 = vector.broadcast %cst_39 : f32 to vector<64x1xf32>
      %51 = arith.divf %49, %50 : vector<64x1xf32>
      %52 = vector.broadcast %51 : vector<64x1xf32> to vector<64x128xf32>
      %53 = arith.subf %47, %52 : vector<64x128xf32>
      %54 = arith.mulf %53, %53 : vector<64x128xf32>
      %cst_40 = arith.constant dense<0.000000e+00> : vector<64xf32>
      %55 = vector.multi_reduction <add>, %54, %cst_40 [1] : vector<64x128xf32> to vector<64xf32>
      %56 = vector.shape_cast %55 : vector<64xf32> to vector<64x1xf32>
      %cst_41 = arith.constant 1.280000e+02 : f32
      %57 = vector.broadcast %cst_41 : f32 to vector<64x1xf32>
      %58 = arith.divf %56, %57 : vector<64x1xf32>
      %cst_42 = arith.constant 9.99999974E-6 : f32
      %59 = vector.broadcast %cst_42 : f32 to vector<64x1xf32>
      %60 = arith.addf %58, %59 : vector<64x1xf32>
      %61 = math.rsqrt %60 : vector<64x1xf32>
      %62 = vector.broadcast %61 : vector<64x1xf32> to vector<64x128xf32>
      %63 = arith.mulf %53, %62 : vector<64x128xf32>
      %64 = vector.broadcast %2 : vector<1x128xf32> to vector<64x128xf32>
      %65 = arith.mulf %63, %64 : vector<64x128xf32>
      %66 = vector.broadcast %5 : vector<1x128xf32> to vector<64x128xf32>
      %67 = arith.addf %65, %66 : vector<64x128xf32>
      %68 = arith.truncf %67 : vector<64x128xf32> to vector<64x128xbf16>
      %c0_43 = arith.constant 0 : index
      %c0_44 = arith.constant 0 : index
      %69 = vector.load %arg8[%c0_43, %c0_44] : memref<128x128xbf16, #tpu.memory_space<vmem>>, vector<128x128xbf16>
      %cst_45 = arith.constant dense<0.000000e+00> : vector<64x128xf32>
      %70 = tpu.matmul %68, %69, %cst_45 {dimension_numbers = #tpu.dot_dimension_numbers<[1], [0], [0], [1], [0, 0, 1, 1], [], []>} : vector<64x128xbf16>, vector<128x128xbf16>, vector<64x128xf32> -> vector<64x128xf32>
      %c0_46 = arith.constant 0 : index
      %c0_47 = arith.constant 0 : index
      %71 = vector.load %arg11[%c0_46, %c0_47] : memref<1x128xf32, #tpu.memory_space<vmem>>, vector<1x128xf32>
      %72 = vector.shape_cast %71 : vector<1x128xf32> to vector<128xf32>
      %73 = vector.shape_cast %72 : vector<128xf32> to vector<1x128xf32>
      %74 = vector.broadcast %73 : vector<1x128xf32> to vector<64x128xf32>
      %75 = arith.addf %70, %74 : vector<64x128xf32>
      %c0_48 = arith.constant 0 : index
      %c0_49 = arith.constant 0 : index
      %76 = vector.load %arg9[%c0_48, %c0_49] : memref<128x128xbf16, #tpu.memory_space<vmem>>, vector<128x128xbf16>
      %cst_50 = arith.constant dense<0.000000e+00> : vector<64x128xf32>
      %77 = tpu.matmul %68, %76, %cst_50 {dimension_numbers = #tpu.dot_dimension_numbers<[1], [0], [0], [1], [0, 0, 1, 1], [], []>} : vector<64x128xbf16>, vector<128x128xbf16>, vector<64x128xf32> -> vector<64x128xf32>
      %c0_51 = arith.constant 0 : index
      %c0_52 = arith.constant 0 : index
      %78 = vector.load %arg12[%c0_51, %c0_52] : memref<1x128xf32, #tpu.memory_space<vmem>>, vector<1x128xf32>
      %79 = vector.shape_cast %78 : vector<1x128xf32> to vector<128xf32>
      %80 = vector.shape_cast %79 : vector<128xf32> to vector<1x128xf32>
      %81 = vector.broadcast %80 : vector<1x128xf32> to vector<64x128xf32>
      %82 = arith.addf %77, %81 : vector<64x128xf32>
      %83 = vector.shape_cast %75 : vector<64x128xf32> to vector<64x4x32xf32>
      %84 = tpu.transpose %83, [1, 0, 2] : vector<64x4x32xf32> -> vector<4x64x32xf32>
      %85 = vector.shape_cast %82 : vector<64x128xf32> to vector<64x4x32xf32>
      %86 = tpu.transpose %85, [1, 0, 2] : vector<64x4x32xf32> -> vector<4x64x32xf32>
      %87 = arith.truncf %84 : vector<4x64x32xf32> to vector<4x64x32xbf16>
      %c0_53 = arith.constant 0 : index
      %88 = arith.index_cast %7 : i32 to index
      %c0_54 = arith.constant 0 : index
      %89 = vector.load %arg17[%c0_53, %88, %c0_54] : memref<4x128x32xbf16, #tpu.memory_space<vmem>>, vector<4x64x32xbf16>
      tpu.vector_store %arg17[%c0_53, %88, %c0_54], %87 {strides = array<i32>} : memref<4x128x32xbf16, #tpu.memory_space<vmem>>, vector<4x64x32xbf16>,
      %90 = arith.truncf %86 : vector<4x64x32xf32> to vector<4x64x32xbf16>
      %c0_55 = arith.constant 0 : index
      %91 = arith.index_cast %7 : i32 to index
      %c0_56 = arith.constant 0 : index
      %92 = vector.load %arg18[%c0_55, %91, %c0_56] : memref<4x128x32xbf16, #tpu.memory_space<vmem>>, vector<4x64x32xbf16>
      tpu.vector_store %arg18[%c0_55, %91, %c0_56], %90 {strides = array<i32>} : memref<4x128x32xbf16, #tpu.memory_space<vmem>>, vector<4x64x32xbf16>,
    } else {
    }
    %c0_i32_4 = arith.constant 0 : i32
    %11 = arith.cmpi eq, %arg2, %c0_i32_4 : i32
    %12 = arith.extui %11 : i1 to i32
    %c0_i32_5 = arith.constant 0 : i32
    %13 = arith.cmpi ne, %12, %c0_i32_5 : i32
    scf.if %13 {
      %c0_35 = arith.constant 0 : index
      %c0_36 = arith.constant 0 : index
      %c0_37 = arith.constant 0 : index
      %46 = vector.load %arg3[%c0_35, %c0_36, %c0_37] : memref<1x64x128xf32, #tpu.memory_space<vmem>>, vector<1x64x128xf32>
      %47 = vector.shape_cast %46 : vector<1x64x128xf32> to vector<64x128xf32>
      %cst_38 = arith.constant dense<0.000000e+00> : vector<64xf32>
      %48 = vector.multi_reduction <add>, %47, %cst_38 [1] : vector<64x128xf32> to vector<64xf32>
      %49 = vector.shape_cast %48 : vector<64xf32> to vector<64x1xf32>
      %cst_39 = arith.constant 1.280000e+02 : f32
      %50 = vector.broadcast %cst_39 : f32 to vector<64x1xf32>
      %51 = arith.divf %49, %50 : vector<64x1xf32>
      %52 = vector.broadcast %51 : vector<64x1xf32> to vector<64x128xf32>
      %53 = arith.subf %47, %52 : vector<64x128xf32>
      %54 = arith.mulf %53, %53 : vector<64x128xf32>
      %cst_40 = arith.constant dense<0.000000e+00> : vector<64xf32>
      %55 = vector.multi_reduction <add>, %54, %cst_40 [1] : vector<64x128xf32> to vector<64xf32>
      %56 = vector.shape_cast %55 : vector<64xf32> to vector<64x1xf32>
      %cst_41 = arith.constant 1.280000e+02 : f32
      %57 = vector.broadcast %cst_41 : f32 to vector<64x1xf32>
      %58 = arith.divf %56, %57 : vector<64x1xf32>
      %cst_42 = arith.constant 9.99999974E-6 : f32
      %59 = vector.broadcast %cst_42 : f32 to vector<64x1xf32>
      %60 = arith.addf %58, %59 : vector<64x1xf32>
      %61 = math.rsqrt %60 : vector<64x1xf32>
      %62 = vector.broadcast %61 : vector<64x1xf32> to vector<64x128xf32>
      %63 = arith.mulf %53, %62 : vector<64x128xf32>
      %64 = vector.broadcast %2 : vector<1x128xf32> to vector<64x128xf32>
      %65 = arith.mulf %63, %64 : vector<64x128xf32>
      %66 = vector.broadcast %5 : vector<1x128xf32> to vector<64x128xf32>
      %67 = arith.addf %65, %66 : vector<64x128xf32>
      %68 = arith.truncf %67 : vector<64x128xf32> to vector<64x128xbf16>
      %c0_43 = arith.constant 0 : index
      %c0_44 = arith.constant 0 : index
      %69 = vector.load %arg7[%c0_43, %c0_44] : memref<128x128xbf16, #tpu.memory_space<vmem>>, vector<128x128xbf16>
      %cst_45 = arith.constant dense<0.000000e+00> : vector<64x128xf32>
      %70 = tpu.matmul %68, %69, %cst_45 {dimension_numbers = #tpu.dot_dimension_numbers<[1], [0], [0], [1], [0, 0, 1, 1], [], []>} : vector<64x128xbf16>, vector<128x128xbf16>, vector<64x128xf32> -> vector<64x128xf32>
      %c0_46 = arith.constant 0 : index
      %c0_47 = arith.constant 0 : index
      %71 = vector.load %arg10[%c0_46, %c0_47] : memref<1x128xf32, #tpu.memory_space<vmem>>, vector<1x128xf32>
      %72 = vector.shape_cast %71 : vector<1x128xf32> to vector<128xf32>
      %73 = vector.shape_cast %72 : vector<128xf32> to vector<1x128xf32>
      %74 = vector.broadcast %73 : vector<1x128xf32> to vector<64x128xf32>
      %75 = arith.addf %70, %74 : vector<64x128xf32>
      %cst_48 = arith.constant 0.176776692 : f32
      %76 = vector.broadcast %cst_48 : f32 to vector<64x128xf32>
      %77 = arith.mulf %75, %76 : vector<64x128xf32>
      %78 = vector.shape_cast %77 : vector<64x128xf32> to vector<64x4x32xf32>
      %79 = tpu.transpose %78, [1, 0, 2] : vector<64x4x32xf32> -> vector<4x64x32xf32>
      %80 = arith.truncf %79 : vector<4x64x32xf32> to vector<4x64x32xbf16>
      %c0_49 = arith.constant 0 : index
      %c0_50 = arith.constant 0 : index
      %c0_51 = arith.constant 0 : index
      %81 = vector.load %arg16[%c0_49, %c0_50, %c0_51] : memref<4x64x32xbf16, #tpu.memory_space<vmem>>, vector<4x64x32xbf16>
      tpu.vector_store %arg16[%c0_49, %c0_50, %c0_51], %80 {strides = array<i32>} : memref<4x64x32xbf16, #tpu.memory_space<vmem>>, vector<4x64x32xbf16>,
      %cst_52 = arith.constant 0xFF800000 : f32
      %82 = vector.broadcast %cst_52 : f32 to vector<4x64x1xf32>
      %c0_53 = arith.constant 0 : index
      %c0_54 = arith.constant 0 : index
      %c0_55 = arith.constant 0 : index
      %83 = vector.load %arg19[%c0_53, %c0_54, %c0_55] : memref<4x64x1xf32, #tpu.memory_space<vmem>>, vector<4x64x1xf32>
      tpu.vector_store %arg19[%c0_53, %c0_54, %c0_55], %82 {strides = array<i32>} : memref<4x64x1xf32, #tpu.memory_space<vmem>>, vector<4x64x1xf32>,
      %cst_56 = arith.constant 0.000000e+00 : f32
      %84 = vector.broadcast %cst_56 : f32 to vector<4x64x1xf32>
      %c0_57 = arith.constant 0 : index
      %c0_58 = arith.constant 0 : index
      %c0_59 = arith.constant 0 : index
      %85 = vector.load %arg20[%c0_57, %c0_58, %c0_59] : memref<4x64x1xf32, #tpu.memory_space<vmem>>, vector<4x64x1xf32>
      tpu.vector_store %arg20[%c0_57, %c0_58, %c0_59], %84 {strides = array<i32>} : memref<4x64x1xf32, #tpu.memory_space<vmem>>, vector<4x64x1xf32>,
      %cst_60 = arith.constant 0.000000e+00 : f32
      %86 = vector.broadcast %cst_60 : f32 to vector<4x64x32xf32>
      %c0_61 = arith.constant 0 : index
      %c0_62 = arith.constant 0 : index
      %c0_63 = arith.constant 0 : index
      %87 = vector.load %arg21[%c0_61, %c0_62, %c0_63] : memref<4x64x32xf32, #tpu.memory_space<vmem>>, vector<4x64x32xf32>
      tpu.vector_store %arg21[%c0_61, %c0_62, %c0_63], %86 {strides = array<i32>} : memref<4x64x32xf32, #tpu.memory_space<vmem>>, vector<4x64x32xf32>,
    } else {
    }
    %c0_6 = arith.constant 0 : index
    %14 = arith.index_cast %7 : i32 to index
    %c0_7 = arith.constant 0 : index
    %15 = vector.load %arg17[%c0_6, %14, %c0_7] : memref<4x128x32xbf16, #tpu.memory_space<vmem>>, vector<4x64x32xbf16>
    %c0_8 = arith.constant 0 : index
    %16 = arith.index_cast %7 : i32 to index
    %c0_9 = arith.constant 0 : index
    %17 = vector.load %arg18[%c0_8, %16, %c0_9] : memref<4x128x32xbf16, #tpu.memory_space<vmem>>, vector<4x64x32xbf16>
    %c0_10 = arith.constant 0 : index
    %c0_11 = arith.constant 0 : index
    %c0_12 = arith.constant 0 : index
    %18 = vector.load %arg16[%c0_10, %c0_11, %c0_12] : memref<4x64x32xbf16, #tpu.memory_space<vmem>>, vector<4x64x32xbf16>
    "tpu.trace_start"() <{level = 10 : i32, message = "hqd,hkd->hqk"}> : () -> ()
    %cst = arith.constant dense<0.000000e+00> : vector<4x64x64xf32>
    %19 = tpu.matmul %18, %15, %cst {dimension_numbers = #tpu.dot_dimension_numbers<[2], [2], [1], [1], [0, 0, 0, 1, 1, 1], [0], [0]>} : vector<4x64x32xbf16>, vector<4x64x32xbf16>, vector<4x64x64xf32> -> vector<4x64x64xf32>
    "tpu.trace_stop"() : () -> ()
    %c0_13 = arith.constant 0 : index
    %c0_14 = arith.constant 0 : index
    %c0_15 = arith.constant 0 : index
    %20 = vector.load %arg19[%c0_13, %c0_14, %c0_15] : memref<4x64x1xf32, #tpu.memory_space<vmem>>, vector<4x64x1xf32>
    %cst_16 = arith.constant dense<0xFF800000> : vector<4x64xf32>
    %21 = vector.multi_reduction <maximumf>, %19, %cst_16 [2] : vector<4x64x64xf32> to vector<4x64xf32>
    %22 = vector.shape_cast %21 : vector<4x64xf32> to vector<4x64x1xf32>
    %23 = arith.maximumf %20, %22 : vector<4x64x1xf32>
    %24 = arith.subf %20, %23 : vector<4x64x1xf32>
    %25 = math.exp %24 : vector<4x64x1xf32>
    %26 = vector.broadcast %23 : vector<4x64x1xf32> to vector<4x64x64xf32>
    %27 = arith.subf %19, %26 : vector<4x64x64xf32>
    %28 = math.exp %27 : vector<4x64x64xf32>
    %c0_17 = arith.constant 0 : index
    %c0_18 = arith.constant 0 : index
    %c0_19 = arith.constant 0 : index
    %29 = vector.load %arg20[%c0_17, %c0_18, %c0_19] : memref<4x64x1xf32, #tpu.memory_space<vmem>>, vector<4x64x1xf32>
    %30 = arith.mulf %25, %29 : vector<4x64x1xf32>
    %cst_20 = arith.constant dense<0.000000e+00> : vector<4x64xf32>
    %31 = vector.multi_reduction <add>, %28, %cst_20 [2] : vector<4x64x64xf32> to vector<4x64xf32>
    %32 = vector.shape_cast %31 : vector<4x64xf32> to vector<4x64x1xf32>
    %33 = arith.addf %30, %32 : vector<4x64x1xf32>
    %c0_21 = arith.constant 0 : index
    %c0_22 = arith.constant 0 : index
    %c0_23 = arith.constant 0 : index
    %34 = vector.load %arg20[%c0_21, %c0_22, %c0_23] : memref<4x64x1xf32, #tpu.memory_space<vmem>>, vector<4x64x1xf32>
    tpu.vector_store %arg20[%c0_21, %c0_22, %c0_23], %33 {strides = array<i32>} : memref<4x64x1xf32, #tpu.memory_space<vmem>>, vector<4x64x1xf32>,
    %c0_24 = arith.constant 0 : index
    %c0_25 = arith.constant 0 : index
    %c0_26 = arith.constant 0 : index
    %35 = vector.load %arg21[%c0_24, %c0_25, %c0_26] : memref<4x64x32xf32, #tpu.memory_space<vmem>>, vector<4x64x32xf32>
    %36 = vector.broadcast %25 : vector<4x64x1xf32> to vector<4x64x32xf32>
    %37 = arith.mulf %36, %35 : vector<4x64x32xf32>
    %38 = arith.truncf %28 : vector<4x64x64xf32> to vector<4x64x64xbf16>
    "tpu.trace_start"() <{level = 10 : i32, message = "hqk,hkd->hqd"}> : () -> ()
    %cst_27 = arith.constant dense<0.000000e+00> : vector<4x64x32xf32>
    %39 = tpu.matmul %38, %17, %cst_27 {dimension_numbers = #tpu.dot_dimension_numbers<[2], [1], [1], [2], [0, 0, 0, 1, 1, 2], [0], [0]>} : vector<4x64x64xbf16>, vector<4x64x32xbf16>, vector<4x64x32xf32> -> vector<4x64x32xf32>
    "tpu.trace_stop"() : () -> ()
    %40 = arith.addf %37, %39 : vector<4x64x32xf32>
    %c0_28 = arith.constant 0 : index
    %c0_29 = arith.constant 0 : index
    %c0_30 = arith.constant 0 : index
    %41 = vector.load %arg21[%c0_28, %c0_29, %c0_30] : memref<4x64x32xf32, #tpu.memory_space<vmem>>, vector<4x64x32xf32>
    tpu.vector_store %arg21[%c0_28, %c0_29, %c0_30], %40 {strides = array<i32>} : memref<4x64x32xf32, #tpu.memory_space<vmem>>, vector<4x64x32xf32>,
    %c0_31 = arith.constant 0 : index
    %c0_32 = arith.constant 0 : index
    %c0_33 = arith.constant 0 : index
    %42 = vector.load %arg19[%c0_31, %c0_32, %c0_33] : memref<4x64x1xf32, #tpu.memory_space<vmem>>, vector<4x64x1xf32>
    tpu.vector_store %arg19[%c0_31, %c0_32, %c0_33], %23 {strides = array<i32>} : memref<4x64x1xf32, #tpu.memory_space<vmem>>, vector<4x64x1xf32>,
    %c1_i32 = arith.constant 1 : i32
    %43 = arith.cmpi eq, %arg2, %c1_i32 : i32
    %44 = arith.extui %43 : i1 to i32
    %c0_i32_34 = arith.constant 0 : i32
    %45 = arith.cmpi ne, %44, %c0_i32_34 : i32
    scf.if %45 {
      %c0_35 = arith.constant 0 : index
      %c0_36 = arith.constant 0 : index
      %c0_37 = arith.constant 0 : index
      %46 = vector.load %arg21[%c0_35, %c0_36, %c0_37] : memref<4x64x32xf32, #tpu.memory_space<vmem>>, vector<4x64x32xf32>
      %c0_38 = arith.constant 0 : index
      %c0_39 = arith.constant 0 : index
      %c0_40 = arith.constant 0 : index
      %47 = vector.load %arg20[%c0_38, %c0_39, %c0_40] : memref<4x64x1xf32, #tpu.memory_space<vmem>>, vector<4x64x1xf32>
      %48 = tpu.reciprocal %47 {approx = true} : vector<4x64x1xf32> -> vector<4x64x1xf32>
      %49 = vector.broadcast %48 : vector<4x64x1xf32> to vector<4x64x32xf32>
      %50 = arith.mulf %46, %49 : vector<4x64x32xf32>
      %51 = arith.truncf %50 : vector<4x64x32xf32> to vector<4x64x32xbf16>
      %52 = tpu.transpose %51, [1, 0, 2] : vector<4x64x32xbf16> -> vector<64x4x32xbf16>
      %53 = vector.shape_cast %52 : vector<64x4x32xbf16> to vector<64x128xbf16>
      %c0_41 = arith.constant 0 : index
      %c0_42 = arith.constant 0 : index
      %54 = vector.load %arg13[%c0_41, %c0_42] : memref<128x128xbf16, #tpu.memory_space<vmem>>, vector<128x128xbf16>
      %cst_43 = arith.constant dense<0.000000e+00> : vector<64x128xf32>
      %55 = tpu.matmul %53, %54, %cst_43 {dimension_numbers = #tpu.dot_dimension_numbers<[1], [0], [0], [1], [0, 0, 1, 1], [], []>} : vector<64x128xbf16>, vector<128x128xbf16>, vector<64x128xf32> -> vector<64x128xf32>
      %c0_44 = arith.constant 0 : index
      %c0_45 = arith.constant 0 : index
      %56 = vector.load %arg14[%c0_44, %c0_45] : memref<1x128xf32, #tpu.memory_space<vmem>>, vector<1x128xf32>
      %57 = vector.shape_cast %56 : vector<1x128xf32> to vector<128xf32>
      %58 = vector.shape_cast %57 : vector<128xf32> to vector<1x128xf32>
      %59 = vector.broadcast %58 : vector<1x128xf32> to vector<64x128xf32>
      %60 = arith.addf %55, %59 : vector<64x128xf32>
      %c0_46 = arith.constant 0 : index
      %c0_47 = arith.constant 0 : index
      %c0_48 = arith.constant 0 : index
      %61 = vector.load %arg15[%c0_46, %c0_47, %c0_48] : memref<1x64x128xf32, #tpu.memory_space<vmem>>, vector<1x64x128xf32>
      %62 = vector.shape_cast %61 : vector<1x64x128xf32> to vector<64x128xf32>
      %63 = vector.shape_cast %60 : vector<64x128xf32> to vector<1x64x128xf32>
      tpu.vector_store %arg15[%c0_46, %c0_47, %c0_48], %63 {strides = array<i32>} : memref<1x64x128xf32, #tpu.memory_space<vmem>>, vector<1x64x128xf32>,
    } else {
    }
    return
  }
  func.func @transform_0(%arg0: i32, %arg1: i32, %arg2: i32) -> (i32, i32, i32) {
    %c0_i32 = arith.constant 0 : i32
    %c0_i32_0 = arith.constant 0 : i32
    return %arg0, %arg1, %c0_i32 : i32, i32, i32
  }
  func.func @transform_1(%arg0: i32, %arg1: i32, %arg2: i32) -> (i32, i32, i32) {
    %c0_i32 = arith.constant 0 : i32
    %0 = arith.cmpi eq, %arg1, %c0_i32 : i32
    %c0_i32_0 = arith.constant 0 : i32
    %1 = arith.select %0, %arg2, %c0_i32_0 : i32
    %c0_i32_1 = arith.constant 0 : i32
    %c0_i32_2 = arith.constant 0 : i32
    return %arg0, %1, %c0_i32_1 : i32, i32, i32
  }
  func.func @transform_2(%arg0: i32, %arg1: i32, %arg2: i32) -> (i32, i32) {
    %c0_i32 = arith.constant 0 : i32
    %c0_i32_0 = arith.constant 0 : i32
    %c0_i32_1 = arith.constant 0 : i32
    return %c0_i32, %c0_i32_0 : i32, i32
  }
  func.func @transform_3(%arg0: i32, %arg1: i32, %arg2: i32) -> (i32, i32) {
    %c0_i32 = arith.constant 0 : i32
    %c0_i32_0 = arith.constant 0 : i32
    %c0_i32_1 = arith.constant 0 : i32
    return %c0_i32, %c0_i32_0 : i32, i32
  }
  func.func @transform_4(%arg0: i32, %arg1: i32, %arg2: i32) -> (i32, i32) {
    %c0_i32 = arith.constant 0 : i32
    %c0_i32_0 = arith.constant 0 : i32
    %c0_i32_1 = arith.constant 0 : i32
    return %c0_i32, %c0_i32_0 : i32, i32
  }
  func.func @transform_5(%arg0: i32, %arg1: i32, %arg2: i32) -> (i32, i32) {
    %c0_i32 = arith.constant 0 : i32
    %c0_i32_0 = arith.constant 0 : i32
    %c0_i32_1 = arith.constant 0 : i32
    return %c0_i32, %c0_i32_0 : i32, i32
  }
  func.func @transform_6(%arg0: i32, %arg1: i32, %arg2: i32) -> (i32, i32) {
    %c0_i32 = arith.constant 0 : i32
    %c0_i32_0 = arith.constant 0 : i32
    %c0_i32_1 = arith.constant 0 : i32
    return %c0_i32, %c0_i32_0 : i32, i32
  }
  func.func @transform_7(%arg0: i32, %arg1: i32, %arg2: i32) -> (i32, i32) {
    %c0_i32 = arith.constant 0 : i32
    %c0_i32_0 = arith.constant 0 : i32
    %c0_i32_1 = arith.constant 0 : i32
    return %c0_i32, %c0_i32_0 : i32, i32
  }
  func.func @transform_8(%arg0: i32, %arg1: i32, %arg2: i32) -> (i32, i32) {
    %c0_i32 = arith.constant 0 : i32
    %c0_i32_0 = arith.constant 0 : i32
    %c0_i32_1 = arith.constant 0 : i32
    return %c0_i32, %c0_i32_0 : i32, i32
  }
  func.func @transform_9(%arg0: i32, %arg1: i32, %arg2: i32) -> (i32, i32) {
    %c0_i32 = arith.constant 0 : i32
    %c0_i32_0 = arith.constant 0 : i32
    %c0_i32_1 = arith.constant 0 : i32
    return %c0_i32, %c0_i32_0 : i32, i32
  }
  func.func @transform_10(%arg0: i32, %arg1: i32, %arg2: i32) -> (i32, i32) {
    %c0_i32 = arith.constant 0 : i32
    %c0_i32_0 = arith.constant 0 : i32
    %c0_i32_1 = arith.constant 0 : i32
    return %c0_i32, %c0_i32_0 : i32, i32
  }
  func.func @transform_11(%arg0: i32, %arg1: i32, %arg2: i32) -> (i32, i32) {
    %c0_i32 = arith.constant 0 : i32
    %c0_i32_0 = arith.constant 0 : i32
    %c0_i32_1 = arith.constant 0 : i32
    return %c0_i32, %c0_i32_0 : i32, i32
  }
  func.func @transform_12(%arg0: i32, %arg1: i32, %arg2: i32) -> (i32, i32, i32) {
    %c0_i32 = arith.constant 0 : i32
    %c0_i32_0 = arith.constant 0 : i32
    return %arg0, %arg1, %c0_i32 : i32, i32, i32
  }
}

</mosaic_0001>

<llo_original>
// kernel: tpu_custom_call.1
$region0: #{tpu_custom_call.1}
  #allocation0 [shape = 'u32[]', space=smem, size = 0x4, offset = 0x4, fixed_abs, tag = 'smem constant byte address 0x4 - core index']
  #allocation1 [shape = 'u32[144,128]{1,0:T(1,128)}', space=vmem, size = 0x12000, scoped, tag = 'internal scratch']
  #allocation2 [shape = 'bf16[4,64,32]{2,1,0:T(16,128)(2,1)}', space=vmem, size = 0x10000, scoped, tag = 'scratch operand']
  #allocation3 [shape = 'bf16[4,128,32]{2,1,0:T(16,128)(2,1)}', space=vmem, size = 0x20000, scoped, tag = 'scratch operand']
  #allocation4 [shape = 'bf16[4,128,32]{2,1,0:T(16,128)(2,1)}', space=vmem, size = 0x20000, scoped, tag = 'scratch operand']
  #allocation5 [shape = 'f32[4,64,1]{2,1,0:T(8,128)}', space=vmem, size = 0x20000, scoped, tag = 'scratch operand']
  #allocation6 [shape = 'f32[4,64,1]{2,1,0:T(8,128)}', space=vmem, size = 0x20000, scoped, tag = 'scratch operand']
  #allocation7 [shape = 'f32[4,64,32]{2,1,0:T(8,128)}', space=vmem, size = 0x20000, scoped, tag = 'scratch operand']
  %s0 = inlined_call_operand.hbm [shape: f32[2,128,128], index: 0, kind: input, shape index: {}]
  %s1 = inlined_call_operand.hbm [shape: f32[2,128,128], index: 1, kind: input, shape index: {}]
  %s2 = inlined_call_operand.vmem [shape: f32[1,128], index: 2, kind: input, shape index: {}]
  %s3 = inlined_call_operand.vmem [shape: f32[1,128], index: 3, kind: input, shape index: {}]
  %s4 = inlined_call_operand.hbm [shape: bf16[128,128], index: 4, kind: input, shape index: {}]
  %s5 = inlined_call_operand.hbm [shape: bf16[128,128], index: 5, kind: input, shape index: {}]
  %s6 = inlined_call_operand.hbm [shape: bf16[128,128], index: 6, kind: input, shape index: {}]
  %s7 = inlined_call_operand.vmem [shape: f32[1,128], index: 7, kind: input, shape index: {}]
  %s8 = inlined_call_operand.vmem [shape: f32[1,128], index: 8, kind: input, shape index: {}]
  %s9 = inlined_call_operand.vmem [shape: f32[1,128], index: 9, kind: input, shape index: {}]
  %s10 = inlined_call_operand.hbm [shape: bf16[128,128], index: 10, kind: input, shape index: {}]
  %s11 = inlined_call_operand.vmem [shape: f32[1,128], index: 11, kind: input, shape index: {}]
  %s12 = inlined_call_operand.hbm [shape: f32[2,128,128], index: 12, kind: output, shape index: {}]
  %s13 = sld [smem:[#allocation0]]
  $region117: #{tpu_custom_call.1} parent=0
    _
  %s15 = ssub.s32 1, %s13
  %s16 = scalar_select 0, %s15, %s13
  $region1: #{tpu_custom_call.1} parent=0
    #allocation8 [shape = 'u8[65536]{0}', space=vmem, size = 0x10000, scoped, tag = 'input window, operand 0']
    #allocation9 [shape = 's32[2]{0}', space=sflag, size = 0x8, scoped, tag = 'scoped memory for tpu_custom_call.1']
    #allocation10 [shape = 's32[2]{0}', space=sflag, size = 0x8, scoped, tag = 'scoped memory for tpu_custom_call.1']
    #allocation11 [shape = 'u8[65536]{0}', space=vmem, size = 0x10000, scoped, tag = 'input window, operand 1']
    #allocation12 [shape = 's32[2]{0}', space=sflag, size = 0x8, scoped, tag = 'scoped memory for tpu_custom_call.1']
    #allocation13 [shape = 'u8[32768]{0}', space=vmem, size = 0x8000, scoped, tag = 'input window, operand 4, single buffered']
    #allocation14 [shape = 'u8[32768]{0}', space=vmem, size = 0x8000, scoped, tag = 'input window, operand 5, single buffered']
    #allocation15 [shape = 's32[1]{0}', space=sflag, size = 0x4, scoped, tag = 'scoped memory for tpu_custom_call.1']
    #allocation16 [shape = 'u8[32768]{0}', space=vmem, size = 0x8000, scoped, tag = 'input window, operand 6, single buffered']
    #allocation17 [shape = 'u8[32768]{0}', space=vmem, size = 0x8000, scoped, tag = 'input window, operand 10, single buffered']
    #allocation18 [shape = 's32[1]{0}', space=sflag, size = 0x4, scoped, tag = 'scoped memory for tpu_custom_call.1']
    #allocation19 [shape = 'u8[65536]{0}', space=vmem, size = 0x10000, scoped, tag = 'output window, operand 0']
    %17 = vsyncpa [#allocation9], 0
    %s18 = scalar_lea.sflag [#allocation9], 1
    %19 = vsyncpa %s18, 0
    %20 = vsyncpa [#allocation12], 0
    %s21 = scalar_lea.sflag [#allocation12], 1
    %22 = vsyncpa %s21, 0
    %23 = vsyncpa [#allocation15], 0
    %24 = vsyncpa [#allocation18], 0
    %25 = vsyncpa [#allocation10], 0
    %s26 = scalar_lea.sflag [#allocation10], 1
    %27 = vsyncpa %s26, 0
    loop: start=0, step=1, limit=10
    $region2: #{tpu_custom_call.1} parent=1 // loop_pre_header
      _
    $region3: #{tpu_custom_call.1} parent=1 // loop_header
      %s29 = sphi 0, %s33
      %p30 = scmp.ge.s32.totalorder %s29, 10
      %s36 = sphi 0, %s55
      %s37 = sphi 0, %s51
      %s38 = sphi 0, %s47
      %s39 = sphi 0, %s36
      %s40 = sphi 0, %s37
      %s41 = sphi 0, %s38
      %s42 = sphi 0, %s39
      %s43 = sphi 0, %s40
      %s44 = sphi 0, %s41
      %s60 = sphi 0, %s62
      %s63 = sphi 0, %s60
      %s64 = sphi 0, %s63
      %s80 = sphi 0, %s64
      %s92 = sphi 0, %s94
      %s95 = sphi 0, %s92
      %s96 = sphi 0, %s95
      %s112 = sphi 0, %s96
      %s116 = sphi 0, %s116
      %s118 = sphi 0, %s116
      %s119 = sphi 0, %s118
      %s133 = sphi 0, %s119
      %s137 = sphi 0, %s137
      %s139 = sphi 0, %s137
      %s140 = sphi 0, %s139
      %s154 = sphi 0, %s140
      %s158 = sphi 0, %s158
      %s160 = sphi 0, %s158
      %s161 = sphi 0, %s160
      %s175 = sphi 0, %s161
      %s179 = sphi 0, %s179
      %s181 = sphi 0, %s179
      %s182 = sphi 0, %s181
      %s196 = sphi 0, %s182
      %s200 = sphi 0, %s200
      %s202 = sphi 0, %s200
      %s203 = sphi 0, %s202
      %s217 = sphi 0, %s203
      %s221 = sphi 0, %s221
      %s223 = sphi 0, %s221
      %s224 = sphi 0, %s223
      %s238 = sphi 0, %s224
      %s242 = sphi 0, %s242
      %s244 = sphi 0, %s242
      %s245 = sphi 0, %s244
      %s259 = sphi 0, %s245
      %s263 = sphi 0, %s263
      %s265 = sphi 0, %s263
      %s266 = sphi 0, %s265
      %s280 = sphi 0, %s266
      %s284 = sphi 0, %s284
      %s286 = sphi 0, %s284
      %s287 = sphi 0, %s286
      %s301 = sphi 0, %s287
      %s305 = sphi 0, %s305
      %s307 = sphi 0, %s305
      %s308 = sphi 0, %s307
      %s322 = sphi 0, %s308
      %s330 = sphi 0, %s332
      %s333 = sphi 0, %s330
      %s334 = sphi 0, %s333
      %s350 = sphi 0, %s334
    $region4: #{tpu_custom_call.1} parent=1 // loop_header_branch
      %32 = sbr.rel (%p30) target = $region8
    $region5: #{tpu_custom_call.1} parent=1 // loop_body
      %s34 = ssub.s32 %s29, 1
      %s35 = ssub.s32 %s29, 2
      %s45 = sadd.s32 1, %s38
      %p46 = scmp.ge.s32.totalorder %s45, 2
      %s47 = scalar_select %p46, 0, %s45
      %s48 = sadd.s32 1, %s37
      %s49 = scalar_select %p46, %s48, %s37
      %p50 = scmp.ge.s32.totalorder %s49, 2
      %s51 = scalar_select %p50, 0, %s49
      %s52 = sadd.s32 1, %s36
      %s53 = scalar_select %p50, %s52, %s36
      %p54 = scmp.ge.s32.totalorder %s53, 2
      %s55 = scalar_select %p54, 0, %s53
      %s56 = ssub.s32 %s36, %s55
      %s57 = ssub.s32 %s37, %s51
      %s58 = sor.u32 %s56, %s57
      %p59 = scmp.eq.s32.totalorder %s58, 0
      %s61 = sadd.s32 %s60, 1
      %s62 = scalar_select %p59, %s60, %s61
      %p65 = pneg %p59
      %p66 = scmp.eq.s32.totalorder %s29, 7
      %p67 = por %p65, %p66
      %p68 = scmp.ne.s32.totalorder %s60, %s63
      %p69 = scmp.eq.s32.totalorder %s29, 0
      %p70 = por %p68, %p69
      %p71 = scmp.ne.s32.totalorder %s60, %s63
      %p72 = scmp.eq.s32.totalorder %s34, 7
      %p73 = por %p71, %p72
      %p74 = scmp.ne.s32.totalorder %s63, %s64
      %p75 = scmp.eq.s32.totalorder %s34, 0
      %p76 = por %p74, %p75
      %p77 = scmp.ne.s32.totalorder %s63, %s64
      %p78 = scmp.eq.s32.totalorder %s35, 7
      %p79 = por %p77, %p78
      %p81 = scmp.ne.s32.totalorder %s64, %s80
      %p82 = scmp.eq.s32.totalorder %s35, 0
      %p83 = por %p81, %p82
      %p84 = scmp.eq.s32.totalorder %s37, 0
      %s85 = scalar_select %p84, %s38, 0
      %p86 = scmp.eq.s32.totalorder %s51, 0
      %s87 = scalar_select %p86, %s47, 0
      %s88 = ssub.s32 %s36, %s55
      %s89 = ssub.s32 %s85, %s87
      %s90 = sor.u32 %s88, %s89
      %p91 = scmp.eq.s32.totalorder %s90, 0
      %s93 = sadd.s32 %s92, 1
      %s94 = scalar_select %p91, %s92, %s93
      %p97 = pneg %p91
      %p98 = scmp.eq.s32.totalorder %s29, 7
      %p99 = por %p97, %p98
      %p100 = scmp.ne.s32.totalorder %s92, %s95
      %p101 = scmp.eq.s32.totalorder %s29, 0
      %p102 = por %p100, %p101
      %p103 = scmp.ne.s32.totalorder %s92, %s95
      %p104 = scmp.eq.s32.totalorder %s34, 7
      %p105 = por %p103, %p104
      %p106 = scmp.ne.s32.totalorder %s95, %s96
      %p107 = scmp.eq.s32.totalorder %s34, 0
      %p108 = por %p106, %p107
      %p109 = scmp.ne.s32.totalorder %s95, %s96
      %p110 = scmp.eq.s32.totalorder %s35, 7
      %p111 = por %p109, %p110
      %p113 = scmp.ne.s32.totalorder %s96, %s112
      %p114 = scmp.eq.s32.totalorder %s35, 0
      %p115 = por %p113, %p114
      %s117 = sadd.s32 %s116, 1
      %p120 = scmp.eq.s32.totalorder %s29, 7
      %p121 = scmp.ne.s32.totalorder %s116, %s118
      %p122 = scmp.eq.s32.totalorder %s29, 0
      %p123 = por %p121, %p122
      %p124 = scmp.ne.s32.totalorder %s116, %s118
      %p125 = scmp.eq.s32.totalorder %s34, 7
      %p126 = por %p124, %p125
      %p127 = scmp.ne.s32.totalorder %s118, %s119
      %p128 = scmp.eq.s32.totalorder %s34, 0
      %p129 = por %p127, %p128
      %p130 = scmp.ne.s32.totalorder %s118, %s119
      %p131 = scmp.eq.s32.totalorder %s35, 7
      %p132 = por %p130, %p131
      %p134 = scmp.ne.s32.totalorder %s119, %s133
      %p135 = scmp.eq.s32.totalorder %s35, 0
      %p136 = por %p134, %p135
      %s138 = sadd.s32 %s137, 1
      %p141 = scmp.eq.s32.totalorder %s29, 7
      %p142 = scmp.ne.s32.totalorder %s137, %s139
      %p143 = scmp.eq.s32.totalorder %s29, 0
      %p144 = por %p142, %p143
      %p145 = scmp.ne.s32.totalorder %s137, %s139
      %p146 = scmp.eq.s32.totalorder %s34, 7
      %p147 = por %p145, %p146
      %p148 = scmp.ne.s32.totalorder %s139, %s140
      %p149 = scmp.eq.s32.totalorder %s34, 0
      %p150 = por %p148, %p149
      %p151 = scmp.ne.s32.totalorder %s139, %s140
      %p152 = scmp.eq.s32.totalorder %s35, 7
      %p153 = por %p151, %p152
      %p155 = scmp.ne.s32.totalorder %s140, %s154
      %p156 = scmp.eq.s32.totalorder %s35, 0
      %p157 = por %p155, %p156
      %s159 = sadd.s32 %s158, 1
      %p162 = scmp.eq.s32.totalorder %s29, 7
      %p163 = scmp.ne.s32.totalorder %s158, %s160
      %p164 = scmp.eq.s32.totalorder %s29, 0
      %p165 = por %p163, %p164
      %p166 = scmp.ne.s32.totalorder %s158, %s160
      %p167 = scmp.eq.s32.totalorder %s34, 7
      %p168 = por %p166, %p167
      %p169 = scmp.ne.s32.totalorder %s160, %s161
      %p170 = scmp.eq.s32.totalorder %s34, 0
      %p171 = por %p169, %p170
      %p172 = scmp.ne.s32.totalorder %s160, %s161
      %p173 = scmp.eq.s32.totalorder %s35, 7
      %p174 = por %p172, %p173
      %p176 = scmp.ne.s32.totalorder %s161, %s175
      %p177 = scmp.eq.s32.totalorder %s35, 0
      %p178 = por %p176, %p177
      %s180 = sadd.s32 %s179, 1
      %p183 = scmp.eq.s32.totalorder %s29, 7
      %p184 = scmp.ne.s32.totalorder %s179, %s181
      %p185 = scmp.eq.s32.totalorder %s29, 0
      %p186 = por %p184, %p185
      %p187 = scmp.ne.s32.totalorder %s179, %s181
      %p188 = scmp.eq.s32.totalorder %s34, 7
      %p189 = por %p187, %p188
      %p190 = scmp.ne.s32.totalorder %s181, %s182
      %p191 = scmp.eq.s32.totalorder %s34, 0
      %p192 = por %p190, %p191
      %p193 = scmp.ne.s32.totalorder %s181, %s182
      %p194 = scmp.eq.s32.totalorder %s35, 7
      %p195 = por %p193, %p194
      %p197 = scmp.ne.s32.totalorder %s182, %s196
      %p198 = scmp.eq.s32.totalorder %s35, 0
      %p199 = por %p197, %p198
      %s201 = sadd.s32 %s200, 1
      %p204 = scmp.eq.s32.totalorder %s29, 7
      %p205 = scmp.ne.s32.totalorder %s200, %s202
      %p206 = scmp.eq.s32.totalorder %s29, 0
      %p207 = por %p205, %p206
      %p208 = scmp.ne.s32.totalorder %s200, %s202
      %p209 = scmp.eq.s32.totalorder %s34, 7
      %p210 = por %p208, %p209
      %p211 = scmp.ne.s32.totalorder %s202, %s203
      %p212 = scmp.eq.s32.totalorder %s34, 0
      %p213 = por %p211, %p212
      %p214 = scmp.ne.s32.totalorder %s202, %s203
      %p215 = scmp.eq.s32.totalorder %s35, 7
      %p216 = por %p214, %p215
      %p218 = scmp.ne.s32.totalorder %s203, %s217
      %p219 = scmp.eq.s32.totalorder %s35, 0
      %p220 = por %p218, %p219
      %s222 = sadd.s32 %s221, 1
      %p225 = scmp.eq.s32.totalorder %s29, 7
      %p226 = scmp.ne.s32.totalorder %s221, %s223
      %p227 = scmp.eq.s32.totalorder %s29, 0
      %p228 = por %p226, %p227
      %p229 = scmp.ne.s32.totalorder %s221, %s223
      %p230 = scmp.eq.s32.totalorder %s34, 7
      %p231 = por %p229, %p230
      %p232 = scmp.ne.s32.totalorder %s223, %s224
      %p233 = scmp.eq.s32.totalorder %s34, 0
      %p234 = por %p232, %p233
      %p235 = scmp.ne.s32.totalorder %s223, %s224
      %p236 = scmp.eq.s32.totalorder %s35, 7
      %p237 = por %p235, %p236
      %p239 = scmp.ne.s32.totalorder %s224, %s238
      %p240 = scmp.eq.s32.totalorder %s35, 0
      %p241 = por %p239, %p240
      %s243 = sadd.s32 %s242, 1
      %p246 = scmp.eq.s32.totalorder %s29, 7
      %p247 = scmp.ne.s32.totalorder %s242, %s244
      %p248 = scmp.eq.s32.totalorder %s29, 0
      %p249 = por %p247, %p248
      %p250 = scmp.ne.s32.totalorder %s242, %s244
      %p251 = scmp.eq.s32.totalorder %s34, 7
      %p252 = por %p250, %p251
      %p253 = scmp.ne.s32.totalorder %s244, %s245
      %p254 = scmp.eq.s32.totalorder %s34, 0
      %p255 = por %p253, %p254
      %p256 = scmp.ne.s32.totalorder %s244, %s245
      %p257 = scmp.eq.s32.totalorder %s35, 7
      %p258 = por %p256, %p257
      %p260 = scmp.ne.s32.totalorder %s245, %s259
      %p261 = scmp.eq.s32.totalorder %s35, 0
      %p262 = por %p260, %p261
      %s264 = sadd.s32 %s263, 1
      %p267 = scmp.eq.s32.totalorder %s29, 7
      %p268 = scmp.ne.s32.totalorder %s263, %s265
      %p269 = scmp.eq.s32.totalorder %s29, 0
      %p270 = por %p268, %p269
      %p271 = scmp.ne.s32.totalorder %s263, %s265
      %p272 = scmp.eq.s32.totalorder %s34, 7
      %p273 = por %p271, %p272
      %p274 = scmp.ne.s32.totalorder %s265, %s266
      %p275 = scmp.eq.s32.totalorder %s34, 0
      %p276 = por %p274, %p275
      %p277 = scmp.ne.s32.totalorder %s265, %s266
      %p278 = scmp.eq.s32.totalorder %s35, 7
      %p279 = por %p277, %p278
      %p281 = scmp.ne.s32.totalorder %s266, %s280
      %p282 = scmp.eq.s32.totalorder %s35, 0
      %p283 = por %p281, %p282
      %s285 = sadd.s32 %s284, 1
      %p288 = scmp.eq.s32.totalorder %s29, 7
      %p289 = scmp.ne.s32.totalorder %s284, %s286
      %p290 = scmp.eq.s32.totalorder %s29, 0
      %p291 = por %p289, %p290
      %p292 = scmp.ne.s32.totalorder %s284, %s286
      %p293 = scmp.eq.s32.totalorder %s34, 7
      %p294 = por %p292, %p293
      %p295 = scmp.ne.s32.totalorder %s286, %s287
      %p296 = scmp.eq.s32.totalorder %s34, 0
      %p297 = por %p295, %p296
      %p298 = scmp.ne.s32.totalorder %s286, %s287
      %p299 = scmp.eq.s32.totalorder %s35, 7
      %p300 = por %p298, %p299
      %p302 = scmp.ne.s32.totalorder %s287, %s301
      %p303 = scmp.eq.s32.totalorder %s35, 0
      %p304 = por %p302, %p303
      %s306 = sadd.s32 %s305, 1
      %p309 = scmp.eq.s32.totalorder %s29, 7
      %p310 = scmp.ne.s32.totalorder %s305, %s307
      %p311 = scmp.eq.s32.totalorder %s29, 0
      %p312 = por %p310, %p311
      %p313 = scmp.ne.s32.totalorder %s305, %s307
      %p314 = scmp.eq.s32.totalorder %s34, 7
      %p315 = por %p313, %p314
      %p316 = scmp.ne.s32.totalorder %s307, %s308
      %p317 = scmp.eq.s32.totalorder %s34, 0
      %p318 = por %p316, %p317
      %p319 = scmp.ne.s32.totalorder %s307, %s308
      %p320 = scmp.eq.s32.totalorder %s35, 7
      %p321 = por %p319, %p320
      %p323 = scmp.ne.s32.totalorder %s308, %s322
      %p324 = scmp.eq.s32.totalorder %s35, 0
      %p325 = por %p323, %p324
      %s326 = ssub.s32 %s36, %s55
      %s327 = ssub.s32 %s37, %s51
      %s328 = sor.u32 %s326, %s327
      %p329 = scmp.eq.s32.totalorder %s328, 0
      %s331 = sadd.s32 %s330, 1
      %s332 = scalar_select %p329, %s330, %s331
      %p335 = pneg %p329
      %p336 = scmp.eq.s32.totalorder %s29, 7
      %p337 = por %p335, %p336
      %p338 = scmp.ne.s32.totalorder %s330, %s333
      %p339 = scmp.eq.s32.totalorder %s29, 0
      %p340 = por %p338, %p339
      %p341 = scmp.ne.s32.totalorder %s330, %s333
      %p342 = scmp.eq.s32.totalorder %s34, 7
      %p343 = por %p341, %p342
      %p344 = scmp.ne.s32.totalorder %s333, %s334
      %p345 = scmp.eq.s32.totalorder %s34, 0
      %p346 = por %p344, %p345
      %p347 = scmp.ne.s32.totalorder %s333, %s334
      %p348 = scmp.eq.s32.totalorder %s35, 7
      %p349 = por %p347, %p348
      %p351 = scmp.ne.s32.totalorder %s334, %s350
      %p352 = scmp.eq.s32.totalorder %s35, 0
      %p353 = por %p351, %p352
      %p354 = scmp.le.s32.totalorder 1, %s29
      %p355 = scmp.lt.s32.totalorder %s29, 9
      %p356 = pnand %p354, %p355
      %p357 = pneg %p356
      // Predicated region
      $region9: #{tpu_custom_call.1} parent=5 // pred_check
        _
      $region10: #{tpu_custom_call.1} parent=5 // pred_check_branch
        %359 = sbr.rel (%p356) target = $region12
      $region11: #{tpu_custom_call.1} parent=5 // pred_region
        %s360 = ssub.s32 %s29, 1
        // Predicated region
        $region13: #{tpu_custom_call.1} parent=11 // pred_check
          %p361 = pneg %p129
        $region14: #{tpu_custom_call.1} parent=11 // pred_check_branch
          %363 = sbr.rel (%p361) target = $region16
        $region15: #{tpu_custom_call.1} parent=11 // pred_region
          _
        $region16: #{tpu_custom_call.1} parent=11 // pred_fallthru
          _
        // Predicated region
        $region17: #{tpu_custom_call.1} parent=11 // pred_check
          %p364 = pneg %p150
        $region18: #{tpu_custom_call.1} parent=11 // pred_check_branch
          %366 = sbr.rel (%p364) target = $region20
        $region19: #{tpu_custom_call.1} parent=11 // pred_region
          _
        $region20: #{tpu_custom_call.1} parent=11 // pred_fallthru
          _
        // Predicated region
        $region21: #{tpu_custom_call.1} parent=11 // pred_check
          %p367 = pneg %p171
        $region22: #{tpu_custom_call.1} parent=11 // pred_check_branch
          %369 = sbr.rel (%p367) target = $region24
        $region23: #{tpu_custom_call.1} parent=11 // pred_region
          %s371 = ssub.s32 1024, 1024
          %372 = vsyncadd [#allocation12], %s371
          %s373 = sshll.u32 [#allocation13], 4
          %s374 = int_to_ptr.vmem [resolvable:$true] %s373
          %379 = dma.hbm_to_vmem [thread:$0]  %s4, 1024, %s374, [#allocation12], 64, 64, 4
        $region24: #{tpu_custom_call.1} parent=11 // pred_fallthru
          _
        // Predicated region
        $region25: #{tpu_custom_call.1} parent=11 // pred_check
          %p380 = pneg %p192
        $region26: #{tpu_custom_call.1} parent=11 // pred_check_branch
          %382 = sbr.rel (%p380) target = $region28
        $region27: #{tpu_custom_call.1} parent=11 // pred_region
          %s384 = ssub.s32 1024, 1024
          %385 = vsyncadd [#allocation15], %s384
          %s386 = sshll.u32 [#allocation14], 4
          %s387 = int_to_ptr.vmem [resolvable:$true] %s386
          %392 = dma.hbm_to_vmem [thread:$0]  %s5, 1024, %s387, [#allocation15], 64, 64, 4
        $region28: #{tpu_custom_call.1} parent=11 // pred_fallthru
          _
        // Predicated region
        $region29: #{tpu_custom_call.1} parent=11 // pred_check
          %p393 = pneg %p213
        $region30: #{tpu_custom_call.1} parent=11 // pred_check_branch
          %395 = sbr.rel (%p393) target = $region32
        $region31: #{tpu_custom_call.1} parent=11 // pred_region
          %s397 = ssub.s32 1024, 1024
          %398 = vsyncadd [#allocation15], %s397
          %s399 = sshll.u32 [#allocation16], 4
          %s400 = int_to_ptr.vmem [resolvable:$true] %s399
          %405 = dma.hbm_to_vmem [thread:$0]  %s6, 1024, %s400, [#allocation15], 64, 64, 4
        $region32: #{tpu_custom_call.1} parent=11 // pred_fallthru
          _
        // Predicated region
        $region33: #{tpu_custom_call.1} parent=11 // pred_check
          %p406 = pneg %p234
        $region34: #{tpu_custom_call.1} parent=11 // pred_check_branch
          %408 = sbr.rel (%p406) target = $region36
        $region35: #{tpu_custom_call.1} parent=11 // pred_region
          _
        $region36: #{tpu_custom_call.1} parent=11 // pred_fallthru
          _
        // Predicated region
        $region37: #{tpu_custom_call.1} parent=11 // pred_check
          %p409 = pneg %p255
        $region38: #{tpu_custom_call.1} parent=11 // pred_check_branch
          %411 = sbr.rel (%p409) target = $region40
        $region39: #{tpu_custom_call.1} parent=11 // pred_region
          _
        $region40: #{tpu_custom_call.1} parent=11 // pred_fallthru
          _
        // Predicated region
        $region41: #{tpu_custom_call.1} parent=11 // pred_check
          %p412 = pneg %p276
        $region42: #{tpu_custom_call.1} parent=11 // pred_check_branch
          %414 = sbr.rel (%p412) target = $region44
        $region43: #{tpu_custom_call.1} parent=11 // pred_region
          _
        $region44: #{tpu_custom_call.1} parent=11 // pred_fallthru
          _
        // Predicated region
        $region45: #{tpu_custom_call.1} parent=11 // pred_check
          %p415 = pneg %p297
        $region46: #{tpu_custom_call.1} parent=11 // pred_check_branch
          %417 = sbr.rel (%p415) target = $region48
        $region47: #{tpu_custom_call.1} parent=11 // pred_region
          %s419 = ssub.s32 1024, 1024
          %420 = vsyncadd [#allocation18], %s419
          %s421 = sshll.u32 [#allocation17], 4
          %s422 = int_to_ptr.vmem [resolvable:$true] %s421
          %427 = dma.hbm_to_vmem [thread:$0]  %s10, 1024, %s422, [#allocation18], 64, 64, 4
        $region48: #{tpu_custom_call.1} parent=11 // pred_fallthru
          _
        // Predicated region
        $region49: #{tpu_custom_call.1} parent=11 // pred_check
          %p428 = pneg %p318
        $region50: #{tpu_custom_call.1} parent=11 // pred_check_branch
          %430 = sbr.rel (%p428) target = $region52
        $region51: #{tpu_custom_call.1} parent=11 // pred_region
          _
        $region52: #{tpu_custom_call.1} parent=11 // pred_fallthru
          _
      $region12: #{tpu_custom_call.1} parent=5 // pred_fallthru
        _
      %p431 = scmp.lt.s32.totalorder %s29, 8
      // Predicated region
      $region53: #{tpu_custom_call.1} parent=5 // pred_check
        %p432 = pneg %p431
      $region54: #{tpu_custom_call.1} parent=5 // pred_check_branch
        %434 = sbr.rel (%p432) target = $region56
      $region55: #{tpu_custom_call.1} parent=5 // pred_region
        // Predicated region
        $region57: #{tpu_custom_call.1} parent=55 // pred_check
          %p435 = pneg %p70
        $region58: #{tpu_custom_call.1} parent=55 // pred_check_branch
          %437 = sbr.rel (%p435) target = $region60
        $region59: #{tpu_custom_call.1} parent=55 // pred_region
          %s438 = sand.u32 %s60, 1
          %s439 = scalar_lea.sflag [#allocation9], %s438
          %s440 = sand.u32 %s60, 1
          %s441 = smul.addr %s440, 64
          %s442 = scalar_lea.vmem [#allocation8], %s441
          %s443 = smul.u32 8, %s37
          %s445 = ssub.s32 1024, 1024
          %446 = vsyncadd %s439, %s445
          %s447 = smul.addr %s36, 16
          %s448 = sadd.s32 %s443, %s447
          %s449 = smul.addr %s448, 128
          %s450 = scalar_lea.hbm %s0, %s449
          %s451 = sshll.u32 %s442, 4
          %s452 = int_to_ptr.vmem [resolvable:$true] %s451
          %457 = dma.hbm_to_vmem [thread:$0]  %s450, 1024, %s452, %s439, 128, 128, 8
        $region60: #{tpu_custom_call.1} parent=55 // pred_fallthru
          _
        // Predicated region
        $region61: #{tpu_custom_call.1} parent=55 // pred_check
          %p458 = pneg %p102
        $region62: #{tpu_custom_call.1} parent=55 // pred_check_branch
          %460 = sbr.rel (%p458) target = $region64
        $region63: #{tpu_custom_call.1} parent=55 // pred_region
          %s461 = sand.u32 %s29, 1
          %s462 = scalar_lea.sflag [#allocation12], %s461
          %s463 = sand.u32 %s92, 1
          %s464 = smul.addr %s463, 64
          %s465 = scalar_lea.vmem [#allocation11], %s464
          %p466 = scmp.eq.s32.totalorder %s37, 0
          %s467 = scalar_select %p466, %s38, 0
          %s468 = smul.u32 8, %s467
          %s470 = ssub.s32 1024, 1024
          %471 = vsyncadd %s462, %s470
          %s472 = smul.addr %s36, 16
          %s473 = sadd.s32 %s468, %s472
          %s474 = smul.addr %s473, 128
          %s475 = scalar_lea.hbm %s1, %s474
          %s476 = sshll.u32 %s465, 4
          %s477 = int_to_ptr.vmem [resolvable:$true] %s476
          %482 = dma.hbm_to_vmem [thread:$0]  %s475, 1024, %s477, %s462, 128, 128, 8
        $region64: #{tpu_custom_call.1} parent=55 // pred_fallthru
          _
      $region56: #{tpu_custom_call.1} parent=5 // pred_fallthru
        _
      %p483 = scmp.le.s32.totalorder 1, %s29
      %p484 = scmp.lt.s32.totalorder %s29, 9
      %p485 = pnand %p483, %p484
      %p486 = pneg %p485
      // Predicated region
      $region65: #{tpu_custom_call.1} parent=5 // pred_check
        _
      $region66: #{tpu_custom_call.1} parent=5 // pred_check_branch
        %488 = sbr.rel (%p485) target = $region68
      $region67: #{tpu_custom_call.1} parent=5 // pred_region
        %s489 = ssub.s32 %s29, 1
        %s490 = sand.u32 %s63, 1
        %s491 = scalar_lea.sflag [#allocation9], %s490
        %s492 = sand.u32 %s63, 1
        %s493 = smul.addr %s492, 64
        %s494 = scalar_lea.vmem [#allocation8], %s493
        // Predicated region
        $region69: #{tpu_custom_call.1} parent=67 // pred_check
          %p495 = pneg %p76
        $region70: #{tpu_custom_call.1} parent=67 // pred_check_branch
          %497 = sbr.rel (%p495) target = $region72
        $region71: #{tpu_custom_call.1} parent=67 // pred_region
          %498 = dma.done %s491, 1024
        $region72: #{tpu_custom_call.1} parent=67 // pred_fallthru
          _
        %s499 = sand.u32 %s34, 1
        %s500 = scalar_lea.sflag [#allocation12], %s499
        %s501 = sand.u32 %s95, 1
        %s502 = smul.addr %s501, 64
        %s503 = scalar_lea.vmem [#allocation11], %s502
        // Predicated region
        $region73: #{tpu_custom_call.1} parent=67 // pred_check
          %p504 = pneg %p108
        $region74: #{tpu_custom_call.1} parent=67 // pred_check_branch
          %506 = sbr.rel (%p504) target = $region76
        $region75: #{tpu_custom_call.1} parent=67 // pred_region
          %507 = dma.done %s500, 1024
        $region76: #{tpu_custom_call.1} parent=67 // pred_fallthru
          _
        // Predicated region
        $region77: #{tpu_custom_call.1} parent=67 // pred_check
          %p508 = pneg %p171
        $region78: #{tpu_custom_call.1} parent=67 // pred_check_branch
          %510 = sbr.rel (%p508) target = $region80
        $region79: #{tpu_custom_call.1} parent=67 // pred_region
          %511 = dma.done [#allocation12], 1024
        $region80: #{tpu_custom_call.1} parent=67 // pred_fallthru
          _
        // Predicated region
        $region81: #{tpu_custom_call.1} parent=67 // pred_check
          %p512 = pneg %p192
        $region82: #{tpu_custom_call.1} parent=67 // pred_check_branch
          %514 = sbr.rel (%p512) target = $region84
        $region83: #{tpu_custom_call.1} parent=67 // pred_region
          %515 = dma.done [#allocation15], 1024
        $region84: #{tpu_custom_call.1} parent=67 // pred_fallthru
          _
        // Predicated region
        $region85: #{tpu_custom_call.1} parent=67 // pred_check
          %p516 = pneg %p213
        $region86: #{tpu_custom_call.1} parent=67 // pred_check_branch
          %518 = sbr.rel (%p516) target = $region88
        $region87: #{tpu_custom_call.1} parent=67 // pred_region
          %519 = dma.done [#allocation15], 1024
        $region88: #{tpu_custom_call.1} parent=67 // pred_fallthru
          _
        // Predicated region
        $region89: #{tpu_custom_call.1} parent=67 // pred_check
          %p520 = pneg %p297
        $region90: #{tpu_custom_call.1} parent=67 // pred_check_branch
          %522 = sbr.rel (%p520) target = $region92
        $region91: #{tpu_custom_call.1} parent=67 // pred_region
          %523 = dma.done [#allocation18], 1024
        $region92: #{tpu_custom_call.1} parent=67 // pred_fallthru
          _
        %s524 = sand.u32 %s63, 1
        %s525 = scalar_lea.sflag [#allocation9], %s524
        %s526 = sand.u32 %s63, 1
        %s527 = smul.addr %s526, 64
        %s528 = scalar_lea.vmem [#allocation8], %s527
        %p529 = pneg %p76
        %p530 = pneg %p73
        %s531 = sand.u32 %s34, 1
        %s532 = scalar_lea.sflag [#allocation12], %s531
        %s533 = sand.u32 %s95, 1
        %s534 = smul.addr %s533, 64
        %s535 = scalar_lea.vmem [#allocation11], %s534
        %p536 = pneg %p108
        %p537 = pneg %p105
        %p538 = pneg %p129
        %p539 = pneg %p126
        %p540 = pneg %p150
        %p541 = pneg %p147
        %p542 = pneg %p171
        %p543 = pneg %p168
        %p544 = pneg %p192
        %p545 = pneg %p189
        %p546 = pneg %p213
        %p547 = pneg %p210
        %p548 = pneg %p234
        %p549 = pneg %p231
        %p550 = pneg %p255
        %p551 = pneg %p252
        %p552 = pneg %p276
        %p553 = pneg %p273
        %p554 = pneg %p297
        %p555 = pneg %p294
        %p556 = pneg %p318
        %p557 = pneg %p315
        %p558 = pneg %p346
        %p559 = pneg %p343
        %s560 = sand.u32 %s333, 1
        %s561 = scalar_lea.sflag [#allocation10], %s560
        %s562 = sand.u32 %s333, 1
        %s563 = smul.addr %s562, 64
        %s564 = scalar_lea.vmem [#allocation19], %s563
        %s565 = smul.u32 8, %s40
        %p566 = scmp.eq.s32.totalorder %s40, 0
        %s567 = scalar_select %p566, %s41, 0
        %s568 = smul.u32 8, %s567
        %s569 = smul.u32 8, %s40
        %v571 = vld [vmem:[%s2] sm:$0x1]
        %v572 = vld [vmem:[%s3] sm:$0x1]
        %s573 = smul.u32 %s41, 64
        %p574 = scmp.eq.s32.totalorder %s40, 0
        // Predicated region
        $region93: #{tpu_custom_call.1} parent=67 // pred_check
          %p575 = pneg %p574
        $region94: #{tpu_custom_call.1} parent=67 // pred_check_branch
          %577 = sbr.rel (%p575) target = $region96
        $region95: #{tpu_custom_call.1} parent=67 // pred_region
          %v578 = vld [vmem:[%s503] sm:$0xff]
          %v579 = vld [vmem:[%s503 + $0x8] sm:$0xff]
          %v580 = vld [vmem:[%s503 + $0x10] sm:$0xff]
          %v581 = vld [vmem:[%s503 + $0x18] sm:$0xff]
          %v582 = vld [vmem:[%s503 + $0x20] sm:$0xff]
          %v583 = vld [vmem:[%s503 + $0x28] sm:$0xff]
          %v584 = vld [vmem:[%s503 + $0x30] sm:$0xff]
          %v585 = vld [vmem:[%s503 + $0x38] sm:$0xff]
          %586 = vadd.xlane.f32.xlu0 %v578
          %v587 = vpop.xlane.xlu0 %586
          %588 = vadd.xlane.f32.xlu0 %v579
          %v589 = vpop.xlane.xlu0 %588
          %590 = vadd.xlane.f32.xlu0 %v580
          %v591 = vpop.xlane.xlu0 %590
          %592 = vadd.xlane.f32.xlu0 %v581
          %v593 = vpop.xlane.xlu0 %592
          %594 = vadd.xlane.f32.xlu0 %v582
          %v595 = vpop.xlane.xlu0 %594
          %596 = vadd.xlane.f32.xlu0 %v583
          %v597 = vpop.xlane.xlu0 %596
          %598 = vadd.xlane.f32.xlu0 %v584
          %v599 = vpop.xlane.xlu0 %598
          %600 = vadd.xlane.f32.xlu0 %v585
          %v601 = vpop.xlane.xlu0 %600
          %v602 = vrcp.pop 128.0
          %v603 = vmul.f32 %v587, %v602
          %v604 = vmul.f32 %v589, %v602
          %v605 = vmul.f32 %v591, %v602
          %v606 = vmul.f32 %v593, %v602
          %v607 = vmul.f32 %v595, %v602
          %v608 = vmul.f32 %v597, %v602
          %v609 = vmul.f32 %v599, %v602
          %v610 = vmul.f32 %v601, %v602
          %v611 = vsub.f32 %v578, %v603
          %v612 = vsub.f32 %v579, %v604
          %v613 = vsub.f32 %v580, %v605
          %v614 = vsub.f32 %v581, %v606
          %v615 = vsub.f32 %v582, %v607
          %v616 = vsub.f32 %v583, %v608
          %v617 = vsub.f32 %v584, %v609
          %v618 = vsub.f32 %v585, %v610
          %v619 = vmul.f32 %v611, %v611
          %v620 = vmul.f32 %v612, %v612
          %v621 = vmul.f32 %v613, %v613
          %v622 = vmul.f32 %v614, %v614
          %v623 = vmul.f32 %v615, %v615
          %v624 = vmul.f32 %v616, %v616
          %v625 = vmul.f32 %v617, %v617
          %v626 = vmul.f32 %v618, %v618
          %627 = vadd.xlane.f32.xlu0 %v619
          %v628 = vpop.xlane.xlu0 %627
          %629 = vadd.xlane.f32.xlu0 %v620
          %v630 = vpop.xlane.xlu0 %629
          %631 = vadd.xlane.f32.xlu0 %v621
          %v632 = vpop.xlane.xlu0 %631
          %633 = vadd.xlane.f32.xlu0 %v622
          %v634 = vpop.xlane.xlu0 %633
          %635 = vadd.xlane.f32.xlu0 %v623
          %v636 = vpop.xlane.xlu0 %635
          %637 = vadd.xlane.f32.xlu0 %v624
          %v638 = vpop.xlane.xlu0 %637
          %639 = vadd.xlane.f32.xlu0 %v625
          %v640 = vpop.xlane.xlu0 %639
          %641 = vadd.xlane.f32.xlu0 %v626
          %v642 = vpop.xlane.xlu0 %641
          %v643 = vmul.f32 %v628, %v602
          %v644 = vmul.f32 %v630, %v602
          %v645 = vmul.f32 %v632, %v602
          %v646 = vmul.f32 %v634, %v602
          %v647 = vmul.f32 %v636, %v602
          %v648 = vmul.f32 %v638, %v602
          %v649 = vmul.f32 %v640, %v602
          %v650 = vmul.f32 %v642, %v602
          %v651 = vadd.f32 %v643, 1e-05
          %v652 = vadd.f32 %v644, 1e-05
          %v653 = vadd.f32 %v645, 1e-05
          %v654 = vadd.f32 %v646, 1e-05
          %v655 = vadd.f32 %v647, 1e-05
          %v656 = vadd.f32 %v648, 1e-05
          %v657 = vadd.f32 %v649, 1e-05
          %v658 = vadd.f32 %v650, 1e-05
          %v659 = vrsqrt.pop %v651
          %v660 = vrsqrt.pop %v652
          %v661 = vrsqrt.pop %v653
          %v662 = vrsqrt.pop %v654
          %v663 = vrsqrt.pop %v655
          %v664 = vrsqrt.pop %v656
          %v665 = vrsqrt.pop %v657
          %v666 = vrsqrt.pop %v658
          %v667 = vmul.f32 %v611, %v659
          %v668 = vmul.f32 %v612, %v660
          %v669 = vmul.f32 %v613, %v661
          %v670 = vmul.f32 %v614, %v662
          %v671 = vmul.f32 %v615, %v663
          %v672 = vmul.f32 %v616, %v664
          %v673 = vmul.f32 %v617, %v665
          %v674 = vmul.f32 %v618, %v666
          %v676 = vlaneseq
          %v677 = vshrl.u32 %v676, 7
          %v678 = vsub.s32 0, %v677
          %v679 = vrot.slane %v571, %v678
          %v681 = vmul.f32 %v667, %v679
          %v682 = vmul.f32 %v668, %v679
          %v683 = vmul.f32 %v669, %v679
          %v684 = vmul.f32 %v670, %v679
          %v685 = vmul.f32 %v671, %v679
          %v686 = vmul.f32 %v672, %v679
          %v687 = vmul.f32 %v673, %v679
          %v688 = vmul.f32 %v674, %v679
          %v690 = vlaneseq
          %v691 = vshrl.u32 %v690, 7
          %v692 = vsub.s32 0, %v691
          %v693 = vrot.slane %v572, %v692
          %v695 = vadd.f32 %v681, %v693
          %v696 = vadd.f32 %v682, %v693
          %v697 = vadd.f32 %v683, %v693
          %v698 = vadd.f32 %v684, %v693
          %v699 = vadd.f32 %v685, %v693
          %v700 = vadd.f32 %v686, %v693
          %v701 = vadd.f32 %v687, %v693
          %v702 = vadd.f32 %v688, %v693
          %v703 = vpack.c.bf16 %v696, %v695
          %v704 = vpack.c.bf16 %v698, %v697
          %v705 = vpack.c.bf16 %v700, %v699
          %v706 = vpack.c.bf16 %v702, %v701
          %v707 = vld [vmem:[#allocation14] sm:$0xf]
          %v708 = vld [vmem:[#allocation14 + $0x4] sm:$0xf]
          %v709 = vld [vmem:[#allocation14 + $0x8] sm:$0xf]
          %v710 = vld [vmem:[#allocation14 + $0xc] sm:$0xf]
          %v711 = vld [vmem:[#allocation14 + $0x10] sm:$0xf]
          %v712 = vld [vmem:[#allocation14 + $0x14] sm:$0xf]
          %v713 = vld [vmem:[#allocation14 + $0x18] sm:$0xf]
          %v714 = vld [vmem:[#allocation14 + $0x1c] sm:$0xf]
          %v715 = vld [vmem:[#allocation14 + $0x20] sm:$0xf]
          %v716 = vld [vmem:[#allocation14 + $0x24] sm:$0xf]
          %v717 = vld [vmem:[#allocation14 + $0x28] sm:$0xf]
          %v718 = vld [vmem:[#allocation14 + $0x2c] sm:$0xf]
          %v719 = vld [vmem:[#allocation14 + $0x30] sm:$0xf]
          %v720 = vld [vmem:[#allocation14 + $0x34] sm:$0xf]
          %v721 = vld [vmem:[#allocation14 + $0x38] sm:$0xf]
          %v722 = vld [vmem:[#allocation14 + $0x3c] sm:$0xf]
          %v723 = vld [vmem:[%s8] sm:$0x1]
          %v725 = vlaneseq
          %v726 = vshrl.u32 %v725, 7
          %v727 = vsub.s32 0, %v726
          %v728 = vrot.slane %v723, %v727
          %v746 = vunpack.c.l.b16 %v707
          %v747 = vunpack.c.l.b16 %v708
          %v748 = vunpack.c.l.b16 %v709
          %v749 = vunpack.c.l.b16 %v710
          %v750 = vunpack.c.l.b16 %v711
          %v751 = vunpack.c.l.b16 %v712
          %v752 = vunpack.c.l.b16 %v713
          %v753 = vunpack.c.l.b16 %v714
          %v754 = vunpack.c.l.b16 %v715
          %v755 = vunpack.c.l.b16 %v716
          %v756 = vunpack.c.l.b16 %v717
          %v757 = vunpack.c.l.b16 %v718
          %v758 = vunpack.c.l.b16 %v719
          %v759 = vunpack.c.l.b16 %v720
          %v760 = vunpack.c.l.b16 %v721
          %v761 = vunpack.c.l.b16 %v722
          %v762 = vpack.c.b16 %v747, %v746
          %v763 = vpack.c.b16 %v749, %v748
          %v764 = vpack.c.b16 %v751, %v750
          %v765 = vpack.c.b16 %v753, %v752
          %v766 = vpack.c.b16 %v755, %v754
          %v767 = vpack.c.b16 %v757, %v756
          %v768 = vpack.c.b16 %v759, %v758
          %v769 = vpack.c.b16 %v761, %v760
          %778 = vmatprep.subr.bf16.mxu0 0
          %779 = vmatpush1.bf16.msra.mxu0 %v762
          %780 = vmatprep.subr.bf16.mxu0 0
          %781 = vmatpush1.bf16.msra.mxu0 %v763
          %782 = vmatprep.subr.bf16.mxu0 0
          %783 = vmatpush1.bf16.msra.mxu0 %v764
          %784 = vmatprep.subr.bf16.mxu0 0
          %785 = vmatpush1.bf16.msra.mxu0 %v765
          %786 = vmatprep.subr.bf16.mxu0 0
          %787 = vmatpush1.bf16.msra.mxu0 %v766
          %788 = vmatprep.subr.bf16.mxu0 0
          %789 = vmatpush1.bf16.msra.mxu0 %v767
          %790 = vmatprep.subr.bf16.mxu0 0
          %791 = vmatpush1.bf16.msra.mxu0 %v768
          %792 = vmatprep.subr.bf16.mxu0 0
          %793 = vmatpush1.bf16.msra.mxu0 %v769
          %794 = vmatprep.subr.bf16.mxu0 0
          %795 = vmatpush1.bf16.msra.mxu0 0
          %796 = vmatprep.subr.bf16.mxu0 0
          %797 = vmatpush1.bf16.msra.mxu0 0
          %798 = vmatprep.subr.bf16.mxu0 0
          %799 = vmatpush1.bf16.msra.mxu0 0
          %800 = vmatprep.subr.bf16.mxu0 0
          %801 = vmatpush1.bf16.msra.mxu0 0
          %802 = vmatprep.subr.bf16.mxu0 0
          %803 = vmatpush1.bf16.msra.mxu0 0
          %804 = vmatprep.subr.bf16.mxu0 0
          %805 = vmatpush1.bf16.msra.mxu0 0
          %806 = vmatprep.subr.bf16.mxu0 0
          %807 = vmatpush1.bf16.msra.mxu0 0
          %808 = vmatprep.subr.bf16.mxu0 0
          %809 = vmatpush1.bf16.msra.mxu0 0
          %810 = vmatprep.mubr.bf16.mxu0 0
          %811 = vmatmul.mubr.bf16.gmra.mrb[0].mxu0 %v703
          %v812 = vpop.f32.mrb[0].mxu0
          %v813 = vadd.f32 %v728, %v812
          %v814 = vpop.f32.mrb[0].mxu0
          %v815 = vpop.f32.mrb[0].mxu0
          %v816 = vadd.f32 %v728, %v815
          %v817 = vpop.f32.mrb[0].mxu0
          %818 = vmatprep.mubr.bf16.mxu0 0
          %819 = vmatmul.mubr.bf16.gmra.mrb[0].mxu0 %v704
          %v820 = vpop.f32.mrb[0].mxu0
          %v821 = vadd.f32 %v728, %v820
          %v822 = vpop.f32.mrb[0].mxu0
          %v823 = vpop.f32.mrb[0].mxu0
          %v824 = vadd.f32 %v728, %v823
          %v825 = vpop.f32.mrb[0].mxu0
          %826 = vmatprep.mubr.bf16.mxu0 0
          %827 = vmatmul.mubr.bf16.gmra.mrb[0].mxu0 %v705
          %v828 = vpop.f32.mrb[0].mxu0
          %v829 = vadd.f32 %v728, %v828
          %v830 = vpop.f32.mrb[0].mxu0
          %v831 = vpop.f32.mrb[0].mxu0
          %v832 = vadd.f32 %v728, %v831
          %v833 = vpop.f32.mrb[0].mxu0
          %834 = vmatprep.mubr.bf16.mxu0 0
          %835 = vmatmul.mubr.bf16.gmra.mrb[0].mxu0 %v706
          %v836 = vpop.f32.mrb[0].mxu0
          %v837 = vadd.f32 %v728, %v836
          %v838 = vpop.f32.mrb[0].mxu0
          %v839 = vpop.f32.mrb[0].mxu0
          %v840 = vadd.f32 %v728, %v839
          %v841 = vpop.f32.mrb[0].mxu0
          %842 = vdwg.mxu0
          %v843 = vld [vmem:[#allocation16] sm:$0xf]
          %v844 = vld [vmem:[#allocation16 + $0x4] sm:$0xf]
          %v845 = vld [vmem:[#allocation16 + $0x8] sm:$0xf]
          %v846 = vld [vmem:[#allocation16 + $0xc] sm:$0xf]
          %v847 = vld [vmem:[#allocation16 + $0x10] sm:$0xf]
          %v848 = vld [vmem:[#allocation16 + $0x14] sm:$0xf]
          %v849 = vld [vmem:[#allocation16 + $0x18] sm:$0xf]
          %v850 = vld [vmem:[#allocation16 + $0x1c] sm:$0xf]
          %v851 = vld [vmem:[#allocation16 + $0x20] sm:$0xf]
          %v852 = vld [vmem:[#allocation16 + $0x24] sm:$0xf]
          %v853 = vld [vmem:[#allocation16 + $0x28] sm:$0xf]
          %v854 = vld [vmem:[#allocation16 + $0x2c] sm:$0xf]
          %v855 = vld [vmem:[#allocation16 + $0x30] sm:$0xf]
          %v856 = vld [vmem:[#allocation16 + $0x34] sm:$0xf]
          %v857 = vld [vmem:[#allocation16 + $0x38] sm:$0xf]
          %v858 = vld [vmem:[#allocation16 + $0x3c] sm:$0xf]
          %v859 = vld [vmem:[%s9] sm:$0x1]
          %v861 = vlaneseq
          %v862 = vshrl.u32 %v861, 7
          %v863 = vsub.s32 0, %v862
          %v864 = vrot.slane %v859, %v863
          %v882 = vunpack.c.l.b16 %v843
          %v883 = vunpack.c.l.b16 %v844
          %v884 = vunpack.c.l.b16 %v845
          %v885 = vunpack.c.l.b16 %v846
          %v886 = vunpack.c.l.b16 %v847
          %v887 = vunpack.c.l.b16 %v848
          %v888 = vunpack.c.l.b16 %v849
          %v889 = vunpack.c.l.b16 %v850
          %v890 = vunpack.c.l.b16 %v851
          %v891 = vunpack.c.l.b16 %v852
          %v892 = vunpack.c.l.b16 %v853
          %v893 = vunpack.c.l.b16 %v854
          %v894 = vunpack.c.l.b16 %v855
          %v895 = vunpack.c.l.b16 %v856
          %v896 = vunpack.c.l.b16 %v857
          %v897 = vunpack.c.l.b16 %v858
          %v898 = vpack.c.b16 %v883, %v882
          %v899 = vpack.c.b16 %v885, %v884
          %v900 = vpack.c.b16 %v887, %v886
          %v901 = vpack.c.b16 %v889, %v888
          %v902 = vpack.c.b16 %v891, %v890
          %v903 = vpack.c.b16 %v893, %v892
          %v904 = vpack.c.b16 %v895, %v894
          %v905 = vpack.c.b16 %v897, %v896
          %914 = vmatprep.subr.bf16.mxu0 0
          %915 = vmatpush1.bf16.msra.mxu0 %v898
          %916 = vmatprep.subr.bf16.mxu0 0
          %917 = vmatpush1.bf16.msra.mxu0 %v899
          %918 = vmatprep.subr.bf16.mxu0 0
          %919 = vmatpush1.bf16.msra.mxu0 %v900
          %920 = vmatprep.subr.bf16.mxu0 0
          %921 = vmatpush1.bf16.msra.mxu0 %v901
          %922 = vmatprep.subr.bf16.mxu0 0
          %923 = vmatpush1.bf16.msra.mxu0 %v902
          %924 = vmatprep.subr.bf16.mxu0 0
          %925 = vmatpush1.bf16.msra.mxu0 %v903
          %926 = vmatprep.subr.bf16.mxu0 0
          %927 = vmatpush1.bf16.msra.mxu0 %v904
          %928 = vmatprep.subr.bf16.mxu0 0
          %929 = vmatpush1.bf16.msra.mxu0 %v905
          %930 = vmatprep.subr.bf16.mxu0 0
          %931 = vmatpush1.bf16.msra.mxu0 0
          %932 = vmatprep.subr.bf16.mxu0 0
          %933 = vmatpush1.bf16.msra.mxu0 0
          %934 = vmatprep.subr.bf16.mxu0 0
          %935 = vmatpush1.bf16.msra.mxu0 0
          %936 = vmatprep.subr.bf16.mxu0 0
          %937 = vmatpush1.bf16.msra.mxu0 0
          %938 = vmatprep.subr.bf16.mxu0 0
          %939 = vmatpush1.bf16.msra.mxu0 0
          %940 = vmatprep.subr.bf16.mxu0 0
          %941 = vmatpush1.bf16.msra.mxu0 0
          %942 = vmatprep.subr.bf16.mxu0 0
          %943 = vmatpush1.bf16.msra.mxu0 0
          %944 = vmatprep.subr.bf16.mxu0 0
          %945 = vmatpush1.bf16.msra.mxu0 0
          %946 = vmatprep.mubr.bf16.mxu0 0
          %947 = vmatmul.mubr.bf16.gmra.mrb[0].mxu0 %v703
          %v948 = vpop.f32.mrb[0].mxu0
          %v949 = vadd.f32 %v864, %v948
          %v950 = vpop.f32.mrb[0].mxu0
          %v951 = vpop.f32.mrb[0].mxu0
          %v952 = vadd.f32 %v864, %v951
          %v953 = vpop.f32.mrb[0].mxu0
          %954 = vmatprep.mubr.bf16.mxu0 0
          %955 = vmatmul.mubr.bf16.gmra.mrb[0].mxu0 %v704
          %v956 = vpop.f32.mrb[0].mxu0
          %v957 = vadd.f32 %v864, %v956
          %v958 = vpop.f32.mrb[0].mxu0
          %v959 = vpop.f32.mrb[0].mxu0
          %v960 = vadd.f32 %v864, %v959
          %v961 = vpop.f32.mrb[0].mxu0
          %962 = vmatprep.mubr.bf16.mxu0 0
          %963 = vmatmul.mubr.bf16.gmra.mrb[0].mxu0 %v705
          %v964 = vpop.f32.mrb[0].mxu0
          %v965 = vadd.f32 %v864, %v964
          %v966 = vpop.f32.mrb[0].mxu0
          %v967 = vpop.f32.mrb[0].mxu0
          %v968 = vadd.f32 %v864, %v967
          %v969 = vpop.f32.mrb[0].mxu0
          %970 = vmatprep.mubr.bf16.mxu0 0
          %971 = vmatmul.mubr.bf16.gmra.mrb[0].mxu0 %v706
          %v972 = vpop.f32.mrb[0].mxu0
          %v973 = vadd.f32 %v864, %v972
          %v974 = vpop.f32.mrb[0].mxu0
          %v975 = vpop.f32.mrb[0].mxu0
          %v976 = vadd.f32 %v864, %v975
          %v977 = vpop.f32.mrb[0].mxu0
          %978 = vdwg.mxu0
          %987 = vrot.lane.b32.xlu0 %v813, 96
          %v988 = vpop.permute.xlu0 %987
          %989 = vrot.lane.b32.xlu0 %v816, 96
          %v990 = vpop.permute.xlu0 %989
          %991 = vrot.lane.b32.xlu0 %v821, 96
          %v992 = vpop.permute.xlu0 %991
          %993 = vrot.lane.b32.xlu0 %v824, 96
          %v994 = vpop.permute.xlu0 %993
          %995 = vrot.lane.b32.xlu0 %v829, 96
          %v996 = vpop.permute.xlu0 %995
          %997 = vrot.lane.b32.xlu0 %v832, 96
          %v998 = vpop.permute.xlu0 %997
          %999 = vrot.lane.b32.xlu0 %v837, 96
          %v1000 = vpop.permute.xlu0 %999
          %1001 = vrot.lane.b32.xlu0 %v840, 96
          %v1002 = vpop.permute.xlu0 %1001
          %1011 = vrot.lane.b32.xlu0 %v813, 64
          %v1012 = vpop.permute.xlu0 %1011
          %1013 = vrot.lane.b32.xlu0 %v816, 64
          %v1014 = vpop.permute.xlu0 %1013
          %1015 = vrot.lane.b32.xlu0 %v821, 64
          %v1016 = vpop.permute.xlu0 %1015
          %1017 = vrot.lane.b32.xlu0 %v824, 64
          %v1018 = vpop.permute.xlu0 %1017
          %1019 = vrot.lane.b32.xlu0 %v829, 64
          %v1020 = vpop.permute.xlu0 %1019
          %1021 = vrot.lane.b32.xlu0 %v832, 64
          %v1022 = vpop.permute.xlu0 %1021
          %1023 = vrot.lane.b32.xlu0 %v837, 64
          %v1024 = vpop.permute.xlu0 %1023
          %1025 = vrot.lane.b32.xlu0 %v840, 64
          %v1026 = vpop.permute.xlu0 %1025
          %1035 = vrot.lane.b32.xlu0 %v813, 32
          %v1036 = vpop.permute.xlu0 %1035
          %1037 = vrot.lane.b32.xlu0 %v816, 32
          %v1038 = vpop.permute.xlu0 %1037
          %1039 = vrot.lane.b32.xlu0 %v821, 32
          %v1040 = vpop.permute.xlu0 %1039
          %1041 = vrot.lane.b32.xlu0 %v824, 32
          %v1042 = vpop.permute.xlu0 %1041
          %1043 = vrot.lane.b32.xlu0 %v829, 32
          %v1044 = vpop.permute.xlu0 %1043
          %1045 = vrot.lane.b32.xlu0 %v832, 32
          %v1046 = vpop.permute.xlu0 %1045
          %1047 = vrot.lane.b32.xlu0 %v837, 32
          %v1048 = vpop.permute.xlu0 %1047
          %1049 = vrot.lane.b32.xlu0 %v840, 32
          %v1050 = vpop.permute.xlu0 %1049
          %v1059 = vcombine.low %v813, %v1012
          %v1060 = vcombine.high %v813, %v1012
          %v1062 = vunpack.c.l.s4 1983009808
          %v1063 = vunpack.c.0.s8 %v1062
          %v1064 = vlaneseq
          %v1065 = vshrl.u32 %v1064, 7
          %v1066 = vsub.s32 %v1063, %v1065
          %v1067 = vrot.slane %v1059, %v1066
          %v1069 = vunpack.c.l.s4 1983009808
          %v1070 = vunpack.c.0.s8 %v1069
          %v1071 = vlaneseq
          %v1072 = vshrl.u32 %v1071, 7
          %v1073 = vsub.s32 %v1070, %v1072
          %v1074 = vrot.slane %v1060, %v1073
          %v1075 = vcombine.low %v988, %v1036
          %v1076 = vcombine.high %v988, %v1036
          %v1078 = vunpack.c.l.s4 1983009808
          %v1079 = vunpack.c.0.s8 %v1078
          %v1080 = vlaneseq
          %v1081 = vshrl.u32 %v1080, 7
          %v1082 = vsub.s32 %v1079, %v1081
          %v1083 = vrot.slane %v1075, %v1082
          %v1085 = vunpack.c.l.s4 1983009808
          %v1086 = vunpack.c.0.s8 %v1085
          %v1087 = vlaneseq
          %v1088 = vshrl.u32 %v1087, 7
          %v1089 = vsub.s32 %v1086, %v1088
          %v1090 = vrot.slane %v1076, %v1089
          %v1091 = vcombine.low %v1067, %v1083
          %v1092 = vcombine.high %v1067, %v1083
          %v1094 = vunpack.c.l.s4 1934713408
          %v1095 = vunpack.c.0.s8 %v1094
          %v1096 = vlaneseq
          %v1097 = vshrl.u32 %v1096, 7
          %v1098 = vsub.s32 %v1095, %v1097
          %v1099 = vrot.slane %v1091, %v1098
          %v1101 = vunpack.c.l.s4 1934713408
          %v1102 = vunpack.c.0.s8 %v1101
          %v1103 = vlaneseq
          %v1104 = vshrl.u32 %v1103, 7
          %v1105 = vsub.s32 %v1102, %v1104
          %v1106 = vrot.slane %v1092, %v1105
          %v1107 = vcombine.low %v1074, %v1090
          %v1108 = vcombine.high %v1074, %v1090
          %v1110 = vunpack.c.l.s4 1934713408
          %v1111 = vunpack.c.0.s8 %v1110
          %v1112 = vlaneseq
          %v1113 = vshrl.u32 %v1112, 7
          %v1114 = vsub.s32 %v1111, %v1113
          %v1115 = vrot.slane %v1107, %v1114
          %v1117 = vunpack.c.l.s4 1934713408
          %v1118 = vunpack.c.0.s8 %v1117
          %v1119 = vlaneseq
          %v1120 = vshrl.u32 %v1119, 7
          %v1121 = vsub.s32 %v1118, %v1120
          %v1122 = vrot.slane %v1108, %v1121
          %v1123 = vcombine.high %v1099, 0.0
          %v1124 = vcombine.high %v1106, 0.0
          %v1125 = vcombine.high %v1115, 0.0
          %v1126 = vcombine.high %v1122, 0.0
          %v1127 = vcombine.low %v816, %v1014
          %v1128 = vcombine.high %v816, %v1014
          %v1130 = vunpack.c.l.s4 1983009808
          %v1131 = vunpack.c.0.s8 %v1130
          %v1132 = vlaneseq
          %v1133 = vshrl.u32 %v1132, 7
          %v1134 = vsub.s32 %v1131, %v1133
          %v1135 = vrot.slane %v1127, %v1134
          %v1137 = vunpack.c.l.s4 1983009808
          %v1138 = vunpack.c.0.s8 %v1137
          %v1139 = vlaneseq
          %v1140 = vshrl.u32 %v1139, 7
          %v1141 = vsub.s32 %v1138, %v1140
          %v1142 = vrot.slane %v1128, %v1141
          %v1143 = vcombine.low %v990, %v1038
          %v1144 = vcombine.high %v990, %v1038
          %v1146 = vunpack.c.l.s4 1983009808
          %v1147 = vunpack.c.0.s8 %v1146
          %v1148 = vlaneseq
          %v1149 = vshrl.u32 %v1148, 7
          %v1150 = vsub.s32 %v1147, %v1149
          %v1151 = vrot.slane %v1143, %v1150
          %v1153 = vunpack.c.l.s4 1983009808
          %v1154 = vunpack.c.0.s8 %v1153
          %v1155 = vlaneseq
          %v1156 = vshrl.u32 %v1155, 7
          %v1157 = vsub.s32 %v1154, %v1156
          %v1158 = vrot.slane %v1144, %v1157
          %v1159 = vcombine.low %v1135, %v1151
          %v1160 = vcombine.high %v1135, %v1151
          %v1162 = vunpack.c.l.s4 1934713408
          %v1163 = vunpack.c.0.s8 %v1162
          %v1164 = vlaneseq
          %v1165 = vshrl.u32 %v1164, 7
          %v1166 = vsub.s32 %v1163, %v1165
          %v1167 = vrot.slane %v1159, %v1166
          %v1169 = vunpack.c.l.s4 1934713408
          %v1170 = vunpack.c.0.s8 %v1169
          %v1171 = vlaneseq
          %v1172 = vshrl.u32 %v1171, 7
          %v1173 = vsub.s32 %v1170, %v1172
          %v1174 = vrot.slane %v1160, %v1173
          %v1175 = vcombine.low %v1142, %v1158
          %v1176 = vcombine.high %v1142, %v1158
          %v1178 = vunpack.c.l.s4 1934713408
          %v1179 = vunpack.c.0.s8 %v1178
          %v1180 = vlaneseq
          %v1181 = vshrl.u32 %v1180, 7
          %v1182 = vsub.s32 %v1179, %v1181
          %v1183 = vrot.slane %v1175, %v1182
          %v1185 = vunpack.c.l.s4 1934713408
          %v1186 = vunpack.c.0.s8 %v1185
          %v1187 = vlaneseq
          %v1188 = vshrl.u32 %v1187, 7
          %v1189 = vsub.s32 %v1186, %v1188
          %v1190 = vrot.slane %v1176, %v1189
          %v1191 = vcombine.high %v1167, 0.0
          %v1192 = vcombine.high %v1174, 0.0
          %v1193 = vcombine.high %v1183, 0.0
          %v1194 = vcombine.high %v1190, 0.0
          %v1195 = vcombine.low %v821, %v1016
          %v1196 = vcombine.high %v821, %v1016
          %v1198 = vunpack.c.l.s4 1983009808
          %v1199 = vunpack.c.0.s8 %v1198
          %v1200 = vlaneseq
          %v1201 = vshrl.u32 %v1200, 7
          %v1202 = vsub.s32 %v1199, %v1201
          %v1203 = vrot.slane %v1195, %v1202
          %v1205 = vunpack.c.l.s4 1983009808
          %v1206 = vunpack.c.0.s8 %v1205
          %v1207 = vlaneseq
          %v1208 = vshrl.u32 %v1207, 7
          %v1209 = vsub.s32 %v1206, %v1208
          %v1210 = vrot.slane %v1196, %v1209
          %v1211 = vcombine.low %v992, %v1040
          %v1212 = vcombine.high %v992, %v1040
          %v1214 = vunpack.c.l.s4 1983009808
          %v1215 = vunpack.c.0.s8 %v1214
          %v1216 = vlaneseq
          %v1217 = vshrl.u32 %v1216, 7
          %v1218 = vsub.s32 %v1215, %v1217
          %v1219 = vrot.slane %v1211, %v1218
          %v1221 = vunpack.c.l.s4 1983009808
          %v1222 = vunpack.c.0.s8 %v1221
          %v1223 = vlaneseq
          %v1224 = vshrl.u32 %v1223, 7
          %v1225 = vsub.s32 %v1222, %v1224
          %v1226 = vrot.slane %v1212, %v1225
          %v1227 = vcombine.low %v1203, %v1219
          %v1228 = vcombine.high %v1203, %v1219
          %v1230 = vunpack.c.l.s4 1934713408
          %v1231 = vunpack.c.0.s8 %v1230
          %v1232 = vlaneseq
          %v1233 = vshrl.u32 %v1232, 7
          %v1234 = vsub.s32 %v1231, %v1233
          %v1235 = vrot.slane %v1227, %v1234
          %v1237 = vunpack.c.l.s4 1934713408
          %v1238 = vunpack.c.0.s8 %v1237
          %v1239 = vlaneseq
          %v1240 = vshrl.u32 %v1239, 7
          %v1241 = vsub.s32 %v1238, %v1240
          %v1242 = vrot.slane %v1228, %v1241
          %v1243 = vcombine.low %v1210, %v1226
          %v1244 = vcombine.high %v1210, %v1226
          %v1246 = vunpack.c.l.s4 1934713408
          %v1247 = vunpack.c.0.s8 %v1246
          %v1248 = vlaneseq
          %v1249 = vshrl.u32 %v1248, 7
          %v1250 = vsub.s32 %v1247, %v1249
          %v1251 = vrot.slane %v1243, %v1250
          %v1253 = vunpack.c.l.s4 1934713408
          %v1254 = vunpack.c.0.s8 %v1253
          %v1255 = vlaneseq
          %v1256 = vshrl.u32 %v1255, 7
          %v1257 = vsub.s32 %v1254, %v1256
          %v1258 = vrot.slane %v1244, %v1257
          %v1259 = vcombine.high %v1235, 0.0
          %v1260 = vcombine.high %v1242, 0.0
          %v1261 = vcombine.high %v1251, 0.0
          %v1262 = vcombine.high %v1258, 0.0
          %v1263 = vcombine.low %v824, %v1018
          %v1264 = vcombine.high %v824, %v1018
          %v1266 = vunpack.c.l.s4 1983009808
          %v1267 = vunpack.c.0.s8 %v1266
          %v1268 = vlaneseq
          %v1269 = vshrl.u32 %v1268, 7
          %v1270 = vsub.s32 %v1267, %v1269
          %v1271 = vrot.slane %v1263, %v1270
          %v1273 = vunpack.c.l.s4 1983009808
          %v1274 = vunpack.c.0.s8 %v1273
          %v1275 = vlaneseq
          %v1276 = vshrl.u32 %v1275, 7
          %v1277 = vsub.s32 %v1274, %v1276
          %v1278 = vrot.slane %v1264, %v1277
          %v1279 = vcombine.low %v994, %v1042
          %v1280 = vcombine.high %v994, %v1042
          %v1282 = vunpack.c.l.s4 1983009808
          %v1283 = vunpack.c.0.s8 %v1282
          %v1284 = vlaneseq
          %v1285 = vshrl.u32 %v1284, 7
          %v1286 = vsub.s32 %v1283, %v1285
          %v1287 = vrot.slane %v1279, %v1286
          %v1289 = vunpack.c.l.s4 1983009808
          %v1290 = vunpack.c.0.s8 %v1289
          %v1291 = vlaneseq
          %v1292 = vshrl.u32 %v1291, 7
          %v1293 = vsub.s32 %v1290, %v1292
          %v1294 = vrot.slane %v1280, %v1293
          %v1295 = vcombine.low %v1271, %v1287
          %v1296 = vcombine.high %v1271, %v1287
          %v1298 = vunpack.c.l.s4 1934713408
          %v1299 = vunpack.c.0.s8 %v1298
          %v1300 = vlaneseq
          %v1301 = vshrl.u32 %v1300, 7
          %v1302 = vsub.s32 %v1299, %v1301
          %v1303 = vrot.slane %v1295, %v1302
          %v1305 = vunpack.c.l.s4 1934713408
          %v1306 = vunpack.c.0.s8 %v1305
          %v1307 = vlaneseq
          %v1308 = vshrl.u32 %v1307, 7
          %v1309 = vsub.s32 %v1306, %v1308
          %v1310 = vrot.slane %v1296, %v1309
          %v1311 = vcombine.low %v1278, %v1294
          %v1312 = vcombine.high %v1278, %v1294
          %v1314 = vunpack.c.l.s4 1934713408
          %v1315 = vunpack.c.0.s8 %v1314
          %v1316 = vlaneseq
          %v1317 = vshrl.u32 %v1316, 7
          %v1318 = vsub.s32 %v1315, %v1317
          %v1319 = vrot.slane %v1311, %v1318
          %v1321 = vunpack.c.l.s4 1934713408
          %v1322 = vunpack.c.0.s8 %v1321
          %v1323 = vlaneseq
          %v1324 = vshrl.u32 %v1323, 7
          %v1325 = vsub.s32 %v1322, %v1324
          %v1326 = vrot.slane %v1312, %v1325
          %v1327 = vcombine.high %v1303, 0.0
          %v1328 = vcombine.high %v1310, 0.0
          %v1329 = vcombine.high %v1319, 0.0
          %v1330 = vcombine.high %v1326, 0.0
          %v1331 = vcombine.low %v829, %v1020
          %v1332 = vcombine.high %v829, %v1020
          %v1334 = vunpack.c.l.s4 1983009808
          %v1335 = vunpack.c.0.s8 %v1334
          %v1336 = vlaneseq
          %v1337 = vshrl.u32 %v1336, 7
          %v1338 = vsub.s32 %v1335, %v1337
          %v1339 = vrot.slane %v1331, %v1338
          %v1341 = vunpack.c.l.s4 1983009808
          %v1342 = vunpack.c.0.s8 %v1341
          %v1343 = vlaneseq
          %v1344 = vshrl.u32 %v1343, 7
          %v1345 = vsub.s32 %v1342, %v1344
          %v1346 = vrot.slane %v1332, %v1345
          %v1347 = vcombine.low %v996, %v1044
          %v1348 = vcombine.high %v996, %v1044
          %v1350 = vunpack.c.l.s4 1983009808
          %v1351 = vunpack.c.0.s8 %v1350
          %v1352 = vlaneseq
          %v1353 = vshrl.u32 %v1352, 7
          %v1354 = vsub.s32 %v1351, %v1353
          %v1355 = vrot.slane %v1347, %v1354
          %v1357 = vunpack.c.l.s4 1983009808
          %v1358 = vunpack.c.0.s8 %v1357
          %v1359 = vlaneseq
          %v1360 = vshrl.u32 %v1359, 7
          %v1361 = vsub.s32 %v1358, %v1360
          %v1362 = vrot.slane %v1348, %v1361
          %v1363 = vcombine.low %v1339, %v1355
          %v1364 = vcombine.high %v1339, %v1355
          %v1366 = vunpack.c.l.s4 1934713408
          %v1367 = vunpack.c.0.s8 %v1366
          %v1368 = vlaneseq
          %v1369 = vshrl.u32 %v1368, 7
          %v1370 = vsub.s32 %v1367, %v1369
          %v1371 = vrot.slane %v1363, %v1370
          %v1373 = vunpack.c.l.s4 1934713408
          %v1374 = vunpack.c.0.s8 %v1373
          %v1375 = vlaneseq
          %v1376 = vshrl.u32 %v1375, 7
          %v1377 = vsub.s32 %v1374, %v1376
          %v1378 = vrot.slane %v1364, %v1377
          %v1379 = vcombine.low %v1346, %v1362
          %v1380 = vcombine.high %v1346, %v1362
          %v1382 = vunpack.c.l.s4 1934713408
          %v1383 = vunpack.c.0.s8 %v1382
          %v1384 = vlaneseq
          %v1385 = vshrl.u32 %v1384, 7
          %v1386 = vsub.s32 %v1383, %v1385
          %v1387 = vrot.slane %v1379, %v1386
          %v1389 = vunpack.c.l.s4 1934713408
          %v1390 = vunpack.c.0.s8 %v1389
          %v1391 = vlaneseq
          %v1392 = vshrl.u32 %v1391, 7
          %v1393 = vsub.s32 %v1390, %v1392
          %v1394 = vrot.slane %v1380, %v1393
          %v1395 = vcombine.high %v1371, 0.0
          %v1396 = vcombine.high %v1378, 0.0
          %v1397 = vcombine.high %v1387, 0.0
          %v1398 = vcombine.high %v1394, 0.0
          %v1399 = vcombine.low %v832, %v1022
          %v1400 = vcombine.high %v832, %v1022
          %v1402 = vunpack.c.l.s4 1983009808
          %v1403 = vunpack.c.0.s8 %v1402
          %v1404 = vlaneseq
          %v1405 = vshrl.u32 %v1404, 7
          %v1406 = vsub.s32 %v1403, %v1405
          %v1407 = vrot.slane %v1399, %v1406
          %v1409 = vunpack.c.l.s4 1983009808
          %v1410 = vunpack.c.0.s8 %v1409
          %v1411 = vlaneseq
          %v1412 = vshrl.u32 %v1411, 7
          %v1413 = vsub.s32 %v1410, %v1412
          %v1414 = vrot.slane %v1400, %v1413
          %v1415 = vcombine.low %v998, %v1046
          %v1416 = vcombine.high %v998, %v1046
          %v1418 = vunpack.c.l.s4 1983009808
          %v1419 = vunpack.c.0.s8 %v1418
          %v1420 = vlaneseq
          %v1421 = vshrl.u32 %v1420, 7
          %v1422 = vsub.s32 %v1419, %v1421
          %v1423 = vrot.slane %v1415, %v1422
          %v1425 = vunpack.c.l.s4 1983009808
          %v1426 = vunpack.c.0.s8 %v1425
          %v1427 = vlaneseq
          %v1428 = vshrl.u32 %v1427, 7
          %v1429 = vsub.s32 %v1426, %v1428
          %v1430 = vrot.slane %v1416, %v1429
          %v1431 = vcombine.low %v1407, %v1423
          %v1432 = vcombine.high %v1407, %v1423
          %v1434 = vunpack.c.l.s4 1934713408
          %v1435 = vunpack.c.0.s8 %v1434
          %v1436 = vlaneseq
          %v1437 = vshrl.u32 %v1436, 7
          %v1438 = vsub.s32 %v1435, %v1437
          %v1439 = vrot.slane %v1431, %v1438
          %v1441 = vunpack.c.l.s4 1934713408
          %v1442 = vunpack.c.0.s8 %v1441
          %v1443 = vlaneseq
          %v1444 = vshrl.u32 %v1443, 7
          %v1445 = vsub.s32 %v1442, %v1444
          %v1446 = vrot.slane %v1432, %v1445
          %v1447 = vcombine.low %v1414, %v1430
          %v1448 = vcombine.high %v1414, %v1430
          %v1450 = vunpack.c.l.s4 1934713408
          %v1451 = vunpack.c.0.s8 %v1450
          %v1452 = vlaneseq
          %v1453 = vshrl.u32 %v1452, 7
          %v1454 = vsub.s32 %v1451, %v1453
          %v1455 = vrot.slane %v1447, %v1454
          %v1457 = vunpack.c.l.s4 1934713408
          %v1458 = vunpack.c.0.s8 %v1457
          %v1459 = vlaneseq
          %v1460 = vshrl.u32 %v1459, 7
          %v1461 = vsub.s32 %v1458, %v1460
          %v1462 = vrot.slane %v1448, %v1461
          %v1463 = vcombine.high %v1439, 0.0
          %v1464 = vcombine.high %v1446, 0.0
          %v1465 = vcombine.high %v1455, 0.0
          %v1466 = vcombine.high %v1462, 0.0
          %v1467 = vcombine.low %v837, %v1024
          %v1468 = vcombine.high %v837, %v1024
          %v1470 = vunpack.c.l.s4 1983009808
          %v1471 = vunpack.c.0.s8 %v1470
          %v1472 = vlaneseq
          %v1473 = vshrl.u32 %v1472, 7
          %v1474 = vsub.s32 %v1471, %v1473
          %v1475 = vrot.slane %v1467, %v1474
          %v1477 = vunpack.c.l.s4 1983009808
          %v1478 = vunpack.c.0.s8 %v1477
          %v1479 = vlaneseq
          %v1480 = vshrl.u32 %v1479, 7
          %v1481 = vsub.s32 %v1478, %v1480
          %v1482 = vrot.slane %v1468, %v1481
          %v1483 = vcombine.low %v1000, %v1048
          %v1484 = vcombine.high %v1000, %v1048
          %v1486 = vunpack.c.l.s4 1983009808
          %v1487 = vunpack.c.0.s8 %v1486
          %v1488 = vlaneseq
          %v1489 = vshrl.u32 %v1488, 7
          %v1490 = vsub.s32 %v1487, %v1489
          %v1491 = vrot.slane %v1483, %v1490
          %v1493 = vunpack.c.l.s4 1983009808
          %v1494 = vunpack.c.0.s8 %v1493
          %v1495 = vlaneseq
          %v1496 = vshrl.u32 %v1495, 7
          %v1497 = vsub.s32 %v1494, %v1496
          %v1498 = vrot.slane %v1484, %v1497
          %v1499 = vcombine.low %v1475, %v1491
          %v1500 = vcombine.high %v1475, %v1491
          %v1502 = vunpack.c.l.s4 1934713408
          %v1503 = vunpack.c.0.s8 %v1502
          %v1504 = vlaneseq
          %v1505 = vshrl.u32 %v1504, 7
          %v1506 = vsub.s32 %v1503, %v1505
          %v1507 = vrot.slane %v1499, %v1506
          %v1509 = vunpack.c.l.s4 1934713408
          %v1510 = vunpack.c.0.s8 %v1509
          %v1511 = vlaneseq
          %v1512 = vshrl.u32 %v1511, 7
          %v1513 = vsub.s32 %v1510, %v1512
          %v1514 = vrot.slane %v1500, %v1513
          %v1515 = vcombine.low %v1482, %v1498
          %v1516 = vcombine.high %v1482, %v1498
          %v1518 = vunpack.c.l.s4 1934713408
          %v1519 = vunpack.c.0.s8 %v1518
          %v1520 = vlaneseq
          %v1521 = vshrl.u32 %v1520, 7
          %v1522 = vsub.s32 %v1519, %v1521
          %v1523 = vrot.slane %v1515, %v1522
          %v1525 = vunpack.c.l.s4 1934713408
          %v1526 = vunpack.c.0.s8 %v1525
          %v1527 = vlaneseq
          %v1528 = vshrl.u32 %v1527, 7
          %v1529 = vsub.s32 %v1526, %v1528
          %v1530 = vrot.slane %v1516, %v1529
          %v1531 = vcombine.high %v1507, 0.0
          %v1532 = vcombine.high %v1514, 0.0
          %v1533 = vcombine.high %v1523, 0.0
          %v1534 = vcombine.high %v1530, 0.0
          %v1535 = vcombine.low %v840, %v1026
          %v1536 = vcombine.high %v840, %v1026
          %v1538 = vunpack.c.l.s4 1983009808
          %v1539 = vunpack.c.0.s8 %v1538
          %v1540 = vlaneseq
          %v1541 = vshrl.u32 %v1540, 7
          %v1542 = vsub.s32 %v1539, %v1541
          %v1543 = vrot.slane %v1535, %v1542
          %v1545 = vunpack.c.l.s4 1983009808
          %v1546 = vunpack.c.0.s8 %v1545
          %v1547 = vlaneseq
          %v1548 = vshrl.u32 %v1547, 7
          %v1549 = vsub.s32 %v1546, %v1548
          %v1550 = vrot.slane %v1536, %v1549
          %v1551 = vcombine.low %v1002, %v1050
          %v1552 = vcombine.high %v1002, %v1050
          %v1554 = vunpack.c.l.s4 1983009808
          %v1555 = vunpack.c.0.s8 %v1554
          %v1556 = vlaneseq
          %v1557 = vshrl.u32 %v1556, 7
          %v1558 = vsub.s32 %v1555, %v1557
          %v1559 = vrot.slane %v1551, %v1558
          %v1561 = vunpack.c.l.s4 1983009808
          %v1562 = vunpack.c.0.s8 %v1561
          %v1563 = vlaneseq
          %v1564 = vshrl.u32 %v1563, 7
          %v1565 = vsub.s32 %v1562, %v1564
          %v1566 = vrot.slane %v1552, %v1565
          %v1567 = vcombine.low %v1543, %v1559
          %v1568 = vcombine.high %v1543, %v1559
          %v1570 = vunpack.c.l.s4 1934713408
          %v1571 = vunpack.c.0.s8 %v1570
          %v1572 = vlaneseq
          %v1573 = vshrl.u32 %v1572, 7
          %v1574 = vsub.s32 %v1571, %v1573
          %v1575 = vrot.slane %v1567, %v1574
          %v1577 = vunpack.c.l.s4 1934713408
          %v1578 = vunpack.c.0.s8 %v1577
          %v1579 = vlaneseq
          %v1580 = vshrl.u32 %v1579, 7
          %v1581 = vsub.s32 %v1578, %v1580
          %v1582 = vrot.slane %v1568, %v1581
          %v1583 = vcombine.low %v1550, %v1566
          %v1584 = vcombine.high %v1550, %v1566
          %v1586 = vunpack.c.l.s4 1934713408
          %v1587 = vunpack.c.0.s8 %v1586
          %v1588 = vlaneseq
          %v1589 = vshrl.u32 %v1588, 7
          %v1590 = vsub.s32 %v1587, %v1589
          %v1591 = vrot.slane %v1583, %v1590
          %v1593 = vunpack.c.l.s4 1934713408
          %v1594 = vunpack.c.0.s8 %v1593
          %v1595 = vlaneseq
          %v1596 = vshrl.u32 %v1595, 7
          %v1597 = vsub.s32 %v1594, %v1596
          %v1598 = vrot.slane %v1584, %v1597
          %v1599 = vcombine.high %v1575, 0.0
          %v1600 = vcombine.high %v1582, 0.0
          %v1601 = vcombine.high %v1591, 0.0
          %v1602 = vcombine.high %v1598, 0.0
          %v1603 = vcombine.low %v1099, %v1106
          %v1605 = vunpack.c.l.s4 1983009808
          %v1606 = vunpack.c.0.s8 %v1605
          %v1607 = vlaneseq
          %v1608 = vshrl.u32 %v1607, 7
          %v1609 = vsub.s32 %v1606, %v1608
          %v1610 = vrot.slane %v1603, %v1609
          %v1611 = vcombine.low %v1123, %v1124
          %v1613 = vunpack.c.l.s4 1983009808
          %v1614 = vunpack.c.0.s8 %v1613
          %v1615 = vlaneseq
          %v1616 = vshrl.u32 %v1615, 7
          %v1617 = vsub.s32 %v1614, %v1616
          %v1618 = vrot.slane %v1611, %v1617
          %v1619 = vcombine.low %v1115, %v1122
          %v1621 = vunpack.c.l.s4 1983009808
          %v1622 = vunpack.c.0.s8 %v1621
          %v1623 = vlaneseq
          %v1624 = vshrl.u32 %v1623, 7
          %v1625 = vsub.s32 %v1622, %v1624
          %v1626 = vrot.slane %v1619, %v1625
          %v1627 = vcombine.low %v1125, %v1126
          %v1629 = vunpack.c.l.s4 1983009808
          %v1630 = vunpack.c.0.s8 %v1629
          %v1631 = vlaneseq
          %v1632 = vshrl.u32 %v1631, 7
          %v1633 = vsub.s32 %v1630, %v1632
          %v1634 = vrot.slane %v1627, %v1633
          %v1635 = vcombine.low %v1610, %v1618
          %v1636 = vcombine.high %v1610, %v1618
          %v1638 = vunpack.c.l.s4 1934713408
          %v1639 = vunpack.c.0.s8 %v1638
          %v1640 = vlaneseq
          %v1641 = vshrl.u32 %v1640, 7
          %v1642 = vsub.s32 %v1639, %v1641
          %v1643 = vrot.slane %v1635, %v1642
          %v1645 = vunpack.c.l.s4 1934713408
          %v1646 = vunpack.c.0.s8 %v1645
          %v1647 = vlaneseq
          %v1648 = vshrl.u32 %v1647, 7
          %v1649 = vsub.s32 %v1646, %v1648
          %v1650 = vrot.slane %v1636, %v1649
          %v1651 = vcombine.low %v1626, %v1634
          %v1652 = vcombine.high %v1626, %v1634
          %v1654 = vunpack.c.l.s4 1934713408
          %v1655 = vunpack.c.0.s8 %v1654
          %v1656 = vlaneseq
          %v1657 = vshrl.u32 %v1656, 7
          %v1658 = vsub.s32 %v1655, %v1657
          %v1659 = vrot.slane %v1651, %v1658
          %v1661 = vunpack.c.l.s4 1934713408
          %v1662 = vunpack.c.0.s8 %v1661
          %v1663 = vlaneseq
          %v1664 = vshrl.u32 %v1663, 7
          %v1665 = vsub.s32 %v1662, %v1664
          %v1666 = vrot.slane %v1652, %v1665
          %v1667 = vcombine.low %v1643, %v1659
          %v1668 = vcombine.high %v1643, %v1659
          %v1669 = vcombine.low %v1650, %v1666
          %v1670 = vcombine.high %v1650, %v1666
          %v1671 = vcombine.low %v1167, %v1174
          %v1673 = vunpack.c.l.s4 1983009808
          %v1674 = vunpack.c.0.s8 %v1673
          %v1675 = vlaneseq
          %v1676 = vshrl.u32 %v1675, 7
          %v1677 = vsub.s32 %v1674, %v1676
          %v1678 = vrot.slane %v1671, %v1677
          %v1679 = vcombine.low %v1191, %v1192
          %v1681 = vunpack.c.l.s4 1983009808
          %v1682 = vunpack.c.0.s8 %v1681
          %v1683 = vlaneseq
          %v1684 = vshrl.u32 %v1683, 7
          %v1685 = vsub.s32 %v1682, %v1684
          %v1686 = vrot.slane %v1679, %v1685
          %v1687 = vcombine.low %v1183, %v1190
          %v1689 = vunpack.c.l.s4 1983009808
          %v1690 = vunpack.c.0.s8 %v1689
          %v1691 = vlaneseq
          %v1692 = vshrl.u32 %v1691, 7
          %v1693 = vsub.s32 %v1690, %v1692
          %v1694 = vrot.slane %v1687, %v1693
          %v1695 = vcombine.low %v1193, %v1194
          %v1697 = vunpack.c.l.s4 1983009808
          %v1698 = vunpack.c.0.s8 %v1697
          %v1699 = vlaneseq
          %v1700 = vshrl.u32 %v1699, 7
          %v1701 = vsub.s32 %v1698, %v1700
          %v1702 = vrot.slane %v1695, %v1701
          %v1703 = vcombine.low %v1678, %v1686
          %v1704 = vcombine.high %v1678, %v1686
          %v1706 = vunpack.c.l.s4 1934713408
          %v1707 = vunpack.c.0.s8 %v1706
          %v1708 = vlaneseq
          %v1709 = vshrl.u32 %v1708, 7
          %v1710 = vsub.s32 %v1707, %v1709
          %v1711 = vrot.slane %v1703, %v1710
          %v1713 = vunpack.c.l.s4 1934713408
          %v1714 = vunpack.c.0.s8 %v1713
          %v1715 = vlaneseq
          %v1716 = vshrl.u32 %v1715, 7
          %v1717 = vsub.s32 %v1714, %v1716
          %v1718 = vrot.slane %v1704, %v1717
          %v1719 = vcombine.low %v1694, %v1702
          %v1720 = vcombine.high %v1694, %v1702
          %v1722 = vunpack.c.l.s4 1934713408
          %v1723 = vunpack.c.0.s8 %v1722
          %v1724 = vlaneseq
          %v1725 = vshrl.u32 %v1724, 7
          %v1726 = vsub.s32 %v1723, %v1725
          %v1727 = vrot.slane %v1719, %v1726
          %v1729 = vunpack.c.l.s4 1934713408
          %v1730 = vunpack.c.0.s8 %v1729
          %v1731 = vlaneseq
          %v1732 = vshrl.u32 %v1731, 7
          %v1733 = vsub.s32 %v1730, %v1732
          %v1734 = vrot.slane %v1720, %v1733
          %v1735 = vcombine.low %v1711, %v1727
          %v1736 = vcombine.high %v1711, %v1727
          %v1737 = vcombine.low %v1718, %v1734
          %v1738 = vcombine.high %v1718, %v1734
          %v1739 = vcombine.low %v1235, %v1242
          %v1741 = vunpack.c.l.s4 1983009808
          %v1742 = vunpack.c.0.s8 %v1741
          %v1743 = vlaneseq
          %v1744 = vshrl.u32 %v1743, 7
          %v1745 = vsub.s32 %v1742, %v1744
          %v1746 = vrot.slane %v1739, %v1745
          %v1747 = vcombine.low %v1259, %v1260
          %v1749 = vunpack.c.l.s4 1983009808
          %v1750 = vunpack.c.0.s8 %v1749
          %v1751 = vlaneseq
          %v1752 = vshrl.u32 %v1751, 7
          %v1753 = vsub.s32 %v1750, %v1752
          %v1754 = vrot.slane %v1747, %v1753
          %v1755 = vcombine.low %v1251, %v1258
          %v1757 = vunpack.c.l.s4 1983009808
          %v1758 = vunpack.c.0.s8 %v1757
          %v1759 = vlaneseq
          %v1760 = vshrl.u32 %v1759, 7
          %v1761 = vsub.s32 %v1758, %v1760
          %v1762 = vrot.slane %v1755, %v1761
          %v1763 = vcombine.low %v1261, %v1262
          %v1765 = vunpack.c.l.s4 1983009808
          %v1766 = vunpack.c.0.s8 %v1765
          %v1767 = vlaneseq
          %v1768 = vshrl.u32 %v1767, 7
          %v1769 = vsub.s32 %v1766, %v1768
          %v1770 = vrot.slane %v1763, %v1769
          %v1771 = vcombine.low %v1746, %v1754
          %v1772 = vcombine.high %v1746, %v1754
          %v1774 = vunpack.c.l.s4 1934713408
          %v1775 = vunpack.c.0.s8 %v1774
          %v1776 = vlaneseq
          %v1777 = vshrl.u32 %v1776, 7
          %v1778 = vsub.s32 %v1775, %v1777
          %v1779 = vrot.slane %v1771, %v1778
          %v1781 = vunpack.c.l.s4 1934713408
          %v1782 = vunpack.c.0.s8 %v1781
          %v1783 = vlaneseq
          %v1784 = vshrl.u32 %v1783, 7
          %v1785 = vsub.s32 %v1782, %v1784
          %v1786 = vrot.slane %v1772, %v1785
          %v1787 = vcombine.low %v1762, %v1770
          %v1788 = vcombine.high %v1762, %v1770
          %v1790 = vunpack.c.l.s4 1934713408
          %v1791 = vunpack.c.0.s8 %v1790
          %v1792 = vlaneseq
          %v1793 = vshrl.u32 %v1792, 7
          %v1794 = vsub.s32 %v1791, %v1793
          %v1795 = vrot.slane %v1787, %v1794
          %v1797 = vunpack.c.l.s4 1934713408
          %v1798 = vunpack.c.0.s8 %v1797
          %v1799 = vlaneseq
          %v1800 = vshrl.u32 %v1799, 7
          %v1801 = vsub.s32 %v1798, %v1800
          %v1802 = vrot.slane %v1788, %v1801
          %v1803 = vcombine.low %v1779, %v1795
          %v1804 = vcombine.high %v1779, %v1795
          %v1805 = vcombine.low %v1786, %v1802
          %v1806 = vcombine.high %v1786, %v1802
          %v1807 = vcombine.low %v1303, %v1310
          %v1809 = vunpack.c.l.s4 1983009808
          %v1810 = vunpack.c.0.s8 %v1809
          %v1811 = vlaneseq
          %v1812 = vshrl.u32 %v1811, 7
          %v1813 = vsub.s32 %v1810, %v1812
          %v1814 = vrot.slane %v1807, %v1813
          %v1815 = vcombine.low %v1327, %v1328
          %v1817 = vunpack.c.l.s4 1983009808
          %v1818 = vunpack.c.0.s8 %v1817
          %v1819 = vlaneseq
          %v1820 = vshrl.u32 %v1819, 7
          %v1821 = vsub.s32 %v1818, %v1820
          %v1822 = vrot.slane %v1815, %v1821
          %v1823 = vcombine.low %v1319, %v1326
          %v1825 = vunpack.c.l.s4 1983009808
          %v1826 = vunpack.c.0.s8 %v1825
          %v1827 = vlaneseq
          %v1828 = vshrl.u32 %v1827, 7
          %v1829 = vsub.s32 %v1826, %v1828
          %v1830 = vrot.slane %v1823, %v1829
          %v1831 = vcombine.low %v1329, %v1330
          %v1833 = vunpack.c.l.s4 1983009808
          %v1834 = vunpack.c.0.s8 %v1833
          %v1835 = vlaneseq
          %v1836 = vshrl.u32 %v1835, 7
          %v1837 = vsub.s32 %v1834, %v1836
          %v1838 = vrot.slane %v1831, %v1837
          %v1839 = vcombine.low %v1814, %v1822
          %v1840 = vcombine.high %v1814, %v1822
          %v1842 = vunpack.c.l.s4 1934713408
          %v1843 = vunpack.c.0.s8 %v1842
          %v1844 = vlaneseq
          %v1845 = vshrl.u32 %v1844, 7
          %v1846 = vsub.s32 %v1843, %v1845
          %v1847 = vrot.slane %v1839, %v1846
          %v1849 = vunpack.c.l.s4 1934713408
          %v1850 = vunpack.c.0.s8 %v1849
          %v1851 = vlaneseq
          %v1852 = vshrl.u32 %v1851, 7
          %v1853 = vsub.s32 %v1850, %v1852
          %v1854 = vrot.slane %v1840, %v1853
          %v1855 = vcombine.low %v1830, %v1838
          %v1856 = vcombine.high %v1830, %v1838
          %v1858 = vunpack.c.l.s4 1934713408
          %v1859 = vunpack.c.0.s8 %v1858
          %v1860 = vlaneseq
          %v1861 = vshrl.u32 %v1860, 7
          %v1862 = vsub.s32 %v1859, %v1861
          %v1863 = vrot.slane %v1855, %v1862
          %v1865 = vunpack.c.l.s4 1934713408
          %v1866 = vunpack.c.0.s8 %v1865
          %v1867 = vlaneseq
          %v1868 = vshrl.u32 %v1867, 7
          %v1869 = vsub.s32 %v1866, %v1868
          %v1870 = vrot.slane %v1856, %v1869
          %v1871 = vcombine.low %v1847, %v1863
          %v1872 = vcombine.high %v1847, %v1863
          %v1873 = vcombine.low %v1854, %v1870
          %v1874 = vcombine.high %v1854, %v1870
          %v1875 = vcombine.low %v1371, %v1378
          %v1877 = vunpack.c.l.s4 1983009808
          %v1878 = vunpack.c.0.s8 %v1877
          %v1879 = vlaneseq
          %v1880 = vshrl.u32 %v1879, 7
          %v1881 = vsub.s32 %v1878, %v1880
          %v1882 = vrot.slane %v1875, %v1881
          %v1883 = vcombine.low %v1395, %v1396
          %v1885 = vunpack.c.l.s4 1983009808
          %v1886 = vunpack.c.0.s8 %v1885
          %v1887 = vlaneseq
          %v1888 = vshrl.u32 %v1887, 7
          %v1889 = vsub.s32 %v1886, %v1888
          %v1890 = vrot.slane %v1883, %v1889
          %v1891 = vcombine.low %v1387, %v1394
          %v1893 = vunpack.c.l.s4 1983009808
          %v1894 = vunpack.c.0.s8 %v1893
          %v1895 = vlaneseq
          %v1896 = vshrl.u32 %v1895, 7
          %v1897 = vsub.s32 %v1894, %v1896
          %v1898 = vrot.slane %v1891, %v1897
          %v1899 = vcombine.low %v1397, %v1398
          %v1901 = vunpack.c.l.s4 1983009808
          %v1902 = vunpack.c.0.s8 %v1901
          %v1903 = vlaneseq
          %v1904 = vshrl.u32 %v1903, 7
          %v1905 = vsub.s32 %v1902, %v1904
          %v1906 = vrot.slane %v1899, %v1905
          %v1907 = vcombine.low %v1882, %v1890
          %v1908 = vcombine.high %v1882, %v1890
          %v1910 = vunpack.c.l.s4 1934713408
          %v1911 = vunpack.c.0.s8 %v1910
          %v1912 = vlaneseq
          %v1913 = vshrl.u32 %v1912, 7
          %v1914 = vsub.s32 %v1911, %v1913
          %v1915 = vrot.slane %v1907, %v1914
          %v1917 = vunpack.c.l.s4 1934713408
          %v1918 = vunpack.c.0.s8 %v1917
          %v1919 = vlaneseq
          %v1920 = vshrl.u32 %v1919, 7
          %v1921 = vsub.s32 %v1918, %v1920
          %v1922 = vrot.slane %v1908, %v1921
          %v1923 = vcombine.low %v1898, %v1906
          %v1924 = vcombine.high %v1898, %v1906
          %v1926 = vunpack.c.l.s4 1934713408
          %v1927 = vunpack.c.0.s8 %v1926
          %v1928 = vlaneseq
          %v1929 = vshrl.u32 %v1928, 7
          %v1930 = vsub.s32 %v1927, %v1929
          %v1931 = vrot.slane %v1923, %v1930
          %v1933 = vunpack.c.l.s4 1934713408
          %v1934 = vunpack.c.0.s8 %v1933
          %v1935 = vlaneseq
          %v1936 = vshrl.u32 %v1935, 7
          %v1937 = vsub.s32 %v1934, %v1936
          %v1938 = vrot.slane %v1924, %v1937
          %v1939 = vcombine.low %v1915, %v1931
          %v1940 = vcombine.high %v1915, %v1931
          %v1941 = vcombine.low %v1922, %v1938
          %v1942 = vcombine.high %v1922, %v1938
          %v1943 = vcombine.low %v1439, %v1446
          %v1945 = vunpack.c.l.s4 1983009808
          %v1946 = vunpack.c.0.s8 %v1945
          %v1947 = vlaneseq
          %v1948 = vshrl.u32 %v1947, 7
          %v1949 = vsub.s32 %v1946, %v1948
          %v1950 = vrot.slane %v1943, %v1949
          %v1951 = vcombine.low %v1463, %v1464
          %v1953 = vunpack.c.l.s4 1983009808
          %v1954 = vunpack.c.0.s8 %v1953
          %v1955 = vlaneseq
          %v1956 = vshrl.u32 %v1955, 7
          %v1957 = vsub.s32 %v1954, %v1956
          %v1958 = vrot.slane %v1951, %v1957
          %v1959 = vcombine.low %v1455, %v1462
          %v1961 = vunpack.c.l.s4 1983009808
          %v1962 = vunpack.c.0.s8 %v1961
          %v1963 = vlaneseq
          %v1964 = vshrl.u32 %v1963, 7
          %v1965 = vsub.s32 %v1962, %v1964
          %v1966 = vrot.slane %v1959, %v1965
          %v1967 = vcombine.low %v1465, %v1466
          %v1969 = vunpack.c.l.s4 1983009808
          %v1970 = vunpack.c.0.s8 %v1969
          %v1971 = vlaneseq
          %v1972 = vshrl.u32 %v1971, 7
          %v1973 = vsub.s32 %v1970, %v1972
          %v1974 = vrot.slane %v1967, %v1973
          %v1975 = vcombine.low %v1950, %v1958
          %v1976 = vcombine.high %v1950, %v1958
          %v1978 = vunpack.c.l.s4 1934713408
          %v1979 = vunpack.c.0.s8 %v1978
          %v1980 = vlaneseq
          %v1981 = vshrl.u32 %v1980, 7
          %v1982 = vsub.s32 %v1979, %v1981
          %v1983 = vrot.slane %v1975, %v1982
          %v1985 = vunpack.c.l.s4 1934713408
          %v1986 = vunpack.c.0.s8 %v1985
          %v1987 = vlaneseq
          %v1988 = vshrl.u32 %v1987, 7
          %v1989 = vsub.s32 %v1986, %v1988
          %v1990 = vrot.slane %v1976, %v1989
          %v1991 = vcombine.low %v1966, %v1974
          %v1992 = vcombine.high %v1966, %v1974
          %v1994 = vunpack.c.l.s4 1934713408
          %v1995 = vunpack.c.0.s8 %v1994
          %v1996 = vlaneseq
          %v1997 = vshrl.u32 %v1996, 7
          %v1998 = vsub.s32 %v1995, %v1997
          %v1999 = vrot.slane %v1991, %v1998
          %v2001 = vunpack.c.l.s4 1934713408
          %v2002 = vunpack.c.0.s8 %v2001
          %v2003 = vlaneseq
          %v2004 = vshrl.u32 %v2003, 7
          %v2005 = vsub.s32 %v2002, %v2004
          %v2006 = vrot.slane %v1992, %v2005
          %v2007 = vcombine.low %v1983, %v1999
          %v2008 = vcombine.high %v1983, %v1999
          %v2009 = vcombine.low %v1990, %v2006
          %v2010 = vcombine.high %v1990, %v2006
          %v2011 = vcombine.low %v1507, %v1514
          %v2013 = vunpack.c.l.s4 1983009808
          %v2014 = vunpack.c.0.s8 %v2013
          %v2015 = vlaneseq
          %v2016 = vshrl.u32 %v2015, 7
          %v2017 = vsub.s32 %v2014, %v2016
          %v2018 = vrot.slane %v2011, %v2017
          %v2019 = vcombine.low %v1531, %v1532
          %v2021 = vunpack.c.l.s4 1983009808
          %v2022 = vunpack.c.0.s8 %v2021
          %v2023 = vlaneseq
          %v2024 = vshrl.u32 %v2023, 7
          %v2025 = vsub.s32 %v2022, %v2024
          %v2026 = vrot.slane %v2019, %v2025
          %v2027 = vcombine.low %v1523, %v1530
          %v2029 = vunpack.c.l.s4 1983009808
          %v2030 = vunpack.c.0.s8 %v2029
          %v2031 = vlaneseq
          %v2032 = vshrl.u32 %v2031, 7
          %v2033 = vsub.s32 %v2030, %v2032
          %v2034 = vrot.slane %v2027, %v2033
          %v2035 = vcombine.low %v1533, %v1534
          %v2037 = vunpack.c.l.s4 1983009808
          %v2038 = vunpack.c.0.s8 %v2037
          %v2039 = vlaneseq
          %v2040 = vshrl.u32 %v2039, 7
          %v2041 = vsub.s32 %v2038, %v2040
          %v2042 = vrot.slane %v2035, %v2041
          %v2043 = vcombine.low %v2018, %v2026
          %v2044 = vcombine.high %v2018, %v2026
          %v2046 = vunpack.c.l.s4 1934713408
          %v2047 = vunpack.c.0.s8 %v2046
          %v2048 = vlaneseq
          %v2049 = vshrl.u32 %v2048, 7
          %v2050 = vsub.s32 %v2047, %v2049
          %v2051 = vrot.slane %v2043, %v2050
          %v2053 = vunpack.c.l.s4 1934713408
          %v2054 = vunpack.c.0.s8 %v2053
          %v2055 = vlaneseq
          %v2056 = vshrl.u32 %v2055, 7
          %v2057 = vsub.s32 %v2054, %v2056
          %v2058 = vrot.slane %v2044, %v2057
          %v2059 = vcombine.low %v2034, %v2042
          %v2060 = vcombine.high %v2034, %v2042
          %v2062 = vunpack.c.l.s4 1934713408
          %v2063 = vunpack.c.0.s8 %v2062
          %v2064 = vlaneseq
          %v2065 = vshrl.u32 %v2064, 7
          %v2066 = vsub.s32 %v2063, %v2065
          %v2067 = vrot.slane %v2059, %v2066
          %v2069 = vunpack.c.l.s4 1934713408
          %v2070 = vunpack.c.0.s8 %v2069
          %v2071 = vlaneseq
          %v2072 = vshrl.u32 %v2071, 7
          %v2073 = vsub.s32 %v2070, %v2072
          %v2074 = vrot.slane %v2060, %v2073
          %v2075 = vcombine.low %v2051, %v2067
          %v2076 = vcombine.high %v2051, %v2067
          %v2077 = vcombine.low %v2058, %v2074
          %v2078 = vcombine.high %v2058, %v2074
          %v2079 = vcombine.low %v1575, %v1582
          %v2081 = vunpack.c.l.s4 1983009808
          %v2082 = vunpack.c.0.s8 %v2081
          %v2083 = vlaneseq
          %v2084 = vshrl.u32 %v2083, 7
          %v2085 = vsub.s32 %v2082, %v2084
          %v2086 = vrot.slane %v2079, %v2085
          %v2087 = vcombine.low %v1599, %v1600
          %v2089 = vunpack.c.l.s4 1983009808
          %v2090 = vunpack.c.0.s8 %v2089
          %v2091 = vlaneseq
          %v2092 = vshrl.u32 %v2091, 7
          %v2093 = vsub.s32 %v2090, %v2092
          %v2094 = vrot.slane %v2087, %v2093
          %v2095 = vcombine.low %v1591, %v1598
          %v2097 = vunpack.c.l.s4 1983009808
          %v2098 = vunpack.c.0.s8 %v2097
          %v2099 = vlaneseq
          %v2100 = vshrl.u32 %v2099, 7
          %v2101 = vsub.s32 %v2098, %v2100
          %v2102 = vrot.slane %v2095, %v2101
          %v2103 = vcombine.low %v1601, %v1602
          %v2105 = vunpack.c.l.s4 1983009808
          %v2106 = vunpack.c.0.s8 %v2105
          %v2107 = vlaneseq
          %v2108 = vshrl.u32 %v2107, 7
          %v2109 = vsub.s32 %v2106, %v2108
          %v2110 = vrot.slane %v2103, %v2109
          %v2111 = vcombine.low %v2086, %v2094
          %v2112 = vcombine.high %v2086, %v2094
          %v2114 = vunpack.c.l.s4 1934713408
          %v2115 = vunpack.c.0.s8 %v2114
          %v2116 = vlaneseq
          %v2117 = vshrl.u32 %v2116, 7
          %v2118 = vsub.s32 %v2115, %v2117
          %v2119 = vrot.slane %v2111, %v2118
          %v2121 = vunpack.c.l.s4 1934713408
          %v2122 = vunpack.c.0.s8 %v2121
          %v2123 = vlaneseq
          %v2124 = vshrl.u32 %v2123, 7
          %v2125 = vsub.s32 %v2122, %v2124
          %v2126 = vrot.slane %v2112, %v2125
          %v2127 = vcombine.low %v2102, %v2110
          %v2128 = vcombine.high %v2102, %v2110
          %v2130 = vunpack.c.l.s4 1934713408
          %v2131 = vunpack.c.0.s8 %v2130
          %v2132 = vlaneseq
          %v2133 = vshrl.u32 %v2132, 7
          %v2134 = vsub.s32 %v2131, %v2133
          %v2135 = vrot.slane %v2127, %v2134
          %v2137 = vunpack.c.l.s4 1934713408
          %v2138 = vunpack.c.0.s8 %v2137
          %v2139 = vlaneseq
          %v2140 = vshrl.u32 %v2139, 7
          %v2141 = vsub.s32 %v2138, %v2140
          %v2142 = vrot.slane %v2128, %v2141
          %v2143 = vcombine.low %v2119, %v2135
          %v2144 = vcombine.high %v2119, %v2135
          %v2145 = vcombine.low %v2126, %v2142
          %v2146 = vcombine.high %v2126, %v2142
          %2155 = vrot.lane.b32.xlu0 %v949, 96
          %v2156 = vpop.permute.xlu0 %2155
          %2157 = vrot.lane.b32.xlu0 %v952, 96
          %v2158 = vpop.permute.xlu0 %2157
          %2159 = vrot.lane.b32.xlu0 %v957, 96
          %v2160 = vpop.permute.xlu0 %2159
          %2161 = vrot.lane.b32.xlu0 %v960, 96
          %v2162 = vpop.permute.xlu0 %2161
          %2163 = vrot.lane.b32.xlu0 %v965, 96
          %v2164 = vpop.permute.xlu0 %2163
          %2165 = vrot.lane.b32.xlu0 %v968, 96
          %v2166 = vpop.permute.xlu0 %2165
          %2167 = vrot.lane.b32.xlu0 %v973, 96
          %v2168 = vpop.permute.xlu0 %2167
          %2169 = vrot.lane.b32.xlu0 %v976, 96
          %v2170 = vpop.permute.xlu0 %2169
          %2179 = vrot.lane.b32.xlu0 %v949, 64
          %v2180 = vpop.permute.xlu0 %2179
          %2181 = vrot.lane.b32.xlu0 %v952, 64
          %v2182 = vpop.permute.xlu0 %2181
          %2183 = vrot.lane.b32.xlu0 %v957, 64
          %v2184 = vpop.permute.xlu0 %2183
          %2185 = vrot.lane.b32.xlu0 %v960, 64
          %v2186 = vpop.permute.xlu0 %2185
          %2187 = vrot.lane.b32.xlu0 %v965, 64
          %v2188 = vpop.permute.xlu0 %2187
          %2189 = vrot.lane.b32.xlu0 %v968, 64
          %v2190 = vpop.permute.xlu0 %2189
          %2191 = vrot.lane.b32.xlu0 %v973, 64
          %v2192 = vpop.permute.xlu0 %2191
          %2193 = vrot.lane.b32.xlu0 %v976, 64
          %v2194 = vpop.permute.xlu0 %2193
          %2203 = vrot.lane.b32.xlu0 %v949, 32
          %v2204 = vpop.permute.xlu0 %2203
          %2205 = vrot.lane.b32.xlu0 %v952, 32
          %v2206 = vpop.permute.xlu0 %2205
          %2207 = vrot.lane.b32.xlu0 %v957, 32
          %v2208 = vpop.permute.xlu0 %2207
          %2209 = vrot.lane.b32.xlu0 %v960, 32
          %v2210 = vpop.permute.xlu0 %2209
          %2211 = vrot.lane.b32.xlu0 %v965, 32
          %v2212 = vpop.permute.xlu0 %2211
          %2213 = vrot.lane.b32.xlu0 %v968, 32
          %v2214 = vpop.permute.xlu0 %2213
          %2215 = vrot.lane.b32.xlu0 %v973, 32
          %v2216 = vpop.permute.xlu0 %2215
          %2217 = vrot.lane.b32.xlu0 %v976, 32
          %v2218 = vpop.permute.xlu0 %2217
          %v2227 = vcombine.low %v949, %v2180
          %v2228 = vcombine.high %v949, %v2180
          %v2230 = vunpack.c.l.s4 1983009808
          %v2231 = vunpack.c.0.s8 %v2230
          %v2232 = vlaneseq
          %v2233 = vshrl.u32 %v2232, 7
          %v2234 = vsub.s32 %v2231, %v2233
          %v2235 = vrot.slane %v2227, %v2234
          %v2237 = vunpack.c.l.s4 1983009808
          %v2238 = vunpack.c.0.s8 %v2237
          %v2239 = vlaneseq
          %v2240 = vshrl.u32 %v2239, 7
          %v2241 = vsub.s32 %v2238, %v2240
          %v2242 = vrot.slane %v2228, %v2241
          %v2243 = vcombine.low %v2156, %v2204
          %v2244 = vcombine.high %v2156, %v2204
          %v2246 = vunpack.c.l.s4 1983009808
          %v2247 = vunpack.c.0.s8 %v2246
          %v2248 = vlaneseq
          %v2249 = vshrl.u32 %v2248, 7
          %v2250 = vsub.s32 %v2247, %v2249
          %v2251 = vrot.slane %v2243, %v2250
          %v2253 = vunpack.c.l.s4 1983009808
          %v2254 = vunpack.c.0.s8 %v2253
          %v2255 = vlaneseq
          %v2256 = vshrl.u32 %v2255, 7
          %v2257 = vsub.s32 %v2254, %v2256
          %v2258 = vrot.slane %v2244, %v2257
          %v2259 = vcombine.low %v2235, %v2251
          %v2260 = vcombine.high %v2235, %v2251
          %v2262 = vunpack.c.l.s4 1934713408
          %v2263 = vunpack.c.0.s8 %v2262
          %v2264 = vlaneseq
          %v2265 = vshrl.u32 %v2264, 7
          %v2266 = vsub.s32 %v2263, %v2265
          %v2267 = vrot.slane %v2259, %v2266
          %v2269 = vunpack.c.l.s4 1934713408
          %v2270 = vunpack.c.0.s8 %v2269
          %v2271 = vlaneseq
          %v2272 = vshrl.u32 %v2271, 7
          %v2273 = vsub.s32 %v2270, %v2272
          %v2274 = vrot.slane %v2260, %v2273
          %v2275 = vcombine.low %v2242, %v2258
          %v2276 = vcombine.high %v2242, %v2258
          %v2278 = vunpack.c.l.s4 1934713408
          %v2279 = vunpack.c.0.s8 %v2278
          %v2280 = vlaneseq
          %v2281 = vshrl.u32 %v2280, 7
          %v2282 = vsub.s32 %v2279, %v2281
          %v2283 = vrot.slane %v2275, %v2282
          %v2285 = vunpack.c.l.s4 1934713408
          %v2286 = vunpack.c.0.s8 %v2285
          %v2287 = vlaneseq
          %v2288 = vshrl.u32 %v2287, 7
          %v2289 = vsub.s32 %v2286, %v2288
          %v2290 = vrot.slane %v2276, %v2289
          %v2291 = vcombine.high %v2267, 0.0
          %v2292 = vcombine.high %v2274, 0.0
          %v2293 = vcombine.high %v2283, 0.0
          %v2294 = vcombine.high %v2290, 0.0
          %v2295 = vcombine.low %v952, %v2182
          %v2296 = vcombine.high %v952, %v2182
          %v2298 = vunpack.c.l.s4 1983009808
          %v2299 = vunpack.c.0.s8 %v2298
          %v2300 = vlaneseq
          %v2301 = vshrl.u32 %v2300, 7
          %v2302 = vsub.s32 %v2299, %v2301
          %v2303 = vrot.slane %v2295, %v2302
          %v2305 = vunpack.c.l.s4 1983009808
          %v2306 = vunpack.c.0.s8 %v2305
          %v2307 = vlaneseq
          %v2308 = vshrl.u32 %v2307, 7
          %v2309 = vsub.s32 %v2306, %v2308
          %v2310 = vrot.slane %v2296, %v2309
          %v2311 = vcombine.low %v2158, %v2206
          %v2312 = vcombine.high %v2158, %v2206
          %v2314 = vunpack.c.l.s4 1983009808
          %v2315 = vunpack.c.0.s8 %v2314
          %v2316 = vlaneseq
          %v2317 = vshrl.u32 %v2316, 7
          %v2318 = vsub.s32 %v2315, %v2317
          %v2319 = vrot.slane %v2311, %v2318
          %v2321 = vunpack.c.l.s4 1983009808
          %v2322 = vunpack.c.0.s8 %v2321
          %v2323 = vlaneseq
          %v2324 = vshrl.u32 %v2323, 7
          %v2325 = vsub.s32 %v2322, %v2324
          %v2326 = vrot.slane %v2312, %v2325
          %v2327 = vcombine.low %v2303, %v2319
          %v2328 = vcombine.high %v2303, %v2319
          %v2330 = vunpack.c.l.s4 1934713408
          %v2331 = vunpack.c.0.s8 %v2330
          %v2332 = vlaneseq
          %v2333 = vshrl.u32 %v2332, 7
          %v2334 = vsub.s32 %v2331, %v2333
          %v2335 = vrot.slane %v2327, %v2334
          %v2337 = vunpack.c.l.s4 1934713408
          %v2338 = vunpack.c.0.s8 %v2337
          %v2339 = vlaneseq
          %v2340 = vshrl.u32 %v2339, 7
          %v2341 = vsub.s32 %v2338, %v2340
          %v2342 = vrot.slane %v2328, %v2341
          %v2343 = vcombine.low %v2310, %v2326
          %v2344 = vcombine.high %v2310, %v2326
          %v2346 = vunpack.c.l.s4 1934713408
          %v2347 = vunpack.c.0.s8 %v2346
          %v2348 = vlaneseq
          %v2349 = vshrl.u32 %v2348, 7
          %v2350 = vsub.s32 %v2347, %v2349
          %v2351 = vrot.slane %v2343, %v2350
          %v2353 = vunpack.c.l.s4 1934713408
          %v2354 = vunpack.c.0.s8 %v2353
          %v2355 = vlaneseq
          %v2356 = vshrl.u32 %v2355, 7
          %v2357 = vsub.s32 %v2354, %v2356
          %v2358 = vrot.slane %v2344, %v2357
          %v2359 = vcombine.high %v2335, 0.0
          %v2360 = vcombine.high %v2342, 0.0
          %v2361 = vcombine.high %v2351, 0.0
          %v2362 = vcombine.high %v2358, 0.0
          %v2363 = vcombine.low %v957, %v2184
          %v2364 = vcombine.high %v957, %v2184
          %v2366 = vunpack.c.l.s4 1983009808
          %v2367 = vunpack.c.0.s8 %v2366
          %v2368 = vlaneseq
          %v2369 = vshrl.u32 %v2368, 7
          %v2370 = vsub.s32 %v2367, %v2369
          %v2371 = vrot.slane %v2363, %v2370
          %v2373 = vunpack.c.l.s4 1983009808
          %v2374 = vunpack.c.0.s8 %v2373
          %v2375 = vlaneseq
          %v2376 = vshrl.u32 %v2375, 7
          %v2377 = vsub.s32 %v2374, %v2376
          %v2378 = vrot.slane %v2364, %v2377
          %v2379 = vcombine.low %v2160, %v2208
          %v2380 = vcombine.high %v2160, %v2208
          %v2382 = vunpack.c.l.s4 1983009808
          %v2383 = vunpack.c.0.s8 %v2382
          %v2384 = vlaneseq
          %v2385 = vshrl.u32 %v2384, 7
          %v2386 = vsub.s32 %v2383, %v2385
          %v2387 = vrot.slane %v2379, %v2386
          %v2389 = vunpack.c.l.s4 1983009808
          %v2390 = vunpack.c.0.s8 %v2389
          %v2391 = vlaneseq
          %v2392 = vshrl.u32 %v2391, 7
          %v2393 = vsub.s32 %v2390, %v2392
          %v2394 = vrot.slane %v2380, %v2393
          %v2395 = vcombine.low %v2371, %v2387
          %v2396 = vcombine.high %v2371, %v2387
          %v2398 = vunpack.c.l.s4 1934713408
          %v2399 = vunpack.c.0.s8 %v2398
          %v2400 = vlaneseq
          %v2401 = vshrl.u32 %v2400, 7
          %v2402 = vsub.s32 %v2399, %v2401
          %v2403 = vrot.slane %v2395, %v2402
          %v2405 = vunpack.c.l.s4 1934713408
          %v2406 = vunpack.c.0.s8 %v2405
          %v2407 = vlaneseq
          %v2408 = vshrl.u32 %v2407, 7
          %v2409 = vsub.s32 %v2406, %v2408
          %v2410 = vrot.slane %v2396, %v2409
          %v2411 = vcombine.low %v2378, %v2394
          %v2412 = vcombine.high %v2378, %v2394
          %v2414 = vunpack.c.l.s4 1934713408
          %v2415 = vunpack.c.0.s8 %v2414
          %v2416 = vlaneseq
          %v2417 = vshrl.u32 %v2416, 7
          %v2418 = vsub.s32 %v2415, %v2417
          %v2419 = vrot.slane %v2411, %v2418
          %v2421 = vunpack.c.l.s4 1934713408
          %v2422 = vunpack.c.0.s8 %v2421
          %v2423 = vlaneseq
          %v2424 = vshrl.u32 %v2423, 7
          %v2425 = vsub.s32 %v2422, %v2424
          %v2426 = vrot.slane %v2412, %v2425
          %v2427 = vcombine.high %v2403, 0.0
          %v2428 = vcombine.high %v2410, 0.0
          %v2429 = vcombine.high %v2419, 0.0
          %v2430 = vcombine.high %v2426, 0.0
          %v2431 = vcombine.low %v960, %v2186
          %v2432 = vcombine.high %v960, %v2186
          %v2434 = vunpack.c.l.s4 1983009808
          %v2435 = vunpack.c.0.s8 %v2434
          %v2436 = vlaneseq
          %v2437 = vshrl.u32 %v2436, 7
          %v2438 = vsub.s32 %v2435, %v2437
          %v2439 = vrot.slane %v2431, %v2438
          %v2441 = vunpack.c.l.s4 1983009808
          %v2442 = vunpack.c.0.s8 %v2441
          %v2443 = vlaneseq
          %v2444 = vshrl.u32 %v2443, 7
          %v2445 = vsub.s32 %v2442, %v2444
          %v2446 = vrot.slane %v2432, %v2445
          %v2447 = vcombine.low %v2162, %v2210
          %v2448 = vcombine.high %v2162, %v2210
          %v2450 = vunpack.c.l.s4 1983009808
          %v2451 = vunpack.c.0.s8 %v2450
          %v2452 = vlaneseq
          %v2453 = vshrl.u32 %v2452, 7
          %v2454 = vsub.s32 %v2451, %v2453
          %v2455 = vrot.slane %v2447, %v2454
          %v2457 = vunpack.c.l.s4 1983009808
          %v2458 = vunpack.c.0.s8 %v2457
          %v2459 = vlaneseq
          %v2460 = vshrl.u32 %v2459, 7
          %v2461 = vsub.s32 %v2458, %v2460
          %v2462 = vrot.slane %v2448, %v2461
          %v2463 = vcombine.low %v2439, %v2455
          %v2464 = vcombine.high %v2439, %v2455
          %v2466 = vunpack.c.l.s4 1934713408
          %v2467 = vunpack.c.0.s8 %v2466
          %v2468 = vlaneseq
          %v2469 = vshrl.u32 %v2468, 7
          %v2470 = vsub.s32 %v2467, %v2469
          %v2471 = vrot.slane %v2463, %v2470
          %v2473 = vunpack.c.l.s4 1934713408
          %v2474 = vunpack.c.0.s8 %v2473
          %v2475 = vlaneseq
          %v2476 = vshrl.u32 %v2475, 7
          %v2477 = vsub.s32 %v2474, %v2476
          %v2478 = vrot.slane %v2464, %v2477
          %v2479 = vcombine.low %v2446, %v2462
          %v2480 = vcombine.high %v2446, %v2462
          %v2482 = vunpack.c.l.s4 1934713408
          %v2483 = vunpack.c.0.s8 %v2482
          %v2484 = vlaneseq
          %v2485 = vshrl.u32 %v2484, 7
          %v2486 = vsub.s32 %v2483, %v2485
          %v2487 = vrot.slane %v2479, %v2486
          %v2489 = vunpack.c.l.s4 1934713408
          %v2490 = vunpack.c.0.s8 %v2489
          %v2491 = vlaneseq
          %v2492 = vshrl.u32 %v2491, 7
          %v2493 = vsub.s32 %v2490, %v2492
          %v2494 = vrot.slane %v2480, %v2493
          %v2495 = vcombine.high %v2471, 0.0
          %v2496 = vcombine.high %v2478, 0.0
          %v2497 = vcombine.high %v2487, 0.0
          %v2498 = vcombine.high %v2494, 0.0
          %v2499 = vcombine.low %v965, %v2188
          %v2500 = vcombine.high %v965, %v2188
          %v2502 = vunpack.c.l.s4 1983009808
          %v2503 = vunpack.c.0.s8 %v2502
          %v2504 = vlaneseq
          %v2505 = vshrl.u32 %v2504, 7
          %v2506 = vsub.s32 %v2503, %v2505
          %v2507 = vrot.slane %v2499, %v2506
          %v2509 = vunpack.c.l.s4 1983009808
          %v2510 = vunpack.c.0.s8 %v2509
          %v2511 = vlaneseq
          %v2512 = vshrl.u32 %v2511, 7
          %v2513 = vsub.s32 %v2510, %v2512
          %v2514 = vrot.slane %v2500, %v2513
          %v2515 = vcombine.low %v2164, %v2212
          %v2516 = vcombine.high %v2164, %v2212
          %v2518 = vunpack.c.l.s4 1983009808
          %v2519 = vunpack.c.0.s8 %v2518
          %v2520 = vlaneseq
          %v2521 = vshrl.u32 %v2520, 7
          %v2522 = vsub.s32 %v2519, %v2521
          %v2523 = vrot.slane %v2515, %v2522
          %v2525 = vunpack.c.l.s4 1983009808
          %v2526 = vunpack.c.0.s8 %v2525
          %v2527 = vlaneseq
          %v2528 = vshrl.u32 %v2527, 7
          %v2529 = vsub.s32 %v2526, %v2528
          %v2530 = vrot.slane %v2516, %v2529
          %v2531 = vcombine.low %v2507, %v2523
          %v2532 = vcombine.high %v2507, %v2523
          %v2534 = vunpack.c.l.s4 1934713408
          %v2535 = vunpack.c.0.s8 %v2534
          %v2536 = vlaneseq
          %v2537 = vshrl.u32 %v2536, 7
          %v2538 = vsub.s32 %v2535, %v2537
          %v2539 = vrot.slane %v2531, %v2538
          %v2541 = vunpack.c.l.s4 1934713408
          %v2542 = vunpack.c.0.s8 %v2541
          %v2543 = vlaneseq
          %v2544 = vshrl.u32 %v2543, 7
          %v2545 = vsub.s32 %v2542, %v2544
          %v2546 = vrot.slane %v2532, %v2545
          %v2547 = vcombine.low %v2514, %v2530
          %v2548 = vcombine.high %v2514, %v2530
          %v2550 = vunpack.c.l.s4 1934713408
          %v2551 = vunpack.c.0.s8 %v2550
          %v2552 = vlaneseq
          %v2553 = vshrl.u32 %v2552, 7
          %v2554 = vsub.s32 %v2551, %v2553
          %v2555 = vrot.slane %v2547, %v2554
          %v2557 = vunpack.c.l.s4 1934713408
          %v2558 = vunpack.c.0.s8 %v2557
          %v2559 = vlaneseq
          %v2560 = vshrl.u32 %v2559, 7
          %v2561 = vsub.s32 %v2558, %v2560
          %v2562 = vrot.slane %v2548, %v2561
          %v2563 = vcombine.high %v2539, 0.0
          %v2564 = vcombine.high %v2546, 0.0
          %v2565 = vcombine.high %v2555, 0.0
          %v2566 = vcombine.high %v2562, 0.0
          %v2567 = vcombine.low %v968, %v2190
          %v2568 = vcombine.high %v968, %v2190
          %v2570 = vunpack.c.l.s4 1983009808
          %v2571 = vunpack.c.0.s8 %v2570
          %v2572 = vlaneseq
          %v2573 = vshrl.u32 %v2572, 7
          %v2574 = vsub.s32 %v2571, %v2573
          %v2575 = vrot.slane %v2567, %v2574
          %v2577 = vunpack.c.l.s4 1983009808
          %v2578 = vunpack.c.0.s8 %v2577
          %v2579 = vlaneseq
          %v2580 = vshrl.u32 %v2579, 7
          %v2581 = vsub.s32 %v2578, %v2580
          %v2582 = vrot.slane %v2568, %v2581
          %v2583 = vcombine.low %v2166, %v2214
          %v2584 = vcombine.high %v2166, %v2214
          %v2586 = vunpack.c.l.s4 1983009808
          %v2587 = vunpack.c.0.s8 %v2586
          %v2588 = vlaneseq
          %v2589 = vshrl.u32 %v2588, 7
          %v2590 = vsub.s32 %v2587, %v2589
          %v2591 = vrot.slane %v2583, %v2590
          %v2593 = vunpack.c.l.s4 1983009808
          %v2594 = vunpack.c.0.s8 %v2593
          %v2595 = vlaneseq
          %v2596 = vshrl.u32 %v2595, 7
          %v2597 = vsub.s32 %v2594, %v2596
          %v2598 = vrot.slane %v2584, %v2597
          %v2599 = vcombine.low %v2575, %v2591
          %v2600 = vcombine.high %v2575, %v2591
          %v2602 = vunpack.c.l.s4 1934713408
          %v2603 = vunpack.c.0.s8 %v2602
          %v2604 = vlaneseq
          %v2605 = vshrl.u32 %v2604, 7
          %v2606 = vsub.s32 %v2603, %v2605
          %v2607 = vrot.slane %v2599, %v2606
          %v2609 = vunpack.c.l.s4 1934713408
          %v2610 = vunpack.c.0.s8 %v2609
          %v2611 = vlaneseq
          %v2612 = vshrl.u32 %v2611, 7
          %v2613 = vsub.s32 %v2610, %v2612
          %v2614 = vrot.slane %v2600, %v2613
          %v2615 = vcombine.low %v2582, %v2598
          %v2616 = vcombine.high %v2582, %v2598
          %v2618 = vunpack.c.l.s4 1934713408
          %v2619 = vunpack.c.0.s8 %v2618
          %v2620 = vlaneseq
          %v2621 = vshrl.u32 %v2620, 7
          %v2622 = vsub.s32 %v2619, %v2621
          %v2623 = vrot.slane %v2615, %v2622
          %v2625 = vunpack.c.l.s4 1934713408
          %v2626 = vunpack.c.0.s8 %v2625
          %v2627 = vlaneseq
          %v2628 = vshrl.u32 %v2627, 7
          %v2629 = vsub.s32 %v2626, %v2628
          %v2630 = vrot.slane %v2616, %v2629
          %v2631 = vcombine.high %v2607, 0.0
          %v2632 = vcombine.high %v2614, 0.0
          %v2633 = vcombine.high %v2623, 0.0
          %v2634 = vcombine.high %v2630, 0.0
          %v2635 = vcombine.low %v973, %v2192
          %v2636 = vcombine.high %v973, %v2192
          %v2638 = vunpack.c.l.s4 1983009808
          %v2639 = vunpack.c.0.s8 %v2638
          %v2640 = vlaneseq
          %v2641 = vshrl.u32 %v2640, 7
          %v2642 = vsub.s32 %v2639, %v2641
          %v2643 = vrot.slane %v2635, %v2642
          %v2645 = vunpack.c.l.s4 1983009808
          %v2646 = vunpack.c.0.s8 %v2645
          %v2647 = vlaneseq
          %v2648 = vshrl.u32 %v2647, 7
          %v2649 = vsub.s32 %v2646, %v2648
          %v2650 = vrot.slane %v2636, %v2649
          %v2651 = vcombine.low %v2168, %v2216
          %v2652 = vcombine.high %v2168, %v2216
          %v2654 = vunpack.c.l.s4 1983009808
          %v2655 = vunpack.c.0.s8 %v2654
          %v2656 = vlaneseq
          %v2657 = vshrl.u32 %v2656, 7
          %v2658 = vsub.s32 %v2655, %v2657
          %v2659 = vrot.slane %v2651, %v2658
          %v2661 = vunpack.c.l.s4 1983009808
          %v2662 = vunpack.c.0.s8 %v2661
          %v2663 = vlaneseq
          %v2664 = vshrl.u32 %v2663, 7
          %v2665 = vsub.s32 %v2662, %v2664
          %v2666 = vrot.slane %v2652, %v2665
          %v2667 = vcombine.low %v2643, %v2659
          %v2668 = vcombine.high %v2643, %v2659
          %v2670 = vunpack.c.l.s4 1934713408
          %v2671 = vunpack.c.0.s8 %v2670
          %v2672 = vlaneseq
          %v2673 = vshrl.u32 %v2672, 7
          %v2674 = vsub.s32 %v2671, %v2673
          %v2675 = vrot.slane %v2667, %v2674
          %v2677 = vunpack.c.l.s4 1934713408
          %v2678 = vunpack.c.0.s8 %v2677
          %v2679 = vlaneseq
          %v2680 = vshrl.u32 %v2679, 7
          %v2681 = vsub.s32 %v2678, %v2680
          %v2682 = vrot.slane %v2668, %v2681
          %v2683 = vcombine.low %v2650, %v2666
          %v2684 = vcombine.high %v2650, %v2666
          %v2686 = vunpack.c.l.s4 1934713408
          %v2687 = vunpack.c.0.s8 %v2686
          %v2688 = vlaneseq
          %v2689 = vshrl.u32 %v2688, 7
          %v2690 = vsub.s32 %v2687, %v2689
          %v2691 = vrot.slane %v2683, %v2690
          %v2693 = vunpack.c.l.s4 1934713408
          %v2694 = vunpack.c.0.s8 %v2693
          %v2695 = vlaneseq
          %v2696 = vshrl.u32 %v2695, 7
          %v2697 = vsub.s32 %v2694, %v2696
          %v2698 = vrot.slane %v2684, %v2697
          %v2699 = vcombine.high %v2675, 0.0
          %v2700 = vcombine.high %v2682, 0.0
          %v2701 = vcombine.high %v2691, 0.0
          %v2702 = vcombine.high %v2698, 0.0
          %v2703 = vcombine.low %v976, %v2194
          %v2704 = vcombine.high %v976, %v2194
          %v2706 = vunpack.c.l.s4 1983009808
          %v2707 = vunpack.c.0.s8 %v2706
          %v2708 = vlaneseq
          %v2709 = vshrl.u32 %v2708, 7
          %v2710 = vsub.s32 %v2707, %v2709
          %v2711 = vrot.slane %v2703, %v2710
          %v2713 = vunpack.c.l.s4 1983009808
          %v2714 = vunpack.c.0.s8 %v2713
          %v2715 = vlaneseq
          %v2716 = vshrl.u32 %v2715, 7
          %v2717 = vsub.s32 %v2714, %v2716
          %v2718 = vrot.slane %v2704, %v2717
          %v2719 = vcombine.low %v2170, %v2218
          %v2720 = vcombine.high %v2170, %v2218
          %v2722 = vunpack.c.l.s4 1983009808
          %v2723 = vunpack.c.0.s8 %v2722
          %v2724 = vlaneseq
          %v2725 = vshrl.u32 %v2724, 7
          %v2726 = vsub.s32 %v2723, %v2725
          %v2727 = vrot.slane %v2719, %v2726
          %v2729 = vunpack.c.l.s4 1983009808
          %v2730 = vunpack.c.0.s8 %v2729
          %v2731 = vlaneseq
          %v2732 = vshrl.u32 %v2731, 7
          %v2733 = vsub.s32 %v2730, %v2732
          %v2734 = vrot.slane %v2720, %v2733
          %v2735 = vcombine.low %v2711, %v2727
          %v2736 = vcombine.high %v2711, %v2727
          %v2738 = vunpack.c.l.s4 1934713408
          %v2739 = vunpack.c.0.s8 %v2738
          %v2740 = vlaneseq
          %v2741 = vshrl.u32 %v2740, 7
          %v2742 = vsub.s32 %v2739, %v2741
          %v2743 = vrot.slane %v2735, %v2742
          %v2745 = vunpack.c.l.s4 1934713408
          %v2746 = vunpack.c.0.s8 %v2745
          %v2747 = vlaneseq
          %v2748 = vshrl.u32 %v2747, 7
          %v2749 = vsub.s32 %v2746, %v2748
          %v2750 = vrot.slane %v2736, %v2749
          %v2751 = vcombine.low %v2718, %v2734
          %v2752 = vcombine.high %v2718, %v2734
          %v2754 = vunpack.c.l.s4 1934713408
          %v2755 = vunpack.c.0.s8 %v2754
          %v2756 = vlaneseq
          %v2757 = vshrl.u32 %v2756, 7
          %v2758 = vsub.s32 %v2755, %v2757
          %v2759 = vrot.slane %v2751, %v2758
          %v2761 = vunpack.c.l.s4 1934713408
          %v2762 = vunpack.c.0.s8 %v2761
          %v2763 = vlaneseq
          %v2764 = vshrl.u32 %v2763, 7
          %v2765 = vsub.s32 %v2762, %v2764
          %v2766 = vrot.slane %v2752, %v2765
          %v2767 = vcombine.high %v2743, 0.0
          %v2768 = vcombine.high %v2750, 0.0
          %v2769 = vcombine.high %v2759, 0.0
          %v2770 = vcombine.high %v2766, 0.0
          %v2771 = vcombine.low %v2267, %v2274
          %v2773 = vunpack.c.l.s4 1983009808
          %v2774 = vunpack.c.0.s8 %v2773
          %v2775 = vlaneseq
          %v2776 = vshrl.u32 %v2775, 7
          %v2777 = vsub.s32 %v2774, %v2776
          %v2778 = vrot.slane %v2771, %v2777
          %v2779 = vcombine.low %v2291, %v2292
          %v2781 = vunpack.c.l.s4 1983009808
          %v2782 = vunpack.c.0.s8 %v2781
          %v2783 = vlaneseq
          %v2784 = vshrl.u32 %v2783, 7
          %v2785 = vsub.s32 %v2782, %v2784
          %v2786 = vrot.slane %v2779, %v2785
          %v2787 = vcombine.low %v2283, %v2290
          %v2789 = vunpack.c.l.s4 1983009808
          %v2790 = vunpack.c.0.s8 %v2789
          %v2791 = vlaneseq
          %v2792 = vshrl.u32 %v2791, 7
          %v2793 = vsub.s32 %v2790, %v2792
          %v2794 = vrot.slane %v2787, %v2793
          %v2795 = vcombine.low %v2293, %v2294
          %v2797 = vunpack.c.l.s4 1983009808
          %v2798 = vunpack.c.0.s8 %v2797
          %v2799 = vlaneseq
          %v2800 = vshrl.u32 %v2799, 7
          %v2801 = vsub.s32 %v2798, %v2800
          %v2802 = vrot.slane %v2795, %v2801
          %v2803 = vcombine.low %v2778, %v2786
          %v2804 = vcombine.high %v2778, %v2786
          %v2806 = vunpack.c.l.s4 1934713408
          %v2807 = vunpack.c.0.s8 %v2806
          %v2808 = vlaneseq
          %v2809 = vshrl.u32 %v2808, 7
          %v2810 = vsub.s32 %v2807, %v2809
          %v2811 = vrot.slane %v2803, %v2810
          %v2813 = vunpack.c.l.s4 1934713408
          %v2814 = vunpack.c.0.s8 %v2813
          %v2815 = vlaneseq
          %v2816 = vshrl.u32 %v2815, 7
          %v2817 = vsub.s32 %v2814, %v2816
          %v2818 = vrot.slane %v2804, %v2817
          %v2819 = vcombine.low %v2794, %v2802
          %v2820 = vcombine.high %v2794, %v2802
          %v2822 = vunpack.c.l.s4 1934713408
          %v2823 = vunpack.c.0.s8 %v2822
          %v2824 = vlaneseq
          %v2825 = vshrl.u32 %v2824, 7
          %v2826 = vsub.s32 %v2823, %v2825
          %v2827 = vrot.slane %v2819, %v2826
          %v2829 = vunpack.c.l.s4 1934713408
          %v2830 = vunpack.c.0.s8 %v2829
          %v2831 = vlaneseq
          %v2832 = vshrl.u32 %v2831, 7
          %v2833 = vsub.s32 %v2830, %v2832
          %v2834 = vrot.slane %v2820, %v2833
          %v2835 = vcombine.low %v2811, %v2827
          %v2836 = vcombine.high %v2811, %v2827
          %v2837 = vcombine.low %v2818, %v2834
          %v2838 = vcombine.high %v2818, %v2834
          %v2839 = vcombine.low %v2335, %v2342
          %v2841 = vunpack.c.l.s4 1983009808
          %v2842 = vunpack.c.0.s8 %v2841
          %v2843 = vlaneseq
          %v2844 = vshrl.u32 %v2843, 7
          %v2845 = vsub.s32 %v2842, %v2844
          %v2846 = vrot.slane %v2839, %v2845
          %v2847 = vcombine.low %v2359, %v2360
          %v2849 = vunpack.c.l.s4 1983009808
          %v2850 = vunpack.c.0.s8 %v2849
          %v2851 = vlaneseq
          %v2852 = vshrl.u32 %v2851, 7
          %v2853 = vsub.s32 %v2850, %v2852
          %v2854 = vrot.slane %v2847, %v2853
          %v2855 = vcombine.low %v2351, %v2358
          %v2857 = vunpack.c.l.s4 1983009808
          %v2858 = vunpack.c.0.s8 %v2857
          %v2859 = vlaneseq
          %v2860 = vshrl.u32 %v2859, 7
          %v2861 = vsub.s32 %v2858, %v2860
          %v2862 = vrot.slane %v2855, %v2861
          %v2863 = vcombine.low %v2361, %v2362
          %v2865 = vunpack.c.l.s4 1983009808
          %v2866 = vunpack.c.0.s8 %v2865
          %v2867 = vlaneseq
          %v2868 = vshrl.u32 %v2867, 7
          %v2869 = vsub.s32 %v2866, %v2868
          %v2870 = vrot.slane %v2863, %v2869
          %v2871 = vcombine.low %v2846, %v2854
          %v2872 = vcombine.high %v2846, %v2854
          %v2874 = vunpack.c.l.s4 1934713408
          %v2875 = vunpack.c.0.s8 %v2874
          %v2876 = vlaneseq
          %v2877 = vshrl.u32 %v2876, 7
          %v2878 = vsub.s32 %v2875, %v2877
          %v2879 = vrot.slane %v2871, %v2878
          %v2881 = vunpack.c.l.s4 1934713408
          %v2882 = vunpack.c.0.s8 %v2881
          %v2883 = vlaneseq
          %v2884 = vshrl.u32 %v2883, 7
          %v2885 = vsub.s32 %v2882, %v2884
          %v2886 = vrot.slane %v2872, %v2885
          %v2887 = vcombine.low %v2862, %v2870
          %v2888 = vcombine.high %v2862, %v2870
          %v2890 = vunpack.c.l.s4 1934713408
          %v2891 = vunpack.c.0.s8 %v2890
          %v2892 = vlaneseq
          %v2893 = vshrl.u32 %v2892, 7
          %v2894 = vsub.s32 %v2891, %v2893
          %v2895 = vrot.slane %v2887, %v2894
          %v2897 = vunpack.c.l.s4 1934713408
          %v2898 = vunpack.c.0.s8 %v2897
          %v2899 = vlaneseq
          %v2900 = vshrl.u32 %v2899, 7
          %v2901 = vsub.s32 %v2898, %v2900
          %v2902 = vrot.slane %v2888, %v2901
          %v2903 = vcombine.low %v2879, %v2895
          %v2904 = vcombine.high %v2879, %v2895
          %v2905 = vcombine.low %v2886, %v2902
          %v2906 = vcombine.high %v2886, %v2902
          %v2907 = vcombine.low %v2403, %v2410
          %v2909 = vunpack.c.l.s4 1983009808
          %v2910 = vunpack.c.0.s8 %v2909
          %v2911 = vlaneseq
          %v2912 = vshrl.u32 %v2911, 7
          %v2913 = vsub.s32 %v2910, %v2912
          %v2914 = vrot.slane %v2907, %v2913
          %v2915 = vcombine.low %v2427, %v2428
          %v2917 = vunpack.c.l.s4 1983009808
          %v2918 = vunpack.c.0.s8 %v2917
          %v2919 = vlaneseq
          %v2920 = vshrl.u32 %v2919, 7
          %v2921 = vsub.s32 %v2918, %v2920
          %v2922 = vrot.slane %v2915, %v2921
          %v2923 = vcombine.low %v2419, %v2426
          %v2925 = vunpack.c.l.s4 1983009808
          %v2926 = vunpack.c.0.s8 %v2925
          %v2927 = vlaneseq
          %v2928 = vshrl.u32 %v2927, 7
          %v2929 = vsub.s32 %v2926, %v2928
          %v2930 = vrot.slane %v2923, %v2929
          %v2931 = vcombine.low %v2429, %v2430
          %v2933 = vunpack.c.l.s4 1983009808
          %v2934 = vunpack.c.0.s8 %v2933
          %v2935 = vlaneseq
          %v2936 = vshrl.u32 %v2935, 7
          %v2937 = vsub.s32 %v2934, %v2936
          %v2938 = vrot.slane %v2931, %v2937
          %v2939 = vcombine.low %v2914, %v2922
          %v2940 = vcombine.high %v2914, %v2922
          %v2942 = vunpack.c.l.s4 1934713408
          %v2943 = vunpack.c.0.s8 %v2942
          %v2944 = vlaneseq
          %v2945 = vshrl.u32 %v2944, 7
          %v2946 = vsub.s32 %v2943, %v2945
          %v2947 = vrot.slane %v2939, %v2946
          %v2949 = vunpack.c.l.s4 1934713408
          %v2950 = vunpack.c.0.s8 %v2949
          %v2951 = vlaneseq
          %v2952 = vshrl.u32 %v2951, 7
          %v2953 = vsub.s32 %v2950, %v2952
          %v2954 = vrot.slane %v2940, %v2953
          %v2955 = vcombine.low %v2930, %v2938
          %v2956 = vcombine.high %v2930, %v2938
          %v2958 = vunpack.c.l.s4 1934713408
          %v2959 = vunpack.c.0.s8 %v2958
          %v2960 = vlaneseq
          %v2961 = vshrl.u32 %v2960, 7
          %v2962 = vsub.s32 %v2959, %v2961
          %v2963 = vrot.slane %v2955, %v2962
          %v2965 = vunpack.c.l.s4 1934713408
          %v2966 = vunpack.c.0.s8 %v2965
          %v2967 = vlaneseq
          %v2968 = vshrl.u32 %v2967, 7
          %v2969 = vsub.s32 %v2966, %v2968
          %v2970 = vrot.slane %v2956, %v2969
          %v2971 = vcombine.low %v2947, %v2963
          %v2972 = vcombine.high %v2947, %v2963
          %v2973 = vcombine.low %v2954, %v2970
          %v2974 = vcombine.high %v2954, %v2970
          %v2975 = vcombine.low %v2471, %v2478
          %v2977 = vunpack.c.l.s4 1983009808
          %v2978 = vunpack.c.0.s8 %v2977
          %v2979 = vlaneseq
          %v2980 = vshrl.u32 %v2979, 7
          %v2981 = vsub.s32 %v2978, %v2980
          %v2982 = vrot.slane %v2975, %v2981
          %v2983 = vcombine.low %v2495, %v2496
          %v2985 = vunpack.c.l.s4 1983009808
          %v2986 = vunpack.c.0.s8 %v2985
          %v2987 = vlaneseq
          %v2988 = vshrl.u32 %v2987, 7
          %v2989 = vsub.s32 %v2986, %v2988
          %v2990 = vrot.slane %v2983, %v2989
          %v2991 = vcombine.low %v2487, %v2494
          %v2993 = vunpack.c.l.s4 1983009808
          %v2994 = vunpack.c.0.s8 %v2993
          %v2995 = vlaneseq
          %v2996 = vshrl.u32 %v2995, 7
          %v2997 = vsub.s32 %v2994, %v2996
          %v2998 = vrot.slane %v2991, %v2997
          %v2999 = vcombine.low %v2497, %v2498
          %v3001 = vunpack.c.l.s4 1983009808
          %v3002 = vunpack.c.0.s8 %v3001
          %v3003 = vlaneseq
          %v3004 = vshrl.u32 %v3003, 7
          %v3005 = vsub.s32 %v3002, %v3004
          %v3006 = vrot.slane %v2999, %v3005
          %v3007 = vcombine.low %v2982, %v2990
          %v3008 = vcombine.high %v2982, %v2990
          %v3010 = vunpack.c.l.s4 1934713408
          %v3011 = vunpack.c.0.s8 %v3010
          %v3012 = vlaneseq
          %v3013 = vshrl.u32 %v3012, 7
          %v3014 = vsub.s32 %v3011, %v3013
          %v3015 = vrot.slane %v3007, %v3014
          %v3017 = vunpack.c.l.s4 1934713408
          %v3018 = vunpack.c.0.s8 %v3017
          %v3019 = vlaneseq
          %v3020 = vshrl.u32 %v3019, 7
          %v3021 = vsub.s32 %v3018, %v3020
          %v3022 = vrot.slane %v3008, %v3021
          %v3023 = vcombine.low %v2998, %v3006
          %v3024 = vcombine.high %v2998, %v3006
          %v3026 = vunpack.c.l.s4 1934713408
          %v3027 = vunpack.c.0.s8 %v3026
          %v3028 = vlaneseq
          %v3029 = vshrl.u32 %v3028, 7
          %v3030 = vsub.s32 %v3027, %v3029
          %v3031 = vrot.slane %v3023, %v3030
          %v3033 = vunpack.c.l.s4 1934713408
          %v3034 = vunpack.c.0.s8 %v3033
          %v3035 = vlaneseq
          %v3036 = vshrl.u32 %v3035, 7
          %v3037 = vsub.s32 %v3034, %v3036
          %v3038 = vrot.slane %v3024, %v3037
          %v3039 = vcombine.low %v3015, %v3031
          %v3040 = vcombine.high %v3015, %v3031
          %v3041 = vcombine.low %v3022, %v3038
          %v3042 = vcombine.high %v3022, %v3038
          %v3043 = vcombine.low %v2539, %v2546
          %v3045 = vunpack.c.l.s4 1983009808
          %v3046 = vunpack.c.0.s8 %v3045
          %v3047 = vlaneseq
          %v3048 = vshrl.u32 %v3047, 7
          %v3049 = vsub.s32 %v3046, %v3048
          %v3050 = vrot.slane %v3043, %v3049
          %v3051 = vcombine.low %v2563, %v2564
          %v3053 = vunpack.c.l.s4 1983009808
          %v3054 = vunpack.c.0.s8 %v3053
          %v3055 = vlaneseq
          %v3056 = vshrl.u32 %v3055, 7
          %v3057 = vsub.s32 %v3054, %v3056
          %v3058 = vrot.slane %v3051, %v3057
          %v3059 = vcombine.low %v2555, %v2562
          %v3061 = vunpack.c.l.s4 1983009808
          %v3062 = vunpack.c.0.s8 %v3061
          %v3063 = vlaneseq
          %v3064 = vshrl.u32 %v3063, 7
          %v3065 = vsub.s32 %v3062, %v3064
          %v3066 = vrot.slane %v3059, %v3065
          %v3067 = vcombine.low %v2565, %v2566
          %v3069 = vunpack.c.l.s4 1983009808
          %v3070 = vunpack.c.0.s8 %v3069
          %v3071 = vlaneseq
          %v3072 = vshrl.u32 %v3071, 7
          %v3073 = vsub.s32 %v3070, %v3072
          %v3074 = vrot.slane %v3067, %v3073
          %v3075 = vcombine.low %v3050, %v3058
          %v3076 = vcombine.high %v3050, %v3058
          %v3078 = vunpack.c.l.s4 1934713408
          %v3079 = vunpack.c.0.s8 %v3078
          %v3080 = vlaneseq
          %v3081 = vshrl.u32 %v3080, 7
          %v3082 = vsub.s32 %v3079, %v3081
          %v3083 = vrot.slane %v3075, %v3082
          %v3085 = vunpack.c.l.s4 1934713408
          %v3086 = vunpack.c.0.s8 %v3085
          %v3087 = vlaneseq
          %v3088 = vshrl.u32 %v3087, 7
          %v3089 = vsub.s32 %v3086, %v3088
          %v3090 = vrot.slane %v3076, %v3089
          %v3091 = vcombine.low %v3066, %v3074
          %v3092 = vcombine.high %v3066, %v3074
          %v3094 = vunpack.c.l.s4 1934713408
          %v3095 = vunpack.c.0.s8 %v3094
          %v3096 = vlaneseq
          %v3097 = vshrl.u32 %v3096, 7
          %v3098 = vsub.s32 %v3095, %v3097
          %v3099 = vrot.slane %v3091, %v3098
          %v3101 = vunpack.c.l.s4 1934713408
          %v3102 = vunpack.c.0.s8 %v3101
          %v3103 = vlaneseq
          %v3104 = vshrl.u32 %v3103, 7
          %v3105 = vsub.s32 %v3102, %v3104
          %v3106 = vrot.slane %v3092, %v3105
          %v3107 = vcombine.low %v3083, %v3099
          %v3108 = vcombine.high %v3083, %v3099
          %v3109 = vcombine.low %v3090, %v3106
          %v3110 = vcombine.high %v3090, %v3106
          %v3111 = vcombine.low %v2607, %v2614
          %v3113 = vunpack.c.l.s4 1983009808
          %v3114 = vunpack.c.0.s8 %v3113
          %v3115 = vlaneseq
          %v3116 = vshrl.u32 %v3115, 7
          %v3117 = vsub.s32 %v3114, %v3116
          %v3118 = vrot.slane %v3111, %v3117
          %v3119 = vcombine.low %v2631, %v2632
          %v3121 = vunpack.c.l.s4 1983009808
          %v3122 = vunpack.c.0.s8 %v3121
          %v3123 = vlaneseq
          %v3124 = vshrl.u32 %v3123, 7
          %v3125 = vsub.s32 %v3122, %v3124
          %v3126 = vrot.slane %v3119, %v3125
          %v3127 = vcombine.low %v2623, %v2630
          %v3129 = vunpack.c.l.s4 1983009808
          %v3130 = vunpack.c.0.s8 %v3129
          %v3131 = vlaneseq
          %v3132 = vshrl.u32 %v3131, 7
          %v3133 = vsub.s32 %v3130, %v3132
          %v3134 = vrot.slane %v3127, %v3133
          %v3135 = vcombine.low %v2633, %v2634
          %v3137 = vunpack.c.l.s4 1983009808
          %v3138 = vunpack.c.0.s8 %v3137
          %v3139 = vlaneseq
          %v3140 = vshrl.u32 %v3139, 7
          %v3141 = vsub.s32 %v3138, %v3140
          %v3142 = vrot.slane %v3135, %v3141
          %v3143 = vcombine.low %v3118, %v3126
          %v3144 = vcombine.high %v3118, %v3126
          %v3146 = vunpack.c.l.s4 1934713408
          %v3147 = vunpack.c.0.s8 %v3146
          %v3148 = vlaneseq
          %v3149 = vshrl.u32 %v3148, 7
          %v3150 = vsub.s32 %v3147, %v3149
          %v3151 = vrot.slane %v3143, %v3150
          %v3153 = vunpack.c.l.s4 1934713408
          %v3154 = vunpack.c.0.s8 %v3153
          %v3155 = vlaneseq
          %v3156 = vshrl.u32 %v3155, 7
          %v3157 = vsub.s32 %v3154, %v3156
          %v3158 = vrot.slane %v3144, %v3157
          %v3159 = vcombine.low %v3134, %v3142
          %v3160 = vcombine.high %v3134, %v3142
          %v3162 = vunpack.c.l.s4 1934713408
          %v3163 = vunpack.c.0.s8 %v3162
          %v3164 = vlaneseq
          %v3165 = vshrl.u32 %v3164, 7
          %v3166 = vsub.s32 %v3163, %v3165
          %v3167 = vrot.slane %v3159, %v3166
          %v3169 = vunpack.c.l.s4 1934713408
          %v3170 = vunpack.c.0.s8 %v3169
          %v3171 = vlaneseq
          %v3172 = vshrl.u32 %v3171, 7
          %v3173 = vsub.s32 %v3170, %v3172
          %v3174 = vrot.slane %v3160, %v3173
          %v3175 = vcombine.low %v3151, %v3167
          %v3176 = vcombine.high %v3151, %v3167
          %v3177 = vcombine.low %v3158, %v3174
          %v3178 = vcombine.high %v3158, %v3174
          %v3179 = vcombine.low %v2675, %v2682
          %v3181 = vunpack.c.l.s4 1983009808
          %v3182 = vunpack.c.0.s8 %v3181
          %v3183 = vlaneseq
          %v3184 = vshrl.u32 %v3183, 7
          %v3185 = vsub.s32 %v3182, %v3184
          %v3186 = vrot.slane %v3179, %v3185
          %v3187 = vcombine.low %v2699, %v2700
          %v3189 = vunpack.c.l.s4 1983009808
          %v3190 = vunpack.c.0.s8 %v3189
          %v3191 = vlaneseq
          %v3192 = vshrl.u32 %v3191, 7
          %v3193 = vsub.s32 %v3190, %v3192
          %v3194 = vrot.slane %v3187, %v3193
          %v3195 = vcombine.low %v2691, %v2698
          %v3197 = vunpack.c.l.s4 1983009808
          %v3198 = vunpack.c.0.s8 %v3197
          %v3199 = vlaneseq
          %v3200 = vshrl.u32 %v3199, 7
          %v3201 = vsub.s32 %v3198, %v3200
          %v3202 = vrot.slane %v3195, %v3201
          %v3203 = vcombine.low %v2701, %v2702
          %v3205 = vunpack.c.l.s4 1983009808
          %v3206 = vunpack.c.0.s8 %v3205
          %v3207 = vlaneseq
          %v3208 = vshrl.u32 %v3207, 7
          %v3209 = vsub.s32 %v3206, %v3208
          %v3210 = vrot.slane %v3203, %v3209
          %v3211 = vcombine.low %v3186, %v3194
          %v3212 = vcombine.high %v3186, %v3194
          %v3214 = vunpack.c.l.s4 1934713408
          %v3215 = vunpack.c.0.s8 %v3214
          %v3216 = vlaneseq
          %v3217 = vshrl.u32 %v3216, 7
          %v3218 = vsub.s32 %v3215, %v3217
          %v3219 = vrot.slane %v3211, %v3218
          %v3221 = vunpack.c.l.s4 1934713408
          %v3222 = vunpack.c.0.s8 %v3221
          %v3223 = vlaneseq
          %v3224 = vshrl.u32 %v3223, 7
          %v3225 = vsub.s32 %v3222, %v3224
          %v3226 = vrot.slane %v3212, %v3225
          %v3227 = vcombine.low %v3202, %v3210
          %v3228 = vcombine.high %v3202, %v3210
          %v3230 = vunpack.c.l.s4 1934713408
          %v3231 = vunpack.c.0.s8 %v3230
          %v3232 = vlaneseq
          %v3233 = vshrl.u32 %v3232, 7
          %v3234 = vsub.s32 %v3231, %v3233
          %v3235 = vrot.slane %v3227, %v3234
          %v3237 = vunpack.c.l.s4 1934713408
          %v3238 = vunpack.c.0.s8 %v3237
          %v3239 = vlaneseq
          %v3240 = vshrl.u32 %v3239, 7
          %v3241 = vsub.s32 %v3238, %v3240
          %v3242 = vrot.slane %v3228, %v3241
          %v3243 = vcombine.low %v3219, %v3235
          %v3244 = vcombine.high %v3219, %v3235
          %v3245 = vcombine.low %v3226, %v3242
          %v3246 = vcombine.high %v3226, %v3242
          %v3247 = vcombine.low %v2743, %v2750
          %v3249 = vunpack.c.l.s4 1983009808
          %v3250 = vunpack.c.0.s8 %v3249
          %v3251 = vlaneseq
          %v3252 = vshrl.u32 %v3251, 7
          %v3253 = vsub.s32 %v3250, %v3252
          %v3254 = vrot.slane %v3247, %v3253
          %v3255 = vcombine.low %v2767, %v2768
          %v3257 = vunpack.c.l.s4 1983009808
          %v3258 = vunpack.c.0.s8 %v3257
          %v3259 = vlaneseq
          %v3260 = vshrl.u32 %v3259, 7
          %v3261 = vsub.s32 %v3258, %v3260
          %v3262 = vrot.slane %v3255, %v3261
          %v3263 = vcombine.low %v2759, %v2766
          %v3265 = vunpack.c.l.s4 1983009808
          %v3266 = vunpack.c.0.s8 %v3265
          %v3267 = vlaneseq
          %v3268 = vshrl.u32 %v3267, 7
          %v3269 = vsub.s32 %v3266, %v3268
          %v3270 = vrot.slane %v3263, %v3269
          %v3271 = vcombine.low %v2769, %v2770
          %v3273 = vunpack.c.l.s4 1983009808
          %v3274 = vunpack.c.0.s8 %v3273
          %v3275 = vlaneseq
          %v3276 = vshrl.u32 %v3275, 7
          %v3277 = vsub.s32 %v3274, %v3276
          %v3278 = vrot.slane %v3271, %v3277
          %v3279 = vcombine.low %v3254, %v3262
          %v3280 = vcombine.high %v3254, %v3262
          %v3282 = vunpack.c.l.s4 1934713408
          %v3283 = vunpack.c.0.s8 %v3282
          %v3284 = vlaneseq
          %v3285 = vshrl.u32 %v3284, 7
          %v3286 = vsub.s32 %v3283, %v3285
          %v3287 = vrot.slane %v3279, %v3286
          %v3289 = vunpack.c.l.s4 1934713408
          %v3290 = vunpack.c.0.s8 %v3289
          %v3291 = vlaneseq
          %v3292 = vshrl.u32 %v3291, 7
          %v3293 = vsub.s32 %v3290, %v3292
          %v3294 = vrot.slane %v3280, %v3293
          %v3295 = vcombine.low %v3270, %v3278
          %v3296 = vcombine.high %v3270, %v3278
          %v3298 = vunpack.c.l.s4 1934713408
          %v3299 = vunpack.c.0.s8 %v3298
          %v3300 = vlaneseq
          %v3301 = vshrl.u32 %v3300, 7
          %v3302 = vsub.s32 %v3299, %v3301
          %v3303 = vrot.slane %v3295, %v3302
          %v3305 = vunpack.c.l.s4 1934713408
          %v3306 = vunpack.c.0.s8 %v3305
          %v3307 = vlaneseq
          %v3308 = vshrl.u32 %v3307, 7
          %v3309 = vsub.s32 %v3306, %v3308
          %v3310 = vrot.slane %v3296, %v3309
          %v3311 = vcombine.low %v3287, %v3303
          %v3312 = vcombine.high %v3287, %v3303
          %v3313 = vcombine.low %v3294, %v3310
          %v3314 = vcombine.high %v3294, %v3310
          %v3315 = vpack.c.bf16 %v1735, %v1667
          %v3316 = vpack.c.bf16 %v1871, %v1803
          %v3317 = vpack.c.bf16 %v2007, %v1939
          %v3318 = vpack.c.bf16 %v2143, %v2075
          %v3319 = vpack.c.bf16 %v1736, %v1668
          %v3320 = vpack.c.bf16 %v1872, %v1804
          %v3321 = vpack.c.bf16 %v2008, %v1940
          %v3322 = vpack.c.bf16 %v2144, %v2076
          %v3323 = vpack.c.bf16 %v1737, %v1669
          %v3324 = vpack.c.bf16 %v1873, %v1805
          %v3325 = vpack.c.bf16 %v2009, %v1941
          %v3326 = vpack.c.bf16 %v2145, %v2077
          %v3327 = vpack.c.bf16 %v1738, %v1670
          %v3328 = vpack.c.bf16 %v1874, %v1806
          %v3329 = vpack.c.bf16 %v2010, %v1942
          %v3330 = vpack.c.bf16 %v2146, %v2078
          %s3331 = sshra.s32 %s573, 4
          %s3332 = sand.u32 %s573, 15
          %s3333 = smul.addr %s3331, 8
          %s3334 = scalar_lea.vmem [#allocation3], %s3333
          %vm3335 = vcmask 261120
          %3336 = vst.msk [vmem:[%s3334] sm:$0xff] %vm3335, %v3315
          %3337 = vst.msk [vmem:[%s3334 + $0x8] sm:$0xff] %vm3335, %v3316
          %3338 = vst.msk [vmem:[%s3334 + $0x10] sm:$0xff] %vm3335, %v3317
          %3339 = vst.msk [vmem:[%s3334 + $0x18] sm:$0xff] %vm3335, %v3318
          %3340 = vst.msk [vmem:[%s3334 + $0x40] sm:$0xff] %vm3335, %v3319
          %3341 = vst.msk [vmem:[%s3334 + $0x48] sm:$0xff] %vm3335, %v3320
          %3342 = vst.msk [vmem:[%s3334 + $0x50] sm:$0xff] %vm3335, %v3321
          %3343 = vst.msk [vmem:[%s3334 + $0x58] sm:$0xff] %vm3335, %v3322
          %3344 = vst.msk [vmem:[%s3334 + $0x80] sm:$0xff] %vm3335, %v3323
          %3345 = vst.msk [vmem:[%s3334 + $0x88] sm:$0xff] %vm3335, %v3324
          %3346 = vst.msk [vmem:[%s3334 + $0x90] sm:$0xff] %vm3335, %v3325
          %3347 = vst.msk [vmem:[%s3334 + $0x98] sm:$0xff] %vm3335, %v3326
          %3348 = vst.msk [vmem:[%s3334 + $0xc0] sm:$0xff] %vm3335, %v3327
          %3349 = vst.msk [vmem:[%s3334 + $0xc8] sm:$0xff] %vm3335, %v3328
          %3350 = vst.msk [vmem:[%s3334 + $0xd0] sm:$0xff] %vm3335, %v3329
          %3351 = vst.msk [vmem:[%s3334 + $0xd8] sm:$0xff] %vm3335, %v3330
          %v3352 = vpack.c.bf16 %v2903, %v2835
          %v3353 = vpack.c.bf16 %v3039, %v2971
          %v3354 = vpack.c.bf16 %v3175, %v3107
          %v3355 = vpack.c.bf16 %v3311, %v3243
          %v3356 = vpack.c.bf16 %v2904, %v2836
          %v3357 = vpack.c.bf16 %v3040, %v2972
          %v3358 = vpack.c.bf16 %v3176, %v3108
          %v3359 = vpack.c.bf16 %v3312, %v3244
          %v3360 = vpack.c.bf16 %v2905, %v2837
          %v3361 = vpack.c.bf16 %v3041, %v2973
          %v3362 = vpack.c.bf16 %v3177, %v3109
          %v3363 = vpack.c.bf16 %v3313, %v3245
          %v3364 = vpack.c.bf16 %v2906, %v2838
          %v3365 = vpack.c.bf16 %v3042, %v2974
          %v3366 = vpack.c.bf16 %v3178, %v3110
          %v3367 = vpack.c.bf16 %v3314, %v3246
          %s3368 = smul.addr %s3331, 8
          %s3369 = scalar_lea.vmem [#allocation4], %s3368
          %3370 = vst.msk [vmem:[%s3369] sm:$0xff] %vm3335, %v3352
          %3371 = vst.msk [vmem:[%s3369 + $0x8] sm:$0xff] %vm3335, %v3353
          %3372 = vst.msk [vmem:[%s3369 + $0x10] sm:$0xff] %vm3335, %v3354
          %3373 = vst.msk [vmem:[%s3369 + $0x18] sm:$0xff] %vm3335, %v3355
          %3374 = vst.msk [vmem:[%s3369 + $0x40] sm:$0xff] %vm3335, %v3356
          %3375 = vst.msk [vmem:[%s3369 + $0x48] sm:$0xff] %vm3335, %v3357
          %3376 = vst.msk [vmem:[%s3369 + $0x50] sm:$0xff] %vm3335, %v3358
          %3377 = vst.msk [vmem:[%s3369 + $0x58] sm:$0xff] %vm3335, %v3359
          %3378 = vst.msk [vmem:[%s3369 + $0x80] sm:$0xff] %vm3335, %v3360
          %3379 = vst.msk [vmem:[%s3369 + $0x88] sm:$0xff] %vm3335, %v3361
          %3380 = vst.msk [vmem:[%s3369 + $0x90] sm:$0xff] %vm3335, %v3362
          %3381 = vst.msk [vmem:[%s3369 + $0x98] sm:$0xff] %vm3335, %v3363
          %3382 = vst.msk [vmem:[%s3369 + $0xc0] sm:$0xff] %vm3335, %v3364
          %3383 = vst.msk [vmem:[%s3369 + $0xc8] sm:$0xff] %vm3335, %v3365
          %3384 = vst.msk [vmem:[%s3369 + $0xd0] sm:$0xff] %vm3335, %v3366
          %3385 = vst.msk [vmem:[%s3369 + $0xd8] sm:$0xff] %vm3335, %v3367
        $region96: #{tpu_custom_call.1} parent=67 // pred_fallthru
          _
        %p3386 = scmp.eq.s32.totalorder %s41, 0
        // Predicated region
        $region97: #{tpu_custom_call.1} parent=67 // pred_check
          %p3387 = pneg %p3386
        $region98: #{tpu_custom_call.1} parent=67 // pred_check_branch
          %3389 = sbr.rel (%p3387) target = $region100
        $region99: #{tpu_custom_call.1} parent=67 // pred_region
          %v3390 = vld [vmem:[%s494] sm:$0xff]
          %v3391 = vld [vmem:[%s494 + $0x8] sm:$0xff]
          %v3392 = vld [vmem:[%s494 + $0x10] sm:$0xff]
          %v3393 = vld [vmem:[%s494 + $0x18] sm:$0xff]
          %v3394 = vld [vmem:[%s494 + $0x20] sm:$0xff]
          %v3395 = vld [vmem:[%s494 + $0x28] sm:$0xff]
          %v3396 = vld [vmem:[%s494 + $0x30] sm:$0xff]
          %v3397 = vld [vmem:[%s494 + $0x38] sm:$0xff]
          %3398 = vadd.xlane.f32.xlu0 %v3390
          %v3399 = vpop.xlane.xlu0 %3398
          %3400 = vadd.xlane.f32.xlu0 %v3391
          %v3401 = vpop.xlane.xlu0 %3400
          %3402 = vadd.xlane.f32.xlu0 %v3392
          %v3403 = vpop.xlane.xlu0 %3402
          %3404 = vadd.xlane.f32.xlu0 %v3393
          %v3405 = vpop.xlane.xlu0 %3404
          %3406 = vadd.xlane.f32.xlu0 %v3394
          %v3407 = vpop.xlane.xlu0 %3406
          %3408 = vadd.xlane.f32.xlu0 %v3395
          %v3409 = vpop.xlane.xlu0 %3408
          %3410 = vadd.xlane.f32.xlu0 %v3396
          %v3411 = vpop.xlane.xlu0 %3410
          %3412 = vadd.xlane.f32.xlu0 %v3397
          %v3413 = vpop.xlane.xlu0 %3412
          %v3414 = vrcp.pop 128.0
          %v3415 = vmul.f32 %v3399, %v3414
          %v3416 = vmul.f32 %v3401, %v3414
          %v3417 = vmul.f32 %v3403, %v3414
          %v3418 = vmul.f32 %v3405, %v3414
          %v3419 = vmul.f32 %v3407, %v3414
          %v3420 = vmul.f32 %v3409, %v3414
          %v3421 = vmul.f32 %v3411, %v3414
          %v3422 = vmul.f32 %v3413, %v3414
          %v3423 = vsub.f32 %v3390, %v3415
          %v3424 = vsub.f32 %v3391, %v3416
          %v3425 = vsub.f32 %v3392, %v3417
          %v3426 = vsub.f32 %v3393, %v3418
          %v3427 = vsub.f32 %v3394, %v3419
          %v3428 = vsub.f32 %v3395, %v3420
          %v3429 = vsub.f32 %v3396, %v3421
          %v3430 = vsub.f32 %v3397, %v3422
          %v3431 = vmul.f32 %v3423, %v3423
          %v3432 = vmul.f32 %v3424, %v3424
          %v3433 = vmul.f32 %v3425, %v3425
          %v3434 = vmul.f32 %v3426, %v3426
          %v3435 = vmul.f32 %v3427, %v3427
          %v3436 = vmul.f32 %v3428, %v3428
          %v3437 = vmul.f32 %v3429, %v3429
          %v3438 = vmul.f32 %v3430, %v3430
          %3439 = vadd.xlane.f32.xlu0 %v3431
          %v3440 = vpop.xlane.xlu0 %3439
          %3441 = vadd.xlane.f32.xlu0 %v3432
          %v3442 = vpop.xlane.xlu0 %3441
          %3443 = vadd.xlane.f32.xlu0 %v3433
          %v3444 = vpop.xlane.xlu0 %3443
          %3445 = vadd.xlane.f32.xlu0 %v3434
          %v3446 = vpop.xlane.xlu0 %3445
          %3447 = vadd.xlane.f32.xlu0 %v3435
          %v3448 = vpop.xlane.xlu0 %3447
          %3449 = vadd.xlane.f32.xlu0 %v3436
          %v3450 = vpop.xlane.xlu0 %3449
          %3451 = vadd.xlane.f32.xlu0 %v3437
          %v3452 = vpop.xlane.xlu0 %3451
          %3453 = vadd.xlane.f32.xlu0 %v3438
          %v3454 = vpop.xlane.xlu0 %3453
          %v3455 = vmul.f32 %v3440, %v3414
          %v3456 = vmul.f32 %v3442, %v3414
          %v3457 = vmul.f32 %v3444, %v3414
          %v3458 = vmul.f32 %v3446, %v3414
          %v3459 = vmul.f32 %v3448, %v3414
          %v3460 = vmul.f32 %v3450, %v3414
          %v3461 = vmul.f32 %v3452, %v3414
          %v3462 = vmul.f32 %v3454, %v3414
          %v3463 = vadd.f32 %v3455, 1e-05
          %v3464 = vadd.f32 %v3456, 1e-05
          %v3465 = vadd.f32 %v3457, 1e-05
          %v3466 = vadd.f32 %v3458, 1e-05
          %v3467 = vadd.f32 %v3459, 1e-05
          %v3468 = vadd.f32 %v3460, 1e-05
          %v3469 = vadd.f32 %v3461, 1e-05
          %v3470 = vadd.f32 %v3462, 1e-05
          %v3471 = vrsqrt.pop %v3463
          %v3472 = vrsqrt.pop %v3464
          %v3473 = vrsqrt.pop %v3465
          %v3474 = vrsqrt.pop %v3466
          %v3475 = vrsqrt.pop %v3467
          %v3476 = vrsqrt.pop %v3468
          %v3477 = vrsqrt.pop %v3469
          %v3478 = vrsqrt.pop %v3470
          %v3479 = vmul.f32 %v3423, %v3471
          %v3480 = vmul.f32 %v3424, %v3472
          %v3481 = vmul.f32 %v3425, %v3473
          %v3482 = vmul.f32 %v3426, %v3474
          %v3483 = vmul.f32 %v3427, %v3475
          %v3484 = vmul.f32 %v3428, %v3476
          %v3485 = vmul.f32 %v3429, %v3477
          %v3486 = vmul.f32 %v3430, %v3478
          %v3488 = vlaneseq
          %v3489 = vshrl.u32 %v3488, 7
          %v3490 = vsub.s32 0, %v3489
          %v3491 = vrot.slane %v571, %v3490
          %v3493 = vmul.f32 %v3479, %v3491
          %v3494 = vmul.f32 %v3480, %v3491
          %v3495 = vmul.f32 %v3481, %v3491
          %v3496 = vmul.f32 %v3482, %v3491
          %v3497 = vmul.f32 %v3483, %v3491
          %v3498 = vmul.f32 %v3484, %v3491
          %v3499 = vmul.f32 %v3485, %v3491
          %v3500 = vmul.f32 %v3486, %v3491
          %v3502 = vlaneseq
          %v3503 = vshrl.u32 %v3502, 7
          %v3504 = vsub.s32 0, %v3503
          %v3505 = vrot.slane %v572, %v3504
          %v3507 = vadd.f32 %v3493, %v3505
          %v3508 = vadd.f32 %v3494, %v3505
          %v3509 = vadd.f32 %v3495, %v3505
          %v3510 = vadd.f32 %v3496, %v3505
          %v3511 = vadd.f32 %v3497, %v3505
          %v3512 = vadd.f32 %v3498, %v3505
          %v3513 = vadd.f32 %v3499, %v3505
          %v3514 = vadd.f32 %v3500, %v3505
          %v3515 = vpack.c.bf16 %v3508, %v3507
          %v3516 = vpack.c.bf16 %v3510, %v3509
          %v3517 = vpack.c.bf16 %v3512, %v3511
          %v3518 = vpack.c.bf16 %v3514, %v3513
          %v3519 = vld [vmem:[#allocation13] sm:$0xf]
          %v3520 = vld [vmem:[#allocation13 + $0x4] sm:$0xf]
          %v3521 = vld [vmem:[#allocation13 + $0x8] sm:$0xf]
          %v3522 = vld [vmem:[#allocation13 + $0xc] sm:$0xf]
          %v3523 = vld [vmem:[#allocation13 + $0x10] sm:$0xf]
          %v3524 = vld [vmem:[#allocation13 + $0x14] sm:$0xf]
          %v3525 = vld [vmem:[#allocation13 + $0x18] sm:$0xf]
          %v3526 = vld [vmem:[#allocation13 + $0x1c] sm:$0xf]
          %v3527 = vld [vmem:[#allocation13 + $0x20] sm:$0xf]
          %v3528 = vld [vmem:[#allocation13 + $0x24] sm:$0xf]
          %v3529 = vld [vmem:[#allocation13 + $0x28] sm:$0xf]
          %v3530 = vld [vmem:[#allocation13 + $0x2c] sm:$0xf]
          %v3531 = vld [vmem:[#allocation13 + $0x30] sm:$0xf]
          %v3532 = vld [vmem:[#allocation13 + $0x34] sm:$0xf]
          %v3533 = vld [vmem:[#allocation13 + $0x38] sm:$0xf]
          %v3534 = vld [vmem:[#allocation13 + $0x3c] sm:$0xf]
          %v3535 = vld [vmem:[%s7] sm:$0x1]
          %v3537 = vlaneseq
          %v3538 = vshrl.u32 %v3537, 7
          %v3539 = vsub.s32 0, %v3538
          %v3540 = vrot.slane %v3535, %v3539
          %v3558 = vunpack.c.l.b16 %v3519
          %v3559 = vunpack.c.l.b16 %v3520
          %v3560 = vunpack.c.l.b16 %v3521
          %v3561 = vunpack.c.l.b16 %v3522
          %v3562 = vunpack.c.l.b16 %v3523
          %v3563 = vunpack.c.l.b16 %v3524
          %v3564 = vunpack.c.l.b16 %v3525
          %v3565 = vunpack.c.l.b16 %v3526
          %v3566 = vunpack.c.l.b16 %v3527
          %v3567 = vunpack.c.l.b16 %v3528
          %v3568 = vunpack.c.l.b16 %v3529
          %v3569 = vunpack.c.l.b16 %v3530
          %v3570 = vunpack.c.l.b16 %v3531
          %v3571 = vunpack.c.l.b16 %v3532
          %v3572 = vunpack.c.l.b16 %v3533
          %v3573 = vunpack.c.l.b16 %v3534
          %v3574 = vpack.c.b16 %v3559, %v3558
          %v3575 = vpack.c.b16 %v3561, %v3560
          %v3576 = vpack.c.b16 %v3563, %v3562
          %v3577 = vpack.c.b16 %v3565, %v3564
          %v3578 = vpack.c.b16 %v3567, %v3566
          %v3579 = vpack.c.b16 %v3569, %v3568
          %v3580 = vpack.c.b16 %v3571, %v3570
          %v3581 = vpack.c.b16 %v3573, %v3572
          %3590 = vmatprep.subr.bf16.mxu0 0
          %3591 = vmatpush1.bf16.msra.mxu0 %v3574
          %3592 = vmatprep.subr.bf16.mxu0 0
          %3593 = vmatpush1.bf16.msra.mxu0 %v3575
          %3594 = vmatprep.subr.bf16.mxu0 0
          %3595 = vmatpush1.bf16.msra.mxu0 %v3576
          %3596 = vmatprep.subr.bf16.mxu0 0
          %3597 = vmatpush1.bf16.msra.mxu0 %v3577
          %3598 = vmatprep.subr.bf16.mxu0 0
          %3599 = vmatpush1.bf16.msra.mxu0 %v3578
          %3600 = vmatprep.subr.bf16.mxu0 0
          %3601 = vmatpush1.bf16.msra.mxu0 %v3579
          %3602 = vmatprep.subr.bf16.mxu0 0
          %3603 = vmatpush1.bf16.msra.mxu0 %v3580
          %3604 = vmatprep.subr.bf16.mxu0 0
          %3605 = vmatpush1.bf16.msra.mxu0 %v3581
          %3606 = vmatprep.subr.bf16.mxu0 0
          %3607 = vmatpush1.bf16.msra.mxu0 0
          %3608 = vmatprep.subr.bf16.mxu0 0
          %3609 = vmatpush1.bf16.msra.mxu0 0
          %3610 = vmatprep.subr.bf16.mxu0 0
          %3611 = vmatpush1.bf16.msra.mxu0 0
          %3612 = vmatprep.subr.bf16.mxu0 0
          %3613 = vmatpush1.bf16.msra.mxu0 0
          %3614 = vmatprep.subr.bf16.mxu0 0
          %3615 = vmatpush1.bf16.msra.mxu0 0
          %3616 = vmatprep.subr.bf16.mxu0 0
          %3617 = vmatpush1.bf16.msra.mxu0 0
          %3618 = vmatprep.subr.bf16.mxu0 0
          %3619 = vmatpush1.bf16.msra.mxu0 0
          %3620 = vmatprep.subr.bf16.mxu0 0
          %3621 = vmatpush1.bf16.msra.mxu0 0
          %3622 = vmatprep.mubr.bf16.mxu0 0
          %3623 = vmatmul.mubr.bf16.gmra.mrb[0].mxu0 %v3515
          %v3624 = vpop.f32.mrb[0].mxu0
          %v3625 = vadd.f32 %v3540, %v3624
          %v3626 = vpop.f32.mrb[0].mxu0
          %v3627 = vpop.f32.mrb[0].mxu0
          %v3628 = vadd.f32 %v3540, %v3627
          %v3629 = vpop.f32.mrb[0].mxu0
          %3630 = vmatprep.mubr.bf16.mxu0 0
          %3631 = vmatmul.mubr.bf16.gmra.mrb[0].mxu0 %v3516
          %v3632 = vpop.f32.mrb[0].mxu0
          %v3633 = vadd.f32 %v3540, %v3632
          %v3634 = vpop.f32.mrb[0].mxu0
          %v3635 = vpop.f32.mrb[0].mxu0
          %v3636 = vadd.f32 %v3540, %v3635
          %v3637 = vpop.f32.mrb[0].mxu0
          %3638 = vmatprep.mubr.bf16.mxu0 0
          %3639 = vmatmul.mubr.bf16.gmra.mrb[0].mxu0 %v3517
          %v3640 = vpop.f32.mrb[0].mxu0
          %v3641 = vadd.f32 %v3540, %v3640
          %v3642 = vpop.f32.mrb[0].mxu0
          %v3643 = vpop.f32.mrb[0].mxu0
          %v3644 = vadd.f32 %v3540, %v3643
          %v3645 = vpop.f32.mrb[0].mxu0
          %3646 = vmatprep.mubr.bf16.mxu0 0
          %3647 = vmatmul.mubr.bf16.gmra.mrb[0].mxu0 %v3518
          %v3648 = vpop.f32.mrb[0].mxu0
          %v3649 = vadd.f32 %v3540, %v3648
          %v3650 = vpop.f32.mrb[0].mxu0
          %v3651 = vpop.f32.mrb[0].mxu0
          %v3652 = vadd.f32 %v3540, %v3651
          %v3653 = vpop.f32.mrb[0].mxu0
          %3654 = vdwg.mxu0
          %v3655 = vmul.f32 %v3625, 0.17677669
          %v3656 = vmul.f32 %v3628, 0.17677669
          %v3657 = vmul.f32 %v3633, 0.17677669
          %v3658 = vmul.f32 %v3636, 0.17677669
          %v3659 = vmul.f32 %v3641, 0.17677669
          %v3660 = vmul.f32 %v3644, 0.17677669
          %v3661 = vmul.f32 %v3649, 0.17677669
          %v3662 = vmul.f32 %v3652, 0.17677669
          %3671 = vrot.lane.b32.xlu0 %v3655, 96
          %v3672 = vpop.permute.xlu0 %3671
          %3673 = vrot.lane.b32.xlu0 %v3656, 96
          %v3674 = vpop.permute.xlu0 %3673
          %3675 = vrot.lane.b32.xlu0 %v3657, 96
          %v3676 = vpop.permute.xlu0 %3675
          %3677 = vrot.lane.b32.xlu0 %v3658, 96
          %v3678 = vpop.permute.xlu0 %3677
          %3679 = vrot.lane.b32.xlu0 %v3659, 96
          %v3680 = vpop.permute.xlu0 %3679
          %3681 = vrot.lane.b32.xlu0 %v3660, 96
          %v3682 = vpop.permute.xlu0 %3681
          %3683 = vrot.lane.b32.xlu0 %v3661, 96
          %v3684 = vpop.permute.xlu0 %3683
          %3685 = vrot.lane.b32.xlu0 %v3662, 96
          %v3686 = vpop.permute.xlu0 %3685
          %3695 = vrot.lane.b32.xlu0 %v3655, 64
          %v3696 = vpop.permute.xlu0 %3695
          %3697 = vrot.lane.b32.xlu0 %v3656, 64
          %v3698 = vpop.permute.xlu0 %3697
          %3699 = vrot.lane.b32.xlu0 %v3657, 64
          %v3700 = vpop.permute.xlu0 %3699
          %3701 = vrot.lane.b32.xlu0 %v3658, 64
          %v3702 = vpop.permute.xlu0 %3701
          %3703 = vrot.lane.b32.xlu0 %v3659, 64
          %v3704 = vpop.permute.xlu0 %3703
          %3705 = vrot.lane.b32.xlu0 %v3660, 64
          %v3706 = vpop.permute.xlu0 %3705
          %3707 = vrot.lane.b32.xlu0 %v3661, 64
          %v3708 = vpop.permute.xlu0 %3707
          %3709 = vrot.lane.b32.xlu0 %v3662, 64
          %v3710 = vpop.permute.xlu0 %3709
          %3719 = vrot.lane.b32.xlu0 %v3655, 32
          %v3720 = vpop.permute.xlu0 %3719
          %3721 = vrot.lane.b32.xlu0 %v3656, 32
          %v3722 = vpop.permute.xlu0 %3721
          %3723 = vrot.lane.b32.xlu0 %v3657, 32
          %v3724 = vpop.permute.xlu0 %3723
          %3725 = vrot.lane.b32.xlu0 %v3658, 32
          %v3726 = vpop.permute.xlu0 %3725
          %3727 = vrot.lane.b32.xlu0 %v3659, 32
          %v3728 = vpop.permute.xlu0 %3727
          %3729 = vrot.lane.b32.xlu0 %v3660, 32
          %v3730 = vpop.permute.xlu0 %3729
          %3731 = vrot.lane.b32.xlu0 %v3661, 32
          %v3732 = vpop.permute.xlu0 %3731
          %3733 = vrot.lane.b32.xlu0 %v3662, 32
          %v3734 = vpop.permute.xlu0 %3733
          %v3743 = vcombine.low %v3655, %v3696
          %v3744 = vcombine.high %v3655, %v3696
          %v3746 = vunpack.c.l.s4 1983009808
          %v3747 = vunpack.c.0.s8 %v3746
          %v3748 = vlaneseq
          %v3749 = vshrl.u32 %v3748, 7
          %v3750 = vsub.s32 %v3747, %v3749
          %v3751 = vrot.slane %v3743, %v3750
          %v3753 = vunpack.c.l.s4 1983009808
          %v3754 = vunpack.c.0.s8 %v3753
          %v3755 = vlaneseq
          %v3756 = vshrl.u32 %v3755, 7
          %v3757 = vsub.s32 %v3754, %v3756
          %v3758 = vrot.slane %v3744, %v3757
          %v3759 = vcombine.low %v3672, %v3720
          %v3760 = vcombine.high %v3672, %v3720
          %v3762 = vunpack.c.l.s4 1983009808
          %v3763 = vunpack.c.0.s8 %v3762
          %v3764 = vlaneseq
          %v3765 = vshrl.u32 %v3764, 7
          %v3766 = vsub.s32 %v3763, %v3765
          %v3767 = vrot.slane %v3759, %v3766
          %v3769 = vunpack.c.l.s4 1983009808
          %v3770 = vunpack.c.0.s8 %v3769
          %v3771 = vlaneseq
          %v3772 = vshrl.u32 %v3771, 7
          %v3773 = vsub.s32 %v3770, %v3772
          %v3774 = vrot.slane %v3760, %v3773
          %v3775 = vcombine.low %v3751, %v3767
          %v3776 = vcombine.high %v3751, %v3767
          %v3778 = vunpack.c.l.s4 1934713408
          %v3779 = vunpack.c.0.s8 %v3778
          %v3780 = vlaneseq
          %v3781 = vshrl.u32 %v3780, 7
          %v3782 = vsub.s32 %v3779, %v3781
          %v3783 = vrot.slane %v3775, %v3782
          %v3785 = vunpack.c.l.s4 1934713408
          %v3786 = vunpack.c.0.s8 %v3785
          %v3787 = vlaneseq
          %v3788 = vshrl.u32 %v3787, 7
          %v3789 = vsub.s32 %v3786, %v3788
          %v3790 = vrot.slane %v3776, %v3789
          %v3791 = vcombine.low %v3758, %v3774
          %v3792 = vcombine.high %v3758, %v3774
          %v3794 = vunpack.c.l.s4 1934713408
          %v3795 = vunpack.c.0.s8 %v3794
          %v3796 = vlaneseq
          %v3797 = vshrl.u32 %v3796, 7
          %v3798 = vsub.s32 %v3795, %v3797
          %v3799 = vrot.slane %v3791, %v3798
          %v3801 = vunpack.c.l.s4 1934713408
          %v3802 = vunpack.c.0.s8 %v3801
          %v3803 = vlaneseq
          %v3804 = vshrl.u32 %v3803, 7
          %v3805 = vsub.s32 %v3802, %v3804
          %v3806 = vrot.slane %v3792, %v3805
          %v3807 = vcombine.high %v3783, 0.0
          %v3808 = vcombine.high %v3790, 0.0
          %v3809 = vcombine.high %v3799, 0.0
          %v3810 = vcombine.high %v3806, 0.0
          %v3811 = vcombine.low %v3656, %v3698
          %v3812 = vcombine.high %v3656, %v3698
          %v3814 = vunpack.c.l.s4 1983009808
          %v3815 = vunpack.c.0.s8 %v3814
          %v3816 = vlaneseq
          %v3817 = vshrl.u32 %v3816, 7
          %v3818 = vsub.s32 %v3815, %v3817
          %v3819 = vrot.slane %v3811, %v3818
          %v3821 = vunpack.c.l.s4 1983009808
          %v3822 = vunpack.c.0.s8 %v3821
          %v3823 = vlaneseq
          %v3824 = vshrl.u32 %v3823, 7
          %v3825 = vsub.s32 %v3822, %v3824
          %v3826 = vrot.slane %v3812, %v3825
          %v3827 = vcombine.low %v3674, %v3722
          %v3828 = vcombine.high %v3674, %v3722
          %v3830 = vunpack.c.l.s4 1983009808
          %v3831 = vunpack.c.0.s8 %v3830
          %v3832 = vlaneseq
          %v3833 = vshrl.u32 %v3832, 7
          %v3834 = vsub.s32 %v3831, %v3833
          %v3835 = vrot.slane %v3827, %v3834
          %v3837 = vunpack.c.l.s4 1983009808
          %v3838 = vunpack.c.0.s8 %v3837
          %v3839 = vlaneseq
          %v3840 = vshrl.u32 %v3839, 7
          %v3841 = vsub.s32 %v3838, %v3840
          %v3842 = vrot.slane %v3828, %v3841
          %v3843 = vcombine.low %v3819, %v3835
          %v3844 = vcombine.high %v3819, %v3835
          %v3846 = vunpack.c.l.s4 1934713408
          %v3847 = vunpack.c.0.s8 %v3846
          %v3848 = vlaneseq
          %v3849 = vshrl.u32 %v3848, 7
          %v3850 = vsub.s32 %v3847, %v3849
          %v3851 = vrot.slane %v3843, %v3850
          %v3853 = vunpack.c.l.s4 1934713408
          %v3854 = vunpack.c.0.s8 %v3853
          %v3855 = vlaneseq
          %v3856 = vshrl.u32 %v3855, 7
          %v3857 = vsub.s32 %v3854, %v3856
          %v3858 = vrot.slane %v3844, %v3857
          %v3859 = vcombine.low %v3826, %v3842
          %v3860 = vcombine.high %v3826, %v3842
          %v3862 = vunpack.c.l.s4 1934713408
          %v3863 = vunpack.c.0.s8 %v3862
          %v3864 = vlaneseq
          %v3865 = vshrl.u32 %v3864, 7
          %v3866 = vsub.s32 %v3863, %v3865
          %v3867 = vrot.slane %v3859, %v3866
          %v3869 = vunpack.c.l.s4 1934713408
          %v3870 = vunpack.c.0.s8 %v3869
          %v3871 = vlaneseq
          %v3872 = vshrl.u32 %v3871, 7
          %v3873 = vsub.s32 %v3870, %v3872
          %v3874 = vrot.slane %v3860, %v3873
          %v3875 = vcombine.high %v3851, 0.0
          %v3876 = vcombine.high %v3858, 0.0
          %v3877 = vcombine.high %v3867, 0.0
          %v3878 = vcombine.high %v3874, 0.0
          %v3879 = vcombine.low %v3657, %v3700
          %v3880 = vcombine.high %v3657, %v3700
          %v3882 = vunpack.c.l.s4 1983009808
          %v3883 = vunpack.c.0.s8 %v3882
          %v3884 = vlaneseq
          %v3885 = vshrl.u32 %v3884, 7
          %v3886 = vsub.s32 %v3883, %v3885
          %v3887 = vrot.slane %v3879, %v3886
          %v3889 = vunpack.c.l.s4 1983009808
          %v3890 = vunpack.c.0.s8 %v3889
          %v3891 = vlaneseq
          %v3892 = vshrl.u32 %v3891, 7
          %v3893 = vsub.s32 %v3890, %v3892
          %v3894 = vrot.slane %v3880, %v3893
          %v3895 = vcombine.low %v3676, %v3724
          %v3896 = vcombine.high %v3676, %v3724
          %v3898 = vunpack.c.l.s4 1983009808
          %v3899 = vunpack.c.0.s8 %v3898
          %v3900 = vlaneseq
          %v3901 = vshrl.u32 %v3900, 7
          %v3902 = vsub.s32 %v3899, %v3901
          %v3903 = vrot.slane %v3895, %v3902
          %v3905 = vunpack.c.l.s4 1983009808
          %v3906 = vunpack.c.0.s8 %v3905
          %v3907 = vlaneseq
          %v3908 = vshrl.u32 %v3907, 7
          %v3909 = vsub.s32 %v3906, %v3908
          %v3910 = vrot.slane %v3896, %v3909
          %v3911 = vcombine.low %v3887, %v3903
          %v3912 = vcombine.high %v3887, %v3903
          %v3914 = vunpack.c.l.s4 1934713408
          %v3915 = vunpack.c.0.s8 %v3914
          %v3916 = vlaneseq
          %v3917 = vshrl.u32 %v3916, 7
          %v3918 = vsub.s32 %v3915, %v3917
          %v3919 = vrot.slane %v3911, %v3918
          %v3921 = vunpack.c.l.s4 1934713408
          %v3922 = vunpack.c.0.s8 %v3921
          %v3923 = vlaneseq
          %v3924 = vshrl.u32 %v3923, 7
          %v3925 = vsub.s32 %v3922, %v3924
          %v3926 = vrot.slane %v3912, %v3925
          %v3927 = vcombine.low %v3894, %v3910
          %v3928 = vcombine.high %v3894, %v3910
          %v3930 = vunpack.c.l.s4 1934713408
          %v3931 = vunpack.c.0.s8 %v3930
          %v3932 = vlaneseq
          %v3933 = vshrl.u32 %v3932, 7
          %v3934 = vsub.s32 %v3931, %v3933
          %v3935 = vrot.slane %v3927, %v3934
          %v3937 = vunpack.c.l.s4 1934713408
          %v3938 = vunpack.c.0.s8 %v3937
          %v3939 = vlaneseq
          %v3940 = vshrl.u32 %v3939, 7
          %v3941 = vsub.s32 %v3938, %v3940
          %v3942 = vrot.slane %v3928, %v3941
          %v3943 = vcombine.high %v3919, 0.0
          %v3944 = vcombine.high %v3926, 0.0
          %v3945 = vcombine.high %v3935, 0.0
          %v3946 = vcombine.high %v3942, 0.0
          %v3947 = vcombine.low %v3658, %v3702
          %v3948 = vcombine.high %v3658, %v3702
          %v3950 = vunpack.c.l.s4 1983009808
          %v3951 = vunpack.c.0.s8 %v3950
          %v3952 = vlaneseq
          %v3953 = vshrl.u32 %v3952, 7
          %v3954 = vsub.s32 %v3951, %v3953
          %v3955 = vrot.slane %v3947, %v3954
          %v3957 = vunpack.c.l.s4 1983009808
          %v3958 = vunpack.c.0.s8 %v3957
          %v3959 = vlaneseq
          %v3960 = vshrl.u32 %v3959, 7
          %v3961 = vsub.s32 %v3958, %v3960
          %v3962 = vrot.slane %v3948, %v3961
          %v3963 = vcombine.low %v3678, %v3726
          %v3964 = vcombine.high %v3678, %v3726
          %v3966 = vunpack.c.l.s4 1983009808
          %v3967 = vunpack.c.0.s8 %v3966
          %v3968 = vlaneseq
          %v3969 = vshrl.u32 %v3968, 7
          %v3970 = vsub.s32 %v3967, %v3969
          %v3971 = vrot.slane %v3963, %v3970
          %v3973 = vunpack.c.l.s4 1983009808
          %v3974 = vunpack.c.0.s8 %v3973
          %v3975 = vlaneseq
          %v3976 = vshrl.u32 %v3975, 7
          %v3977 = vsub.s32 %v3974, %v3976
          %v3978 = vrot.slane %v3964, %v3977
          %v3979 = vcombine.low %v3955, %v3971
          %v3980 = vcombine.high %v3955, %v3971
          %v3982 = vunpack.c.l.s4 1934713408
          %v3983 = vunpack.c.0.s8 %v3982
          %v3984 = vlaneseq
          %v3985 = vshrl.u32 %v3984, 7
          %v3986 = vsub.s32 %v3983, %v3985
          %v3987 = vrot.slane %v3979, %v3986
          %v3989 = vunpack.c.l.s4 1934713408
          %v3990 = vunpack.c.0.s8 %v3989
          %v3991 = vlaneseq
          %v3992 = vshrl.u32 %v3991, 7
          %v3993 = vsub.s32 %v3990, %v3992
          %v3994 = vrot.slane %v3980, %v3993
          %v3995 = vcombine.low %v3962, %v3978
          %v3996 = vcombine.high %v3962, %v3978
          %v3998 = vunpack.c.l.s4 1934713408
          %v3999 = vunpack.c.0.s8 %v3998
          %v4000 = vlaneseq
          %v4001 = vshrl.u32 %v4000, 7
          %v4002 = vsub.s32 %v3999, %v4001
          %v4003 = vrot.slane %v3995, %v4002
          %v4005 = vunpack.c.l.s4 1934713408
          %v4006 = vunpack.c.0.s8 %v4005
          %v4007 = vlaneseq
          %v4008 = vshrl.u32 %v4007, 7
          %v4009 = vsub.s32 %v4006, %v4008
          %v4010 = vrot.slane %v3996, %v4009
          %v4011 = vcombine.high %v3987, 0.0
          %v4012 = vcombine.high %v3994, 0.0
          %v4013 = vcombine.high %v4003, 0.0
          %v4014 = vcombine.high %v4010, 0.0
          %v4015 = vcombine.low %v3659, %v3704
          %v4016 = vcombine.high %v3659, %v3704
          %v4018 = vunpack.c.l.s4 1983009808
          %v4019 = vunpack.c.0.s8 %v4018
          %v4020 = vlaneseq
          %v4021 = vshrl.u32 %v4020, 7
          %v4022 = vsub.s32 %v4019, %v4021
          %v4023 = vrot.slane %v4015, %v4022
          %v4025 = vunpack.c.l.s4 1983009808
          %v4026 = vunpack.c.0.s8 %v4025
          %v4027 = vlaneseq
          %v4028 = vshrl.u32 %v4027, 7
          %v4029 = vsub.s32 %v4026, %v4028
          %v4030 = vrot.slane %v4016, %v4029
          %v4031 = vcombine.low %v3680, %v3728
          %v4032 = vcombine.high %v3680, %v3728
          %v4034 = vunpack.c.l.s4 1983009808
          %v4035 = vunpack.c.0.s8 %v4034
          %v4036 = vlaneseq
          %v4037 = vshrl.u32 %v4036, 7
          %v4038 = vsub.s32 %v4035, %v4037
          %v4039 = vrot.slane %v4031, %v4038
          %v4041 = vunpack.c.l.s4 1983009808
          %v4042 = vunpack.c.0.s8 %v4041
          %v4043 = vlaneseq
          %v4044 = vshrl.u32 %v4043, 7
          %v4045 = vsub.s32 %v4042, %v4044
          %v4046 = vrot.slane %v4032, %v4045
          %v4047 = vcombine.low %v4023, %v4039
          %v4048 = vcombine.high %v4023, %v4039
          %v4050 = vunpack.c.l.s4 1934713408
          %v4051 = vunpack.c.0.s8 %v4050
          %v4052 = vlaneseq
          %v4053 = vshrl.u32 %v4052, 7
          %v4054 = vsub.s32 %v4051, %v4053
          %v4055 = vrot.slane %v4047, %v4054
          %v4057 = vunpack.c.l.s4 1934713408
          %v4058 = vunpack.c.0.s8 %v4057
          %v4059 = vlaneseq
          %v4060 = vshrl.u32 %v4059, 7
          %v4061 = vsub.s32 %v4058, %v4060
          %v4062 = vrot.slane %v4048, %v4061
          %v4063 = vcombine.low %v4030, %v4046
          %v4064 = vcombine.high %v4030, %v4046
          %v4066 = vunpack.c.l.s4 1934713408
          %v4067 = vunpack.c.0.s8 %v4066
          %v4068 = vlaneseq
          %v4069 = vshrl.u32 %v4068, 7
          %v4070 = vsub.s32 %v4067, %v4069
          %v4071 = vrot.slane %v4063, %v4070
          %v4073 = vunpack.c.l.s4 1934713408
          %v4074 = vunpack.c.0.s8 %v4073
          %v4075 = vlaneseq
          %v4076 = vshrl.u32 %v4075, 7
          %v4077 = vsub.s32 %v4074, %v4076
          %v4078 = vrot.slane %v4064, %v4077
          %v4079 = vcombine.high %v4055, 0.0
          %v4080 = vcombine.high %v4062, 0.0
          %v4081 = vcombine.high %v4071, 0.0
          %v4082 = vcombine.high %v4078, 0.0
          %v4083 = vcombine.low %v3660, %v3706
          %v4084 = vcombine.high %v3660, %v3706
          %v4086 = vunpack.c.l.s4 1983009808
          %v4087 = vunpack.c.0.s8 %v4086
          %v4088 = vlaneseq
          %v4089 = vshrl.u32 %v4088, 7
          %v4090 = vsub.s32 %v4087, %v4089
          %v4091 = vrot.slane %v4083, %v4090
          %v4093 = vunpack.c.l.s4 1983009808
          %v4094 = vunpack.c.0.s8 %v4093
          %v4095 = vlaneseq
          %v4096 = vshrl.u32 %v4095, 7
          %v4097 = vsub.s32 %v4094, %v4096
          %v4098 = vrot.slane %v4084, %v4097
          %v4099 = vcombine.low %v3682, %v3730
          %v4100 = vcombine.high %v3682, %v3730
          %v4102 = vunpack.c.l.s4 1983009808
          %v4103 = vunpack.c.0.s8 %v4102
          %v4104 = vlaneseq
          %v4105 = vshrl.u32 %v4104, 7
          %v4106 = vsub.s32 %v4103, %v4105
          %v4107 = vrot.slane %v4099, %v4106
          %v4109 = vunpack.c.l.s4 1983009808
          %v4110 = vunpack.c.0.s8 %v4109
          %v4111 = vlaneseq
          %v4112 = vshrl.u32 %v4111, 7
          %v4113 = vsub.s32 %v4110, %v4112
          %v4114 = vrot.slane %v4100, %v4113
          %v4115 = vcombine.low %v4091, %v4107
          %v4116 = vcombine.high %v4091, %v4107
          %v4118 = vunpack.c.l.s4 1934713408
          %v4119 = vunpack.c.0.s8 %v4118
          %v4120 = vlaneseq
          %v4121 = vshrl.u32 %v4120, 7
          %v4122 = vsub.s32 %v4119, %v4121
          %v4123 = vrot.slane %v4115, %v4122
          %v4125 = vunpack.c.l.s4 1934713408
          %v4126 = vunpack.c.0.s8 %v4125
          %v4127 = vlaneseq
          %v4128 = vshrl.u32 %v4127, 7
          %v4129 = vsub.s32 %v4126, %v4128
          %v4130 = vrot.slane %v4116, %v4129
          %v4131 = vcombine.low %v4098, %v4114
          %v4132 = vcombine.high %v4098, %v4114
          %v4134 = vunpack.c.l.s4 1934713408
          %v4135 = vunpack.c.0.s8 %v4134
          %v4136 = vlaneseq
          %v4137 = vshrl.u32 %v4136, 7
          %v4138 = vsub.s32 %v4135, %v4137
          %v4139 = vrot.slane %v4131, %v4138
          %v4141 = vunpack.c.l.s4 1934713408
          %v4142 = vunpack.c.0.s8 %v4141
          %v4143 = vlaneseq
          %v4144 = vshrl.u32 %v4143, 7
          %v4145 = vsub.s32 %v4142, %v4144
          %v4146 = vrot.slane %v4132, %v4145
          %v4147 = vcombine.high %v4123, 0.0
          %v4148 = vcombine.high %v4130, 0.0
          %v4149 = vcombine.high %v4139, 0.0
          %v4150 = vcombine.high %v4146, 0.0
          %v4151 = vcombine.low %v3661, %v3708
          %v4152 = vcombine.high %v3661, %v3708
          %v4154 = vunpack.c.l.s4 1983009808
          %v4155 = vunpack.c.0.s8 %v4154
          %v4156 = vlaneseq
          %v4157 = vshrl.u32 %v4156, 7
          %v4158 = vsub.s32 %v4155, %v4157
          %v4159 = vrot.slane %v4151, %v4158
          %v4161 = vunpack.c.l.s4 1983009808
          %v4162 = vunpack.c.0.s8 %v4161
          %v4163 = vlaneseq
          %v4164 = vshrl.u32 %v4163, 7
          %v4165 = vsub.s32 %v4162, %v4164
          %v4166 = vrot.slane %v4152, %v4165
          %v4167 = vcombine.low %v3684, %v3732
          %v4168 = vcombine.high %v3684, %v3732
          %v4170 = vunpack.c.l.s4 1983009808
          %v4171 = vunpack.c.0.s8 %v4170
          %v4172 = vlaneseq
          %v4173 = vshrl.u32 %v4172, 7
          %v4174 = vsub.s32 %v4171, %v4173
          %v4175 = vrot.slane %v4167, %v4174
          %v4177 = vunpack.c.l.s4 1983009808
          %v4178 = vunpack.c.0.s8 %v4177
          %v4179 = vlaneseq
          %v4180 = vshrl.u32 %v4179, 7
          %v4181 = vsub.s32 %v4178, %v4180
          %v4182 = vrot.slane %v4168, %v4181
          %v4183 = vcombine.low %v4159, %v4175
          %v4184 = vcombine.high %v4159, %v4175
          %v4186 = vunpack.c.l.s4 1934713408
          %v4187 = vunpack.c.0.s8 %v4186
          %v4188 = vlaneseq
          %v4189 = vshrl.u32 %v4188, 7
          %v4190 = vsub.s32 %v4187, %v4189
          %v4191 = vrot.slane %v4183, %v4190
          %v4193 = vunpack.c.l.s4 1934713408
          %v4194 = vunpack.c.0.s8 %v4193
          %v4195 = vlaneseq
          %v4196 = vshrl.u32 %v4195, 7
          %v4197 = vsub.s32 %v4194, %v4196
          %v4198 = vrot.slane %v4184, %v4197
          %v4199 = vcombine.low %v4166, %v4182
          %v4200 = vcombine.high %v4166, %v4182
          %v4202 = vunpack.c.l.s4 1934713408
          %v4203 = vunpack.c.0.s8 %v4202
          %v4204 = vlaneseq
          %v4205 = vshrl.u32 %v4204, 7
          %v4206 = vsub.s32 %v4203, %v4205
          %v4207 = vrot.slane %v4199, %v4206
          %v4209 = vunpack.c.l.s4 1934713408
          %v4210 = vunpack.c.0.s8 %v4209
          %v4211 = vlaneseq
          %v4212 = vshrl.u32 %v4211, 7
          %v4213 = vsub.s32 %v4210, %v4212
          %v4214 = vrot.slane %v4200, %v4213
          %v4215 = vcombine.high %v4191, 0.0
          %v4216 = vcombine.high %v4198, 0.0
          %v4217 = vcombine.high %v4207, 0.0
          %v4218 = vcombine.high %v4214, 0.0
          %v4219 = vcombine.low %v3662, %v3710
          %v4220 = vcombine.high %v3662, %v3710
          %v4222 = vunpack.c.l.s4 1983009808
          %v4223 = vunpack.c.0.s8 %v4222
          %v4224 = vlaneseq
          %v4225 = vshrl.u32 %v4224, 7
          %v4226 = vsub.s32 %v4223, %v4225
          %v4227 = vrot.slane %v4219, %v4226
          %v4229 = vunpack.c.l.s4 1983009808
          %v4230 = vunpack.c.0.s8 %v4229
          %v4231 = vlaneseq
          %v4232 = vshrl.u32 %v4231, 7
          %v4233 = vsub.s32 %v4230, %v4232
          %v4234 = vrot.slane %v4220, %v4233
          %v4235 = vcombine.low %v3686, %v3734
          %v4236 = vcombine.high %v3686, %v3734
          %v4238 = vunpack.c.l.s4 1983009808
          %v4239 = vunpack.c.0.s8 %v4238
          %v4240 = vlaneseq
          %v4241 = vshrl.u32 %v4240, 7
          %v4242 = vsub.s32 %v4239, %v4241
          %v4243 = vrot.slane %v4235, %v4242
          %v4245 = vunpack.c.l.s4 1983009808
          %v4246 = vunpack.c.0.s8 %v4245
          %v4247 = vlaneseq
          %v4248 = vshrl.u32 %v4247, 7
          %v4249 = vsub.s32 %v4246, %v4248
          %v4250 = vrot.slane %v4236, %v4249
          %v4251 = vcombine.low %v4227, %v4243
          %v4252 = vcombine.high %v4227, %v4243
          %v4254 = vunpack.c.l.s4 1934713408
          %v4255 = vunpack.c.0.s8 %v4254
          %v4256 = vlaneseq
          %v4257 = vshrl.u32 %v4256, 7
          %v4258 = vsub.s32 %v4255, %v4257
          %v4259 = vrot.slane %v4251, %v4258
          %v4261 = vunpack.c.l.s4 1934713408
          %v4262 = vunpack.c.0.s8 %v4261
          %v4263 = vlaneseq
          %v4264 = vshrl.u32 %v4263, 7
          %v4265 = vsub.s32 %v4262, %v4264
          %v4266 = vrot.slane %v4252, %v4265
          %v4267 = vcombine.low %v4234, %v4250
          %v4268 = vcombine.high %v4234, %v4250
          %v4270 = vunpack.c.l.s4 1934713408
          %v4271 = vunpack.c.0.s8 %v4270
          %v4272 = vlaneseq
          %v4273 = vshrl.u32 %v4272, 7
          %v4274 = vsub.s32 %v4271, %v4273
          %v4275 = vrot.slane %v4267, %v4274
          %v4277 = vunpack.c.l.s4 1934713408
          %v4278 = vunpack.c.0.s8 %v4277
          %v4279 = vlaneseq
          %v4280 = vshrl.u32 %v4279, 7
          %v4281 = vsub.s32 %v4278, %v4280
          %v4282 = vrot.slane %v4268, %v4281
          %v4283 = vcombine.high %v4259, 0.0
          %v4284 = vcombine.high %v4266, 0.0
          %v4285 = vcombine.high %v4275, 0.0
          %v4286 = vcombine.high %v4282, 0.0
          %v4287 = vcombine.low %v3783, %v3790
          %v4289 = vunpack.c.l.s4 1983009808
          %v4290 = vunpack.c.0.s8 %v4289
          %v4291 = vlaneseq
          %v4292 = vshrl.u32 %v4291, 7
          %v4293 = vsub.s32 %v4290, %v4292
          %v4294 = vrot.slane %v4287, %v4293
          %v4295 = vcombine.low %v3807, %v3808
          %v4297 = vunpack.c.l.s4 1983009808
          %v4298 = vunpack.c.0.s8 %v4297
          %v4299 = vlaneseq
          %v4300 = vshrl.u32 %v4299, 7
          %v4301 = vsub.s32 %v4298, %v4300
          %v4302 = vrot.slane %v4295, %v4301
          %v4303 = vcombine.low %v3799, %v3806
          %v4305 = vunpack.c.l.s4 1983009808
          %v4306 = vunpack.c.0.s8 %v4305
          %v4307 = vlaneseq
          %v4308 = vshrl.u32 %v4307, 7
          %v4309 = vsub.s32 %v4306, %v4308
          %v4310 = vrot.slane %v4303, %v4309
          %v4311 = vcombine.low %v3809, %v3810
          %v4313 = vunpack.c.l.s4 1983009808
          %v4314 = vunpack.c.0.s8 %v4313
          %v4315 = vlaneseq
          %v4316 = vshrl.u32 %v4315, 7
          %v4317 = vsub.s32 %v4314, %v4316
          %v4318 = vrot.slane %v4311, %v4317
          %v4319 = vcombine.low %v4294, %v4302
          %v4320 = vcombine.high %v4294, %v4302
          %v4322 = vunpack.c.l.s4 1934713408
          %v4323 = vunpack.c.0.s8 %v4322
          %v4324 = vlaneseq
          %v4325 = vshrl.u32 %v4324, 7
          %v4326 = vsub.s32 %v4323, %v4325
          %v4327 = vrot.slane %v4319, %v4326
          %v4329 = vunpack.c.l.s4 1934713408
          %v4330 = vunpack.c.0.s8 %v4329
          %v4331 = vlaneseq
          %v4332 = vshrl.u32 %v4331, 7
          %v4333 = vsub.s32 %v4330, %v4332
          %v4334 = vrot.slane %v4320, %v4333
          %v4335 = vcombine.low %v4310, %v4318
          %v4336 = vcombine.high %v4310, %v4318
          %v4338 = vunpack.c.l.s4 1934713408
          %v4339 = vunpack.c.0.s8 %v4338
          %v4340 = vlaneseq
          %v4341 = vshrl.u32 %v4340, 7
          %v4342 = vsub.s32 %v4339, %v4341
          %v4343 = vrot.slane %v4335, %v4342
          %v4345 = vunpack.c.l.s4 1934713408
          %v4346 = vunpack.c.0.s8 %v4345
          %v4347 = vlaneseq
          %v4348 = vshrl.u32 %v4347, 7
          %v4349 = vsub.s32 %v4346, %v4348
          %v4350 = vrot.slane %v4336, %v4349
          %v4351 = vcombine.low %v4327, %v4343
          %v4352 = vcombine.high %v4327, %v4343
          %v4353 = vcombine.low %v4334, %v4350
          %v4354 = vcombine.high %v4334, %v4350
          %v4355 = vcombine.low %v3851, %v3858
          %v4357 = vunpack.c.l.s4 1983009808
          %v4358 = vunpack.c.0.s8 %v4357
          %v4359 = vlaneseq
          %v4360 = vshrl.u32 %v4359, 7
          %v4361 = vsub.s32 %v4358, %v4360
          %v4362 = vrot.slane %v4355, %v4361
          %v4363 = vcombine.low %v3875, %v3876
          %v4365 = vunpack.c.l.s4 1983009808
          %v4366 = vunpack.c.0.s8 %v4365
          %v4367 = vlaneseq
          %v4368 = vshrl.u32 %v4367, 7
          %v4369 = vsub.s32 %v4366, %v4368
          %v4370 = vrot.slane %v4363, %v4369
          %v4371 = vcombine.low %v3867, %v3874
          %v4373 = vunpack.c.l.s4 1983009808
          %v4374 = vunpack.c.0.s8 %v4373
          %v4375 = vlaneseq
          %v4376 = vshrl.u32 %v4375, 7
          %v4377 = vsub.s32 %v4374, %v4376
          %v4378 = vrot.slane %v4371, %v4377
          %v4379 = vcombine.low %v3877, %v3878
          %v4381 = vunpack.c.l.s4 1983009808
          %v4382 = vunpack.c.0.s8 %v4381
          %v4383 = vlaneseq
          %v4384 = vshrl.u32 %v4383, 7
          %v4385 = vsub.s32 %v4382, %v4384
          %v4386 = vrot.slane %v4379, %v4385
          %v4387 = vcombine.low %v4362, %v4370
          %v4388 = vcombine.high %v4362, %v4370
          %v4390 = vunpack.c.l.s4 1934713408
          %v4391 = vunpack.c.0.s8 %v4390
          %v4392 = vlaneseq
          %v4393 = vshrl.u32 %v4392, 7
          %v4394 = vsub.s32 %v4391, %v4393
          %v4395 = vrot.slane %v4387, %v4394
          %v4397 = vunpack.c.l.s4 1934713408
          %v4398 = vunpack.c.0.s8 %v4397
          %v4399 = vlaneseq
          %v4400 = vshrl.u32 %v4399, 7
          %v4401 = vsub.s32 %v4398, %v4400
          %v4402 = vrot.slane %v4388, %v4401
          %v4403 = vcombine.low %v4378, %v4386
          %v4404 = vcombine.high %v4378, %v4386
          %v4406 = vunpack.c.l.s4 1934713408
          %v4407 = vunpack.c.0.s8 %v4406
          %v4408 = vlaneseq
          %v4409 = vshrl.u32 %v4408, 7
          %v4410 = vsub.s32 %v4407, %v4409
          %v4411 = vrot.slane %v4403, %v4410
          %v4413 = vunpack.c.l.s4 1934713408
          %v4414 = vunpack.c.0.s8 %v4413
          %v4415 = vlaneseq
          %v4416 = vshrl.u32 %v4415, 7
          %v4417 = vsub.s32 %v4414, %v4416
          %v4418 = vrot.slane %v4404, %v4417
          %v4419 = vcombine.low %v4395, %v4411
          %v4420 = vcombine.high %v4395, %v4411
          %v4421 = vcombine.low %v4402, %v4418
          %v4422 = vcombine.high %v4402, %v4418
          %v4423 = vcombine.low %v3919, %v3926
          %v4425 = vunpack.c.l.s4 1983009808
          %v4426 = vunpack.c.0.s8 %v4425
          %v4427 = vlaneseq
          %v4428 = vshrl.u32 %v4427, 7
          %v4429 = vsub.s32 %v4426, %v4428
          %v4430 = vrot.slane %v4423, %v4429
          %v4431 = vcombine.low %v3943, %v3944
          %v4433 = vunpack.c.l.s4 1983009808
          %v4434 = vunpack.c.0.s8 %v4433
          %v4435 = vlaneseq
          %v4436 = vshrl.u32 %v4435, 7
          %v4437 = vsub.s32 %v4434, %v4436
          %v4438 = vrot.slane %v4431, %v4437
          %v4439 = vcombine.low %v3935, %v3942
          %v4441 = vunpack.c.l.s4 1983009808
          %v4442 = vunpack.c.0.s8 %v4441
          %v4443 = vlaneseq
          %v4444 = vshrl.u32 %v4443, 7
          %v4445 = vsub.s32 %v4442, %v4444
          %v4446 = vrot.slane %v4439, %v4445
          %v4447 = vcombine.low %v3945, %v3946
          %v4449 = vunpack.c.l.s4 1983009808
          %v4450 = vunpack.c.0.s8 %v4449
          %v4451 = vlaneseq
          %v4452 = vshrl.u32 %v4451, 7
          %v4453 = vsub.s32 %v4450, %v4452
          %v4454 = vrot.slane %v4447, %v4453
          %v4455 = vcombine.low %v4430, %v4438
          %v4456 = vcombine.high %v4430, %v4438
          %v4458 = vunpack.c.l.s4 1934713408
          %v4459 = vunpack.c.0.s8 %v4458
          %v4460 = vlaneseq
          %v4461 = vshrl.u32 %v4460, 7
          %v4462 = vsub.s32 %v4459, %v4461
          %v4463 = vrot.slane %v4455, %v4462
          %v4465 = vunpack.c.l.s4 1934713408
          %v4466 = vunpack.c.0.s8 %v4465
          %v4467 = vlaneseq
          %v4468 = vshrl.u32 %v4467, 7
          %v4469 = vsub.s32 %v4466, %v4468
          %v4470 = vrot.slane %v4456, %v4469
          %v4471 = vcombine.low %v4446, %v4454
          %v4472 = vcombine.high %v4446, %v4454
          %v4474 = vunpack.c.l.s4 1934713408
          %v4475 = vunpack.c.0.s8 %v4474
          %v4476 = vlaneseq
          %v4477 = vshrl.u32 %v4476, 7
          %v4478 = vsub.s32 %v4475, %v4477
          %v4479 = vrot.slane %v4471, %v4478
          %v4481 = vunpack.c.l.s4 1934713408
          %v4482 = vunpack.c.0.s8 %v4481
          %v4483 = vlaneseq
          %v4484 = vshrl.u32 %v4483, 7
          %v4485 = vsub.s32 %v4482, %v4484
          %v4486 = vrot.slane %v4472, %v4485
          %v4487 = vcombine.low %v4463, %v4479
          %v4488 = vcombine.high %v4463, %v4479
          %v4489 = vcombine.low %v4470, %v4486
          %v4490 = vcombine.high %v4470, %v4486
          %v4491 = vcombine.low %v3987, %v3994
          %v4493 = vunpack.c.l.s4 1983009808
          %v4494 = vunpack.c.0.s8 %v4493
          %v4495 = vlaneseq
          %v4496 = vshrl.u32 %v4495, 7
          %v4497 = vsub.s32 %v4494, %v4496
          %v4498 = vrot.slane %v4491, %v4497
          %v4499 = vcombine.low %v4011, %v4012
          %v4501 = vunpack.c.l.s4 1983009808
          %v4502 = vunpack.c.0.s8 %v4501
          %v4503 = vlaneseq
          %v4504 = vshrl.u32 %v4503, 7
          %v4505 = vsub.s32 %v4502, %v4504
          %v4506 = vrot.slane %v4499, %v4505
          %v4507 = vcombine.low %v4003, %v4010
          %v4509 = vunpack.c.l.s4 1983009808
          %v4510 = vunpack.c.0.s8 %v4509
          %v4511 = vlaneseq
          %v4512 = vshrl.u32 %v4511, 7
          %v4513 = vsub.s32 %v4510, %v4512
          %v4514 = vrot.slane %v4507, %v4513
          %v4515 = vcombine.low %v4013, %v4014
          %v4517 = vunpack.c.l.s4 1983009808
          %v4518 = vunpack.c.0.s8 %v4517
          %v4519 = vlaneseq
          %v4520 = vshrl.u32 %v4519, 7
          %v4521 = vsub.s32 %v4518, %v4520
          %v4522 = vrot.slane %v4515, %v4521
          %v4523 = vcombine.low %v4498, %v4506
          %v4524 = vcombine.high %v4498, %v4506
          %v4526 = vunpack.c.l.s4 1934713408
          %v4527 = vunpack.c.0.s8 %v4526
          %v4528 = vlaneseq
          %v4529 = vshrl.u32 %v4528, 7
          %v4530 = vsub.s32 %v4527, %v4529
          %v4531 = vrot.slane %v4523, %v4530
          %v4533 = vunpack.c.l.s4 1934713408
          %v4534 = vunpack.c.0.s8 %v4533
          %v4535 = vlaneseq
          %v4536 = vshrl.u32 %v4535, 7
          %v4537 = vsub.s32 %v4534, %v4536
          %v4538 = vrot.slane %v4524, %v4537
          %v4539 = vcombine.low %v4514, %v4522
          %v4540 = vcombine.high %v4514, %v4522
          %v4542 = vunpack.c.l.s4 1934713408
          %v4543 = vunpack.c.0.s8 %v4542
          %v4544 = vlaneseq
          %v4545 = vshrl.u32 %v4544, 7
          %v4546 = vsub.s32 %v4543, %v4545
          %v4547 = vrot.slane %v4539, %v4546
          %v4549 = vunpack.c.l.s4 1934713408
          %v4550 = vunpack.c.0.s8 %v4549
          %v4551 = vlaneseq
          %v4552 = vshrl.u32 %v4551, 7
          %v4553 = vsub.s32 %v4550, %v4552
          %v4554 = vrot.slane %v4540, %v4553
          %v4555 = vcombine.low %v4531, %v4547
          %v4556 = vcombine.high %v4531, %v4547
          %v4557 = vcombine.low %v4538, %v4554
          %v4558 = vcombine.high %v4538, %v4554
          %v4559 = vcombine.low %v4055, %v4062
          %v4561 = vunpack.c.l.s4 1983009808
          %v4562 = vunpack.c.0.s8 %v4561
          %v4563 = vlaneseq
          %v4564 = vshrl.u32 %v4563, 7
          %v4565 = vsub.s32 %v4562, %v4564
          %v4566 = vrot.slane %v4559, %v4565
          %v4567 = vcombine.low %v4079, %v4080
          %v4569 = vunpack.c.l.s4 1983009808
          %v4570 = vunpack.c.0.s8 %v4569
          %v4571 = vlaneseq
          %v4572 = vshrl.u32 %v4571, 7
          %v4573 = vsub.s32 %v4570, %v4572
          %v4574 = vrot.slane %v4567, %v4573
          %v4575 = vcombine.low %v4071, %v4078
          %v4577 = vunpack.c.l.s4 1983009808
          %v4578 = vunpack.c.0.s8 %v4577
          %v4579 = vlaneseq
          %v4580 = vshrl.u32 %v4579, 7
          %v4581 = vsub.s32 %v4578, %v4580
          %v4582 = vrot.slane %v4575, %v4581
          %v4583 = vcombine.low %v4081, %v4082
          %v4585 = vunpack.c.l.s4 1983009808
          %v4586 = vunpack.c.0.s8 %v4585
          %v4587 = vlaneseq
          %v4588 = vshrl.u32 %v4587, 7
          %v4589 = vsub.s32 %v4586, %v4588
          %v4590 = vrot.slane %v4583, %v4589
          %v4591 = vcombine.low %v4566, %v4574
          %v4592 = vcombine.high %v4566, %v4574
          %v4594 = vunpack.c.l.s4 1934713408
          %v4595 = vunpack.c.0.s8 %v4594
          %v4596 = vlaneseq
          %v4597 = vshrl.u32 %v4596, 7
          %v4598 = vsub.s32 %v4595, %v4597
          %v4599 = vrot.slane %v4591, %v4598
          %v4601 = vunpack.c.l.s4 1934713408
          %v4602 = vunpack.c.0.s8 %v4601
          %v4603 = vlaneseq
          %v4604 = vshrl.u32 %v4603, 7
          %v4605 = vsub.s32 %v4602, %v4604
          %v4606 = vrot.slane %v4592, %v4605
          %v4607 = vcombine.low %v4582, %v4590
          %v4608 = vcombine.high %v4582, %v4590
          %v4610 = vunpack.c.l.s4 1934713408
          %v4611 = vunpack.c.0.s8 %v4610
          %v4612 = vlaneseq
          %v4613 = vshrl.u32 %v4612, 7
          %v4614 = vsub.s32 %v4611, %v4613
          %v4615 = vrot.slane %v4607, %v4614
          %v4617 = vunpack.c.l.s4 1934713408
          %v4618 = vunpack.c.0.s8 %v4617
          %v4619 = vlaneseq
          %v4620 = vshrl.u32 %v4619, 7
          %v4621 = vsub.s32 %v4618, %v4620
          %v4622 = vrot.slane %v4608, %v4621
          %v4623 = vcombine.low %v4599, %v4615
          %v4624 = vcombine.high %v4599, %v4615
          %v4625 = vcombine.low %v4606, %v4622
          %v4626 = vcombine.high %v4606, %v4622
          %v4627 = vcombine.low %v4123, %v4130
          %v4629 = vunpack.c.l.s4 1983009808
          %v4630 = vunpack.c.0.s8 %v4629
          %v4631 = vlaneseq
          %v4632 = vshrl.u32 %v4631, 7
          %v4633 = vsub.s32 %v4630, %v4632
          %v4634 = vrot.slane %v4627, %v4633
          %v4635 = vcombine.low %v4147, %v4148
          %v4637 = vunpack.c.l.s4 1983009808
          %v4638 = vunpack.c.0.s8 %v4637
          %v4639 = vlaneseq
          %v4640 = vshrl.u32 %v4639, 7
          %v4641 = vsub.s32 %v4638, %v4640
          %v4642 = vrot.slane %v4635, %v4641
          %v4643 = vcombine.low %v4139, %v4146
          %v4645 = vunpack.c.l.s4 1983009808
          %v4646 = vunpack.c.0.s8 %v4645
          %v4647 = vlaneseq
          %v4648 = vshrl.u32 %v4647, 7
          %v4649 = vsub.s32 %v4646, %v4648
          %v4650 = vrot.slane %v4643, %v4649
          %v4651 = vcombine.low %v4149, %v4150
          %v4653 = vunpack.c.l.s4 1983009808
          %v4654 = vunpack.c.0.s8 %v4653
          %v4655 = vlaneseq
          %v4656 = vshrl.u32 %v4655, 7
          %v4657 = vsub.s32 %v4654, %v4656
          %v4658 = vrot.slane %v4651, %v4657
          %v4659 = vcombine.low %v4634, %v4642
          %v4660 = vcombine.high %v4634, %v4642
          %v4662 = vunpack.c.l.s4 1934713408
          %v4663 = vunpack.c.0.s8 %v4662
          %v4664 = vlaneseq
          %v4665 = vshrl.u32 %v4664, 7
          %v4666 = vsub.s32 %v4663, %v4665
          %v4667 = vrot.slane %v4659, %v4666
          %v4669 = vunpack.c.l.s4 1934713408
          %v4670 = vunpack.c.0.s8 %v4669
          %v4671 = vlaneseq
          %v4672 = vshrl.u32 %v4671, 7
          %v4673 = vsub.s32 %v4670, %v4672
          %v4674 = vrot.slane %v4660, %v4673
          %v4675 = vcombine.low %v4650, %v4658
          %v4676 = vcombine.high %v4650, %v4658
          %v4678 = vunpack.c.l.s4 1934713408
          %v4679 = vunpack.c.0.s8 %v4678
          %v4680 = vlaneseq
          %v4681 = vshrl.u32 %v4680, 7
          %v4682 = vsub.s32 %v4679, %v4681
          %v4683 = vrot.slane %v4675, %v4682
          %v4685 = vunpack.c.l.s4 1934713408
          %v4686 = vunpack.c.0.s8 %v4685
          %v4687 = vlaneseq
          %v4688 = vshrl.u32 %v4687, 7
          %v4689 = vsub.s32 %v4686, %v4688
          %v4690 = vrot.slane %v4676, %v4689
          %v4691 = vcombine.low %v4667, %v4683
          %v4692 = vcombine.high %v4667, %v4683
          %v4693 = vcombine.low %v4674, %v4690
          %v4694 = vcombine.high %v4674, %v4690
          %v4695 = vcombine.low %v4191, %v4198
          %v4697 = vunpack.c.l.s4 1983009808
          %v4698 = vunpack.c.0.s8 %v4697
          %v4699 = vlaneseq
          %v4700 = vshrl.u32 %v4699, 7
          %v4701 = vsub.s32 %v4698, %v4700
          %v4702 = vrot.slane %v4695, %v4701
          %v4703 = vcombine.low %v4215, %v4216
          %v4705 = vunpack.c.l.s4 1983009808
          %v4706 = vunpack.c.0.s8 %v4705
          %v4707 = vlaneseq
          %v4708 = vshrl.u32 %v4707, 7
          %v4709 = vsub.s32 %v4706, %v4708
          %v4710 = vrot.slane %v4703, %v4709
          %v4711 = vcombine.low %v4207, %v4214
          %v4713 = vunpack.c.l.s4 1983009808
          %v4714 = vunpack.c.0.s8 %v4713
          %v4715 = vlaneseq
          %v4716 = vshrl.u32 %v4715, 7
          %v4717 = vsub.s32 %v4714, %v4716
          %v4718 = vrot.slane %v4711, %v4717
          %v4719 = vcombine.low %v4217, %v4218
          %v4721 = vunpack.c.l.s4 1983009808
          %v4722 = vunpack.c.0.s8 %v4721
          %v4723 = vlaneseq
          %v4724 = vshrl.u32 %v4723, 7
          %v4725 = vsub.s32 %v4722, %v4724
          %v4726 = vrot.slane %v4719, %v4725
          %v4727 = vcombine.low %v4702, %v4710
          %v4728 = vcombine.high %v4702, %v4710
          %v4730 = vunpack.c.l.s4 1934713408
          %v4731 = vunpack.c.0.s8 %v4730
          %v4732 = vlaneseq
          %v4733 = vshrl.u32 %v4732, 7
          %v4734 = vsub.s32 %v4731, %v4733
          %v4735 = vrot.slane %v4727, %v4734
          %v4737 = vunpack.c.l.s4 1934713408
          %v4738 = vunpack.c.0.s8 %v4737
          %v4739 = vlaneseq
          %v4740 = vshrl.u32 %v4739, 7
          %v4741 = vsub.s32 %v4738, %v4740
          %v4742 = vrot.slane %v4728, %v4741
          %v4743 = vcombine.low %v4718, %v4726
          %v4744 = vcombine.high %v4718, %v4726
          %v4746 = vunpack.c.l.s4 1934713408
          %v4747 = vunpack.c.0.s8 %v4746
          %v4748 = vlaneseq
          %v4749 = vshrl.u32 %v4748, 7
          %v4750 = vsub.s32 %v4747, %v4749
          %v4751 = vrot.slane %v4743, %v4750
          %v4753 = vunpack.c.l.s4 1934713408
          %v4754 = vunpack.c.0.s8 %v4753
          %v4755 = vlaneseq
          %v4756 = vshrl.u32 %v4755, 7
          %v4757 = vsub.s32 %v4754, %v4756
          %v4758 = vrot.slane %v4744, %v4757
          %v4759 = vcombine.low %v4735, %v4751
          %v4760 = vcombine.high %v4735, %v4751
          %v4761 = vcombine.low %v4742, %v4758
          %v4762 = vcombine.high %v4742, %v4758
          %v4763 = vcombine.low %v4259, %v4266
          %v4765 = vunpack.c.l.s4 1983009808
          %v4766 = vunpack.c.0.s8 %v4765
          %v4767 = vlaneseq
          %v4768 = vshrl.u32 %v4767, 7
          %v4769 = vsub.s32 %v4766, %v4768
          %v4770 = vrot.slane %v4763, %v4769
          %v4771 = vcombine.low %v4283, %v4284
          %v4773 = vunpack.c.l.s4 1983009808
          %v4774 = vunpack.c.0.s8 %v4773
          %v4775 = vlaneseq
          %v4776 = vshrl.u32 %v4775, 7
          %v4777 = vsub.s32 %v4774, %v4776
          %v4778 = vrot.slane %v4771, %v4777
          %v4779 = vcombine.low %v4275, %v4282
          %v4781 = vunpack.c.l.s4 1983009808
          %v4782 = vunpack.c.0.s8 %v4781
          %v4783 = vlaneseq
          %v4784 = vshrl.u32 %v4783, 7
          %v4785 = vsub.s32 %v4782, %v4784
          %v4786 = vrot.slane %v4779, %v4785
          %v4787 = vcombine.low %v4285, %v4286
          %v4789 = vunpack.c.l.s4 1983009808
          %v4790 = vunpack.c.0.s8 %v4789
          %v4791 = vlaneseq
          %v4792 = vshrl.u32 %v4791, 7
          %v4793 = vsub.s32 %v4790, %v4792
          %v4794 = vrot.slane %v4787, %v4793
          %v4795 = vcombine.low %v4770, %v4778
          %v4796 = vcombine.high %v4770, %v4778
          %v4798 = vunpack.c.l.s4 1934713408
          %v4799 = vunpack.c.0.s8 %v4798
          %v4800 = vlaneseq
          %v4801 = vshrl.u32 %v4800, 7
          %v4802 = vsub.s32 %v4799, %v4801
          %v4803 = vrot.slane %v4795, %v4802
          %v4805 = vunpack.c.l.s4 1934713408
          %v4806 = vunpack.c.0.s8 %v4805
          %v4807 = vlaneseq
          %v4808 = vshrl.u32 %v4807, 7
          %v4809 = vsub.s32 %v4806, %v4808
          %v4810 = vrot.slane %v4796, %v4809
          %v4811 = vcombine.low %v4786, %v4794
          %v4812 = vcombine.high %v4786, %v4794
          %v4814 = vunpack.c.l.s4 1934713408
          %v4815 = vunpack.c.0.s8 %v4814
          %v4816 = vlaneseq
          %v4817 = vshrl.u32 %v4816, 7
          %v4818 = vsub.s32 %v4815, %v4817
          %v4819 = vrot.slane %v4811, %v4818
          %v4821 = vunpack.c.l.s4 1934713408
          %v4822 = vunpack.c.0.s8 %v4821
          %v4823 = vlaneseq
          %v4824 = vshrl.u32 %v4823, 7
          %v4825 = vsub.s32 %v4822, %v4824
          %v4826 = vrot.slane %v4812, %v4825
          %v4827 = vcombine.low %v4803, %v4819
          %v4828 = vcombine.high %v4803, %v4819
          %v4829 = vcombine.low %v4810, %v4826
          %v4830 = vcombine.high %v4810, %v4826
          %v4831 = vpack.c.bf16 %v4419, %v4351
          %v4832 = vpack.c.bf16 %v4555, %v4487
          %v4833 = vpack.c.bf16 %v4691, %v4623
          %v4834 = vpack.c.bf16 %v4827, %v4759
          %v4835 = vpack.c.bf16 %v4420, %v4352
          %v4836 = vpack.c.bf16 %v4556, %v4488
          %v4837 = vpack.c.bf16 %v4692, %v4624
          %v4838 = vpack.c.bf16 %v4828, %v4760
          %v4839 = vpack.c.bf16 %v4421, %v4353
          %v4840 = vpack.c.bf16 %v4557, %v4489
          %v4841 = vpack.c.bf16 %v4693, %v4625
          %v4842 = vpack.c.bf16 %v4829, %v4761
          %v4843 = vpack.c.bf16 %v4422, %v4354
          %v4844 = vpack.c.bf16 %v4558, %v4490
          %v4845 = vpack.c.bf16 %v4694, %v4626
          %v4846 = vpack.c.bf16 %v4830, %v4762
          %vm4847 = vcmask 261120
          %4848 = vst.msk [vmem:[#allocation2] sm:$0xff] %vm4847, %v4831
          %4849 = vst.msk [vmem:[#allocation2 + $0x8] sm:$0xff] %vm4847, %v4832
          %4850 = vst.msk [vmem:[#allocation2 + $0x10] sm:$0xff] %vm4847, %v4833
          %4851 = vst.msk [vmem:[#allocation2 + $0x18] sm:$0xff] %vm4847, %v4834
          %4852 = vst.msk [vmem:[#allocation2 + $0x20] sm:$0xff] %vm4847, %v4835
          %4853 = vst.msk [vmem:[#allocation2 + $0x28] sm:$0xff] %vm4847, %v4836
          %4854 = vst.msk [vmem:[#allocation2 + $0x30] sm:$0xff] %vm4847, %v4837
          %4855 = vst.msk [vmem:[#allocation2 + $0x38] sm:$0xff] %vm4847, %v4838
          %4856 = vst.msk [vmem:[#allocation2 + $0x40] sm:$0xff] %vm4847, %v4839
          %4857 = vst.msk [vmem:[#allocation2 + $0x48] sm:$0xff] %vm4847, %v4840
          %4858 = vst.msk [vmem:[#allocation2 + $0x50] sm:$0xff] %vm4847, %v4841
          %4859 = vst.msk [vmem:[#allocation2 + $0x58] sm:$0xff] %vm4847, %v4842
          %4860 = vst.msk [vmem:[#allocation2 + $0x60] sm:$0xff] %vm4847, %v4843
          %4861 = vst.msk [vmem:[#allocation2 + $0x68] sm:$0xff] %vm4847, %v4844
          %4862 = vst.msk [vmem:[#allocation2 + $0x70] sm:$0xff] %vm4847, %v4845
          %4863 = vst.msk [vmem:[#allocation2 + $0x78] sm:$0xff] %vm4847, %v4846
          %vm4864 = vcmask 7168
          %4865 = vst.msk [vmem:[#allocation5] sm:$0xff] %vm4864, -inf
          %4866 = vst.msk [vmem:[#allocation5 + $0x8] sm:$0xff] %vm4864, -inf
          %4867 = vst.msk [vmem:[#allocation5 + $0x10] sm:$0xff] %vm4864, -inf
          %4868 = vst.msk [vmem:[#allocation5 + $0x18] sm:$0xff] %vm4864, -inf
          %4869 = vst.msk [vmem:[#allocation5 + $0x20] sm:$0xff] %vm4864, -inf
          %4870 = vst.msk [vmem:[#allocation5 + $0x28] sm:$0xff] %vm4864, -inf
          %4871 = vst.msk [vmem:[#allocation5 + $0x30] sm:$0xff] %vm4864, -inf
          %4872 = vst.msk [vmem:[#allocation5 + $0x38] sm:$0xff] %vm4864, -inf
          %4873 = vst.msk [vmem:[#allocation5 + $0x40] sm:$0xff] %vm4864, -inf
          %4874 = vst.msk [vmem:[#allocation5 + $0x48] sm:$0xff] %vm4864, -inf
          %4875 = vst.msk [vmem:[#allocation5 + $0x50] sm:$0xff] %vm4864, -inf
          %4876 = vst.msk [vmem:[#allocation5 + $0x58] sm:$0xff] %vm4864, -inf
          %4877 = vst.msk [vmem:[#allocation5 + $0x60] sm:$0xff] %vm4864, -inf
          %4878 = vst.msk [vmem:[#allocation5 + $0x68] sm:$0xff] %vm4864, -inf
          %4879 = vst.msk [vmem:[#allocation5 + $0x70] sm:$0xff] %vm4864, -inf
          %4880 = vst.msk [vmem:[#allocation5 + $0x78] sm:$0xff] %vm4864, -inf
          %4881 = vst.msk [vmem:[#allocation5 + $0x80] sm:$0xff] %vm4864, -inf
          %4882 = vst.msk [vmem:[#allocation5 + $0x88] sm:$0xff] %vm4864, -inf
          %4883 = vst.msk [vmem:[#allocation5 + $0x90] sm:$0xff] %vm4864, -inf
          %4884 = vst.msk [vmem:[#allocation5 + $0x98] sm:$0xff] %vm4864, -inf
          %4885 = vst.msk [vmem:[#allocation5 + $0xa0] sm:$0xff] %vm4864, -inf
          %4886 = vst.msk [vmem:[#allocation5 + $0xa8] sm:$0xff] %vm4864, -inf
          %4887 = vst.msk [vmem:[#allocation5 + $0xb0] sm:$0xff] %vm4864, -inf
          %4888 = vst.msk [vmem:[#allocation5 + $0xb8] sm:$0xff] %vm4864, -inf
          %4889 = vst.msk [vmem:[#allocation5 + $0xc0] sm:$0xff] %vm4864, -inf
          %4890 = vst.msk [vmem:[#allocation5 + $0xc8] sm:$0xff] %vm4864, -inf
          %4891 = vst.msk [vmem:[#allocation5 + $0xd0] sm:$0xff] %vm4864, -inf
          %4892 = vst.msk [vmem:[#allocation5 + $0xd8] sm:$0xff] %vm4864, -inf
          %4893 = vst.msk [vmem:[#allocation5 + $0xe0] sm:$0xff] %vm4864, -inf
          %4894 = vst.msk [vmem:[#allocation5 + $0xe8] sm:$0xff] %vm4864, -inf
          %4895 = vst.msk [vmem:[#allocation5 + $0xf0] sm:$0xff] %vm4864, -inf
          %4896 = vst.msk [vmem:[#allocation5 + $0xf8] sm:$0xff] %vm4864, -inf
          %4897 = vst.msk [vmem:[#allocation6] sm:$0xff] %vm4864, 0.0
          %4898 = vst.msk [vmem:[#allocation6 + $0x8] sm:$0xff] %vm4864, 0.0
          %4899 = vst.msk [vmem:[#allocation6 + $0x10] sm:$0xff] %vm4864, 0.0
          %4900 = vst.msk [vmem:[#allocation6 + $0x18] sm:$0xff] %vm4864, 0.0
          %4901 = vst.msk [vmem:[#allocation6 + $0x20] sm:$0xff] %vm4864, 0.0
          %4902 = vst.msk [vmem:[#allocation6 + $0x28] sm:$0xff] %vm4864, 0.0
          %4903 = vst.msk [vmem:[#allocation6 + $0x30] sm:$0xff] %vm4864, 0.0
          %4904 = vst.msk [vmem:[#allocation6 + $0x38] sm:$0xff] %vm4864, 0.0
          %4905 = vst.msk [vmem:[#allocation6 + $0x40] sm:$0xff] %vm4864, 0.0
          %4906 = vst.msk [vmem:[#allocation6 + $0x48] sm:$0xff] %vm4864, 0.0
          %4907 = vst.msk [vmem:[#allocation6 + $0x50] sm:$0xff] %vm4864, 0.0
          %4908 = vst.msk [vmem:[#allocation6 + $0x58] sm:$0xff] %vm4864, 0.0
          %4909 = vst.msk [vmem:[#allocation6 + $0x60] sm:$0xff] %vm4864, 0.0
          %4910 = vst.msk [vmem:[#allocation6 + $0x68] sm:$0xff] %vm4864, 0.0
          %4911 = vst.msk [vmem:[#allocation6 + $0x70] sm:$0xff] %vm4864, 0.0
          %4912 = vst.msk [vmem:[#allocation6 + $0x78] sm:$0xff] %vm4864, 0.0
          %4913 = vst.msk [vmem:[#allocation6 + $0x80] sm:$0xff] %vm4864, 0.0
          %4914 = vst.msk [vmem:[#allocation6 + $0x88] sm:$0xff] %vm4864, 0.0
          %4915 = vst.msk [vmem:[#allocation6 + $0x90] sm:$0xff] %vm4864, 0.0
          %4916 = vst.msk [vmem:[#allocation6 + $0x98] sm:$0xff] %vm4864, 0.0
          %4917 = vst.msk [vmem:[#allocation6 + $0xa0] sm:$0xff] %vm4864, 0.0
          %4918 = vst.msk [vmem:[#allocation6 + $0xa8] sm:$0xff] %vm4864, 0.0
          %4919 = vst.msk [vmem:[#allocation6 + $0xb0] sm:$0xff] %vm4864, 0.0
          %4920 = vst.msk [vmem:[#allocation6 + $0xb8] sm:$0xff] %vm4864, 0.0
          %4921 = vst.msk [vmem:[#allocation6 + $0xc0] sm:$0xff] %vm4864, 0.0
          %4922 = vst.msk [vmem:[#allocation6 + $0xc8] sm:$0xff] %vm4864, 0.0
          %4923 = vst.msk [vmem:[#allocation6 + $0xd0] sm:$0xff] %vm4864, 0.0
          %4924 = vst.msk [vmem:[#allocation6 + $0xd8] sm:$0xff] %vm4864, 0.0
          %4925 = vst.msk [vmem:[#allocation6 + $0xe0] sm:$0xff] %vm4864, 0.0
          %4926 = vst.msk [vmem:[#allocation6 + $0xe8] sm:$0xff] %vm4864, 0.0
          %4927 = vst.msk [vmem:[#allocation6 + $0xf0] sm:$0xff] %vm4864, 0.0
          %4928 = vst.msk [vmem:[#allocation6 + $0xf8] sm:$0xff] %vm4864, 0.0
          %4929 = vst.msk [vmem:[#allocation7] sm:$0xff] %vm4847, 0.0
          %4930 = vst.msk [vmem:[#allocation7 + $0x8] sm:$0xff] %vm4847, 0.0
          %4931 = vst.msk [vmem:[#allocation7 + $0x10] sm:$0xff] %vm4847, 0.0
          %4932 = vst.msk [vmem:[#allocation7 + $0x18] sm:$0xff] %vm4847, 0.0
          %4933 = vst.msk [vmem:[#allocation7 + $0x20] sm:$0xff] %vm4847, 0.0
          %4934 = vst.msk [vmem:[#allocation7 + $0x28] sm:$0xff] %vm4847, 0.0
          %4935 = vst.msk [vmem:[#allocation7 + $0x30] sm:$0xff] %vm4847, 0.0
          %4936 = vst.msk [vmem:[#allocation7 + $0x38] sm:$0xff] %vm4847, 0.0
          %4937 = vst.msk [vmem:[#allocation7 + $0x40] sm:$0xff] %vm4847, 0.0
          %4938 = vst.msk [vmem:[#allocation7 + $0x48] sm:$0xff] %vm4847, 0.0
          %4939 = vst.msk [vmem:[#allocation7 + $0x50] sm:$0xff] %vm4847, 0.0
          %4940 = vst.msk [vmem:[#allocation7 + $0x58] sm:$0xff] %vm4847, 0.0
          %4941 = vst.msk [vmem:[#allocation7 + $0x60] sm:$0xff] %vm4847, 0.0
          %4942 = vst.msk [vmem:[#allocation7 + $0x68] sm:$0xff] %vm4847, 0.0
          %4943 = vst.msk [vmem:[#allocation7 + $0x70] sm:$0xff] %vm4847, 0.0
          %4944 = vst.msk [vmem:[#allocation7 + $0x78] sm:$0xff] %vm4847, 0.0
          %4945 = vst.msk [vmem:[#allocation7 + $0x80] sm:$0xff] %vm4847, 0.0
          %4946 = vst.msk [vmem:[#allocation7 + $0x88] sm:$0xff] %vm4847, 0.0
          %4947 = vst.msk [vmem:[#allocation7 + $0x90] sm:$0xff] %vm4847, 0.0
          %4948 = vst.msk [vmem:[#allocation7 + $0x98] sm:$0xff] %vm4847, 0.0
          %4949 = vst.msk [vmem:[#allocation7 + $0xa0] sm:$0xff] %vm4847, 0.0
          %4950 = vst.msk [vmem:[#allocation7 + $0xa8] sm:$0xff] %vm4847, 0.0
          %4951 = vst.msk [vmem:[#allocation7 + $0xb0] sm:$0xff] %vm4847, 0.0
          %4952 = vst.msk [vmem:[#allocation7 + $0xb8] sm:$0xff] %vm4847, 0.0
          %4953 = vst.msk [vmem:[#allocation7 + $0xc0] sm:$0xff] %vm4847, 0.0
          %4954 = vst.msk [vmem:[#allocation7 + $0xc8] sm:$0xff] %vm4847, 0.0
          %4955 = vst.msk [vmem:[#allocation7 + $0xd0] sm:$0xff] %vm4847, 0.0
          %4956 = vst.msk [vmem:[#allocation7 + $0xd8] sm:$0xff] %vm4847, 0.0
          %4957 = vst.msk [vmem:[#allocation7 + $0xe0] sm:$0xff] %vm4847, 0.0
          %4958 = vst.msk [vmem:[#allocation7 + $0xe8] sm:$0xff] %vm4847, 0.0
          %4959 = vst.msk [vmem:[#allocation7 + $0xf0] sm:$0xff] %vm4847, 0.0
          %4960 = vst.msk [vmem:[#allocation7 + $0xf8] sm:$0xff] %vm4847, 0.0
        $region100: #{tpu_custom_call.1} parent=67 // pred_fallthru
          _
        %s4961 = sshra.s32 %s573, 4
        %s4962 = sand.u32 %s573, 15
        %s4963 = smul.addr %s4961, 8
        %s4964 = scalar_lea.vmem [#allocation3], %s4963
        %v4965 = vld [vmem:[%s4964] sm:$0xff]
        %v4966 = vld [vmem:[%s4964 + $0x8] sm:$0xff]
        %v4967 = vld [vmem:[%s4964 + $0x10] sm:$0xff]
        %v4968 = vld [vmem:[%s4964 + $0x18] sm:$0xff]
        %v4969 = vld [vmem:[%s4964 + $0x40] sm:$0xff]
        %v4970 = vld [vmem:[%s4964 + $0x48] sm:$0xff]
        %v4971 = vld [vmem:[%s4964 + $0x50] sm:$0xff]
        %v4972 = vld [vmem:[%s4964 + $0x58] sm:$0xff]
        %v4973 = vld [vmem:[%s4964 + $0x80] sm:$0xff]
        %v4974 = vld [vmem:[%s4964 + $0x88] sm:$0xff]
        %v4975 = vld [vmem:[%s4964 + $0x90] sm:$0xff]
        %v4976 = vld [vmem:[%s4964 + $0x98] sm:$0xff]
        %v4977 = vld [vmem:[%s4964 + $0xc0] sm:$0xff]
        %v4978 = vld [vmem:[%s4964 + $0xc8] sm:$0xff]
        %v4979 = vld [vmem:[%s4964 + $0xd0] sm:$0xff]
        %v4980 = vld [vmem:[%s4964 + $0xd8] sm:$0xff]
        %s4981 = smul.addr %s4961, 8
        %s4982 = scalar_lea.vmem [#allocation4], %s4981
        %v4983 = vld [vmem:[%s4982] sm:$0xff]
        %v4984 = vld [vmem:[%s4982 + $0x8] sm:$0xff]
        %v4985 = vld [vmem:[%s4982 + $0x10] sm:$0xff]
        %v4986 = vld [vmem:[%s4982 + $0x18] sm:$0xff]
        %v4987 = vld [vmem:[%s4982 + $0x40] sm:$0xff]
        %v4988 = vld [vmem:[%s4982 + $0x48] sm:$0xff]
        %v4989 = vld [vmem:[%s4982 + $0x50] sm:$0xff]
        %v4990 = vld [vmem:[%s4982 + $0x58] sm:$0xff]
        %v4991 = vld [vmem:[%s4982 + $0x80] sm:$0xff]
        %v4992 = vld [vmem:[%s4982 + $0x88] sm:$0xff]
        %v4993 = vld [vmem:[%s4982 + $0x90] sm:$0xff]
        %v4994 = vld [vmem:[%s4982 + $0x98] sm:$0xff]
        %v4995 = vld [vmem:[%s4982 + $0xc0] sm:$0xff]
        %v4996 = vld [vmem:[%s4982 + $0xc8] sm:$0xff]
        %v4997 = vld [vmem:[%s4982 + $0xd0] sm:$0xff]
        %v4998 = vld [vmem:[%s4982 + $0xd8] sm:$0xff]
        %v4999 = vld [vmem:[#allocation2] sm:$0xff]
        %v5000 = vld [vmem:[#allocation2 + $0x8] sm:$0xff]
        %v5001 = vld [vmem:[#allocation2 + $0x10] sm:$0xff]
        %v5002 = vld [vmem:[#allocation2 + $0x18] sm:$0xff]
        %v5003 = vld [vmem:[#allocation2 + $0x20] sm:$0xff]
        %v5004 = vld [vmem:[#allocation2 + $0x28] sm:$0xff]
        %v5005 = vld [vmem:[#allocation2 + $0x30] sm:$0xff]
        %v5006 = vld [vmem:[#allocation2 + $0x38] sm:$0xff]
        %v5007 = vld [vmem:[#allocation2 + $0x40] sm:$0xff]
        %v5008 = vld [vmem:[#allocation2 + $0x48] sm:$0xff]
        %v5009 = vld [vmem:[#allocation2 + $0x50] sm:$0xff]
        %v5010 = vld [vmem:[#allocation2 + $0x58] sm:$0xff]
        %v5011 = vld [vmem:[#allocation2 + $0x60] sm:$0xff]
        %v5012 = vld [vmem:[#allocation2 + $0x68] sm:$0xff]
        %v5013 = vld [vmem:[#allocation2 + $0x70] sm:$0xff]
        %v5014 = vld [vmem:[#allocation2 + $0x78] sm:$0xff]
        %vm5015 = vcmask 261120
        %v5017 = vsel %vm5015, %v4999, 0
        %v5020 = vsel %vm5015, %v5000, 0
        %v5023 = vsel %vm5015, %v5001, 0
        %v5026 = vsel %vm5015, %v5002, 0
        %v5029 = vsel %vm5015, %v4965, 0
        %v5032 = vsel %vm5015, %v4966, 0
        %v5035 = vsel %vm5015, %v4967, 0
        %v5038 = vsel %vm5015, %v4968, 0
        %5040 = vmatprep.subr.bf16.mxu0 0
        %5041 = vmatpush1.bf16.xpose.msra.mxu0 %v5029
        %5042 = vmatprep.subr.bf16.mxu0 0
        %5043 = vmatpush1.bf16.xpose.msra.mxu0 %v5032
        %5044 = vmatprep.subr.bf16.mxu0 0
        %5045 = vmatpush1.bf16.xpose.msra.mxu0 %v5035
        %5046 = vmatprep.subr.bf16.mxu0 0
        %5047 = vmatpush1.bf16.xpose.msra.mxu0 %v5038
        %5048 = vmatprep.subr.bf16.mxu0 0
        %5049 = vmatpush1.bf16.xpose.msra.mxu0 0
        %5050 = vmatprep.subr.bf16.mxu0 0
        %5051 = vmatpush1.bf16.xpose.msra.mxu0 0
        %5052 = vmatprep.subr.bf16.mxu0 0
        %5053 = vmatpush1.bf16.xpose.msra.mxu0 0
        %5054 = vmatprep.subr.bf16.mxu0 0
        %5055 = vmatpush1.bf16.xpose.msra.mxu0 0
        %5056 = vmatprep.subr.bf16.mxu0 0
        %5057 = vmatpush1.bf16.xpose.msra.mxu0 0
        %5058 = vmatprep.subr.bf16.mxu0 0
        %5059 = vmatpush1.bf16.xpose.msra.mxu0 0
        %5060 = vmatprep.subr.bf16.mxu0 0
        %5061 = vmatpush1.bf16.xpose.msra.mxu0 0
        %5062 = vmatprep.subr.bf16.mxu0 0
        %5063 = vmatpush1.bf16.xpose.msra.mxu0 0
        %5064 = vmatprep.subr.bf16.mxu0 0
        %5065 = vmatpush1.bf16.xpose.msra.mxu0 0
        %5066 = vmatprep.subr.bf16.mxu0 0
        %5067 = vmatpush1.bf16.xpose.msra.mxu0 0
        %5068 = vmatprep.subr.bf16.mxu0 0
        %5069 = vmatpush1.bf16.xpose.msra.mxu0 0
        %5070 = vmatprep.subr.bf16.mxu0 0
        %5071 = vmatpush1.bf16.xpose.msra.mxu0 0
        %5072 = vmatprep.mubr.bf16.mxu0 0
        %5073 = vmatmul.mubr.bf16.gmra.mrb[0].mxu0 %v5017
        %v5074 = vpop.f32.mrb[0].mxu0
        %v5075 = vadd.f32 0.0, %v5074
        %v5076 = vpop.f32.mrb[0].mxu0
        %v5077 = vpop.f32.mrb[0].mxu0
        %v5078 = vadd.f32 0.0, %v5077
        %v5079 = vpop.f32.mrb[0].mxu0
        %5080 = vmatprep.mubr.bf16.mxu0 0
        %5081 = vmatmul.mubr.bf16.gmra.mrb[0].mxu0 %v5020
        %v5082 = vpop.f32.mrb[0].mxu0
        %v5083 = vadd.f32 0.0, %v5082
        %v5084 = vpop.f32.mrb[0].mxu0
        %v5085 = vpop.f32.mrb[0].mxu0
        %v5086 = vadd.f32 0.0, %v5085
        %v5087 = vpop.f32.mrb[0].mxu0
        %5088 = vmatprep.mubr.bf16.mxu0 0
        %5089 = vmatmul.mubr.bf16.gmra.mrb[0].mxu0 %v5023
        %v5090 = vpop.f32.mrb[0].mxu0
        %v5091 = vadd.f32 0.0, %v5090
        %v5092 = vpop.f32.mrb[0].mxu0
        %v5093 = vpop.f32.mrb[0].mxu0
        %v5094 = vadd.f32 0.0, %v5093
        %v5095 = vpop.f32.mrb[0].mxu0
        %5096 = vmatprep.mubr.bf16.mxu0 0
        %5097 = vmatmul.mubr.bf16.gmra.mrb[0].mxu0 %v5026
        %v5098 = vpop.f32.mrb[0].mxu0
        %v5099 = vadd.f32 0.0, %v5098
        %v5100 = vpop.f32.mrb[0].mxu0
        %v5101 = vpop.f32.mrb[0].mxu0
        %v5102 = vadd.f32 0.0, %v5101
        %v5103 = vpop.f32.mrb[0].mxu0
        %5104 = vdwg.mxu0
        %v5106 = vsel %vm5015, %v5003, 0
        %v5109 = vsel %vm5015, %v5004, 0
        %v5112 = vsel %vm5015, %v5005, 0
        %v5115 = vsel %vm5015, %v5006, 0
        %v5118 = vsel %vm5015, %v4969, 0
        %v5121 = vsel %vm5015, %v4970, 0
        %v5124 = vsel %vm5015, %v4971, 0
        %v5127 = vsel %vm5015, %v4972, 0
        %5129 = vmatprep.subr.bf16.mxu0 0
        %5130 = vmatpush1.bf16.xpose.msra.mxu0 %v5118
        %5131 = vmatprep.subr.bf16.mxu0 0
        %5132 = vmatpush1.bf16.xpose.msra.mxu0 %v5121
        %5133 = vmatprep.subr.bf16.mxu0 0
        %5134 = vmatpush1.bf16.xpose.msra.mxu0 %v5124
        %5135 = vmatprep.subr.bf16.mxu0 0
        %5136 = vmatpush1.bf16.xpose.msra.mxu0 %v5127
        %5137 = vmatprep.subr.bf16.mxu0 0
        %5138 = vmatpush1.bf16.xpose.msra.mxu0 0
        %5139 = vmatprep.subr.bf16.mxu0 0
        %5140 = vmatpush1.bf16.xpose.msra.mxu0 0
        %5141 = vmatprep.subr.bf16.mxu0 0
        %5142 = vmatpush1.bf16.xpose.msra.mxu0 0
        %5143 = vmatprep.subr.bf16.mxu0 0
        %5144 = vmatpush1.bf16.xpose.msra.mxu0 0
        %5145 = vmatprep.subr.bf16.mxu0 0
        %5146 = vmatpush1.bf16.xpose.msra.mxu0 0
        %5147 = vmatprep.subr.bf16.mxu0 0
        %5148 = vmatpush1.bf16.xpose.msra.mxu0 0
        %5149 = vmatprep.subr.bf16.mxu0 0
        %5150 = vmatpush1.bf16.xpose.msra.mxu0 0
        %5151 = vmatprep.subr.bf16.mxu0 0
        %5152 = vmatpush1.bf16.xpose.msra.mxu0 0
        %5153 = vmatprep.subr.bf16.mxu0 0
        %5154 = vmatpush1.bf16.xpose.msra.mxu0 0
        %5155 = vmatprep.subr.bf16.mxu0 0
        %5156 = vmatpush1.bf16.xpose.msra.mxu0 0
        %5157 = vmatprep.subr.bf16.mxu0 0
        %5158 = vmatpush1.bf16.xpose.msra.mxu0 0
        %5159 = vmatprep.subr.bf16.mxu0 0
        %5160 = vmatpush1.bf16.xpose.msra.mxu0 0
        %5161 = vmatprep.mubr.bf16.mxu0 0
        %5162 = vmatmul.mubr.bf16.gmra.mrb[0].mxu0 %v5106
        %v5163 = vpop.f32.mrb[0].mxu0
        %v5164 = vadd.f32 0.0, %v5163
        %v5165 = vpop.f32.mrb[0].mxu0
        %v5166 = vpop.f32.mrb[0].mxu0
        %v5167 = vadd.f32 0.0, %v5166
        %v5168 = vpop.f32.mrb[0].mxu0
        %5169 = vmatprep.mubr.bf16.mxu0 0
        %5170 = vmatmul.mubr.bf16.gmra.mrb[0].mxu0 %v5109
        %v5171 = vpop.f32.mrb[0].mxu0
        %v5172 = vadd.f32 0.0, %v5171
        %v5173 = vpop.f32.mrb[0].mxu0
        %v5174 = vpop.f32.mrb[0].mxu0
        %v5175 = vadd.f32 0.0, %v5174
        %v5176 = vpop.f32.mrb[0].mxu0
        %5177 = vmatprep.mubr.bf16.mxu0 0
        %5178 = vmatmul.mubr.bf16.gmra.mrb[0].mxu0 %v5112
        %v5179 = vpop.f32.mrb[0].mxu0
        %v5180 = vadd.f32 0.0, %v5179
        %v5181 = vpop.f32.mrb[0].mxu0
        %v5182 = vpop.f32.mrb[0].mxu0
        %v5183 = vadd.f32 0.0, %v5182
        %v5184 = vpop.f32.mrb[0].mxu0
        %5185 = vmatprep.mubr.bf16.mxu0 0
        %5186 = vmatmul.mubr.bf16.gmra.mrb[0].mxu0 %v5115
        %v5187 = vpop.f32.mrb[0].mxu0
        %v5188 = vadd.f32 0.0, %v5187
        %v5189 = vpop.f32.mrb[0].mxu0
        %v5190 = vpop.f32.mrb[0].mxu0
        %v5191 = vadd.f32 0.0, %v5190
        %v5192 = vpop.f32.mrb[0].mxu0
        %5193 = vdwg.mxu0
        %v5195 = vsel %vm5015, %v5007, 0
        %v5198 = vsel %vm5015, %v5008, 0
        %v5201 = vsel %vm5015, %v5009, 0
        %v5204 = vsel %vm5015, %v5010, 0
        %v5207 = vsel %vm5015, %v4973, 0
        %v5210 = vsel %vm5015, %v4974, 0
        %v5213 = vsel %vm5015, %v4975, 0
        %v5216 = vsel %vm5015, %v4976, 0
        %5218 = vmatprep.subr.bf16.mxu0 0
        %5219 = vmatpush1.bf16.xpose.msra.mxu0 %v5207
        %5220 = vmatprep.subr.bf16.mxu0 0
        %5221 = vmatpush1.bf16.xpose.msra.mxu0 %v5210
        %5222 = vmatprep.subr.bf16.mxu0 0
        %5223 = vmatpush1.bf16.xpose.msra.mxu0 %v5213
        %5224 = vmatprep.subr.bf16.mxu0 0
        %5225 = vmatpush1.bf16.xpose.msra.mxu0 %v5216
        %5226 = vmatprep.subr.bf16.mxu0 0
        %5227 = vmatpush1.bf16.xpose.msra.mxu0 0
        %5228 = vmatprep.subr.bf16.mxu0 0
        %5229 = vmatpush1.bf16.xpose.msra.mxu0 0
        %5230 = vmatprep.subr.bf16.mxu0 0
        %5231 = vmatpush1.bf16.xpose.msra.mxu0 0
        %5232 = vmatprep.subr.bf16.mxu0 0
        %5233 = vmatpush1.bf16.xpose.msra.mxu0 0
        %5234 = vmatprep.subr.bf16.mxu0 0
        %5235 = vmatpush1.bf16.xpose.msra.mxu0 0
        %5236 = vmatprep.subr.bf16.mxu0 0
        %5237 = vmatpush1.bf16.xpose.msra.mxu0 0
        %5238 = vmatprep.subr.bf16.mxu0 0
        %5239 = vmatpush1.bf16.xpose.msra.mxu0 0
        %5240 = vmatprep.subr.bf16.mxu0 0
        %5241 = vmatpush1.bf16.xpose.msra.mxu0 0
        %5242 = vmatprep.subr.bf16.mxu0 0
        %5243 = vmatpush1.bf16.xpose.msra.mxu0 0
        %5244 = vmatprep.subr.bf16.mxu0 0
        %5245 = vmatpush1.bf16.xpose.msra.mxu0 0
        %5246 = vmatprep.subr.bf16.mxu0 0
        %5247 = vmatpush1.bf16.xpose.msra.mxu0 0
        %5248 = vmatprep.subr.bf16.mxu0 0
        %5249 = vmatpush1.bf16.xpose.msra.mxu0 0
        %5250 = vmatprep.mubr.bf16.mxu0 0
        %5251 = vmatmul.mubr.bf16.gmra.mrb[0].mxu0 %v5195
        %v5252 = vpop.f32.mrb[0].mxu0
        %v5253 = vadd.f32 0.0, %v5252
        %v5254 = vpop.f32.mrb[0].mxu0
        %v5255 = vpop.f32.mrb[0].mxu0
        %v5256 = vadd.f32 0.0, %v5255
        %v5257 = vpop.f32.mrb[0].mxu0
        %5258 = vmatprep.mubr.bf16.mxu0 0
        %5259 = vmatmul.mubr.bf16.gmra.mrb[0].mxu0 %v5198
        %v5260 = vpop.f32.mrb[0].mxu0
        %v5261 = vadd.f32 0.0, %v5260
        %v5262 = vpop.f32.mrb[0].mxu0
        %v5263 = vpop.f32.mrb[0].mxu0
        %v5264 = vadd.f32 0.0, %v5263
        %v5265 = vpop.f32.mrb[0].mxu0
        %5266 = vmatprep.mubr.bf16.mxu0 0
        %5267 = vmatmul.mubr.bf16.gmra.mrb[0].mxu0 %v5201
        %v5268 = vpop.f32.mrb[0].mxu0
        %v5269 = vadd.f32 0.0, %v5268
        %v5270 = vpop.f32.mrb[0].mxu0
        %v5271 = vpop.f32.mrb[0].mxu0
        %v5272 = vadd.f32 0.0, %v5271
        %v5273 = vpop.f32.mrb[0].mxu0
        %5274 = vmatprep.mubr.bf16.mxu0 0
        %5275 = vmatmul.mubr.bf16.gmra.mrb[0].mxu0 %v5204
        %v5276 = vpop.f32.mrb[0].mxu0
        %v5277 = vadd.f32 0.0, %v5276
        %v5278 = vpop.f32.mrb[0].mxu0
        %v5279 = vpop.f32.mrb[0].mxu0
        %v5280 = vadd.f32 0.0, %v5279
        %v5281 = vpop.f32.mrb[0].mxu0
        %5282 = vdwg.mxu0
        %v5284 = vsel %vm5015, %v5011, 0
        %v5287 = vsel %vm5015, %v5012, 0
        %v5290 = vsel %vm5015, %v5013, 0
        %v5293 = vsel %vm5015, %v5014, 0
        %v5296 = vsel %vm5015, %v4977, 0
        %v5299 = vsel %vm5015, %v4978, 0
        %v5302 = vsel %vm5015, %v4979, 0
        %v5305 = vsel %vm5015, %v4980, 0
        %5307 = vmatprep.subr.bf16.mxu0 0
        %5308 = vmatpush1.bf16.xpose.msra.mxu0 %v5296
        %5309 = vmatprep.subr.bf16.mxu0 0
        %5310 = vmatpush1.bf16.xpose.msra.mxu0 %v5299
        %5311 = vmatprep.subr.bf16.mxu0 0
        %5312 = vmatpush1.bf16.xpose.msra.mxu0 %v5302
        %5313 = vmatprep.subr.bf16.mxu0 0
        %5314 = vmatpush1.bf16.xpose.msra.mxu0 %v5305
        %5315 = vmatprep.subr.bf16.mxu0 0
        %5316 = vmatpush1.bf16.xpose.msra.mxu0 0
        %5317 = vmatprep.subr.bf16.mxu0 0
        %5318 = vmatpush1.bf16.xpose.msra.mxu0 0
        %5319 = vmatprep.subr.bf16.mxu0 0
        %5320 = vmatpush1.bf16.xpose.msra.mxu0 0
        %5321 = vmatprep.subr.bf16.mxu0 0
        %5322 = vmatpush1.bf16.xpose.msra.mxu0 0
        %5323 = vmatprep.subr.bf16.mxu0 0
        %5324 = vmatpush1.bf16.xpose.msra.mxu0 0
        %5325 = vmatprep.subr.bf16.mxu0 0
        %5326 = vmatpush1.bf16.xpose.msra.mxu0 0
        %5327 = vmatprep.subr.bf16.mxu0 0
        %5328 = vmatpush1.bf16.xpose.msra.mxu0 0
        %5329 = vmatprep.subr.bf16.mxu0 0
        %5330 = vmatpush1.bf16.xpose.msra.mxu0 0
        %5331 = vmatprep.subr.bf16.mxu0 0
        %5332 = vmatpush1.bf16.xpose.msra.mxu0 0
        %5333 = vmatprep.subr.bf16.mxu0 0
        %5334 = vmatpush1.bf16.xpose.msra.mxu0 0
        %5335 = vmatprep.subr.bf16.mxu0 0
        %5336 = vmatpush1.bf16.xpose.msra.mxu0 0
        %5337 = vmatprep.subr.bf16.mxu0 0
        %5338 = vmatpush1.bf16.xpose.msra.mxu0 0
        %5339 = vmatprep.mubr.bf16.mxu0 0
        %5340 = vmatmul.mubr.bf16.gmra.mrb[0].mxu0 %v5284
        %v5341 = vpop.f32.mrb[0].mxu0
        %v5342 = vadd.f32 0.0, %v5341
        %v5343 = vpop.f32.mrb[0].mxu0
        %v5344 = vpop.f32.mrb[0].mxu0
        %v5345 = vadd.f32 0.0, %v5344
        %v5346 = vpop.f32.mrb[0].mxu0
        %5347 = vmatprep.mubr.bf16.mxu0 0
        %5348 = vmatmul.mubr.bf16.gmra.mrb[0].mxu0 %v5287
        %v5349 = vpop.f32.mrb[0].mxu0
        %v5350 = vadd.f32 0.0, %v5349
        %v5351 = vpop.f32.mrb[0].mxu0
        %v5352 = vpop.f32.mrb[0].mxu0
        %v5353 = vadd.f32 0.0, %v5352
        %v5354 = vpop.f32.mrb[0].mxu0
        %5355 = vmatprep.mubr.bf16.mxu0 0
        %5356 = vmatmul.mubr.bf16.gmra.mrb[0].mxu0 %v5290
        %v5357 = vpop.f32.mrb[0].mxu0
        %v5358 = vadd.f32 0.0, %v5357
        %v5359 = vpop.f32.mrb[0].mxu0
        %v5360 = vpop.f32.mrb[0].mxu0
        %v5361 = vadd.f32 0.0, %v5360
        %v5362 = vpop.f32.mrb[0].mxu0
        %5363 = vmatprep.mubr.bf16.mxu0 0
        %5364 = vmatmul.mubr.bf16.gmra.mrb[0].mxu0 %v5293
        %v5365 = vpop.f32.mrb[0].mxu0
        %v5366 = vadd.f32 0.0, %v5365
        %v5367 = vpop.f32.mrb[0].mxu0
        %v5368 = vpop.f32.mrb[0].mxu0
        %v5369 = vadd.f32 0.0, %v5368
        %v5370 = vpop.f32.mrb[0].mxu0
        %5371 = vdwg.mxu0
        %v5372 = vld [vmem:[#allocation5] sm:$0xff]
        %v5373 = vld [vmem:[#allocation5 + $0x8] sm:$0xff]
        %v5374 = vld [vmem:[#allocation5 + $0x10] sm:$0xff]
        %v5375 = vld [vmem:[#allocation5 + $0x18] sm:$0xff]
        %v5376 = vld [vmem:[#allocation5 + $0x20] sm:$0xff]
        %v5377 = vld [vmem:[#allocation5 + $0x28] sm:$0xff]
        %v5378 = vld [vmem:[#allocation5 + $0x30] sm:$0xff]
        %v5379 = vld [vmem:[#allocation5 + $0x38] sm:$0xff]
        %v5380 = vld [vmem:[#allocation5 + $0x40] sm:$0xff]
        %v5381 = vld [vmem:[#allocation5 + $0x48] sm:$0xff]
        %v5382 = vld [vmem:[#allocation5 + $0x50] sm:$0xff]
        %v5383 = vld [vmem:[#allocation5 + $0x58] sm:$0xff]
        %v5384 = vld [vmem:[#allocation5 + $0x60] sm:$0xff]
        %v5385 = vld [vmem:[#allocation5 + $0x68] sm:$0xff]
        %v5386 = vld [vmem:[#allocation5 + $0x70] sm:$0xff]
        %v5387 = vld [vmem:[#allocation5 + $0x78] sm:$0xff]
        %v5388 = vld [vmem:[#allocation5 + $0x80] sm:$0xff]
        %v5389 = vld [vmem:[#allocation5 + $0x88] sm:$0xff]
        %v5390 = vld [vmem:[#allocation5 + $0x90] sm:$0xff]
        %v5391 = vld [vmem:[#allocation5 + $0x98] sm:$0xff]
        %v5392 = vld [vmem:[#allocation5 + $0xa0] sm:$0xff]
        %v5393 = vld [vmem:[#allocation5 + $0xa8] sm:$0xff]
        %v5394 = vld [vmem:[#allocation5 + $0xb0] sm:$0xff]
        %v5395 = vld [vmem:[#allocation5 + $0xb8] sm:$0xff]
        %v5396 = vld [vmem:[#allocation5 + $0xc0] sm:$0xff]
        %v5397 = vld [vmem:[#allocation5 + $0xc8] sm:$0xff]
        %v5398 = vld [vmem:[#allocation5 + $0xd0] sm:$0xff]
        %v5399 = vld [vmem:[#allocation5 + $0xd8] sm:$0xff]
        %v5400 = vld [vmem:[#allocation5 + $0xe0] sm:$0xff]
        %v5401 = vld [vmem:[#allocation5 + $0xe8] sm:$0xff]
        %v5402 = vld [vmem:[#allocation5 + $0xf0] sm:$0xff]
        %v5403 = vld [vmem:[#allocation5 + $0xf8] sm:$0xff]
        %vm5404 = vcmask 523264
        %v5405 = vsel %vm5404, %v5075, -inf
        %5406 = vmax.xlane.f32.xlu0 %v5405
        %v5407 = vpop.xlane.xlu0 %5406
        %v5408 = vsel %vm5404, %v5078, -inf
        %5409 = vmax.xlane.f32.xlu0 %v5408
        %v5410 = vpop.xlane.xlu0 %5409
        %v5411 = vsel %vm5404, %v5083, -inf
        %5412 = vmax.xlane.f32.xlu0 %v5411
        %v5413 = vpop.xlane.xlu0 %5412
        %v5414 = vsel %vm5404, %v5086, -inf
        %5415 = vmax.xlane.f32.xlu0 %v5414
        %v5416 = vpop.xlane.xlu0 %5415
        %v5417 = vsel %vm5404, %v5091, -inf
        %5418 = vmax.xlane.f32.xlu0 %v5417
        %v5419 = vpop.xlane.xlu0 %5418
        %v5420 = vsel %vm5404, %v5094, -inf
        %5421 = vmax.xlane.f32.xlu0 %v5420
        %v5422 = vpop.xlane.xlu0 %5421
        %v5423 = vsel %vm5404, %v5099, -inf
        %5424 = vmax.xlane.f32.xlu0 %v5423
        %v5425 = vpop.xlane.xlu0 %5424
        %v5426 = vsel %vm5404, %v5102, -inf
        %5427 = vmax.xlane.f32.xlu0 %v5426
        %v5428 = vpop.xlane.xlu0 %5427
        %v5429 = vsel %vm5404, %v5164, -inf
        %5430 = vmax.xlane.f32.xlu0 %v5429
        %v5431 = vpop.xlane.xlu0 %5430
        %v5432 = vsel %vm5404, %v5167, -inf
        %5433 = vmax.xlane.f32.xlu0 %v5432
        %v5434 = vpop.xlane.xlu0 %5433
        %v5435 = vsel %vm5404, %v5172, -inf
        %5436 = vmax.xlane.f32.xlu0 %v5435
        %v5437 = vpop.xlane.xlu0 %5436
        %v5438 = vsel %vm5404, %v5175, -inf
        %5439 = vmax.xlane.f32.xlu0 %v5438
        %v5440 = vpop.xlane.xlu0 %5439
        %v5441 = vsel %vm5404, %v5180, -inf
        %5442 = vmax.xlane.f32.xlu0 %v5441
        %v5443 = vpop.xlane.xlu0 %5442
        %v5444 = vsel %vm5404, %v5183, -inf
        %5445 = vmax.xlane.f32.xlu0 %v5444
        %v5446 = vpop.xlane.xlu0 %5445
        %v5447 = vsel %vm5404, %v5188, -inf
        %5448 = vmax.xlane.f32.xlu0 %v5447
        %v5449 = vpop.xlane.xlu0 %5448
        %v5450 = vsel %vm5404, %v5191, -inf
        %5451 = vmax.xlane.f32.xlu0 %v5450
        %v5452 = vpop.xlane.xlu0 %5451
        %v5453 = vsel %vm5404, %v5253, -inf
        %5454 = vmax.xlane.f32.xlu0 %v5453
        %v5455 = vpop.xlane.xlu0 %5454
        %v5456 = vsel %vm5404, %v5256, -inf
        %5457 = vmax.xlane.f32.xlu0 %v5456
        %v5458 = vpop.xlane.xlu0 %5457
        %v5459 = vsel %vm5404, %v5261, -inf
        %5460 = vmax.xlane.f32.xlu0 %v5459
        %v5461 = vpop.xlane.xlu0 %5460
        %v5462 = vsel %vm5404, %v5264, -inf
        %5463 = vmax.xlane.f32.xlu0 %v5462
        %v5464 = vpop.xlane.xlu0 %5463
        %v5465 = vsel %vm5404, %v5269, -inf
        %5466 = vmax.xlane.f32.xlu0 %v5465
        %v5467 = vpop.xlane.xlu0 %5466
        %v5468 = vsel %vm5404, %v5272, -inf
        %5469 = vmax.xlane.f32.xlu0 %v5468
        %v5470 = vpop.xlane.xlu0 %5469
        %v5471 = vsel %vm5404, %v5277, -inf
        %5472 = vmax.xlane.f32.xlu0 %v5471
        %v5473 = vpop.xlane.xlu0 %5472
        %v5474 = vsel %vm5404, %v5280, -inf
        %5475 = vmax.xlane.f32.xlu0 %v5474
        %v5476 = vpop.xlane.xlu0 %5475
        %v5477 = vsel %vm5404, %v5342, -inf
        %5478 = vmax.xlane.f32.xlu0 %v5477
        %v5479 = vpop.xlane.xlu0 %5478
        %v5480 = vsel %vm5404, %v5345, -inf
        %5481 = vmax.xlane.f32.xlu0 %v5480
        %v5482 = vpop.xlane.xlu0 %5481
        %v5483 = vsel %vm5404, %v5350, -inf
        %5484 = vmax.xlane.f32.xlu0 %v5483
        %v5485 = vpop.xlane.xlu0 %5484
        %v5486 = vsel %vm5404, %v5353, -inf
        %5487 = vmax.xlane.f32.xlu0 %v5486
        %v5488 = vpop.xlane.xlu0 %5487
        %v5489 = vsel %vm5404, %v5358, -inf
        %5490 = vmax.xlane.f32.xlu0 %v5489
        %v5491 = vpop.xlane.xlu0 %5490
        %v5492 = vsel %vm5404, %v5361, -inf
        %5493 = vmax.xlane.f32.xlu0 %v5492
        %v5494 = vpop.xlane.xlu0 %5493
        %v5495 = vsel %vm5404, %v5366, -inf
        %5496 = vmax.xlane.f32.xlu0 %v5495
        %v5497 = vpop.xlane.xlu0 %5496
        %v5498 = vsel %vm5404, %v5369, -inf
        %5499 = vmax.xlane.f32.xlu0 %v5498
        %v5500 = vpop.xlane.xlu0 %5499
        %v5501 = vmax.f32 %v5372, %v5407
        %v5502 = vmax.f32 %v5373, %v5410
        %v5503 = vmax.f32 %v5374, %v5413
        %v5504 = vmax.f32 %v5375, %v5416
        %v5505 = vmax.f32 %v5376, %v5419
        %v5506 = vmax.f32 %v5377, %v5422
        %v5507 = vmax.f32 %v5378, %v5425
        %v5508 = vmax.f32 %v5379, %v5428
        %v5509 = vmax.f32 %v5380, %v5431
        %v5510 = vmax.f32 %v5381, %v5434
        %v5511 = vmax.f32 %v5382, %v5437
        %v5512 = vmax.f32 %v5383, %v5440
        %v5513 = vmax.f32 %v5384, %v5443
        %v5514 = vmax.f32 %v5385, %v5446
        %v5515 = vmax.f32 %v5386, %v5449
        %v5516 = vmax.f32 %v5387, %v5452
        %v5517 = vmax.f32 %v5388, %v5455
        %v5518 = vmax.f32 %v5389, %v5458
        %v5519 = vmax.f32 %v5390, %v5461
        %v5520 = vmax.f32 %v5391, %v5464
        %v5521 = vmax.f32 %v5392, %v5467
        %v5522 = vmax.f32 %v5393, %v5470
        %v5523 = vmax.f32 %v5394, %v5473
        %v5524 = vmax.f32 %v5395, %v5476
        %v5525 = vmax.f32 %v5396, %v5479
        %v5526 = vmax.f32 %v5397, %v5482
        %v5527 = vmax.f32 %v5398, %v5485
        %v5528 = vmax.f32 %v5399, %v5488
        %v5529 = vmax.f32 %v5400, %v5491
        %v5530 = vmax.f32 %v5401, %v5494
        %v5531 = vmax.f32 %v5402, %v5497
        %v5532 = vmax.f32 %v5403, %v5500
        %v5533 = vsub.f32 %v5372, %v5501
        %v5534 = vsub.f32 %v5373, %v5502
        %v5535 = vsub.f32 %v5374, %v5503
        %v5536 = vsub.f32 %v5375, %v5504
        %v5537 = vsub.f32 %v5376, %v5505
        %v5538 = vsub.f32 %v5377, %v5506
        %v5539 = vsub.f32 %v5378, %v5507
        %v5540 = vsub.f32 %v5379, %v5508
        %v5541 = vsub.f32 %v5380, %v5509
        %v5542 = vsub.f32 %v5381, %v5510
        %v5543 = vsub.f32 %v5382, %v5511
        %v5544 = vsub.f32 %v5383, %v5512
        %v5545 = vsub.f32 %v5384, %v5513
        %v5546 = vsub.f32 %v5385, %v5514
        %v5547 = vsub.f32 %v5386, %v5515
        %v5548 = vsub.f32 %v5387, %v5516
        %v5549 = vsub.f32 %v5388, %v5517
        %v5550 = vsub.f32 %v5389, %v5518
        %v5551 = vsub.f32 %v5390, %v5519
        %v5552 = vsub.f32 %v5391, %v5520
        %v5553 = vsub.f32 %v5392, %v5521
        %v5554 = vsub.f32 %v5393, %v5522
        %v5555 = vsub.f32 %v5394, %v5523
        %v5556 = vsub.f32 %v5395, %v5524
        %v5557 = vsub.f32 %v5396, %v5525
        %v5558 = vsub.f32 %v5397, %v5526
        %v5559 = vsub.f32 %v5398, %v5527
        %v5560 = vsub.f32 %v5399, %v5528
        %v5561 = vsub.f32 %v5400, %v5529
        %v5562 = vsub.f32 %v5401, %v5530
        %v5563 = vsub.f32 %v5402, %v5531
        %v5564 = vsub.f32 %v5403, %v5532
        %v5565 = vmul.f32 %v5533, 1.442695
        %v5566 = vpow.pop %v5565
        %v5567 = vmul.f32 %v5534, 1.442695
        %v5568 = vpow.pop %v5567
        %v5569 = vmul.f32 %v5535, 1.442695
        %v5570 = vpow.pop %v5569
        %v5571 = vmul.f32 %v5536, 1.442695
        %v5572 = vpow.pop %v5571
        %v5573 = vmul.f32 %v5537, 1.442695
        %v5574 = vpow.pop %v5573
        %v5575 = vmul.f32 %v5538, 1.442695
        %v5576 = vpow.pop %v5575
        %v5577 = vmul.f32 %v5539, 1.442695
        %v5578 = vpow.pop %v5577
        %v5579 = vmul.f32 %v5540, 1.442695
        %v5580 = vpow.pop %v5579
        %v5581 = vmul.f32 %v5541, 1.442695
        %v5582 = vpow.pop %v5581
        %v5583 = vmul.f32 %v5542, 1.442695
        %v5584 = vpow.pop %v5583
        %v5585 = vmul.f32 %v5543, 1.442695
        %v5586 = vpow.pop %v5585
        %v5587 = vmul.f32 %v5544, 1.442695
        %v5588 = vpow.pop %v5587
        %v5589 = vmul.f32 %v5545, 1.442695
        %v5590 = vpow.pop %v5589
        %v5591 = vmul.f32 %v5546, 1.442695
        %v5592 = vpow.pop %v5591
        %v5593 = vmul.f32 %v5547, 1.442695
        %v5594 = vpow.pop %v5593
        %v5595 = vmul.f32 %v5548, 1.442695
        %v5596 = vpow.pop %v5595
        %v5597 = vmul.f32 %v5549, 1.442695
        %v5598 = vpow.pop %v5597
        %v5599 = vmul.f32 %v5550, 1.442695
        %v5600 = vpow.pop %v5599
        %v5601 = vmul.f32 %v5551, 1.442695
        %v5602 = vpow.pop %v5601
        %v5603 = vmul.f32 %v5552, 1.442695
        %v5604 = vpow.pop %v5603
        %v5605 = vmul.f32 %v5553, 1.442695
        %v5606 = vpow.pop %v5605
        %v5607 = vmul.f32 %v5554, 1.442695
        %v5608 = vpow.pop %v5607
        %v5609 = vmul.f32 %v5555, 1.442695
        %v5610 = vpow.pop %v5609
        %v5611 = vmul.f32 %v5556, 1.442695
        %v5612 = vpow.pop %v5611
        %v5613 = vmul.f32 %v5557, 1.442695
        %v5614 = vpow.pop %v5613
        %v5615 = vmul.f32 %v5558, 1.442695
        %v5616 = vpow.pop %v5615
        %v5617 = vmul.f32 %v5559, 1.442695
        %v5618 = vpow.pop %v5617
        %v5619 = vmul.f32 %v5560, 1.442695
        %v5620 = vpow.pop %v5619
        %v5621 = vmul.f32 %v5561, 1.442695
        %v5622 = vpow.pop %v5621
        %v5623 = vmul.f32 %v5562, 1.442695
        %v5624 = vpow.pop %v5623
        %v5625 = vmul.f32 %v5563, 1.442695
        %v5626 = vpow.pop %v5625
        %v5627 = vmul.f32 %v5564, 1.442695
        %v5628 = vpow.pop %v5627
        %5630 = vset.pattern.permute.xlu0 0
        %5631 = vperm.xlu0 %5630, %v5501
        %v5632 = vpop.permute.xlu0 %5631
        %5635 = vset.pattern.permute.xlu0 0
        %5636 = vperm.xlu0 %5635, %v5502
        %v5637 = vpop.permute.xlu0 %5636
        %5640 = vset.pattern.permute.xlu0 0
        %5641 = vperm.xlu0 %5640, %v5503
        %v5642 = vpop.permute.xlu0 %5641
        %5645 = vset.pattern.permute.xlu0 0
        %5646 = vperm.xlu0 %5645, %v5504
        %v5647 = vpop.permute.xlu0 %5646
        %5650 = vset.pattern.permute.xlu0 0
        %5651 = vperm.xlu0 %5650, %v5505
        %v5652 = vpop.permute.xlu0 %5651
        %5655 = vset.pattern.permute.xlu0 0
        %5656 = vperm.xlu0 %5655, %v5506
        %v5657 = vpop.permute.xlu0 %5656
        %5660 = vset.pattern.permute.xlu0 0
        %5661 = vperm.xlu0 %5660, %v5507
        %v5662 = vpop.permute.xlu0 %5661
        %5665 = vset.pattern.permute.xlu0 0
        %5666 = vperm.xlu0 %5665, %v5508
        %v5667 = vpop.permute.xlu0 %5666
        %5670 = vset.pattern.permute.xlu0 0
        %5671 = vperm.xlu0 %5670, %v5509
        %v5672 = vpop.permute.xlu0 %5671
        %5675 = vset.pattern.permute.xlu0 0
        %5676 = vperm.xlu0 %5675, %v5510
        %v5677 = vpop.permute.xlu0 %5676
        %5680 = vset.pattern.permute.xlu0 0
        %5681 = vperm.xlu0 %5680, %v5511
        %v5682 = vpop.permute.xlu0 %5681
        %5685 = vset.pattern.permute.xlu0 0
        %5686 = vperm.xlu0 %5685, %v5512
        %v5687 = vpop.permute.xlu0 %5686
        %5690 = vset.pattern.permute.xlu0 0
        %5691 = vperm.xlu0 %5690, %v5513
        %v5692 = vpop.permute.xlu0 %5691
        %5695 = vset.pattern.permute.xlu0 0
        %5696 = vperm.xlu0 %5695, %v5514
        %v5697 = vpop.permute.xlu0 %5696
        %5700 = vset.pattern.permute.xlu0 0
        %5701 = vperm.xlu0 %5700, %v5515
        %v5702 = vpop.permute.xlu0 %5701
        %5705 = vset.pattern.permute.xlu0 0
        %5706 = vperm.xlu0 %5705, %v5516
        %v5707 = vpop.permute.xlu0 %5706
        %5710 = vset.pattern.permute.xlu0 0
        %5711 = vperm.xlu0 %5710, %v5517
        %v5712 = vpop.permute.xlu0 %5711
        %5715 = vset.pattern.permute.xlu0 0
        %5716 = vperm.xlu0 %5715, %v5518
        %v5717 = vpop.permute.xlu0 %5716
        %5720 = vset.pattern.permute.xlu0 0
        %5721 = vperm.xlu0 %5720, %v5519
        %v5722 = vpop.permute.xlu0 %5721
        %5725 = vset.pattern.permute.xlu0 0
        %5726 = vperm.xlu0 %5725, %v5520
        %v5727 = vpop.permute.xlu0 %5726
        %5730 = vset.pattern.permute.xlu0 0
        %5731 = vperm.xlu0 %5730, %v5521
        %v5732 = vpop.permute.xlu0 %5731
        %5735 = vset.pattern.permute.xlu0 0
        %5736 = vperm.xlu0 %5735, %v5522
        %v5737 = vpop.permute.xlu0 %5736
        %5740 = vset.pattern.permute.xlu0 0
        %5741 = vperm.xlu0 %5740, %v5523
        %v5742 = vpop.permute.xlu0 %5741
        %5745 = vset.pattern.permute.xlu0 0
        %5746 = vperm.xlu0 %5745, %v5524
        %v5747 = vpop.permute.xlu0 %5746
        %5750 = vset.pattern.permute.xlu0 0
        %5751 = vperm.xlu0 %5750, %v5525
        %v5752 = vpop.permute.xlu0 %5751
        %5755 = vset.pattern.permute.xlu0 0
        %5756 = vperm.xlu0 %5755, %v5526
        %v5757 = vpop.permute.xlu0 %5756
        %5760 = vset.pattern.permute.xlu0 0
        %5761 = vperm.xlu0 %5760, %v5527
        %v5762 = vpop.permute.xlu0 %5761
        %5765 = vset.pattern.permute.xlu0 0
        %5766 = vperm.xlu0 %5765, %v5528
        %v5767 = vpop.permute.xlu0 %5766
        %5770 = vset.pattern.permute.xlu0 0
        %5771 = vperm.xlu0 %5770, %v5529
        %v5772 = vpop.permute.xlu0 %5771
        %5775 = vset.pattern.permute.xlu0 0
        %5776 = vperm.xlu0 %5775, %v5530
        %v5777 = vpop.permute.xlu0 %5776
        %5780 = vset.pattern.permute.xlu0 0
        %5781 = vperm.xlu0 %5780, %v5531
        %v5782 = vpop.permute.xlu0 %5781
        %5785 = vset.pattern.permute.xlu0 0
        %5786 = vperm.xlu0 %5785, %v5532
        %v5787 = vpop.permute.xlu0 %5786
        %v5789 = vsub.f32 %v5075, %v5632
        %v5790 = vsub.f32 %v5078, %v5637
        %v5791 = vsub.f32 %v5083, %v5642
        %v5792 = vsub.f32 %v5086, %v5647
        %v5793 = vsub.f32 %v5091, %v5652
        %v5794 = vsub.f32 %v5094, %v5657
        %v5795 = vsub.f32 %v5099, %v5662
        %v5796 = vsub.f32 %v5102, %v5667
        %v5797 = vsub.f32 %v5164, %v5672
        %v5798 = vsub.f32 %v5167, %v5677
        %v5799 = vsub.f32 %v5172, %v5682
        %v5800 = vsub.f32 %v5175, %v5687
        %v5801 = vsub.f32 %v5180, %v5692
        %v5802 = vsub.f32 %v5183, %v5697
        %v5803 = vsub.f32 %v5188, %v5702
        %v5804 = vsub.f32 %v5191, %v5707
        %v5805 = vsub.f32 %v5253, %v5712
        %v5806 = vsub.f32 %v5256, %v5717
        %v5807 = vsub.f32 %v5261, %v5722
        %v5808 = vsub.f32 %v5264, %v5727
        %v5809 = vsub.f32 %v5269, %v5732
        %v5810 = vsub.f32 %v5272, %v5737
        %v5811 = vsub.f32 %v5277, %v5742
        %v5812 = vsub.f32 %v5280, %v5747
        %v5813 = vsub.f32 %v5342, %v5752
        %v5814 = vsub.f32 %v5345, %v5757
        %v5815 = vsub.f32 %v5350, %v5762
        %v5816 = vsub.f32 %v5353, %v5767
        %v5817 = vsub.f32 %v5358, %v5772
        %v5818 = vsub.f32 %v5361, %v5777
        %v5819 = vsub.f32 %v5366, %v5782
        %v5820 = vsub.f32 %v5369, %v5787
        %v5821 = vmul.f32 %v5789, 1.442695
        %v5822 = vpow.pop %v5821
        %v5823 = vmul.f32 %v5790, 1.442695
        %v5824 = vpow.pop %v5823
        %v5825 = vmul.f32 %v5791, 1.442695
        %v5826 = vpow.pop %v5825
        %v5827 = vmul.f32 %v5792, 1.442695
        %v5828 = vpow.pop %v5827
        %v5829 = vmul.f32 %v5793, 1.442695
        %v5830 = vpow.pop %v5829
        %v5831 = vmul.f32 %v5794, 1.442695
        %v5832 = vpow.pop %v5831
        %v5833 = vmul.f32 %v5795, 1.442695
        %v5834 = vpow.pop %v5833
        %v5835 = vmul.f32 %v5796, 1.442695
        %v5836 = vpow.pop %v5835
        %v5837 = vmul.f32 %v5797, 1.442695
        %v5838 = vpow.pop %v5837
        %v5839 = vmul.f32 %v5798, 1.442695
        %v5840 = vpow.pop %v5839
        %v5841 = vmul.f32 %v5799, 1.442695
        %v5842 = vpow.pop %v5841
        %v5843 = vmul.f32 %v5800, 1.442695
        %v5844 = vpow.pop %v5843
        %v5845 = vmul.f32 %v5801, 1.442695
        %v5846 = vpow.pop %v5845
        %v5847 = vmul.f32 %v5802, 1.442695
        %v5848 = vpow.pop %v5847
        %v5849 = vmul.f32 %v5803, 1.442695
        %v5850 = vpow.pop %v5849
        %v5851 = vmul.f32 %v5804, 1.442695
        %v5852 = vpow.pop %v5851
        %v5853 = vmul.f32 %v5805, 1.442695
        %v5854 = vpow.pop %v5853
        %v5855 = vmul.f32 %v5806, 1.442695
        %v5856 = vpow.pop %v5855
        %v5857 = vmul.f32 %v5807, 1.442695
        %v5858 = vpow.pop %v5857
        %v5859 = vmul.f32 %v5808, 1.442695
        %v5860 = vpow.pop %v5859
        %v5861 = vmul.f32 %v5809, 1.442695
        %v5862 = vpow.pop %v5861
        %v5863 = vmul.f32 %v5810, 1.442695
        %v5864 = vpow.pop %v5863
        %v5865 = vmul.f32 %v5811, 1.442695
        %v5866 = vpow.pop %v5865
        %v5867 = vmul.f32 %v5812, 1.442695
        %v5868 = vpow.pop %v5867
        %v5869 = vmul.f32 %v5813, 1.442695
        %v5870 = vpow.pop %v5869
        %v5871 = vmul.f32 %v5814, 1.442695
        %v5872 = vpow.pop %v5871
        %v5873 = vmul.f32 %v5815, 1.442695
        %v5874 = vpow.pop %v5873
        %v5875 = vmul.f32 %v5816, 1.442695
        %v5876 = vpow.pop %v5875
        %v5877 = vmul.f32 %v5817, 1.442695
        %v5878 = vpow.pop %v5877
        %v5879 = vmul.f32 %v5818, 1.442695
        %v5880 = vpow.pop %v5879
        %v5881 = vmul.f32 %v5819, 1.442695
        %v5882 = vpow.pop %v5881
        %v5883 = vmul.f32 %v5820, 1.442695
        %v5884 = vpow.pop %v5883
        %v5885 = vld [vmem:[#allocation6] sm:$0xff]
        %v5886 = vld [vmem:[#allocation6 + $0x8] sm:$0xff]
        %v5887 = vld [vmem:[#allocation6 + $0x10] sm:$0xff]
        %v5888 = vld [vmem:[#allocation6 + $0x18] sm:$0xff]
        %v5889 = vld [vmem:[#allocation6 + $0x20] sm:$0xff]
        %v5890 = vld [vmem:[#allocation6 + $0x28] sm:$0xff]
        %v5891 = vld [vmem:[#allocation6 + $0x30] sm:$0xff]
        %v5892 = vld [vmem:[#allocation6 + $0x38] sm:$0xff]
        %v5893 = vld [vmem:[#allocation6 + $0x40] sm:$0xff]
        %v5894 = vld [vmem:[#allocation6 + $0x48] sm:$0xff]
        %v5895 = vld [vmem:[#allocation6 + $0x50] sm:$0xff]
        %v5896 = vld [vmem:[#allocation6 + $0x58] sm:$0xff]
        %v5897 = vld [vmem:[#allocation6 + $0x60] sm:$0xff]
        %v5898 = vld [vmem:[#allocation6 + $0x68] sm:$0xff]
        %v5899 = vld [vmem:[#allocation6 + $0x70] sm:$0xff]
        %v5900 = vld [vmem:[#allocation6 + $0x78] sm:$0xff]
        %v5901 = vld [vmem:[#allocation6 + $0x80] sm:$0xff]
        %v5902 = vld [vmem:[#allocation6 + $0x88] sm:$0xff]
        %v5903 = vld [vmem:[#allocation6 + $0x90] sm:$0xff]
        %v5904 = vld [vmem:[#allocation6 + $0x98] sm:$0xff]
        %v5905 = vld [vmem:[#allocation6 + $0xa0] sm:$0xff]
        %v5906 = vld [vmem:[#allocation6 + $0xa8] sm:$0xff]
        %v5907 = vld [vmem:[#allocation6 + $0xb0] sm:$0xff]
        %v5908 = vld [vmem:[#allocation6 + $0xb8] sm:$0xff]
        %v5909 = vld [vmem:[#allocation6 + $0xc0] sm:$0xff]
        %v5910 = vld [vmem:[#allocation6 + $0xc8] sm:$0xff]
        %v5911 = vld [vmem:[#allocation6 + $0xd0] sm:$0xff]
        %v5912 = vld [vmem:[#allocation6 + $0xd8] sm:$0xff]
        %v5913 = vld [vmem:[#allocation6 + $0xe0] sm:$0xff]
        %v5914 = vld [vmem:[#allocation6 + $0xe8] sm:$0xff]
        %v5915 = vld [vmem:[#allocation6 + $0xf0] sm:$0xff]
        %v5916 = vld [vmem:[#allocation6 + $0xf8] sm:$0xff]
        %v5917 = vmul.f32 %v5566, %v5885
        %v5918 = vmul.f32 %v5568, %v5886
        %v5919 = vmul.f32 %v5570, %v5887
        %v5920 = vmul.f32 %v5572, %v5888
        %v5921 = vmul.f32 %v5574, %v5889
        %v5922 = vmul.f32 %v5576, %v5890
        %v5923 = vmul.f32 %v5578, %v5891
        %v5924 = vmul.f32 %v5580, %v5892
        %v5925 = vmul.f32 %v5582, %v5893
        %v5926 = vmul.f32 %v5584, %v5894
        %v5927 = vmul.f32 %v5586, %v5895
        %v5928 = vmul.f32 %v5588, %v5896
        %v5929 = vmul.f32 %v5590, %v5897
        %v5930 = vmul.f32 %v5592, %v5898
        %v5931 = vmul.f32 %v5594, %v5899
        %v5932 = vmul.f32 %v5596, %v5900
        %v5933 = vmul.f32 %v5598, %v5901
        %v5934 = vmul.f32 %v5600, %v5902
        %v5935 = vmul.f32 %v5602, %v5903
        %v5936 = vmul.f32 %v5604, %v5904
        %v5937 = vmul.f32 %v5606, %v5905
        %v5938 = vmul.f32 %v5608, %v5906
        %v5939 = vmul.f32 %v5610, %v5907
        %v5940 = vmul.f32 %v5612, %v5908
        %v5941 = vmul.f32 %v5614, %v5909
        %v5942 = vmul.f32 %v5616, %v5910
        %v5943 = vmul.f32 %v5618, %v5911
        %v5944 = vmul.f32 %v5620, %v5912
        %v5945 = vmul.f32 %v5622, %v5913
        %v5946 = vmul.f32 %v5624, %v5914
        %v5947 = vmul.f32 %v5626, %v5915
        %v5948 = vmul.f32 %v5628, %v5916
        %v5949 = vsel %vm5404, %v5822, 0.0
        %5950 = vadd.xlane.f32.xlu0 %v5949
        %v5951 = vpop.xlane.xlu0 %5950
        %v5952 = vsel %vm5404, %v5824, 0.0
        %5953 = vadd.xlane.f32.xlu0 %v5952
        %v5954 = vpop.xlane.xlu0 %5953
        %v5955 = vsel %vm5404, %v5826, 0.0
        %5956 = vadd.xlane.f32.xlu0 %v5955
        %v5957 = vpop.xlane.xlu0 %5956
        %v5958 = vsel %vm5404, %v5828, 0.0
        %5959 = vadd.xlane.f32.xlu0 %v5958
        %v5960 = vpop.xlane.xlu0 %5959
        %v5961 = vsel %vm5404, %v5830, 0.0
        %5962 = vadd.xlane.f32.xlu0 %v5961
        %v5963 = vpop.xlane.xlu0 %5962
        %v5964 = vsel %vm5404, %v5832, 0.0
        %5965 = vadd.xlane.f32.xlu0 %v5964
        %v5966 = vpop.xlane.xlu0 %5965
        %v5967 = vsel %vm5404, %v5834, 0.0
        %5968 = vadd.xlane.f32.xlu0 %v5967
        %v5969 = vpop.xlane.xlu0 %5968
        %v5970 = vsel %vm5404, %v5836, 0.0
        %5971 = vadd.xlane.f32.xlu0 %v5970
        %v5972 = vpop.xlane.xlu0 %5971
        %v5973 = vsel %vm5404, %v5838, 0.0
        %5974 = vadd.xlane.f32.xlu0 %v5973
        %v5975 = vpop.xlane.xlu0 %5974
        %v5976 = vsel %vm5404, %v5840, 0.0
        %5977 = vadd.xlane.f32.xlu0 %v5976
        %v5978 = vpop.xlane.xlu0 %5977
        %v5979 = vsel %vm5404, %v5842, 0.0
        %5980 = vadd.xlane.f32.xlu0 %v5979
        %v5981 = vpop.xlane.xlu0 %5980
        %v5982 = vsel %vm5404, %v5844, 0.0
        %5983 = vadd.xlane.f32.xlu0 %v5982
        %v5984 = vpop.xlane.xlu0 %5983
        %v5985 = vsel %vm5404, %v5846, 0.0
        %5986 = vadd.xlane.f32.xlu0 %v5985
        %v5987 = vpop.xlane.xlu0 %5986
        %v5988 = vsel %vm5404, %v5848, 0.0
        %5989 = vadd.xlane.f32.xlu0 %v5988
        %v5990 = vpop.xlane.xlu0 %5989
        %v5991 = vsel %vm5404, %v5850, 0.0
        %5992 = vadd.xlane.f32.xlu0 %v5991
        %v5993 = vpop.xlane.xlu0 %5992
        %v5994 = vsel %vm5404, %v5852, 0.0
        %5995 = vadd.xlane.f32.xlu0 %v5994
        %v5996 = vpop.xlane.xlu0 %5995
        %v5997 = vsel %vm5404, %v5854, 0.0
        %5998 = vadd.xlane.f32.xlu0 %v5997
        %v5999 = vpop.xlane.xlu0 %5998
        %v6000 = vsel %vm5404, %v5856, 0.0
        %6001 = vadd.xlane.f32.xlu0 %v6000
        %v6002 = vpop.xlane.xlu0 %6001
        %v6003 = vsel %vm5404, %v5858, 0.0
        %6004 = vadd.xlane.f32.xlu0 %v6003
        %v6005 = vpop.xlane.xlu0 %6004
        %v6006 = vsel %vm5404, %v5860, 0.0
        %6007 = vadd.xlane.f32.xlu0 %v6006
        %v6008 = vpop.xlane.xlu0 %6007
        %v6009 = vsel %vm5404, %v5862, 0.0
        %6010 = vadd.xlane.f32.xlu0 %v6009
        %v6011 = vpop.xlane.xlu0 %6010
        %v6012 = vsel %vm5404, %v5864, 0.0
        %6013 = vadd.xlane.f32.xlu0 %v6012
        %v6014 = vpop.xlane.xlu0 %6013
        %v6015 = vsel %vm5404, %v5866, 0.0
        %6016 = vadd.xlane.f32.xlu0 %v6015
        %v6017 = vpop.xlane.xlu0 %6016
        %v6018 = vsel %vm5404, %v5868, 0.0
        %6019 = vadd.xlane.f32.xlu0 %v6018
        %v6020 = vpop.xlane.xlu0 %6019
        %v6021 = vsel %vm5404, %v5870, 0.0
        %6022 = vadd.xlane.f32.xlu0 %v6021
        %v6023 = vpop.xlane.xlu0 %6022
        %v6024 = vsel %vm5404, %v5872, 0.0
        %6025 = vadd.xlane.f32.xlu0 %v6024
        %v6026 = vpop.xlane.xlu0 %6025
        %v6027 = vsel %vm5404, %v5874, 0.0
        %6028 = vadd.xlane.f32.xlu0 %v6027
        %v6029 = vpop.xlane.xlu0 %6028
        %v6030 = vsel %vm5404, %v5876, 0.0
        %6031 = vadd.xlane.f32.xlu0 %v6030
        %v6032 = vpop.xlane.xlu0 %6031
        %v6033 = vsel %vm5404, %v5878, 0.0
        %6034 = vadd.xlane.f32.xlu0 %v6033
        %v6035 = vpop.xlane.xlu0 %6034
        %v6036 = vsel %vm5404, %v5880, 0.0
        %6037 = vadd.xlane.f32.xlu0 %v6036
        %v6038 = vpop.xlane.xlu0 %6037
        %v6039 = vsel %vm5404, %v5882, 0.0
        %6040 = vadd.xlane.f32.xlu0 %v6039
        %v6041 = vpop.xlane.xlu0 %6040
        %v6042 = vsel %vm5404, %v5884, 0.0
        %6043 = vadd.xlane.f32.xlu0 %v6042
        %v6044 = vpop.xlane.xlu0 %6043
        %v6045 = vadd.f32 %v5917, %v5951
        %v6046 = vadd.f32 %v5918, %v5954
        %v6047 = vadd.f32 %v5919, %v5957
        %v6048 = vadd.f32 %v5920, %v5960
        %v6049 = vadd.f32 %v5921, %v5963
        %v6050 = vadd.f32 %v5922, %v5966
        %v6051 = vadd.f32 %v5923, %v5969
        %v6052 = vadd.f32 %v5924, %v5972
        %v6053 = vadd.f32 %v5925, %v5975
        %v6054 = vadd.f32 %v5926, %v5978
        %v6055 = vadd.f32 %v5927, %v5981
        %v6056 = vadd.f32 %v5928, %v5984
        %v6057 = vadd.f32 %v5929, %v5987
        %v6058 = vadd.f32 %v5930, %v5990
        %v6059 = vadd.f32 %v5931, %v5993
        %v6060 = vadd.f32 %v5932, %v5996
        %v6061 = vadd.f32 %v5933, %v5999
        %v6062 = vadd.f32 %v5934, %v6002
        %v6063 = vadd.f32 %v5935, %v6005
        %v6064 = vadd.f32 %v5936, %v6008
        %v6065 = vadd.f32 %v5937, %v6011
        %v6066 = vadd.f32 %v5938, %v6014
        %v6067 = vadd.f32 %v5939, %v6017
        %v6068 = vadd.f32 %v5940, %v6020
        %v6069 = vadd.f32 %v5941, %v6023
        %v6070 = vadd.f32 %v5942, %v6026
        %v6071 = vadd.f32 %v5943, %v6029
        %v6072 = vadd.f32 %v5944, %v6032
        %v6073 = vadd.f32 %v5945, %v6035
        %v6074 = vadd.f32 %v5946, %v6038
        %v6075 = vadd.f32 %v5947, %v6041
        %v6076 = vadd.f32 %v5948, %v6044
        %vm6077 = vcmask 7168
        %6078 = vst.msk [vmem:[#allocation6] sm:$0xff] %vm6077, %v6045
        %6079 = vst.msk [vmem:[#allocation6 + $0x8] sm:$0xff] %vm6077, %v6046
        %6080 = vst.msk [vmem:[#allocation6 + $0x10] sm:$0xff] %vm6077, %v6047
        %6081 = vst.msk [vmem:[#allocation6 + $0x18] sm:$0xff] %vm6077, %v6048
        %6082 = vst.msk [vmem:[#allocation6 + $0x20] sm:$0xff] %vm6077, %v6049
        %6083 = vst.msk [vmem:[#allocation6 + $0x28] sm:$0xff] %vm6077, %v6050
        %6084 = vst.msk [vmem:[#allocation6 + $0x30] sm:$0xff] %vm6077, %v6051
        %6085 = vst.msk [vmem:[#allocation6 + $0x38] sm:$0xff] %vm6077, %v6052
        %6086 = vst.msk [vmem:[#allocation6 + $0x40] sm:$0xff] %vm6077, %v6053
        %6087 = vst.msk [vmem:[#allocation6 + $0x48] sm:$0xff] %vm6077, %v6054
        %6088 = vst.msk [vmem:[#allocation6 + $0x50] sm:$0xff] %vm6077, %v6055
        %6089 = vst.msk [vmem:[#allocation6 + $0x58] sm:$0xff] %vm6077, %v6056
        %6090 = vst.msk [vmem:[#allocation6 + $0x60] sm:$0xff] %vm6077, %v6057
        %6091 = vst.msk [vmem:[#allocation6 + $0x68] sm:$0xff] %vm6077, %v6058
        %6092 = vst.msk [vmem:[#allocation6 + $0x70] sm:$0xff] %vm6077, %v6059
        %6093 = vst.msk [vmem:[#allocation6 + $0x78] sm:$0xff] %vm6077, %v6060
        %6094 = vst.msk [vmem:[#allocation6 + $0x80] sm:$0xff] %vm6077, %v6061
        %6095 = vst.msk [vmem:[#allocation6 + $0x88] sm:$0xff] %vm6077, %v6062
        %6096 = vst.msk [vmem:[#allocation6 + $0x90] sm:$0xff] %vm6077, %v6063
        %6097 = vst.msk [vmem:[#allocation6 + $0x98] sm:$0xff] %vm6077, %v6064
        %6098 = vst.msk [vmem:[#allocation6 + $0xa0] sm:$0xff] %vm6077, %v6065
        %6099 = vst.msk [vmem:[#allocation6 + $0xa8] sm:$0xff] %vm6077, %v6066
        %6100 = vst.msk [vmem:[#allocation6 + $0xb0] sm:$0xff] %vm6077, %v6067
        %6101 = vst.msk [vmem:[#allocation6 + $0xb8] sm:$0xff] %vm6077, %v6068
        %6102 = vst.msk [vmem:[#allocation6 + $0xc0] sm:$0xff] %vm6077, %v6069
        %6103 = vst.msk [vmem:[#allocation6 + $0xc8] sm:$0xff] %vm6077, %v6070
        %6104 = vst.msk [vmem:[#allocation6 + $0xd0] sm:$0xff] %vm6077, %v6071
        %6105 = vst.msk [vmem:[#allocation6 + $0xd8] sm:$0xff] %vm6077, %v6072
        %6106 = vst.msk [vmem:[#allocation6 + $0xe0] sm:$0xff] %vm6077, %v6073
        %6107 = vst.msk [vmem:[#allocation6 + $0xe8] sm:$0xff] %vm6077, %v6074
        %6108 = vst.msk [vmem:[#allocation6 + $0xf0] sm:$0xff] %vm6077, %v6075
        %6109 = vst.msk [vmem:[#allocation6 + $0xf8] sm:$0xff] %vm6077, %v6076
        %v6110 = vld [vmem:[#allocation7] sm:$0xff]
        %v6111 = vld [vmem:[#allocation7 + $0x8] sm:$0xff]
        %v6112 = vld [vmem:[#allocation7 + $0x10] sm:$0xff]
        %v6113 = vld [vmem:[#allocation7 + $0x18] sm:$0xff]
        %v6114 = vld [vmem:[#allocation7 + $0x20] sm:$0xff]
        %v6115 = vld [vmem:[#allocation7 + $0x28] sm:$0xff]
        %v6116 = vld [vmem:[#allocation7 + $0x30] sm:$0xff]
        %v6117 = vld [vmem:[#allocation7 + $0x38] sm:$0xff]
        %v6118 = vld [vmem:[#allocation7 + $0x40] sm:$0xff]
        %v6119 = vld [vmem:[#allocation7 + $0x48] sm:$0xff]
        %v6120 = vld [vmem:[#allocation7 + $0x50] sm:$0xff]
        %v6121 = vld [vmem:[#allocation7 + $0x58] sm:$0xff]
        %v6122 = vld [vmem:[#allocation7 + $0x60] sm:$0xff]
        %v6123 = vld [vmem:[#allocation7 + $0x68] sm:$0xff]
        %v6124 = vld [vmem:[#allocation7 + $0x70] sm:$0xff]
        %v6125 = vld [vmem:[#allocation7 + $0x78] sm:$0xff]
        %v6126 = vld [vmem:[#allocation7 + $0x80] sm:$0xff]
        %v6127 = vld [vmem:[#allocation7 + $0x88] sm:$0xff]
        %v6128 = vld [vmem:[#allocation7 + $0x90] sm:$0xff]
        %v6129 = vld [vmem:[#allocation7 + $0x98] sm:$0xff]
        %v6130 = vld [vmem:[#allocation7 + $0xa0] sm:$0xff]
        %v6131 = vld [vmem:[#allocation7 + $0xa8] sm:$0xff]
        %v6132 = vld [vmem:[#allocation7 + $0xb0] sm:$0xff]
        %v6133 = vld [vmem:[#allocation7 + $0xb8] sm:$0xff]
        %v6134 = vld [vmem:[#allocation7 + $0xc0] sm:$0xff]
        %v6135 = vld [vmem:[#allocation7 + $0xc8] sm:$0xff]
        %v6136 = vld [vmem:[#allocation7 + $0xd0] sm:$0xff]
        %v6137 = vld [vmem:[#allocation7 + $0xd8] sm:$0xff]
        %v6138 = vld [vmem:[#allocation7 + $0xe0] sm:$0xff]
        %v6139 = vld [vmem:[#allocation7 + $0xe8] sm:$0xff]
        %v6140 = vld [vmem:[#allocation7 + $0xf0] sm:$0xff]
        %v6141 = vld [vmem:[#allocation7 + $0xf8] sm:$0xff]
        %6143 = vset.pattern.permute.xlu0 0
        %6144 = vperm.xlu0 %6143, %v5566
        %v6145 = vpop.permute.xlu0 %6144
        %6148 = vset.pattern.permute.xlu0 0
        %6149 = vperm.xlu0 %6148, %v5568
        %v6150 = vpop.permute.xlu0 %6149
        %6153 = vset.pattern.permute.xlu0 0
        %6154 = vperm.xlu0 %6153, %v5570
        %v6155 = vpop.permute.xlu0 %6154
        %6158 = vset.pattern.permute.xlu0 0
        %6159 = vperm.xlu0 %6158, %v5572
        %v6160 = vpop.permute.xlu0 %6159
        %6163 = vset.pattern.permute.xlu0 0
        %6164 = vperm.xlu0 %6163, %v5574
        %v6165 = vpop.permute.xlu0 %6164
        %6168 = vset.pattern.permute.xlu0 0
        %6169 = vperm.xlu0 %6168, %v5576
        %v6170 = vpop.permute.xlu0 %6169
        %6173 = vset.pattern.permute.xlu0 0
        %6174 = vperm.xlu0 %6173, %v5578
        %v6175 = vpop.permute.xlu0 %6174
        %6178 = vset.pattern.permute.xlu0 0
        %6179 = vperm.xlu0 %6178, %v5580
        %v6180 = vpop.permute.xlu0 %6179
        %6183 = vset.pattern.permute.xlu0 0
        %6184 = vperm.xlu0 %6183, %v5582
        %v6185 = vpop.permute.xlu0 %6184
        %6188 = vset.pattern.permute.xlu0 0
        %6189 = vperm.xlu0 %6188, %v5584
        %v6190 = vpop.permute.xlu0 %6189
        %6193 = vset.pattern.permute.xlu0 0
        %6194 = vperm.xlu0 %6193, %v5586
        %v6195 = vpop.permute.xlu0 %6194
        %6198 = vset.pattern.permute.xlu0 0
        %6199 = vperm.xlu0 %6198, %v5588
        %v6200 = vpop.permute.xlu0 %6199
        %6203 = vset.pattern.permute.xlu0 0
        %6204 = vperm.xlu0 %6203, %v5590
        %v6205 = vpop.permute.xlu0 %6204
        %6208 = vset.pattern.permute.xlu0 0
        %6209 = vperm.xlu0 %6208, %v5592
        %v6210 = vpop.permute.xlu0 %6209
        %6213 = vset.pattern.permute.xlu0 0
        %6214 = vperm.xlu0 %6213, %v5594
        %v6215 = vpop.permute.xlu0 %6214
        %6218 = vset.pattern.permute.xlu0 0
        %6219 = vperm.xlu0 %6218, %v5596
        %v6220 = vpop.permute.xlu0 %6219
        %6223 = vset.pattern.permute.xlu0 0
        %6224 = vperm.xlu0 %6223, %v5598
        %v6225 = vpop.permute.xlu0 %6224
        %6228 = vset.pattern.permute.xlu0 0
        %6229 = vperm.xlu0 %6228, %v5600
        %v6230 = vpop.permute.xlu0 %6229
        %6233 = vset.pattern.permute.xlu0 0
        %6234 = vperm.xlu0 %6233, %v5602
        %v6235 = vpop.permute.xlu0 %6234
        %6238 = vset.pattern.permute.xlu0 0
        %6239 = vperm.xlu0 %6238, %v5604
        %v6240 = vpop.permute.xlu0 %6239
        %6243 = vset.pattern.permute.xlu0 0
        %6244 = vperm.xlu0 %6243, %v5606
        %v6245 = vpop.permute.xlu0 %6244
        %6248 = vset.pattern.permute.xlu0 0
        %6249 = vperm.xlu0 %6248, %v5608
        %v6250 = vpop.permute.xlu0 %6249
        %6253 = vset.pattern.permute.xlu0 0
        %6254 = vperm.xlu0 %6253, %v5610
        %v6255 = vpop.permute.xlu0 %6254
        %6258 = vset.pattern.permute.xlu0 0
        %6259 = vperm.xlu0 %6258, %v5612
        %v6260 = vpop.permute.xlu0 %6259
        %6263 = vset.pattern.permute.xlu0 0
        %6264 = vperm.xlu0 %6263, %v5614
        %v6265 = vpop.permute.xlu0 %6264
        %6268 = vset.pattern.permute.xlu0 0
        %6269 = vperm.xlu0 %6268, %v5616
        %v6270 = vpop.permute.xlu0 %6269
        %6273 = vset.pattern.permute.xlu0 0
        %6274 = vperm.xlu0 %6273, %v5618
        %v6275 = vpop.permute.xlu0 %6274
        %6278 = vset.pattern.permute.xlu0 0
        %6279 = vperm.xlu0 %6278, %v5620
        %v6280 = vpop.permute.xlu0 %6279
        %6283 = vset.pattern.permute.xlu0 0
        %6284 = vperm.xlu0 %6283, %v5622
        %v6285 = vpop.permute.xlu0 %6284
        %6288 = vset.pattern.permute.xlu0 0
        %6289 = vperm.xlu0 %6288, %v5624
        %v6290 = vpop.permute.xlu0 %6289
        %6293 = vset.pattern.permute.xlu0 0
        %6294 = vperm.xlu0 %6293, %v5626
        %v6295 = vpop.permute.xlu0 %6294
        %6298 = vset.pattern.permute.xlu0 0
        %6299 = vperm.xlu0 %6298, %v5628
        %v6300 = vpop.permute.xlu0 %6299
        %v6302 = vmul.f32 %v6145, %v6110
        %v6303 = vmul.f32 %v6150, %v6111
        %v6304 = vmul.f32 %v6155, %v6112
        %v6305 = vmul.f32 %v6160, %v6113
        %v6306 = vmul.f32 %v6165, %v6114
        %v6307 = vmul.f32 %v6170, %v6115
        %v6308 = vmul.f32 %v6175, %v6116
        %v6309 = vmul.f32 %v6180, %v6117
        %v6310 = vmul.f32 %v6185, %v6118
        %v6311 = vmul.f32 %v6190, %v6119
        %v6312 = vmul.f32 %v6195, %v6120
        %v6313 = vmul.f32 %v6200, %v6121
        %v6314 = vmul.f32 %v6205, %v6122
        %v6315 = vmul.f32 %v6210, %v6123
        %v6316 = vmul.f32 %v6215, %v6124
        %v6317 = vmul.f32 %v6220, %v6125
        %v6318 = vmul.f32 %v6225, %v6126
        %v6319 = vmul.f32 %v6230, %v6127
        %v6320 = vmul.f32 %v6235, %v6128
        %v6321 = vmul.f32 %v6240, %v6129
        %v6322 = vmul.f32 %v6245, %v6130
        %v6323 = vmul.f32 %v6250, %v6131
        %v6324 = vmul.f32 %v6255, %v6132
        %v6325 = vmul.f32 %v6260, %v6133
        %v6326 = vmul.f32 %v6265, %v6134
        %v6327 = vmul.f32 %v6270, %v6135
        %v6328 = vmul.f32 %v6275, %v6136
        %v6329 = vmul.f32 %v6280, %v6137
        %v6330 = vmul.f32 %v6285, %v6138
        %v6331 = vmul.f32 %v6290, %v6139
        %v6332 = vmul.f32 %v6295, %v6140
        %v6333 = vmul.f32 %v6300, %v6141
        %v6334 = vpack.c.bf16 %v5824, %v5822
        %v6335 = vpack.c.bf16 %v5828, %v5826
        %v6336 = vpack.c.bf16 %v5832, %v5830
        %v6337 = vpack.c.bf16 %v5836, %v5834
        %v6338 = vpack.c.bf16 %v5840, %v5838
        %v6339 = vpack.c.bf16 %v5844, %v5842
        %v6340 = vpack.c.bf16 %v5848, %v5846
        %v6341 = vpack.c.bf16 %v5852, %v5850
        %v6342 = vpack.c.bf16 %v5856, %v5854
        %v6343 = vpack.c.bf16 %v5860, %v5858
        %v6344 = vpack.c.bf16 %v5864, %v5862
        %v6345 = vpack.c.bf16 %v5868, %v5866
        %v6346 = vpack.c.bf16 %v5872, %v5870
        %v6347 = vpack.c.bf16 %v5876, %v5874
        %v6348 = vpack.c.bf16 %v5880, %v5878
        %v6349 = vpack.c.bf16 %v5884, %v5882
        %v6351 = vsel %vm5404, %v6334, 0
        %v6354 = vsel %vm5404, %v6335, 0
        %v6357 = vsel %vm5404, %v6336, 0
        %v6360 = vsel %vm5404, %v6337, 0
        %6362 = vmatprep.subr.bf16.mxu0 0
        %6363 = vmatpush1.bf16.msra.mxu0 %v4983
        %6364 = vmatprep.subr.bf16.mxu0 0
        %6365 = vmatpush1.bf16.msra.mxu0 %v4984
        %6366 = vmatprep.subr.bf16.mxu0 0
        %6367 = vmatpush1.bf16.msra.mxu0 %v4985
        %6368 = vmatprep.subr.bf16.mxu0 0
        %6369 = vmatpush1.bf16.msra.mxu0 %v4986
        %6370 = vmatprep.subr.bf16.mxu0 0
        %6371 = vmatpush1.bf16.msra.mxu0 0
        %6372 = vmatprep.subr.bf16.mxu0 0
        %6373 = vmatpush1.bf16.msra.mxu0 0
        %6374 = vmatprep.subr.bf16.mxu0 0
        %6375 = vmatpush1.bf16.msra.mxu0 0
        %6376 = vmatprep.subr.bf16.mxu0 0
        %6377 = vmatpush1.bf16.msra.mxu0 0
        %6378 = vmatprep.subr.bf16.mxu0 0
        %6379 = vmatpush1.bf16.msra.mxu0 0
        %6380 = vmatprep.subr.bf16.mxu0 0
        %6381 = vmatpush1.bf16.msra.mxu0 0
        %6382 = vmatprep.subr.bf16.mxu0 0
        %6383 = vmatpush1.bf16.msra.mxu0 0
        %6384 = vmatprep.subr.bf16.mxu0 0
        %6385 = vmatpush1.bf16.msra.mxu0 0
        %6386 = vmatprep.subr.bf16.mxu0 0
        %6387 = vmatpush1.bf16.msra.mxu0 0
        %6388 = vmatprep.subr.bf16.mxu0 0
        %6389 = vmatpush1.bf16.msra.mxu0 0
        %6390 = vmatprep.subr.bf16.mxu0 0
        %6391 = vmatpush1.bf16.msra.mxu0 0
        %6392 = vmatprep.subr.bf16.mxu0 0
        %6393 = vmatpush1.bf16.msra.mxu0 0
        %6394 = vmatprep.mubr.bf16.mxu0 0
        %6395 = vmatmul.mubr.bf16.gmra.mrb[0].mxu0 %v6351
        %v6396 = vpop.f32.mrb[0].mxu0
        %v6397 = vadd.f32 0.0, %v6396
        %v6398 = vpop.f32.mrb[0].mxu0
        %v6399 = vpop.f32.mrb[0].mxu0
        %v6400 = vadd.f32 0.0, %v6399
        %v6401 = vpop.f32.mrb[0].mxu0
        %6402 = vmatprep.mubr.bf16.mxu0 0
        %6403 = vmatmul.mubr.bf16.gmra.mrb[0].mxu0 %v6354
        %v6404 = vpop.f32.mrb[0].mxu0
        %v6405 = vadd.f32 0.0, %v6404
        %v6406 = vpop.f32.mrb[0].mxu0
        %v6407 = vpop.f32.mrb[0].mxu0
        %v6408 = vadd.f32 0.0, %v6407
        %v6409 = vpop.f32.mrb[0].mxu0
        %6410 = vmatprep.mubr.bf16.mxu0 0
        %6411 = vmatmul.mubr.bf16.gmra.mrb[0].mxu0 %v6357
        %v6412 = vpop.f32.mrb[0].mxu0
        %v6413 = vadd.f32 0.0, %v6412
        %v6414 = vpop.f32.mrb[0].mxu0
        %v6415 = vpop.f32.mrb[0].mxu0
        %v6416 = vadd.f32 0.0, %v6415
        %v6417 = vpop.f32.mrb[0].mxu0
        %6418 = vmatprep.mubr.bf16.mxu0 0
        %6419 = vmatmul.mubr.bf16.gmra.mrb[0].mxu0 %v6360
        %v6420 = vpop.f32.mrb[0].mxu0
        %v6421 = vadd.f32 0.0, %v6420
        %v6422 = vpop.f32.mrb[0].mxu0
        %v6423 = vpop.f32.mrb[0].mxu0
        %v6424 = vadd.f32 0.0, %v6423
        %v6425 = vpop.f32.mrb[0].mxu0
        %6426 = vdwg.mxu0
        %v6428 = vsel %vm5404, %v6338, 0
        %v6431 = vsel %vm5404, %v6339, 0
        %v6434 = vsel %vm5404, %v6340, 0
        %v6437 = vsel %vm5404, %v6341, 0
        %6439 = vmatprep.subr.bf16.mxu0 0
        %6440 = vmatpush1.bf16.msra.mxu0 %v4987
        %6441 = vmatprep.subr.bf16.mxu0 0
        %6442 = vmatpush1.bf16.msra.mxu0 %v4988
        %6443 = vmatprep.subr.bf16.mxu0 0
        %6444 = vmatpush1.bf16.msra.mxu0 %v4989
        %6445 = vmatprep.subr.bf16.mxu0 0
        %6446 = vmatpush1.bf16.msra.mxu0 %v4990
        %6447 = vmatprep.subr.bf16.mxu0 0
        %6448 = vmatpush1.bf16.msra.mxu0 0
        %6449 = vmatprep.subr.bf16.mxu0 0
        %6450 = vmatpush1.bf16.msra.mxu0 0
        %6451 = vmatprep.subr.bf16.mxu0 0
        %6452 = vmatpush1.bf16.msra.mxu0 0
        %6453 = vmatprep.subr.bf16.mxu0 0
        %6454 = vmatpush1.bf16.msra.mxu0 0
        %6455 = vmatprep.subr.bf16.mxu0 0
        %6456 = vmatpush1.bf16.msra.mxu0 0
        %6457 = vmatprep.subr.bf16.mxu0 0
        %6458 = vmatpush1.bf16.msra.mxu0 0
        %6459 = vmatprep.subr.bf16.mxu0 0
        %6460 = vmatpush1.bf16.msra.mxu0 0
        %6461 = vmatprep.subr.bf16.mxu0 0
        %6462 = vmatpush1.bf16.msra.mxu0 0
        %6463 = vmatprep.subr.bf16.mxu0 0
        %6464 = vmatpush1.bf16.msra.mxu0 0
        %6465 = vmatprep.subr.bf16.mxu0 0
        %6466 = vmatpush1.bf16.msra.mxu0 0
        %6467 = vmatprep.subr.bf16.mxu0 0
        %6468 = vmatpush1.bf16.msra.mxu0 0
        %6469 = vmatprep.subr.bf16.mxu0 0
        %6470 = vmatpush1.bf16.msra.mxu0 0
        %6471 = vmatprep.mubr.bf16.mxu0 0
        %6472 = vmatmul.mubr.bf16.gmra.mrb[0].mxu0 %v6428
        %v6473 = vpop.f32.mrb[0].mxu0
        %v6474 = vadd.f32 0.0, %v6473
        %v6475 = vpop.f32.mrb[0].mxu0
        %v6476 = vpop.f32.mrb[0].mxu0
        %v6477 = vadd.f32 0.0, %v6476
        %v6478 = vpop.f32.mrb[0].mxu0
        %6479 = vmatprep.mubr.bf16.mxu0 0
        %6480 = vmatmul.mubr.bf16.gmra.mrb[0].mxu0 %v6431
        %v6481 = vpop.f32.mrb[0].mxu0
        %v6482 = vadd.f32 0.0, %v6481
        %v6483 = vpop.f32.mrb[0].mxu0
        %v6484 = vpop.f32.mrb[0].mxu0
        %v6485 = vadd.f32 0.0, %v6484
        %v6486 = vpop.f32.mrb[0].mxu0
        %6487 = vmatprep.mubr.bf16.mxu0 0
        %6488 = vmatmul.mubr.bf16.gmra.mrb[0].mxu0 %v6434
        %v6489 = vpop.f32.mrb[0].mxu0
        %v6490 = vadd.f32 0.0, %v6489
        %v6491 = vpop.f32.mrb[0].mxu0
        %v6492 = vpop.f32.mrb[0].mxu0
        %v6493 = vadd.f32 0.0, %v6492
        %v6494 = vpop.f32.mrb[0].mxu0
        %6495 = vmatprep.mubr.bf16.mxu0 0
        %6496 = vmatmul.mubr.bf16.gmra.mrb[0].mxu0 %v6437
        %v6497 = vpop.f32.mrb[0].mxu0
        %v6498 = vadd.f32 0.0, %v6497
        %v6499 = vpop.f32.mrb[0].mxu0
        %v6500 = vpop.f32.mrb[0].mxu0
        %v6501 = vadd.f32 0.0, %v6500
        %v6502 = vpop.f32.mrb[0].mxu0
        %6503 = vdwg.mxu0
        %v6505 = vsel %vm5404, %v6342, 0
        %v6508 = vsel %vm5404, %v6343, 0
        %v6511 = vsel %vm5404, %v6344, 0
        %v6514 = vsel %vm5404, %v6345, 0
        %6516 = vmatprep.subr.bf16.mxu0 0
        %6517 = vmatpush1.bf16.msra.mxu0 %v4991
        %6518 = vmatprep.subr.bf16.mxu0 0
        %6519 = vmatpush1.bf16.msra.mxu0 %v4992
        %6520 = vmatprep.subr.bf16.mxu0 0
        %6521 = vmatpush1.bf16.msra.mxu0 %v4993
        %6522 = vmatprep.subr.bf16.mxu0 0
        %6523 = vmatpush1.bf16.msra.mxu0 %v4994
        %6524 = vmatprep.subr.bf16.mxu0 0
        %6525 = vmatpush1.bf16.msra.mxu0 0
        %6526 = vmatprep.subr.bf16.mxu0 0
        %6527 = vmatpush1.bf16.msra.mxu0 0
        %6528 = vmatprep.subr.bf16.mxu0 0
        %6529 = vmatpush1.bf16.msra.mxu0 0
        %6530 = vmatprep.subr.bf16.mxu0 0
        %6531 = vmatpush1.bf16.msra.mxu0 0
        %6532 = vmatprep.subr.bf16.mxu0 0
        %6533 = vmatpush1.bf16.msra.mxu0 0
        %6534 = vmatprep.subr.bf16.mxu0 0
        %6535 = vmatpush1.bf16.msra.mxu0 0
        %6536 = vmatprep.subr.bf16.mxu0 0
        %6537 = vmatpush1.bf16.msra.mxu0 0
        %6538 = vmatprep.subr.bf16.mxu0 0
        %6539 = vmatpush1.bf16.msra.mxu0 0
        %6540 = vmatprep.subr.bf16.mxu0 0
        %6541 = vmatpush1.bf16.msra.mxu0 0
        %6542 = vmatprep.subr.bf16.mxu0 0
        %6543 = vmatpush1.bf16.msra.mxu0 0
        %6544 = vmatprep.subr.bf16.mxu0 0
        %6545 = vmatpush1.bf16.msra.mxu0 0
        %6546 = vmatprep.subr.bf16.mxu0 0
        %6547 = vmatpush1.bf16.msra.mxu0 0
        %6548 = vmatprep.mubr.bf16.mxu0 0
        %6549 = vmatmul.mubr.bf16.gmra.mrb[0].mxu0 %v6505
        %v6550 = vpop.f32.mrb[0].mxu0
        %v6551 = vadd.f32 0.0, %v6550
        %v6552 = vpop.f32.mrb[0].mxu0
        %v6553 = vpop.f32.mrb[0].mxu0
        %v6554 = vadd.f32 0.0, %v6553
        %v6555 = vpop.f32.mrb[0].mxu0
        %6556 = vmatprep.mubr.bf16.mxu0 0
        %6557 = vmatmul.mubr.bf16.gmra.mrb[0].mxu0 %v6508
        %v6558 = vpop.f32.mrb[0].mxu0
        %v6559 = vadd.f32 0.0, %v6558
        %v6560 = vpop.f32.mrb[0].mxu0
        %v6561 = vpop.f32.mrb[0].mxu0
        %v6562 = vadd.f32 0.0, %v6561
        %v6563 = vpop.f32.mrb[0].mxu0
        %6564 = vmatprep.mubr.bf16.mxu0 0
        %6565 = vmatmul.mubr.bf16.gmra.mrb[0].mxu0 %v6511
        %v6566 = vpop.f32.mrb[0].mxu0
        %v6567 = vadd.f32 0.0, %v6566
        %v6568 = vpop.f32.mrb[0].mxu0
        %v6569 = vpop.f32.mrb[0].mxu0
        %v6570 = vadd.f32 0.0, %v6569
        %v6571 = vpop.f32.mrb[0].mxu0
        %6572 = vmatprep.mubr.bf16.mxu0 0
        %6573 = vmatmul.mubr.bf16.gmra.mrb[0].mxu0 %v6514
        %v6574 = vpop.f32.mrb[0].mxu0
        %v6575 = vadd.f32 0.0, %v6574
        %v6576 = vpop.f32.mrb[0].mxu0
        %v6577 = vpop.f32.mrb[0].mxu0
        %v6578 = vadd.f32 0.0, %v6577
        %v6579 = vpop.f32.mrb[0].mxu0
        %6580 = vdwg.mxu0
        %v6582 = vsel %vm5404, %v6346, 0
        %v6585 = vsel %vm5404, %v6347, 0
        %v6588 = vsel %vm5404, %v6348, 0
        %v6591 = vsel %vm5404, %v6349, 0
        %6593 = vmatprep.subr.bf16.mxu0 0
        %6594 = vmatpush1.bf16.msra.mxu0 %v4995
        %6595 = vmatprep.subr.bf16.mxu0 0
        %6596 = vmatpush1.bf16.msra.mxu0 %v4996
        %6597 = vmatprep.subr.bf16.mxu0 0
        %6598 = vmatpush1.bf16.msra.mxu0 %v4997
        %6599 = vmatprep.subr.bf16.mxu0 0
        %6600 = vmatpush1.bf16.msra.mxu0 %v4998
        %6601 = vmatprep.subr.bf16.mxu0 0
        %6602 = vmatpush1.bf16.msra.mxu0 0
        %6603 = vmatprep.subr.bf16.mxu0 0
        %6604 = vmatpush1.bf16.msra.mxu0 0
        %6605 = vmatprep.subr.bf16.mxu0 0
        %6606 = vmatpush1.bf16.msra.mxu0 0
        %6607 = vmatprep.subr.bf16.mxu0 0
        %6608 = vmatpush1.bf16.msra.mxu0 0
        %6609 = vmatprep.subr.bf16.mxu0 0
        %6610 = vmatpush1.bf16.msra.mxu0 0
        %6611 = vmatprep.subr.bf16.mxu0 0
        %6612 = vmatpush1.bf16.msra.mxu0 0
        %6613 = vmatprep.subr.bf16.mxu0 0
        %6614 = vmatpush1.bf16.msra.mxu0 0
        %6615 = vmatprep.subr.bf16.mxu0 0
        %6616 = vmatpush1.bf16.msra.mxu0 0
        %6617 = vmatprep.subr.bf16.mxu0 0
        %6618 = vmatpush1.bf16.msra.mxu0 0
        %6619 = vmatprep.subr.bf16.mxu0 0
        %6620 = vmatpush1.bf16.msra.mxu0 0
        %6621 = vmatprep.subr.bf16.mxu0 0
        %6622 = vmatpush1.bf16.msra.mxu0 0
        %6623 = vmatprep.subr.bf16.mxu0 0
        %6624 = vmatpush1.bf16.msra.mxu0 0
        %6625 = vmatprep.mubr.bf16.mxu0 0
        %6626 = vmatmul.mubr.bf16.gmra.mrb[0].mxu0 %v6582
        %v6627 = vpop.f32.mrb[0].mxu0
        %v6628 = vadd.f32 0.0, %v6627
        %v6629 = vpop.f32.mrb[0].mxu0
        %v6630 = vpop.f32.mrb[0].mxu0
        %v6631 = vadd.f32 0.0, %v6630
        %v6632 = vpop.f32.mrb[0].mxu0
        %6633 = vmatprep.mubr.bf16.mxu0 0
        %6634 = vmatmul.mubr.bf16.gmra.mrb[0].mxu0 %v6585
        %v6635 = vpop.f32.mrb[0].mxu0
        %v6636 = vadd.f32 0.0, %v6635
        %v6637 = vpop.f32.mrb[0].mxu0
        %v6638 = vpop.f32.mrb[0].mxu0
        %v6639 = vadd.f32 0.0, %v6638
        %v6640 = vpop.f32.mrb[0].mxu0
        %6641 = vmatprep.mubr.bf16.mxu0 0
        %6642 = vmatmul.mubr.bf16.gmra.mrb[0].mxu0 %v6588
        %v6643 = vpop.f32.mrb[0].mxu0
        %v6644 = vadd.f32 0.0, %v6643
        %v6645 = vpop.f32.mrb[0].mxu0
        %v6646 = vpop.f32.mrb[0].mxu0
        %v6647 = vadd.f32 0.0, %v6646
        %v6648 = vpop.f32.mrb[0].mxu0
        %6649 = vmatprep.mubr.bf16.mxu0 0
        %6650 = vmatmul.mubr.bf16.gmra.mrb[0].mxu0 %v6591
        %v6651 = vpop.f32.mrb[0].mxu0
        %v6652 = vadd.f32 0.0, %v6651
        %v6653 = vpop.f32.mrb[0].mxu0
        %v6654 = vpop.f32.mrb[0].mxu0
        %v6655 = vadd.f32 0.0, %v6654
        %v6656 = vpop.f32.mrb[0].mxu0
        %6657 = vdwg.mxu0
        %v6658 = vadd.f32 %v6302, %v6397
        %v6659 = vadd.f32 %v6303, %v6400
        %v6660 = vadd.f32 %v6304, %v6405
        %v6661 = vadd.f32 %v6305, %v6408
        %v6662 = vadd.f32 %v6306, %v6413
        %v6663 = vadd.f32 %v6307, %v6416
        %v6664 = vadd.f32 %v6308, %v6421
        %v6665 = vadd.f32 %v6309, %v6424
        %v6666 = vadd.f32 %v6310, %v6474
        %v6667 = vadd.f32 %v6311, %v6477
        %v6668 = vadd.f32 %v6312, %v6482
        %v6669 = vadd.f32 %v6313, %v6485
        %v6670 = vadd.f32 %v6314, %v6490
        %v6671 = vadd.f32 %v6315, %v6493
        %v6672 = vadd.f32 %v6316, %v6498
        %v6673 = vadd.f32 %v6317, %v6501
        %v6674 = vadd.f32 %v6318, %v6551
        %v6675 = vadd.f32 %v6319, %v6554
        %v6676 = vadd.f32 %v6320, %v6559
        %v6677 = vadd.f32 %v6321, %v6562
        %v6678 = vadd.f32 %v6322, %v6567
        %v6679 = vadd.f32 %v6323, %v6570
        %v6680 = vadd.f32 %v6324, %v6575
        %v6681 = vadd.f32 %v6325, %v6578
        %v6682 = vadd.f32 %v6326, %v6628
        %v6683 = vadd.f32 %v6327, %v6631
        %v6684 = vadd.f32 %v6328, %v6636
        %v6685 = vadd.f32 %v6329, %v6639
        %v6686 = vadd.f32 %v6330, %v6644
        %v6687 = vadd.f32 %v6331, %v6647
        %v6688 = vadd.f32 %v6332, %v6652
        %v6689 = vadd.f32 %v6333, %v6655
        %6690 = vst.msk [vmem:[#allocation7] sm:$0xff] %vm5015, %v6658
        %6691 = vst.msk [vmem:[#allocation7 + $0x8] sm:$0xff] %vm5015, %v6659
        %6692 = vst.msk [vmem:[#allocation7 + $0x10] sm:$0xff] %vm5015, %v6660
        %6693 = vst.msk [vmem:[#allocation7 + $0x18] sm:$0xff] %vm5015, %v6661
        %6694 = vst.msk [vmem:[#allocation7 + $0x20] sm:$0xff] %vm5015, %v6662
        %6695 = vst.msk [vmem:[#allocation7 + $0x28] sm:$0xff] %vm5015, %v6663
        %6696 = vst.msk [vmem:[#allocation7 + $0x30] sm:$0xff] %vm5015, %v6664
        %6697 = vst.msk [vmem:[#allocation7 + $0x38] sm:$0xff] %vm5015, %v6665
        %6698 = vst.msk [vmem:[#allocation7 + $0x40] sm:$0xff] %vm5015, %v6666
        %6699 = vst.msk [vmem:[#allocation7 + $0x48] sm:$0xff] %vm5015, %v6667
        %6700 = vst.msk [vmem:[#allocation7 + $0x50] sm:$0xff] %vm5015, %v6668
        %6701 = vst.msk [vmem:[#allocation7 + $0x58] sm:$0xff] %vm5015, %v6669
        %6702 = vst.msk [vmem:[#allocation7 + $0x60] sm:$0xff] %vm5015, %v6670
        %6703 = vst.msk [vmem:[#allocation7 + $0x68] sm:$0xff] %vm5015, %v6671
        %6704 = vst.msk [vmem:[#allocation7 + $0x70] sm:$0xff] %vm5015, %v6672
        %6705 = vst.msk [vmem:[#allocation7 + $0x78] sm:$0xff] %vm5015, %v6673
        %6706 = vst.msk [vmem:[#allocation7 + $0x80] sm:$0xff] %vm5015, %v6674
        %6707 = vst.msk [vmem:[#allocation7 + $0x88] sm:$0xff] %vm5015, %v6675
        %6708 = vst.msk [vmem:[#allocation7 + $0x90] sm:$0xff] %vm5015, %v6676
        %6709 = vst.msk [vmem:[#allocation7 + $0x98] sm:$0xff] %vm5015, %v6677
        %6710 = vst.msk [vmem:[#allocation7 + $0xa0] sm:$0xff] %vm5015, %v6678
        %6711 = vst.msk [vmem:[#allocation7 + $0xa8] sm:$0xff] %vm5015, %v6679
        %6712 = vst.msk [vmem:[#allocation7 + $0xb0] sm:$0xff] %vm5015, %v6680
        %6713 = vst.msk [vmem:[#allocation7 + $0xb8] sm:$0xff] %vm5015, %v6681
        %6714 = vst.msk [vmem:[#allocation7 + $0xc0] sm:$0xff] %vm5015, %v6682
        %6715 = vst.msk [vmem:[#allocation7 + $0xc8] sm:$0xff] %vm5015, %v6683
        %6716 = vst.msk [vmem:[#allocation7 + $0xd0] sm:$0xff] %vm5015, %v6684
        %6717 = vst.msk [vmem:[#allocation7 + $0xd8] sm:$0xff] %vm5015, %v6685
        %6718 = vst.msk [vmem:[#allocation7 + $0xe0] sm:$0xff] %vm5015, %v6686
        %6719 = vst.msk [vmem:[#allocation7 + $0xe8] sm:$0xff] %vm5015, %v6687
        %6720 = vst.msk [vmem:[#allocation7 + $0xf0] sm:$0xff] %vm5015, %v6688
        %6721 = vst.msk [vmem:[#allocation7 + $0xf8] sm:$0xff] %vm5015, %v6689
        %6722 = vst.msk [vmem:[#allocation5] sm:$0xff] %vm6077, %v5501
        %6723 = vst.msk [vmem:[#allocation5 + $0x8] sm:$0xff] %vm6077, %v5502
        %6724 = vst.msk [vmem:[#allocation5 + $0x10] sm:$0xff] %vm6077, %v5503
        %6725 = vst.msk [vmem:[#allocation5 + $0x18] sm:$0xff] %vm6077, %v5504
        %6726 = vst.msk [vmem:[#allocation5 + $0x20] sm:$0xff] %vm6077, %v5505
        %6727 = vst.msk [vmem:[#allocation5 + $0x28] sm:$0xff] %vm6077, %v5506
        %6728 = vst.msk [vmem:[#allocation5 + $0x30] sm:$0xff] %vm6077, %v5507
        %6729 = vst.msk [vmem:[#allocation5 + $0x38] sm:$0xff] %vm6077, %v5508
        %6730 = vst.msk [vmem:[#allocation5 + $0x40] sm:$0xff] %vm6077, %v5509
        %6731 = vst.msk [vmem:[#allocation5 + $0x48] sm:$0xff] %vm6077, %v5510
        %6732 = vst.msk [vmem:[#allocation5 + $0x50] sm:$0xff] %vm6077, %v5511
        %6733 = vst.msk [vmem:[#allocation5 + $0x58] sm:$0xff] %vm6077, %v5512
        %6734 = vst.msk [vmem:[#allocation5 + $0x60] sm:$0xff] %vm6077, %v5513
        %6735 = vst.msk [vmem:[#allocation5 + $0x68] sm:$0xff] %vm6077, %v5514
        %6736 = vst.msk [vmem:[#allocation5 + $0x70] sm:$0xff] %vm6077, %v5515
        %6737 = vst.msk [vmem:[#allocation5 + $0x78] sm:$0xff] %vm6077, %v5516
        %6738 = vst.msk [vmem:[#allocation5 + $0x80] sm:$0xff] %vm6077, %v5517
        %6739 = vst.msk [vmem:[#allocation5 + $0x88] sm:$0xff] %vm6077, %v5518
        %6740 = vst.msk [vmem:[#allocation5 + $0x90] sm:$0xff] %vm6077, %v5519
        %6741 = vst.msk [vmem:[#allocation5 + $0x98] sm:$0xff] %vm6077, %v5520
        %6742 = vst.msk [vmem:[#allocation5 + $0xa0] sm:$0xff] %vm6077, %v5521
        %6743 = vst.msk [vmem:[#allocation5 + $0xa8] sm:$0xff] %vm6077, %v5522
        %6744 = vst.msk [vmem:[#allocation5 + $0xb0] sm:$0xff] %vm6077, %v5523
        %6745 = vst.msk [vmem:[#allocation5 + $0xb8] sm:$0xff] %vm6077, %v5524
        %6746 = vst.msk [vmem:[#allocation5 + $0xc0] sm:$0xff] %vm6077, %v5525
        %6747 = vst.msk [vmem:[#allocation5 + $0xc8] sm:$0xff] %vm6077, %v5526
        %6748 = vst.msk [vmem:[#allocation5 + $0xd0] sm:$0xff] %vm6077, %v5527
        %6749 = vst.msk [vmem:[#allocation5 + $0xd8] sm:$0xff] %vm6077, %v5528
        %6750 = vst.msk [vmem:[#allocation5 + $0xe0] sm:$0xff] %vm6077, %v5529
        %6751 = vst.msk [vmem:[#allocation5 + $0xe8] sm:$0xff] %vm6077, %v5530
        %6752 = vst.msk [vmem:[#allocation5 + $0xf0] sm:$0xff] %vm6077, %v5531
        %6753 = vst.msk [vmem:[#allocation5 + $0xf8] sm:$0xff] %vm6077, %v5532
        %p6754 = scmp.eq.s32.totalorder %s41, 1
        // Predicated region
        $region101: #{tpu_custom_call.1} parent=67 // pred_check
          %p6755 = pneg %p6754
        $region102: #{tpu_custom_call.1} parent=67 // pred_check_branch
          %6757 = sbr.rel (%p6755) target = $region104
        $region103: #{tpu_custom_call.1} parent=67 // pred_region
          %v6758 = vld [vmem:[#allocation7] sm:$0xff]
          %v6759 = vld [vmem:[#allocation7 + $0x8] sm:$0xff]
          %v6760 = vld [vmem:[#allocation7 + $0x10] sm:$0xff]
          %v6761 = vld [vmem:[#allocation7 + $0x18] sm:$0xff]
          %v6762 = vld [vmem:[#allocation7 + $0x20] sm:$0xff]
          %v6763 = vld [vmem:[#allocation7 + $0x28] sm:$0xff]
          %v6764 = vld [vmem:[#allocation7 + $0x30] sm:$0xff]
          %v6765 = vld [vmem:[#allocation7 + $0x38] sm:$0xff]
          %v6766 = vld [vmem:[#allocation7 + $0x40] sm:$0xff]
          %v6767 = vld [vmem:[#allocation7 + $0x48] sm:$0xff]
          %v6768 = vld [vmem:[#allocation7 + $0x50] sm:$0xff]
          %v6769 = vld [vmem:[#allocation7 + $0x58] sm:$0xff]
          %v6770 = vld [vmem:[#allocation7 + $0x60] sm:$0xff]
          %v6771 = vld [vmem:[#allocation7 + $0x68] sm:$0xff]
          %v6772 = vld [vmem:[#allocation7 + $0x70] sm:$0xff]
          %v6773 = vld [vmem:[#allocation7 + $0x78] sm:$0xff]
          %v6774 = vld [vmem:[#allocation7 + $0x80] sm:$0xff]
          %v6775 = vld [vmem:[#allocation7 + $0x88] sm:$0xff]
          %v6776 = vld [vmem:[#allocation7 + $0x90] sm:$0xff]
          %v6777 = vld [vmem:[#allocation7 + $0x98] sm:$0xff]
          %v6778 = vld [vmem:[#allocation7 + $0xa0] sm:$0xff]
          %v6779 = vld [vmem:[#allocation7 + $0xa8] sm:$0xff]
          %v6780 = vld [vmem:[#allocation7 + $0xb0] sm:$0xff]
          %v6781 = vld [vmem:[#allocation7 + $0xb8] sm:$0xff]
          %v6782 = vld [vmem:[#allocation7 + $0xc0] sm:$0xff]
          %v6783 = vld [vmem:[#allocation7 + $0xc8] sm:$0xff]
          %v6784 = vld [vmem:[#allocation7 + $0xd0] sm:$0xff]
          %v6785 = vld [vmem:[#allocation7 + $0xd8] sm:$0xff]
          %v6786 = vld [vmem:[#allocation7 + $0xe0] sm:$0xff]
          %v6787 = vld [vmem:[#allocation7 + $0xe8] sm:$0xff]
          %v6788 = vld [vmem:[#allocation7 + $0xf0] sm:$0xff]
          %v6789 = vld [vmem:[#allocation7 + $0xf8] sm:$0xff]
          %v6790 = vld [vmem:[#allocation6] sm:$0xff]
          %v6791 = vld [vmem:[#allocation6 + $0x8] sm:$0xff]
          %v6792 = vld [vmem:[#allocation6 + $0x10] sm:$0xff]
          %v6793 = vld [vmem:[#allocation6 + $0x18] sm:$0xff]
          %v6794 = vld [vmem:[#allocation6 + $0x20] sm:$0xff]
          %v6795 = vld [vmem:[#allocation6 + $0x28] sm:$0xff]
          %v6796 = vld [vmem:[#allocation6 + $0x30] sm:$0xff]
          %v6797 = vld [vmem:[#allocation6 + $0x38] sm:$0xff]
          %v6798 = vld [vmem:[#allocation6 + $0x40] sm:$0xff]
          %v6799 = vld [vmem:[#allocation6 + $0x48] sm:$0xff]
          %v6800 = vld [vmem:[#allocation6 + $0x50] sm:$0xff]
          %v6801 = vld [vmem:[#allocation6 + $0x58] sm:$0xff]
          %v6802 = vld [vmem:[#allocation6 + $0x60] sm:$0xff]
          %v6803 = vld [vmem:[#allocation6 + $0x68] sm:$0xff]
          %v6804 = vld [vmem:[#allocation6 + $0x70] sm:$0xff]
          %v6805 = vld [vmem:[#allocation6 + $0x78] sm:$0xff]
          %v6806 = vld [vmem:[#allocation6 + $0x80] sm:$0xff]
          %v6807 = vld [vmem:[#allocation6 + $0x88] sm:$0xff]
          %v6808 = vld [vmem:[#allocation6 + $0x90] sm:$0xff]
          %v6809 = vld [vmem:[#allocation6 + $0x98] sm:$0xff]
          %v6810 = vld [vmem:[#allocation6 + $0xa0] sm:$0xff]
          %v6811 = vld [vmem:[#allocation6 + $0xa8] sm:$0xff]
          %v6812 = vld [vmem:[#allocation6 + $0xb0] sm:$0xff]
          %v6813 = vld [vmem:[#allocation6 + $0xb8] sm:$0xff]
          %v6814 = vld [vmem:[#allocation6 + $0xc0] sm:$0xff]
          %v6815 = vld [vmem:[#allocation6 + $0xc8] sm:$0xff]
          %v6816 = vld [vmem:[#allocation6 + $0xd0] sm:$0xff]
          %v6817 = vld [vmem:[#allocation6 + $0xd8] sm:$0xff]
          %v6818 = vld [vmem:[#allocation6 + $0xe0] sm:$0xff]
          %v6819 = vld [vmem:[#allocation6 + $0xe8] sm:$0xff]
          %v6820 = vld [vmem:[#allocation6 + $0xf0] sm:$0xff]
          %v6821 = vld [vmem:[#allocation6 + $0xf8] sm:$0xff]
          %v6822 = vrcp.pop %v6790
          %v6823 = vrcp.pop %v6791
          %v6824 = vrcp.pop %v6792
          %v6825 = vrcp.pop %v6793
          %v6826 = vrcp.pop %v6794
          %v6827 = vrcp.pop %v6795
          %v6828 = vrcp.pop %v6796
          %v6829 = vrcp.pop %v6797
          %v6830 = vrcp.pop %v6798
          %v6831 = vrcp.pop %v6799
          %v6832 = vrcp.pop %v6800
          %v6833 = vrcp.pop %v6801
          %v6834 = vrcp.pop %v6802
          %v6835 = vrcp.pop %v6803
          %v6836 = vrcp.pop %v6804
          %v6837 = vrcp.pop %v6805
          %v6838 = vrcp.pop %v6806
          %v6839 = vrcp.pop %v6807
          %v6840 = vrcp.pop %v6808
          %v6841 = vrcp.pop %v6809
          %v6842 = vrcp.pop %v6810
          %v6843 = vrcp.pop %v6811
          %v6844 = vrcp.pop %v6812
          %v6845 = vrcp.pop %v6813
          %v6846 = vrcp.pop %v6814
          %v6847 = vrcp.pop %v6815
          %v6848 = vrcp.pop %v6816
          %v6849 = vrcp.pop %v6817
          %v6850 = vrcp.pop %v6818
          %v6851 = vrcp.pop %v6819
          %v6852 = vrcp.pop %v6820
          %v6853 = vrcp.pop %v6821
          %6855 = vset.pattern.permute.xlu0 0
          %6856 = vperm.xlu0 %6855, %v6822
          %v6857 = vpop.permute.xlu0 %6856
          %6860 = vset.pattern.permute.xlu0 0
          %6861 = vperm.xlu0 %6860, %v6823
          %v6862 = vpop.permute.xlu0 %6861
          %6865 = vset.pattern.permute.xlu0 0
          %6866 = vperm.xlu0 %6865, %v6824
          %v6867 = vpop.permute.xlu0 %6866
          %6870 = vset.pattern.permute.xlu0 0
          %6871 = vperm.xlu0 %6870, %v6825
          %v6872 = vpop.permute.xlu0 %6871
          %6875 = vset.pattern.permute.xlu0 0
          %6876 = vperm.xlu0 %6875, %v6826
          %v6877 = vpop.permute.xlu0 %6876
          %6880 = vset.pattern.permute.xlu0 0
          %6881 = vperm.xlu0 %6880, %v6827
          %v6882 = vpop.permute.xlu0 %6881
          %6885 = vset.pattern.permute.xlu0 0
          %6886 = vperm.xlu0 %6885, %v6828
          %v6887 = vpop.permute.xlu0 %6886
          %6890 = vset.pattern.permute.xlu0 0
          %6891 = vperm.xlu0 %6890, %v6829
          %v6892 = vpop.permute.xlu0 %6891
          %6895 = vset.pattern.permute.xlu0 0
          %6896 = vperm.xlu0 %6895, %v6830
          %v6897 = vpop.permute.xlu0 %6896
          %6900 = vset.pattern.permute.xlu0 0
          %6901 = vperm.xlu0 %6900, %v6831
          %v6902 = vpop.permute.xlu0 %6901
          %6905 = vset.pattern.permute.xlu0 0
          %6906 = vperm.xlu0 %6905, %v6832
          %v6907 = vpop.permute.xlu0 %6906
          %6910 = vset.pattern.permute.xlu0 0
          %6911 = vperm.xlu0 %6910, %v6833
          %v6912 = vpop.permute.xlu0 %6911
          %6915 = vset.pattern.permute.xlu0 0
          %6916 = vperm.xlu0 %6915, %v6834
          %v6917 = vpop.permute.xlu0 %6916
          %6920 = vset.pattern.permute.xlu0 0
          %6921 = vperm.xlu0 %6920, %v6835
          %v6922 = vpop.permute.xlu0 %6921
          %6925 = vset.pattern.permute.xlu0 0
          %6926 = vperm.xlu0 %6925, %v6836
          %v6927 = vpop.permute.xlu0 %6926
          %6930 = vset.pattern.permute.xlu0 0
          %6931 = vperm.xlu0 %6930, %v6837
          %v6932 = vpop.permute.xlu0 %6931
          %6935 = vset.pattern.permute.xlu0 0
          %6936 = vperm.xlu0 %6935, %v6838
          %v6937 = vpop.permute.xlu0 %6936
          %6940 = vset.pattern.permute.xlu0 0
          %6941 = vperm.xlu0 %6940, %v6839
          %v6942 = vpop.permute.xlu0 %6941
          %6945 = vset.pattern.permute.xlu0 0
          %6946 = vperm.xlu0 %6945, %v6840
          %v6947 = vpop.permute.xlu0 %6946
          %6950 = vset.pattern.permute.xlu0 0
          %6951 = vperm.xlu0 %6950, %v6841
          %v6952 = vpop.permute.xlu0 %6951
          %6955 = vset.pattern.permute.xlu0 0
          %6956 = vperm.xlu0 %6955, %v6842
          %v6957 = vpop.permute.xlu0 %6956
          %6960 = vset.pattern.permute.xlu0 0
          %6961 = vperm.xlu0 %6960, %v6843
          %v6962 = vpop.permute.xlu0 %6961
          %6965 = vset.pattern.permute.xlu0 0
          %6966 = vperm.xlu0 %6965, %v6844
          %v6967 = vpop.permute.xlu0 %6966
          %6970 = vset.pattern.permute.xlu0 0
          %6971 = vperm.xlu0 %6970, %v6845
          %v6972 = vpop.permute.xlu0 %6971
          %6975 = vset.pattern.permute.xlu0 0
          %6976 = vperm.xlu0 %6975, %v6846
          %v6977 = vpop.permute.xlu0 %6976
          %6980 = vset.pattern.permute.xlu0 0
          %6981 = vperm.xlu0 %6980, %v6847
          %v6982 = vpop.permute.xlu0 %6981
          %6985 = vset.pattern.permute.xlu0 0
          %6986 = vperm.xlu0 %6985, %v6848
          %v6987 = vpop.permute.xlu0 %6986
          %6990 = vset.pattern.permute.xlu0 0
          %6991 = vperm.xlu0 %6990, %v6849
          %v6992 = vpop.permute.xlu0 %6991
          %6995 = vset.pattern.permute.xlu0 0
          %6996 = vperm.xlu0 %6995, %v6850
          %v6997 = vpop.permute.xlu0 %6996
          %7000 = vset.pattern.permute.xlu0 0
          %7001 = vperm.xlu0 %7000, %v6851
          %v7002 = vpop.permute.xlu0 %7001
          %7005 = vset.pattern.permute.xlu0 0
          %7006 = vperm.xlu0 %7005, %v6852
          %v7007 = vpop.permute.xlu0 %7006
          %7010 = vset.pattern.permute.xlu0 0
          %7011 = vperm.xlu0 %7010, %v6853
          %v7012 = vpop.permute.xlu0 %7011
          %v7014 = vmul.f32 %v6758, %v6857
          %v7015 = vmul.f32 %v6759, %v6862
          %v7016 = vmul.f32 %v6760, %v6867
          %v7017 = vmul.f32 %v6761, %v6872
          %v7018 = vmul.f32 %v6762, %v6877
          %v7019 = vmul.f32 %v6763, %v6882
          %v7020 = vmul.f32 %v6764, %v6887
          %v7021 = vmul.f32 %v6765, %v6892
          %v7022 = vmul.f32 %v6766, %v6897
          %v7023 = vmul.f32 %v6767, %v6902
          %v7024 = vmul.f32 %v6768, %v6907
          %v7025 = vmul.f32 %v6769, %v6912
          %v7026 = vmul.f32 %v6770, %v6917
          %v7027 = vmul.f32 %v6771, %v6922
          %v7028 = vmul.f32 %v6772, %v6927
          %v7029 = vmul.f32 %v6773, %v6932
          %v7030 = vmul.f32 %v6774, %v6937
          %v7031 = vmul.f32 %v6775, %v6942
          %v7032 = vmul.f32 %v6776, %v6947
          %v7033 = vmul.f32 %v6777, %v6952
          %v7034 = vmul.f32 %v6778, %v6957
          %v7035 = vmul.f32 %v6779, %v6962
          %v7036 = vmul.f32 %v6780, %v6967
          %v7037 = vmul.f32 %v6781, %v6972
          %v7038 = vmul.f32 %v6782, %v6977
          %v7039 = vmul.f32 %v6783, %v6982
          %v7040 = vmul.f32 %v6784, %v6987
          %v7041 = vmul.f32 %v6785, %v6992
          %v7042 = vmul.f32 %v6786, %v6997
          %v7043 = vmul.f32 %v6787, %v7002
          %v7044 = vmul.f32 %v6788, %v7007
          %v7045 = vmul.f32 %v6789, %v7012
          %v7046 = vpack.c.bf16 %v7015, %v7014
          %v7047 = vpack.c.bf16 %v7017, %v7016
          %v7048 = vpack.c.bf16 %v7019, %v7018
          %v7049 = vpack.c.bf16 %v7021, %v7020
          %v7050 = vpack.c.bf16 %v7023, %v7022
          %v7051 = vpack.c.bf16 %v7025, %v7024
          %v7052 = vpack.c.bf16 %v7027, %v7026
          %v7053 = vpack.c.bf16 %v7029, %v7028
          %v7054 = vpack.c.bf16 %v7031, %v7030
          %v7055 = vpack.c.bf16 %v7033, %v7032
          %v7056 = vpack.c.bf16 %v7035, %v7034
          %v7057 = vpack.c.bf16 %v7037, %v7036
          %v7058 = vpack.c.bf16 %v7039, %v7038
          %v7059 = vpack.c.bf16 %v7041, %v7040
          %v7060 = vpack.c.bf16 %v7043, %v7042
          %v7061 = vpack.c.bf16 %v7045, %v7044
          %v7064 = vpack.i.b16 %v7050, %v7046
          %v7066 = vshrl.u32 %v7046, 16
          %v7067 = vshrl.u32 %v7050, 16
          %v7068 = vpack.i.b16 %v7067, %v7066
          %v7072 = vpack.i.b16 %v7058, %v7054
          %v7074 = vshrl.u32 %v7054, 16
          %v7075 = vshrl.u32 %v7058, 16
          %v7076 = vpack.i.b16 %v7075, %v7074
          %v7079 = vpack.i.b16 0, 0
          %v7081 = vshrl.u32 0, 16
          %v7082 = vpack.i.b16 %v7081, %v7081
          %v7086 = vpack.i.b16 %v7051, %v7047
          %v7088 = vshrl.u32 %v7047, 16
          %v7089 = vshrl.u32 %v7051, 16
          %v7090 = vpack.i.b16 %v7089, %v7088
          %v7094 = vpack.i.b16 %v7059, %v7055
          %v7096 = vshrl.u32 %v7055, 16
          %v7097 = vshrl.u32 %v7059, 16
          %v7098 = vpack.i.b16 %v7097, %v7096
          %v7102 = vpack.i.b16 %v7052, %v7048
          %v7104 = vshrl.u32 %v7048, 16
          %v7105 = vshrl.u32 %v7052, 16
          %v7106 = vpack.i.b16 %v7105, %v7104
          %v7110 = vpack.i.b16 %v7060, %v7056
          %v7112 = vshrl.u32 %v7056, 16
          %v7113 = vshrl.u32 %v7060, 16
          %v7114 = vpack.i.b16 %v7113, %v7112
          %v7118 = vpack.i.b16 %v7053, %v7049
          %v7120 = vshrl.u32 %v7049, 16
          %v7121 = vshrl.u32 %v7053, 16
          %v7122 = vpack.i.b16 %v7121, %v7120
          %v7126 = vpack.i.b16 %v7061, %v7057
          %v7128 = vshrl.u32 %v7057, 16
          %v7129 = vshrl.u32 %v7061, 16
          %v7130 = vpack.i.b16 %v7129, %v7128
          %v7132 = vcombine.high %v7064, %v7079
          %v7134 = vunpack.c.l.s4 1983009808
          %v7135 = vunpack.c.0.s8 %v7134
          %v7136 = vlaneseq
          %v7137 = vshrl.u32 %v7136, 7
          %v7138 = vsub.s32 %v7135, %v7137
          %v7139 = vrot.slane %v7064, %v7138
          %v7141 = vunpack.c.l.s4 1983009808
          %v7142 = vunpack.c.0.s8 %v7141
          %v7143 = vlaneseq
          %v7144 = vshrl.u32 %v7143, 7
          %v7145 = vsub.s32 %v7142, %v7144
          %v7146 = vrot.slane %v7132, %v7145
          %v7147 = vcombine.high %v7072, %v7079
          %v7149 = vunpack.c.l.s4 1983009808
          %v7150 = vunpack.c.0.s8 %v7149
          %v7151 = vlaneseq
          %v7152 = vshrl.u32 %v7151, 7
          %v7153 = vsub.s32 %v7150, %v7152
          %v7154 = vrot.slane %v7072, %v7153
          %v7156 = vunpack.c.l.s4 1983009808
          %v7157 = vunpack.c.0.s8 %v7156
          %v7158 = vlaneseq
          %v7159 = vshrl.u32 %v7158, 7
          %v7160 = vsub.s32 %v7157, %v7159
          %v7161 = vrot.slane %v7147, %v7160
          %v7162 = vcombine.low %v7139, %v7154
          %v7163 = vcombine.high %v7139, %v7154
          %v7165 = vunpack.c.l.s4 1934713408
          %v7166 = vunpack.c.0.s8 %v7165
          %v7167 = vlaneseq
          %v7168 = vshrl.u32 %v7167, 7
          %v7169 = vsub.s32 %v7166, %v7168
          %v7170 = vrot.slane %v7162, %v7169
          %v7172 = vunpack.c.l.s4 1934713408
          %v7173 = vunpack.c.0.s8 %v7172
          %v7174 = vlaneseq
          %v7175 = vshrl.u32 %v7174, 7
          %v7176 = vsub.s32 %v7173, %v7175
          %v7177 = vrot.slane %v7163, %v7176
          %v7178 = vcombine.low %v7146, %v7161
          %v7179 = vcombine.high %v7146, %v7161
          %v7181 = vunpack.c.l.s4 1934713408
          %v7182 = vunpack.c.0.s8 %v7181
          %v7183 = vlaneseq
          %v7184 = vshrl.u32 %v7183, 7
          %v7185 = vsub.s32 %v7182, %v7184
          %v7186 = vrot.slane %v7178, %v7185
          %v7188 = vunpack.c.l.s4 1934713408
          %v7189 = vunpack.c.0.s8 %v7188
          %v7190 = vlaneseq
          %v7191 = vshrl.u32 %v7190, 7
          %v7192 = vsub.s32 %v7189, %v7191
          %v7193 = vrot.slane %v7179, %v7192
          %v7194 = vcombine.high %v7170, 0
          %v7195 = vcombine.high %v7177, 0
          %v7196 = vcombine.high %v7186, 0
          %v7197 = vcombine.high %v7193, 0
          %v7198 = vcombine.high %v7068, %v7082
          %v7200 = vunpack.c.l.s4 1983009808
          %v7201 = vunpack.c.0.s8 %v7200
          %v7202 = vlaneseq
          %v7203 = vshrl.u32 %v7202, 7
          %v7204 = vsub.s32 %v7201, %v7203
          %v7205 = vrot.slane %v7068, %v7204
          %v7207 = vunpack.c.l.s4 1983009808
          %v7208 = vunpack.c.0.s8 %v7207
          %v7209 = vlaneseq
          %v7210 = vshrl.u32 %v7209, 7
          %v7211 = vsub.s32 %v7208, %v7210
          %v7212 = vrot.slane %v7198, %v7211
          %v7213 = vcombine.high %v7076, %v7082
          %v7215 = vunpack.c.l.s4 1983009808
          %v7216 = vunpack.c.0.s8 %v7215
          %v7217 = vlaneseq
          %v7218 = vshrl.u32 %v7217, 7
          %v7219 = vsub.s32 %v7216, %v7218
          %v7220 = vrot.slane %v7076, %v7219
          %v7222 = vunpack.c.l.s4 1983009808
          %v7223 = vunpack.c.0.s8 %v7222
          %v7224 = vlaneseq
          %v7225 = vshrl.u32 %v7224, 7
          %v7226 = vsub.s32 %v7223, %v7225
          %v7227 = vrot.slane %v7213, %v7226
          %v7228 = vcombine.low %v7205, %v7220
          %v7229 = vcombine.high %v7205, %v7220
          %v7231 = vunpack.c.l.s4 1934713408
          %v7232 = vunpack.c.0.s8 %v7231
          %v7233 = vlaneseq
          %v7234 = vshrl.u32 %v7233, 7
          %v7235 = vsub.s32 %v7232, %v7234
          %v7236 = vrot.slane %v7228, %v7235
          %v7238 = vunpack.c.l.s4 1934713408
          %v7239 = vunpack.c.0.s8 %v7238
          %v7240 = vlaneseq
          %v7241 = vshrl.u32 %v7240, 7
          %v7242 = vsub.s32 %v7239, %v7241
          %v7243 = vrot.slane %v7229, %v7242
          %v7244 = vcombine.low %v7212, %v7227
          %v7245 = vcombine.high %v7212, %v7227
          %v7247 = vunpack.c.l.s4 1934713408
          %v7248 = vunpack.c.0.s8 %v7247
          %v7249 = vlaneseq
          %v7250 = vshrl.u32 %v7249, 7
          %v7251 = vsub.s32 %v7248, %v7250
          %v7252 = vrot.slane %v7244, %v7251
          %v7254 = vunpack.c.l.s4 1934713408
          %v7255 = vunpack.c.0.s8 %v7254
          %v7256 = vlaneseq
          %v7257 = vshrl.u32 %v7256, 7
          %v7258 = vsub.s32 %v7255, %v7257
          %v7259 = vrot.slane %v7245, %v7258
          %v7260 = vcombine.high %v7236, 0
          %v7261 = vcombine.high %v7243, 0
          %v7262 = vcombine.high %v7252, 0
          %v7263 = vcombine.high %v7259, 0
          %v7264 = vcombine.high %v7086, %v7079
          %v7266 = vunpack.c.l.s4 1983009808
          %v7267 = vunpack.c.0.s8 %v7266
          %v7268 = vlaneseq
          %v7269 = vshrl.u32 %v7268, 7
          %v7270 = vsub.s32 %v7267, %v7269
          %v7271 = vrot.slane %v7086, %v7270
          %v7273 = vunpack.c.l.s4 1983009808
          %v7274 = vunpack.c.0.s8 %v7273
          %v7275 = vlaneseq
          %v7276 = vshrl.u32 %v7275, 7
          %v7277 = vsub.s32 %v7274, %v7276
          %v7278 = vrot.slane %v7264, %v7277
          %v7279 = vcombine.high %v7094, %v7079
          %v7281 = vunpack.c.l.s4 1983009808
          %v7282 = vunpack.c.0.s8 %v7281
          %v7283 = vlaneseq
          %v7284 = vshrl.u32 %v7283, 7
          %v7285 = vsub.s32 %v7282, %v7284
          %v7286 = vrot.slane %v7094, %v7285
          %v7288 = vunpack.c.l.s4 1983009808
          %v7289 = vunpack.c.0.s8 %v7288
          %v7290 = vlaneseq
          %v7291 = vshrl.u32 %v7290, 7
          %v7292 = vsub.s32 %v7289, %v7291
          %v7293 = vrot.slane %v7279, %v7292
          %v7294 = vcombine.low %v7271, %v7286
          %v7295 = vcombine.high %v7271, %v7286
          %v7297 = vunpack.c.l.s4 1934713408
          %v7298 = vunpack.c.0.s8 %v7297
          %v7299 = vlaneseq
          %v7300 = vshrl.u32 %v7299, 7
          %v7301 = vsub.s32 %v7298, %v7300
          %v7302 = vrot.slane %v7294, %v7301
          %v7304 = vunpack.c.l.s4 1934713408
          %v7305 = vunpack.c.0.s8 %v7304
          %v7306 = vlaneseq
          %v7307 = vshrl.u32 %v7306, 7
          %v7308 = vsub.s32 %v7305, %v7307
          %v7309 = vrot.slane %v7295, %v7308
          %v7310 = vcombine.low %v7278, %v7293
          %v7311 = vcombine.high %v7278, %v7293
          %v7313 = vunpack.c.l.s4 1934713408
          %v7314 = vunpack.c.0.s8 %v7313
          %v7315 = vlaneseq
          %v7316 = vshrl.u32 %v7315, 7
          %v7317 = vsub.s32 %v7314, %v7316
          %v7318 = vrot.slane %v7310, %v7317
          %v7320 = vunpack.c.l.s4 1934713408
          %v7321 = vunpack.c.0.s8 %v7320
          %v7322 = vlaneseq
          %v7323 = vshrl.u32 %v7322, 7
          %v7324 = vsub.s32 %v7321, %v7323
          %v7325 = vrot.slane %v7311, %v7324
          %v7326 = vcombine.high %v7302, 0
          %v7327 = vcombine.high %v7309, 0
          %v7328 = vcombine.high %v7318, 0
          %v7329 = vcombine.high %v7325, 0
          %v7330 = vcombine.high %v7090, %v7082
          %v7332 = vunpack.c.l.s4 1983009808
          %v7333 = vunpack.c.0.s8 %v7332
          %v7334 = vlaneseq
          %v7335 = vshrl.u32 %v7334, 7
          %v7336 = vsub.s32 %v7333, %v7335
          %v7337 = vrot.slane %v7090, %v7336
          %v7339 = vunpack.c.l.s4 1983009808
          %v7340 = vunpack.c.0.s8 %v7339
          %v7341 = vlaneseq
          %v7342 = vshrl.u32 %v7341, 7
          %v7343 = vsub.s32 %v7340, %v7342
          %v7344 = vrot.slane %v7330, %v7343
          %v7345 = vcombine.high %v7098, %v7082
          %v7347 = vunpack.c.l.s4 1983009808
          %v7348 = vunpack.c.0.s8 %v7347
          %v7349 = vlaneseq
          %v7350 = vshrl.u32 %v7349, 7
          %v7351 = vsub.s32 %v7348, %v7350
          %v7352 = vrot.slane %v7098, %v7351
          %v7354 = vunpack.c.l.s4 1983009808
          %v7355 = vunpack.c.0.s8 %v7354
          %v7356 = vlaneseq
          %v7357 = vshrl.u32 %v7356, 7
          %v7358 = vsub.s32 %v7355, %v7357
          %v7359 = vrot.slane %v7345, %v7358
          %v7360 = vcombine.low %v7337, %v7352
          %v7361 = vcombine.high %v7337, %v7352
          %v7363 = vunpack.c.l.s4 1934713408
          %v7364 = vunpack.c.0.s8 %v7363
          %v7365 = vlaneseq
          %v7366 = vshrl.u32 %v7365, 7
          %v7367 = vsub.s32 %v7364, %v7366
          %v7368 = vrot.slane %v7360, %v7367
          %v7370 = vunpack.c.l.s4 1934713408
          %v7371 = vunpack.c.0.s8 %v7370
          %v7372 = vlaneseq
          %v7373 = vshrl.u32 %v7372, 7
          %v7374 = vsub.s32 %v7371, %v7373
          %v7375 = vrot.slane %v7361, %v7374
          %v7376 = vcombine.low %v7344, %v7359
          %v7377 = vcombine.high %v7344, %v7359
          %v7379 = vunpack.c.l.s4 1934713408
          %v7380 = vunpack.c.0.s8 %v7379
          %v7381 = vlaneseq
          %v7382 = vshrl.u32 %v7381, 7
          %v7383 = vsub.s32 %v7380, %v7382
          %v7384 = vrot.slane %v7376, %v7383
          %v7386 = vunpack.c.l.s4 1934713408
          %v7387 = vunpack.c.0.s8 %v7386
          %v7388 = vlaneseq
          %v7389 = vshrl.u32 %v7388, 7
          %v7390 = vsub.s32 %v7387, %v7389
          %v7391 = vrot.slane %v7377, %v7390
          %v7392 = vcombine.high %v7368, 0
          %v7393 = vcombine.high %v7375, 0
          %v7394 = vcombine.high %v7384, 0
          %v7395 = vcombine.high %v7391, 0
          %v7396 = vcombine.high %v7102, %v7079
          %v7398 = vunpack.c.l.s4 1983009808
          %v7399 = vunpack.c.0.s8 %v7398
          %v7400 = vlaneseq
          %v7401 = vshrl.u32 %v7400, 7
          %v7402 = vsub.s32 %v7399, %v7401
          %v7403 = vrot.slane %v7102, %v7402
          %v7405 = vunpack.c.l.s4 1983009808
          %v7406 = vunpack.c.0.s8 %v7405
          %v7407 = vlaneseq
          %v7408 = vshrl.u32 %v7407, 7
          %v7409 = vsub.s32 %v7406, %v7408
          %v7410 = vrot.slane %v7396, %v7409
          %v7411 = vcombine.high %v7110, %v7079
          %v7413 = vunpack.c.l.s4 1983009808
          %v7414 = vunpack.c.0.s8 %v7413
          %v7415 = vlaneseq
          %v7416 = vshrl.u32 %v7415, 7
          %v7417 = vsub.s32 %v7414, %v7416
          %v7418 = vrot.slane %v7110, %v7417
          %v7420 = vunpack.c.l.s4 1983009808
          %v7421 = vunpack.c.0.s8 %v7420
          %v7422 = vlaneseq
          %v7423 = vshrl.u32 %v7422, 7
          %v7424 = vsub.s32 %v7421, %v7423
          %v7425 = vrot.slane %v7411, %v7424
          %v7426 = vcombine.low %v7403, %v7418
          %v7427 = vcombine.high %v7403, %v7418
          %v7429 = vunpack.c.l.s4 1934713408
          %v7430 = vunpack.c.0.s8 %v7429
          %v7431 = vlaneseq
          %v7432 = vshrl.u32 %v7431, 7
          %v7433 = vsub.s32 %v7430, %v7432
          %v7434 = vrot.slane %v7426, %v7433
          %v7436 = vunpack.c.l.s4 1934713408
          %v7437 = vunpack.c.0.s8 %v7436
          %v7438 = vlaneseq
          %v7439 = vshrl.u32 %v7438, 7
          %v7440 = vsub.s32 %v7437, %v7439
          %v7441 = vrot.slane %v7427, %v7440
          %v7442 = vcombine.low %v7410, %v7425
          %v7443 = vcombine.high %v7410, %v7425
          %v7445 = vunpack.c.l.s4 1934713408
          %v7446 = vunpack.c.0.s8 %v7445
          %v7447 = vlaneseq
          %v7448 = vshrl.u32 %v7447, 7
          %v7449 = vsub.s32 %v7446, %v7448
          %v7450 = vrot.slane %v7442, %v7449
          %v7452 = vunpack.c.l.s4 1934713408
          %v7453 = vunpack.c.0.s8 %v7452
          %v7454 = vlaneseq
          %v7455 = vshrl.u32 %v7454, 7
          %v7456 = vsub.s32 %v7453, %v7455
          %v7457 = vrot.slane %v7443, %v7456
          %v7458 = vcombine.high %v7434, 0
          %v7459 = vcombine.high %v7441, 0
          %v7460 = vcombine.high %v7450, 0
          %v7461 = vcombine.high %v7457, 0
          %v7462 = vcombine.high %v7106, %v7082
          %v7464 = vunpack.c.l.s4 1983009808
          %v7465 = vunpack.c.0.s8 %v7464
          %v7466 = vlaneseq
          %v7467 = vshrl.u32 %v7466, 7
          %v7468 = vsub.s32 %v7465, %v7467
          %v7469 = vrot.slane %v7106, %v7468
          %v7471 = vunpack.c.l.s4 1983009808
          %v7472 = vunpack.c.0.s8 %v7471
          %v7473 = vlaneseq
          %v7474 = vshrl.u32 %v7473, 7
          %v7475 = vsub.s32 %v7472, %v7474
          %v7476 = vrot.slane %v7462, %v7475
          %v7477 = vcombine.high %v7114, %v7082
          %v7479 = vunpack.c.l.s4 1983009808
          %v7480 = vunpack.c.0.s8 %v7479
          %v7481 = vlaneseq
          %v7482 = vshrl.u32 %v7481, 7
          %v7483 = vsub.s32 %v7480, %v7482
          %v7484 = vrot.slane %v7114, %v7483
          %v7486 = vunpack.c.l.s4 1983009808
          %v7487 = vunpack.c.0.s8 %v7486
          %v7488 = vlaneseq
          %v7489 = vshrl.u32 %v7488, 7
          %v7490 = vsub.s32 %v7487, %v7489
          %v7491 = vrot.slane %v7477, %v7490
          %v7492 = vcombine.low %v7469, %v7484
          %v7493 = vcombine.high %v7469, %v7484
          %v7495 = vunpack.c.l.s4 1934713408
          %v7496 = vunpack.c.0.s8 %v7495
          %v7497 = vlaneseq
          %v7498 = vshrl.u32 %v7497, 7
          %v7499 = vsub.s32 %v7496, %v7498
          %v7500 = vrot.slane %v7492, %v7499
          %v7502 = vunpack.c.l.s4 1934713408
          %v7503 = vunpack.c.0.s8 %v7502
          %v7504 = vlaneseq
          %v7505 = vshrl.u32 %v7504, 7
          %v7506 = vsub.s32 %v7503, %v7505
          %v7507 = vrot.slane %v7493, %v7506
          %v7508 = vcombine.low %v7476, %v7491
          %v7509 = vcombine.high %v7476, %v7491
          %v7511 = vunpack.c.l.s4 1934713408
          %v7512 = vunpack.c.0.s8 %v7511
          %v7513 = vlaneseq
          %v7514 = vshrl.u32 %v7513, 7
          %v7515 = vsub.s32 %v7512, %v7514
          %v7516 = vrot.slane %v7508, %v7515
          %v7518 = vunpack.c.l.s4 1934713408
          %v7519 = vunpack.c.0.s8 %v7518
          %v7520 = vlaneseq
          %v7521 = vshrl.u32 %v7520, 7
          %v7522 = vsub.s32 %v7519, %v7521
          %v7523 = vrot.slane %v7509, %v7522
          %v7524 = vcombine.high %v7500, 0
          %v7525 = vcombine.high %v7507, 0
          %v7526 = vcombine.high %v7516, 0
          %v7527 = vcombine.high %v7523, 0
          %v7528 = vcombine.high %v7118, %v7079
          %v7530 = vunpack.c.l.s4 1983009808
          %v7531 = vunpack.c.0.s8 %v7530
          %v7532 = vlaneseq
          %v7533 = vshrl.u32 %v7532, 7
          %v7534 = vsub.s32 %v7531, %v7533
          %v7535 = vrot.slane %v7118, %v7534
          %v7537 = vunpack.c.l.s4 1983009808
          %v7538 = vunpack.c.0.s8 %v7537
          %v7539 = vlaneseq
          %v7540 = vshrl.u32 %v7539, 7
          %v7541 = vsub.s32 %v7538, %v7540
          %v7542 = vrot.slane %v7528, %v7541
          %v7543 = vcombine.high %v7126, %v7079
          %v7545 = vunpack.c.l.s4 1983009808
          %v7546 = vunpack.c.0.s8 %v7545
          %v7547 = vlaneseq
          %v7548 = vshrl.u32 %v7547, 7
          %v7549 = vsub.s32 %v7546, %v7548
          %v7550 = vrot.slane %v7126, %v7549
          %v7552 = vunpack.c.l.s4 1983009808
          %v7553 = vunpack.c.0.s8 %v7552
          %v7554 = vlaneseq
          %v7555 = vshrl.u32 %v7554, 7
          %v7556 = vsub.s32 %v7553, %v7555
          %v7557 = vrot.slane %v7543, %v7556
          %v7558 = vcombine.low %v7535, %v7550
          %v7559 = vcombine.high %v7535, %v7550
          %v7561 = vunpack.c.l.s4 1934713408
          %v7562 = vunpack.c.0.s8 %v7561
          %v7563 = vlaneseq
          %v7564 = vshrl.u32 %v7563, 7
          %v7565 = vsub.s32 %v7562, %v7564
          %v7566 = vrot.slane %v7558, %v7565
          %v7568 = vunpack.c.l.s4 1934713408
          %v7569 = vunpack.c.0.s8 %v7568
          %v7570 = vlaneseq
          %v7571 = vshrl.u32 %v7570, 7
          %v7572 = vsub.s32 %v7569, %v7571
          %v7573 = vrot.slane %v7559, %v7572
          %v7574 = vcombine.low %v7542, %v7557
          %v7575 = vcombine.high %v7542, %v7557
          %v7577 = vunpack.c.l.s4 1934713408
          %v7578 = vunpack.c.0.s8 %v7577
          %v7579 = vlaneseq
          %v7580 = vshrl.u32 %v7579, 7
          %v7581 = vsub.s32 %v7578, %v7580
          %v7582 = vrot.slane %v7574, %v7581
          %v7584 = vunpack.c.l.s4 1934713408
          %v7585 = vunpack.c.0.s8 %v7584
          %v7586 = vlaneseq
          %v7587 = vshrl.u32 %v7586, 7
          %v7588 = vsub.s32 %v7585, %v7587
          %v7589 = vrot.slane %v7575, %v7588
          %v7590 = vcombine.high %v7566, 0
          %v7591 = vcombine.high %v7573, 0
          %v7592 = vcombine.high %v7582, 0
          %v7593 = vcombine.high %v7589, 0
          %v7594 = vcombine.high %v7122, %v7082
          %v7596 = vunpack.c.l.s4 1983009808
          %v7597 = vunpack.c.0.s8 %v7596
          %v7598 = vlaneseq
          %v7599 = vshrl.u32 %v7598, 7
          %v7600 = vsub.s32 %v7597, %v7599
          %v7601 = vrot.slane %v7122, %v7600
          %v7603 = vunpack.c.l.s4 1983009808
          %v7604 = vunpack.c.0.s8 %v7603
          %v7605 = vlaneseq
          %v7606 = vshrl.u32 %v7605, 7
          %v7607 = vsub.s32 %v7604, %v7606
          %v7608 = vrot.slane %v7594, %v7607
          %v7609 = vcombine.high %v7130, %v7082
          %v7611 = vunpack.c.l.s4 1983009808
          %v7612 = vunpack.c.0.s8 %v7611
          %v7613 = vlaneseq
          %v7614 = vshrl.u32 %v7613, 7
          %v7615 = vsub.s32 %v7612, %v7614
          %v7616 = vrot.slane %v7130, %v7615
          %v7618 = vunpack.c.l.s4 1983009808
          %v7619 = vunpack.c.0.s8 %v7618
          %v7620 = vlaneseq
          %v7621 = vshrl.u32 %v7620, 7
          %v7622 = vsub.s32 %v7619, %v7621
          %v7623 = vrot.slane %v7609, %v7622
          %v7624 = vcombine.low %v7601, %v7616
          %v7625 = vcombine.high %v7601, %v7616
          %v7627 = vunpack.c.l.s4 1934713408
          %v7628 = vunpack.c.0.s8 %v7627
          %v7629 = vlaneseq
          %v7630 = vshrl.u32 %v7629, 7
          %v7631 = vsub.s32 %v7628, %v7630
          %v7632 = vrot.slane %v7624, %v7631
          %v7634 = vunpack.c.l.s4 1934713408
          %v7635 = vunpack.c.0.s8 %v7634
          %v7636 = vlaneseq
          %v7637 = vshrl.u32 %v7636, 7
          %v7638 = vsub.s32 %v7635, %v7637
          %v7639 = vrot.slane %v7625, %v7638
          %v7640 = vcombine.low %v7608, %v7623
          %v7641 = vcombine.high %v7608, %v7623
          %v7643 = vunpack.c.l.s4 1934713408
          %v7644 = vunpack.c.0.s8 %v7643
          %v7645 = vlaneseq
          %v7646 = vshrl.u32 %v7645, 7
          %v7647 = vsub.s32 %v7644, %v7646
          %v7648 = vrot.slane %v7640, %v7647
          %v7650 = vunpack.c.l.s4 1934713408
          %v7651 = vunpack.c.0.s8 %v7650
          %v7652 = vlaneseq
          %v7653 = vshrl.u32 %v7652, 7
          %v7654 = vsub.s32 %v7651, %v7653
          %v7655 = vrot.slane %v7641, %v7654
          %v7656 = vcombine.high %v7632, 0
          %v7657 = vcombine.high %v7639, 0
          %v7658 = vcombine.high %v7648, 0
          %v7659 = vcombine.high %v7655, 0
          %v7660 = vcombine.low %v7170, %v7177
          %v7662 = vunpack.c.l.s4 1983009808
          %v7663 = vunpack.c.0.s8 %v7662
          %v7664 = vlaneseq
          %v7665 = vshrl.u32 %v7664, 7
          %v7666 = vsub.s32 %v7663, %v7665
          %v7667 = vrot.slane %v7660, %v7666
          %v7668 = vcombine.low %v7194, %v7195
          %v7670 = vunpack.c.l.s4 1983009808
          %v7671 = vunpack.c.0.s8 %v7670
          %v7672 = vlaneseq
          %v7673 = vshrl.u32 %v7672, 7
          %v7674 = vsub.s32 %v7671, %v7673
          %v7675 = vrot.slane %v7668, %v7674
          %v7676 = vcombine.low %v7186, %v7193
          %v7678 = vunpack.c.l.s4 1983009808
          %v7679 = vunpack.c.0.s8 %v7678
          %v7680 = vlaneseq
          %v7681 = vshrl.u32 %v7680, 7
          %v7682 = vsub.s32 %v7679, %v7681
          %v7683 = vrot.slane %v7676, %v7682
          %v7684 = vcombine.low %v7196, %v7197
          %v7686 = vunpack.c.l.s4 1983009808
          %v7687 = vunpack.c.0.s8 %v7686
          %v7688 = vlaneseq
          %v7689 = vshrl.u32 %v7688, 7
          %v7690 = vsub.s32 %v7687, %v7689
          %v7691 = vrot.slane %v7684, %v7690
          %v7692 = vcombine.low %v7667, %v7675
          %v7694 = vunpack.c.l.s4 1934713408
          %v7695 = vunpack.c.0.s8 %v7694
          %v7696 = vlaneseq
          %v7697 = vshrl.u32 %v7696, 7
          %v7698 = vsub.s32 %v7695, %v7697
          %v7699 = vrot.slane %v7692, %v7698
          %v7700 = vcombine.low %v7683, %v7691
          %v7702 = vunpack.c.l.s4 1934713408
          %v7703 = vunpack.c.0.s8 %v7702
          %v7704 = vlaneseq
          %v7705 = vshrl.u32 %v7704, 7
          %v7706 = vsub.s32 %v7703, %v7705
          %v7707 = vrot.slane %v7700, %v7706
          %v7708 = vcombine.low %v7699, %v7707
          %v7709 = vcombine.high %v7699, %v7707
          %v7710 = vcombine.low %v7236, %v7243
          %v7712 = vunpack.c.l.s4 1983009808
          %v7713 = vunpack.c.0.s8 %v7712
          %v7714 = vlaneseq
          %v7715 = vshrl.u32 %v7714, 7
          %v7716 = vsub.s32 %v7713, %v7715
          %v7717 = vrot.slane %v7710, %v7716
          %v7718 = vcombine.low %v7260, %v7261
          %v7720 = vunpack.c.l.s4 1983009808
          %v7721 = vunpack.c.0.s8 %v7720
          %v7722 = vlaneseq
          %v7723 = vshrl.u32 %v7722, 7
          %v7724 = vsub.s32 %v7721, %v7723
          %v7725 = vrot.slane %v7718, %v7724
          %v7726 = vcombine.low %v7252, %v7259
          %v7728 = vunpack.c.l.s4 1983009808
          %v7729 = vunpack.c.0.s8 %v7728
          %v7730 = vlaneseq
          %v7731 = vshrl.u32 %v7730, 7
          %v7732 = vsub.s32 %v7729, %v7731
          %v7733 = vrot.slane %v7726, %v7732
          %v7734 = vcombine.low %v7262, %v7263
          %v7736 = vunpack.c.l.s4 1983009808
          %v7737 = vunpack.c.0.s8 %v7736
          %v7738 = vlaneseq
          %v7739 = vshrl.u32 %v7738, 7
          %v7740 = vsub.s32 %v7737, %v7739
          %v7741 = vrot.slane %v7734, %v7740
          %v7742 = vcombine.low %v7717, %v7725
          %v7744 = vunpack.c.l.s4 1934713408
          %v7745 = vunpack.c.0.s8 %v7744
          %v7746 = vlaneseq
          %v7747 = vshrl.u32 %v7746, 7
          %v7748 = vsub.s32 %v7745, %v7747
          %v7749 = vrot.slane %v7742, %v7748
          %v7750 = vcombine.low %v7733, %v7741
          %v7752 = vunpack.c.l.s4 1934713408
          %v7753 = vunpack.c.0.s8 %v7752
          %v7754 = vlaneseq
          %v7755 = vshrl.u32 %v7754, 7
          %v7756 = vsub.s32 %v7753, %v7755
          %v7757 = vrot.slane %v7750, %v7756
          %v7758 = vcombine.low %v7749, %v7757
          %v7759 = vcombine.high %v7749, %v7757
          %v7760 = vcombine.low %v7302, %v7309
          %v7762 = vunpack.c.l.s4 1983009808
          %v7763 = vunpack.c.0.s8 %v7762
          %v7764 = vlaneseq
          %v7765 = vshrl.u32 %v7764, 7
          %v7766 = vsub.s32 %v7763, %v7765
          %v7767 = vrot.slane %v7760, %v7766
          %v7768 = vcombine.low %v7326, %v7327
          %v7770 = vunpack.c.l.s4 1983009808
          %v7771 = vunpack.c.0.s8 %v7770
          %v7772 = vlaneseq
          %v7773 = vshrl.u32 %v7772, 7
          %v7774 = vsub.s32 %v7771, %v7773
          %v7775 = vrot.slane %v7768, %v7774
          %v7776 = vcombine.low %v7318, %v7325
          %v7778 = vunpack.c.l.s4 1983009808
          %v7779 = vunpack.c.0.s8 %v7778
          %v7780 = vlaneseq
          %v7781 = vshrl.u32 %v7780, 7
          %v7782 = vsub.s32 %v7779, %v7781
          %v7783 = vrot.slane %v7776, %v7782
          %v7784 = vcombine.low %v7328, %v7329
          %v7786 = vunpack.c.l.s4 1983009808
          %v7787 = vunpack.c.0.s8 %v7786
          %v7788 = vlaneseq
          %v7789 = vshrl.u32 %v7788, 7
          %v7790 = vsub.s32 %v7787, %v7789
          %v7791 = vrot.slane %v7784, %v7790
          %v7792 = vcombine.low %v7767, %v7775
          %v7794 = vunpack.c.l.s4 1934713408
          %v7795 = vunpack.c.0.s8 %v7794
          %v7796 = vlaneseq
          %v7797 = vshrl.u32 %v7796, 7
          %v7798 = vsub.s32 %v7795, %v7797
          %v7799 = vrot.slane %v7792, %v7798
          %v7800 = vcombine.low %v7783, %v7791
          %v7802 = vunpack.c.l.s4 1934713408
          %v7803 = vunpack.c.0.s8 %v7802
          %v7804 = vlaneseq
          %v7805 = vshrl.u32 %v7804, 7
          %v7806 = vsub.s32 %v7803, %v7805
          %v7807 = vrot.slane %v7800, %v7806
          %v7808 = vcombine.low %v7799, %v7807
          %v7809 = vcombine.high %v7799, %v7807
          %v7810 = vcombine.low %v7368, %v7375
          %v7812 = vunpack.c.l.s4 1983009808
          %v7813 = vunpack.c.0.s8 %v7812
          %v7814 = vlaneseq
          %v7815 = vshrl.u32 %v7814, 7
          %v7816 = vsub.s32 %v7813, %v7815
          %v7817 = vrot.slane %v7810, %v7816
          %v7818 = vcombine.low %v7392, %v7393
          %v7820 = vunpack.c.l.s4 1983009808
          %v7821 = vunpack.c.0.s8 %v7820
          %v7822 = vlaneseq
          %v7823 = vshrl.u32 %v7822, 7
          %v7824 = vsub.s32 %v7821, %v7823
          %v7825 = vrot.slane %v7818, %v7824
          %v7826 = vcombine.low %v7384, %v7391
          %v7828 = vunpack.c.l.s4 1983009808
          %v7829 = vunpack.c.0.s8 %v7828
          %v7830 = vlaneseq
          %v7831 = vshrl.u32 %v7830, 7
          %v7832 = vsub.s32 %v7829, %v7831
          %v7833 = vrot.slane %v7826, %v7832
          %v7834 = vcombine.low %v7394, %v7395
          %v7836 = vunpack.c.l.s4 1983009808
          %v7837 = vunpack.c.0.s8 %v7836
          %v7838 = vlaneseq
          %v7839 = vshrl.u32 %v7838, 7
          %v7840 = vsub.s32 %v7837, %v7839
          %v7841 = vrot.slane %v7834, %v7840
          %v7842 = vcombine.low %v7817, %v7825
          %v7844 = vunpack.c.l.s4 1934713408
          %v7845 = vunpack.c.0.s8 %v7844
          %v7846 = vlaneseq
          %v7847 = vshrl.u32 %v7846, 7
          %v7848 = vsub.s32 %v7845, %v7847
          %v7849 = vrot.slane %v7842, %v7848
          %v7850 = vcombine.low %v7833, %v7841
          %v7852 = vunpack.c.l.s4 1934713408
          %v7853 = vunpack.c.0.s8 %v7852
          %v7854 = vlaneseq
          %v7855 = vshrl.u32 %v7854, 7
          %v7856 = vsub.s32 %v7853, %v7855
          %v7857 = vrot.slane %v7850, %v7856
          %v7858 = vcombine.low %v7849, %v7857
          %v7859 = vcombine.high %v7849, %v7857
          %v7860 = vcombine.low %v7434, %v7441
          %v7862 = vunpack.c.l.s4 1983009808
          %v7863 = vunpack.c.0.s8 %v7862
          %v7864 = vlaneseq
          %v7865 = vshrl.u32 %v7864, 7
          %v7866 = vsub.s32 %v7863, %v7865
          %v7867 = vrot.slane %v7860, %v7866
          %v7868 = vcombine.low %v7458, %v7459
          %v7870 = vunpack.c.l.s4 1983009808
          %v7871 = vunpack.c.0.s8 %v7870
          %v7872 = vlaneseq
          %v7873 = vshrl.u32 %v7872, 7
          %v7874 = vsub.s32 %v7871, %v7873
          %v7875 = vrot.slane %v7868, %v7874
          %v7876 = vcombine.low %v7450, %v7457
          %v7878 = vunpack.c.l.s4 1983009808
          %v7879 = vunpack.c.0.s8 %v7878
          %v7880 = vlaneseq
          %v7881 = vshrl.u32 %v7880, 7
          %v7882 = vsub.s32 %v7879, %v7881
          %v7883 = vrot.slane %v7876, %v7882
          %v7884 = vcombine.low %v7460, %v7461
          %v7886 = vunpack.c.l.s4 1983009808
          %v7887 = vunpack.c.0.s8 %v7886
          %v7888 = vlaneseq
          %v7889 = vshrl.u32 %v7888, 7
          %v7890 = vsub.s32 %v7887, %v7889
          %v7891 = vrot.slane %v7884, %v7890
          %v7892 = vcombine.low %v7867, %v7875
          %v7894 = vunpack.c.l.s4 1934713408
          %v7895 = vunpack.c.0.s8 %v7894
          %v7896 = vlaneseq
          %v7897 = vshrl.u32 %v7896, 7
          %v7898 = vsub.s32 %v7895, %v7897
          %v7899 = vrot.slane %v7892, %v7898
          %v7900 = vcombine.low %v7883, %v7891
          %v7902 = vunpack.c.l.s4 1934713408
          %v7903 = vunpack.c.0.s8 %v7902
          %v7904 = vlaneseq
          %v7905 = vshrl.u32 %v7904, 7
          %v7906 = vsub.s32 %v7903, %v7905
          %v7907 = vrot.slane %v7900, %v7906
          %v7908 = vcombine.low %v7899, %v7907
          %v7909 = vcombine.high %v7899, %v7907
          %v7910 = vcombine.low %v7500, %v7507
          %v7912 = vunpack.c.l.s4 1983009808
          %v7913 = vunpack.c.0.s8 %v7912
          %v7914 = vlaneseq
          %v7915 = vshrl.u32 %v7914, 7
          %v7916 = vsub.s32 %v7913, %v7915
          %v7917 = vrot.slane %v7910, %v7916
          %v7918 = vcombine.low %v7524, %v7525
          %v7920 = vunpack.c.l.s4 1983009808
          %v7921 = vunpack.c.0.s8 %v7920
          %v7922 = vlaneseq
          %v7923 = vshrl.u32 %v7922, 7
          %v7924 = vsub.s32 %v7921, %v7923
          %v7925 = vrot.slane %v7918, %v7924
          %v7926 = vcombine.low %v7516, %v7523
          %v7928 = vunpack.c.l.s4 1983009808
          %v7929 = vunpack.c.0.s8 %v7928
          %v7930 = vlaneseq
          %v7931 = vshrl.u32 %v7930, 7
          %v7932 = vsub.s32 %v7929, %v7931
          %v7933 = vrot.slane %v7926, %v7932
          %v7934 = vcombine.low %v7526, %v7527
          %v7936 = vunpack.c.l.s4 1983009808
          %v7937 = vunpack.c.0.s8 %v7936
          %v7938 = vlaneseq
          %v7939 = vshrl.u32 %v7938, 7
          %v7940 = vsub.s32 %v7937, %v7939
          %v7941 = vrot.slane %v7934, %v7940
          %v7942 = vcombine.low %v7917, %v7925
          %v7944 = vunpack.c.l.s4 1934713408
          %v7945 = vunpack.c.0.s8 %v7944
          %v7946 = vlaneseq
          %v7947 = vshrl.u32 %v7946, 7
          %v7948 = vsub.s32 %v7945, %v7947
          %v7949 = vrot.slane %v7942, %v7948
          %v7950 = vcombine.low %v7933, %v7941
          %v7952 = vunpack.c.l.s4 1934713408
          %v7953 = vunpack.c.0.s8 %v7952
          %v7954 = vlaneseq
          %v7955 = vshrl.u32 %v7954, 7
          %v7956 = vsub.s32 %v7953, %v7955
          %v7957 = vrot.slane %v7950, %v7956
          %v7958 = vcombine.low %v7949, %v7957
          %v7959 = vcombine.high %v7949, %v7957
          %v7960 = vcombine.low %v7566, %v7573
          %v7962 = vunpack.c.l.s4 1983009808
          %v7963 = vunpack.c.0.s8 %v7962
          %v7964 = vlaneseq
          %v7965 = vshrl.u32 %v7964, 7
          %v7966 = vsub.s32 %v7963, %v7965
          %v7967 = vrot.slane %v7960, %v7966
          %v7968 = vcombine.low %v7590, %v7591
          %v7970 = vunpack.c.l.s4 1983009808
          %v7971 = vunpack.c.0.s8 %v7970
          %v7972 = vlaneseq
          %v7973 = vshrl.u32 %v7972, 7
          %v7974 = vsub.s32 %v7971, %v7973
          %v7975 = vrot.slane %v7968, %v7974
          %v7976 = vcombine.low %v7582, %v7589
          %v7978 = vunpack.c.l.s4 1983009808
          %v7979 = vunpack.c.0.s8 %v7978
          %v7980 = vlaneseq
          %v7981 = vshrl.u32 %v7980, 7
          %v7982 = vsub.s32 %v7979, %v7981
          %v7983 = vrot.slane %v7976, %v7982
          %v7984 = vcombine.low %v7592, %v7593
          %v7986 = vunpack.c.l.s4 1983009808
          %v7987 = vunpack.c.0.s8 %v7986
          %v7988 = vlaneseq
          %v7989 = vshrl.u32 %v7988, 7
          %v7990 = vsub.s32 %v7987, %v7989
          %v7991 = vrot.slane %v7984, %v7990
          %v7992 = vcombine.low %v7967, %v7975
          %v7994 = vunpack.c.l.s4 1934713408
          %v7995 = vunpack.c.0.s8 %v7994
          %v7996 = vlaneseq
          %v7997 = vshrl.u32 %v7996, 7
          %v7998 = vsub.s32 %v7995, %v7997
          %v7999 = vrot.slane %v7992, %v7998
          %v8000 = vcombine.low %v7983, %v7991
          %v8002 = vunpack.c.l.s4 1934713408
          %v8003 = vunpack.c.0.s8 %v8002
          %v8004 = vlaneseq
          %v8005 = vshrl.u32 %v8004, 7
          %v8006 = vsub.s32 %v8003, %v8005
          %v8007 = vrot.slane %v8000, %v8006
          %v8008 = vcombine.low %v7999, %v8007
          %v8009 = vcombine.high %v7999, %v8007
          %v8010 = vcombine.low %v7632, %v7639
          %v8012 = vunpack.c.l.s4 1983009808
          %v8013 = vunpack.c.0.s8 %v8012
          %v8014 = vlaneseq
          %v8015 = vshrl.u32 %v8014, 7
          %v8016 = vsub.s32 %v8013, %v8015
          %v8017 = vrot.slane %v8010, %v8016
          %v8018 = vcombine.low %v7656, %v7657
          %v8020 = vunpack.c.l.s4 1983009808
          %v8021 = vunpack.c.0.s8 %v8020
          %v8022 = vlaneseq
          %v8023 = vshrl.u32 %v8022, 7
          %v8024 = vsub.s32 %v8021, %v8023
          %v8025 = vrot.slane %v8018, %v8024
          %v8026 = vcombine.low %v7648, %v7655
          %v8028 = vunpack.c.l.s4 1983009808
          %v8029 = vunpack.c.0.s8 %v8028
          %v8030 = vlaneseq
          %v8031 = vshrl.u32 %v8030, 7
          %v8032 = vsub.s32 %v8029, %v8031
          %v8033 = vrot.slane %v8026, %v8032
          %v8034 = vcombine.low %v7658, %v7659
          %v8036 = vunpack.c.l.s4 1983009808
          %v8037 = vunpack.c.0.s8 %v8036
          %v8038 = vlaneseq
          %v8039 = vshrl.u32 %v8038, 7
          %v8040 = vsub.s32 %v8037, %v8039
          %v8041 = vrot.slane %v8034, %v8040
          %v8042 = vcombine.low %v8017, %v8025
          %v8044 = vunpack.c.l.s4 1934713408
          %v8045 = vunpack.c.0.s8 %v8044
          %v8046 = vlaneseq
          %v8047 = vshrl.u32 %v8046, 7
          %v8048 = vsub.s32 %v8045, %v8047
          %v8049 = vrot.slane %v8042, %v8048
          %v8050 = vcombine.low %v8033, %v8041
          %v8052 = vunpack.c.l.s4 1934713408
          %v8053 = vunpack.c.0.s8 %v8052
          %v8054 = vlaneseq
          %v8055 = vshrl.u32 %v8054, 7
          %v8056 = vsub.s32 %v8053, %v8055
          %v8057 = vrot.slane %v8050, %v8056
          %v8058 = vcombine.low %v8049, %v8057
          %v8059 = vcombine.high %v8049, %v8057
          %v8062 = vpack.i.b16 %v7758, %v7708
          %v8063 = vshrl.u32 %v7708, 16
          %v8064 = vshrl.u32 %v7758, 16
          %v8065 = vpack.i.b16 %v8064, %v8063
          %v8068 = vpack.i.b16 %v7759, %v7709
          %v8069 = vshrl.u32 %v7709, 16
          %v8070 = vshrl.u32 %v7759, 16
          %v8071 = vpack.i.b16 %v8070, %v8069
          %v8074 = vpack.i.b16 %v7858, %v7808
          %v8075 = vshrl.u32 %v7808, 16
          %v8076 = vshrl.u32 %v7858, 16
          %v8077 = vpack.i.b16 %v8076, %v8075
          %v8080 = vpack.i.b16 %v7859, %v7809
          %v8081 = vshrl.u32 %v7809, 16
          %v8082 = vshrl.u32 %v7859, 16
          %v8083 = vpack.i.b16 %v8082, %v8081
          %v8086 = vpack.i.b16 %v7958, %v7908
          %v8087 = vshrl.u32 %v7908, 16
          %v8088 = vshrl.u32 %v7958, 16
          %v8089 = vpack.i.b16 %v8088, %v8087
          %v8092 = vpack.i.b16 %v7959, %v7909
          %v8093 = vshrl.u32 %v7909, 16
          %v8094 = vshrl.u32 %v7959, 16
          %v8095 = vpack.i.b16 %v8094, %v8093
          %v8098 = vpack.i.b16 %v8058, %v8008
          %v8099 = vshrl.u32 %v8008, 16
          %v8100 = vshrl.u32 %v8058, 16
          %v8101 = vpack.i.b16 %v8100, %v8099
          %v8104 = vpack.i.b16 %v8059, %v8009
          %v8105 = vshrl.u32 %v8009, 16
          %v8106 = vshrl.u32 %v8059, 16
          %v8107 = vpack.i.b16 %v8106, %v8105
          %8108 = vrot.lane.b32.xlu0 %v8065, 32
          %v8109 = vpop.permute.xlu0 %8108
          %8110 = vrot.lane.b32.xlu0 %v8077, 32
          %v8111 = vpop.permute.xlu0 %8110
          %8112 = vrot.lane.b32.xlu0 %v8089, 32
          %v8113 = vpop.permute.xlu0 %8112
          %8114 = vrot.lane.b32.xlu0 %v8101, 32
          %v8115 = vpop.permute.xlu0 %8114
          %8116 = vrot.lane.b32.xlu0 %v8068, 64
          %v8117 = vpop.permute.xlu0 %8116
          %8118 = vrot.lane.b32.xlu0 %v8080, 64
          %v8119 = vpop.permute.xlu0 %8118
          %8120 = vrot.lane.b32.xlu0 %v8092, 64
          %v8121 = vpop.permute.xlu0 %8120
          %8122 = vrot.lane.b32.xlu0 %v8104, 64
          %v8123 = vpop.permute.xlu0 %8122
          %8124 = vrot.lane.b32.xlu0 %v8071, 96
          %v8125 = vpop.permute.xlu0 %8124
          %8126 = vrot.lane.b32.xlu0 %v8083, 96
          %v8127 = vpop.permute.xlu0 %8126
          %8128 = vrot.lane.b32.xlu0 %v8095, 96
          %v8129 = vpop.permute.xlu0 %8128
          %8130 = vrot.lane.b32.xlu0 %v8107, 96
          %v8131 = vpop.permute.xlu0 %8130
          %v8134 = vsel %vm5015, %v8062, %v8109
          %v8137 = vsel %vm5015, %v8074, %v8111
          %v8140 = vsel %vm5015, %v8086, %v8113
          %v8143 = vsel %vm5015, %v8098, %v8115
          %v8145 = vsel %vm5404, %v8134, %v8117
          %v8147 = vsel %vm5404, %v8137, %v8119
          %v8149 = vsel %vm5404, %v8140, %v8121
          %v8151 = vsel %vm5404, %v8143, %v8123
          %vm8152 = vcmask 785408
          %v8154 = vsel %vm8152, %v8145, %v8125
          %v8157 = vsel %vm8152, %v8147, %v8127
          %v8160 = vsel %vm8152, %v8149, %v8129
          %v8163 = vsel %vm8152, %v8151, %v8131
          %v8165 = vld [vmem:[#allocation17] sm:$0xf]
          %v8166 = vld [vmem:[#allocation17 + $0x4] sm:$0xf]
          %v8167 = vld [vmem:[#allocation17 + $0x8] sm:$0xf]
          %v8168 = vld [vmem:[#allocation17 + $0xc] sm:$0xf]
          %v8169 = vld [vmem:[#allocation17 + $0x10] sm:$0xf]
          %v8170 = vld [vmem:[#allocation17 + $0x14] sm:$0xf]
          %v8171 = vld [vmem:[#allocation17 + $0x18] sm:$0xf]
          %v8172 = vld [vmem:[#allocation17 + $0x1c] sm:$0xf]
          %v8173 = vld [vmem:[#allocation17 + $0x20] sm:$0xf]
          %v8174 = vld [vmem:[#allocation17 + $0x24] sm:$0xf]
          %v8175 = vld [vmem:[#allocation17 + $0x28] sm:$0xf]
          %v8176 = vld [vmem:[#allocation17 + $0x2c] sm:$0xf]
          %v8177 = vld [vmem:[#allocation17 + $0x30] sm:$0xf]
          %v8178 = vld [vmem:[#allocation17 + $0x34] sm:$0xf]
          %v8179 = vld [vmem:[#allocation17 + $0x38] sm:$0xf]
          %v8180 = vld [vmem:[#allocation17 + $0x3c] sm:$0xf]
          %v8181 = vld [vmem:[%s11] sm:$0x1]
          %v8183 = vlaneseq
          %v8184 = vshrl.u32 %v8183, 7
          %v8185 = vsub.s32 0, %v8184
          %v8186 = vrot.slane %v8181, %v8185
          %v8204 = vunpack.c.l.b16 %v8165
          %v8205 = vunpack.c.l.b16 %v8166
          %v8206 = vunpack.c.l.b16 %v8167
          %v8207 = vunpack.c.l.b16 %v8168
          %v8208 = vunpack.c.l.b16 %v8169
          %v8209 = vunpack.c.l.b16 %v8170
          %v8210 = vunpack.c.l.b16 %v8171
          %v8211 = vunpack.c.l.b16 %v8172
          %v8212 = vunpack.c.l.b16 %v8173
          %v8213 = vunpack.c.l.b16 %v8174
          %v8214 = vunpack.c.l.b16 %v8175
          %v8215 = vunpack.c.l.b16 %v8176
          %v8216 = vunpack.c.l.b16 %v8177
          %v8217 = vunpack.c.l.b16 %v8178
          %v8218 = vunpack.c.l.b16 %v8179
          %v8219 = vunpack.c.l.b16 %v8180
          %v8220 = vpack.c.b16 %v8205, %v8204
          %v8221 = vpack.c.b16 %v8207, %v8206
          %v8222 = vpack.c.b16 %v8209, %v8208
          %v8223 = vpack.c.b16 %v8211, %v8210
          %v8224 = vpack.c.b16 %v8213, %v8212
          %v8225 = vpack.c.b16 %v8215, %v8214
          %v8226 = vpack.c.b16 %v8217, %v8216
          %v8227 = vpack.c.b16 %v8219, %v8218
          %8236 = vmatprep.subr.bf16.mxu0 0
          %8237 = vmatpush1.bf16.msra.mxu0 %v8220
          %8238 = vmatprep.subr.bf16.mxu0 0
          %8239 = vmatpush1.bf16.msra.mxu0 %v8221
          %8240 = vmatprep.subr.bf16.mxu0 0
          %8241 = vmatpush1.bf16.msra.mxu0 %v8222
          %8242 = vmatprep.subr.bf16.mxu0 0
          %8243 = vmatpush1.bf16.msra.mxu0 %v8223
          %8244 = vmatprep.subr.bf16.mxu0 0
          %8245 = vmatpush1.bf16.msra.mxu0 %v8224
          %8246 = vmatprep.subr.bf16.mxu0 0
          %8247 = vmatpush1.bf16.msra.mxu0 %v8225
          %8248 = vmatprep.subr.bf16.mxu0 0
          %8249 = vmatpush1.bf16.msra.mxu0 %v8226
          %8250 = vmatprep.subr.bf16.mxu0 0
          %8251 = vmatpush1.bf16.msra.mxu0 %v8227
          %8252 = vmatprep.subr.bf16.mxu0 0
          %8253 = vmatpush1.bf16.msra.mxu0 0
          %8254 = vmatprep.subr.bf16.mxu0 0
          %8255 = vmatpush1.bf16.msra.mxu0 0
          %8256 = vmatprep.subr.bf16.mxu0 0
          %8257 = vmatpush1.bf16.msra.mxu0 0
          %8258 = vmatprep.subr.bf16.mxu0 0
          %8259 = vmatpush1.bf16.msra.mxu0 0
          %8260 = vmatprep.subr.bf16.mxu0 0
          %8261 = vmatpush1.bf16.msra.mxu0 0
          %8262 = vmatprep.subr.bf16.mxu0 0
          %8263 = vmatpush1.bf16.msra.mxu0 0
          %8264 = vmatprep.subr.bf16.mxu0 0
          %8265 = vmatpush1.bf16.msra.mxu0 0
          %8266 = vmatprep.subr.bf16.mxu0 0
          %8267 = vmatpush1.bf16.msra.mxu0 0
          %8268 = vmatprep.mubr.bf16.mxu0 0
          %8269 = vmatmul.mubr.bf16.gmra.mrb[0].mxu0 %v8154
          %v8270 = vpop.f32.mrb[0].mxu0
          %v8271 = vadd.f32 %v8186, %v8270
          %v8272 = vpop.f32.mrb[0].mxu0
          %v8273 = vpop.f32.mrb[0].mxu0
          %v8274 = vadd.f32 %v8186, %v8273
          %v8275 = vpop.f32.mrb[0].mxu0
          %8276 = vmatprep.mubr.bf16.mxu0 0
          %8277 = vmatmul.mubr.bf16.gmra.mrb[0].mxu0 %v8157
          %v8278 = vpop.f32.mrb[0].mxu0
          %v8279 = vadd.f32 %v8186, %v8278
          %v8280 = vpop.f32.mrb[0].mxu0
          %v8281 = vpop.f32.mrb[0].mxu0
          %v8282 = vadd.f32 %v8186, %v8281
          %v8283 = vpop.f32.mrb[0].mxu0
          %8284 = vmatprep.mubr.bf16.mxu0 0
          %8285 = vmatmul.mubr.bf16.gmra.mrb[0].mxu0 %v8160
          %v8286 = vpop.f32.mrb[0].mxu0
          %v8287 = vadd.f32 %v8186, %v8286
          %v8288 = vpop.f32.mrb[0].mxu0
          %v8289 = vpop.f32.mrb[0].mxu0
          %v8290 = vadd.f32 %v8186, %v8289
          %v8291 = vpop.f32.mrb[0].mxu0
          %8292 = vmatprep.mubr.bf16.mxu0 0
          %8293 = vmatmul.mubr.bf16.gmra.mrb[0].mxu0 %v8163
          %v8294 = vpop.f32.mrb[0].mxu0
          %v8295 = vadd.f32 %v8186, %v8294
          %v8296 = vpop.f32.mrb[0].mxu0
          %v8297 = vpop.f32.mrb[0].mxu0
          %v8298 = vadd.f32 %v8186, %v8297
          %v8299 = vpop.f32.mrb[0].mxu0
          %8300 = vdwg.mxu0
          %8301 = vst [vmem:[%s564] sm:$0xff] %v8271
          %8302 = vst [vmem:[%s564 + $0x8] sm:$0xff] %v8274
          %8303 = vst [vmem:[%s564 + $0x10] sm:$0xff] %v8279
          %8304 = vst [vmem:[%s564 + $0x18] sm:$0xff] %v8282
          %8305 = vst [vmem:[%s564 + $0x20] sm:$0xff] %v8287
          %8306 = vst [vmem:[%s564 + $0x28] sm:$0xff] %v8290
          %8307 = vst [vmem:[%s564 + $0x30] sm:$0xff] %v8295
          %8308 = vst [vmem:[%s564 + $0x38] sm:$0xff] %v8298
        $region104: #{tpu_custom_call.1} parent=67 // pred_fallthru
          _
        %s8309 = sand.u32 %s333, 1
        %s8310 = scalar_lea.sflag [#allocation10], %s8309
        %s8311 = sand.u32 %s333, 1
        %s8312 = smul.addr %s8311, 64
        %s8313 = scalar_lea.vmem [#allocation19], %s8312
        // Predicated region
        $region105: #{tpu_custom_call.1} parent=67 // pred_check
          %p8314 = pneg %p343
        $region106: #{tpu_custom_call.1} parent=67 // pred_check_branch
          %8316 = sbr.rel (%p8314) target = $region108
        $region107: #{tpu_custom_call.1} parent=67 // pred_region
          %s8317 = smul.u32 8, %s40
          %s8319 = ssub.s32 1024, 1024
          %8320 = vsyncadd %s8310, %s8319
          %s8321 = smul.addr %s39, 16
          %s8322 = sadd.s32 %s8317, %s8321
          %s8323 = smul.addr %s8322, 128
          %s8324 = scalar_lea.hbm %s12, %s8323
          %s8325 = sshll.u32 %s8313, 4
          %s8326 = int_to_ptr.vmem [resolvable:$true] %s8325
          %8331 = dma.vmem_to_hbm [thread:$0]  %s8326, 1024, %s8324, %s8310, 128, 128, 8
        $region108: #{tpu_custom_call.1} parent=67 // pred_fallthru
          _
      $region68: #{tpu_custom_call.1} parent=5 // pred_fallthru
        _
      %p8332 = scmp.le.s32.totalorder 2, %s29
      // Predicated region
      $region109: #{tpu_custom_call.1} parent=5 // pred_check
        %p8333 = pneg %p8332
      $region110: #{tpu_custom_call.1} parent=5 // pred_check_branch
        %8335 = sbr.rel (%p8333) target = $region112
      $region111: #{tpu_custom_call.1} parent=5 // pred_region
        %s8336 = ssub.s32 %s29, 2
        // Predicated region
        $region113: #{tpu_custom_call.1} parent=111 // pred_check
          %p8337 = pneg %p349
        $region114: #{tpu_custom_call.1} parent=111 // pred_check_branch
          %8339 = sbr.rel (%p8337) target = $region116
        $region115: #{tpu_custom_call.1} parent=111 // pred_region
          %s8340 = sand.u32 %s334, 1
          %s8341 = scalar_lea.sflag [#allocation10], %s8340
          %s8342 = sand.u32 %s334, 1
          %s8343 = smul.addr %s8342, 64
          %s8344 = scalar_lea.vmem [#allocation19], %s8343
          %8345 = dma.done %s8341, 1024
        $region116: #{tpu_custom_call.1} parent=111 // pred_fallthru
          _
      $region112: #{tpu_custom_call.1} parent=5 // pred_fallthru
        _
    $region6: #{tpu_custom_call.1} parent=1 // loop_footer
      %s33 = sadd.s32 1, %s29
    $region7: #{tpu_custom_call.1} parent=1 // loop_footer_branch
      %28 = sbr.rel target = $region3
    $region8: #{tpu_custom_call.1} parent=1 // loop_exit
      _
    %8346 = vsyncpa [#allocation9], 1
    %s8347 = scalar_lea.sflag [#allocation9], 1
    %8348 = vsyncpa %s8347, 1
    %8349 = vsyncpa [#allocation12], 1
    %s8350 = scalar_lea.sflag [#allocation12], 1
    %8351 = vsyncpa %s8350, 1
    %8352 = vsyncpa [#allocation15], 1
    %8353 = vsyncpa [#allocation18], 1
    %8354 = vsyncpa [#allocation10], 1
    %s8355 = scalar_lea.sflag [#allocation10], 1
    %8356 = vsyncpa %s8355, 1

</llo_original>
